<compile_context>
chip_gen: v7x
topology: tpu7x:2x2x1
jax: 0.10.0
libtpu: 0.0.40
codegen_flags: <defaults>
</compile_context>

<pallas_src>
import functools

import jax
import jax.numpy as jnp
import numpy as np
from jax.experimental import pallas as pl
from jax.experimental.pallas import tpu as pltpu


def _dcnv2_kernel(g, n_groups, Cp, H,
                  xr_ref, py_ref, px_ref, mraw_ref, w_ref, b_ref,
                  o_ref, samp_ref):
    """One (batch, pixel-tile) grid step of modulated deformable conv.

    xr_ref   : (Cp*H, W)           bf16  input feature map (channel-padded), resident per n
    py/px_ref: (n_groups, g*T)     f32   absolute sampling coords, tap-major inside the tile
    mraw_ref : (n_groups, g*T)     f32   pre-sigmoid modulation mask, same layout
    w_ref    : (C_out, KKp*Cp)     bf16  fused DCN weight (tap-major, channel-minor)
    b_ref    : (C_out, 1)          f32   DCN bias
    o_ref    : (C_out, T)          f32   output pixels for this tile
    samp_ref : (KKp*Cp, T)         bf16  sampled-taps scratch
    """
    W = xr_ref.shape[1]
    T = o_ref.shape[-1]
    GT = g * T

    xr = xr_ref[...]                                          # (Cp*H, W) bf16

    # input row / col indices generated in-kernel (no DMA, no lane-1 operands)
    r_idx = jax.lax.broadcasted_iota(jnp.int32, (H, GT), 0).astype(jnp.float32)
    s_idx = jax.lax.broadcasted_iota(jnp.int32, (W, GT), 0).astype(jnp.float32)

    for jg in range(n_groups):                                # static unroll over tap-groups
        py = py_ref[jg:jg + 1, :]                             # (1, GT)
        px = px_ref[jg:jg + 1, :]                             # (1, GT)
        # sigmoid via EUP exp + approx reciprocal (free slots)
        mask = pl.reciprocal(1.0 + jnp.exp(-mraw_ref[jg:jg + 1, :]), approx=True)

        # separable bilinear weights; max(1-|.|,0) reproduces zero-padded sampling
        wx = jnp.maximum(1.0 - jnp.abs(s_idx - px), 0.0)      # (W, GT)
        wy = jnp.maximum(1.0 - jnp.abs(r_idx - py), 0.0)      # (H, GT)
        wy = wy * mask                                        # fold DCNv2 mask into wy

        # column interpolation for all g taps in ONE MXU matmul (bf16 in, f32 acc)
        t_im = jnp.dot(xr, wx.astype(jnp.bfloat16),
                       preferred_element_type=jnp.float32)    # (Cp*H, GT)
        # row interpolation + modulation: VPU weighted reduce over H
        s = jnp.sum(t_im.reshape(Cp, H, GT) * wy[None, :, :], axis=1)   # (Cp, GT)
        s_bf = s.astype(jnp.bfloat16)

        # scatter the g taps into 8-aligned channel slots of the bf16 scratch
        for j in range(g):
            k = jg * g + j
            samp_ref[k * Cp:(k + 1) * Cp, :] = s_bf[:, j * T:(j + 1) * T]

    # single fused output contraction over (taps x channels) + bias
    out = jnp.dot(w_ref[...], samp_ref[...],
                  preferred_element_type=jnp.float32)         # (C_out, T)
    o_ref[...] = out + b_ref[...]


def modulated_deform_conv_with_off_and_mask(x, w_off, b_off, w_dcn, b_dcn, *,
                                            kernel_size=3, stride=1, padding=1,
                                            dilation=1):
    # TODO(synk): stride != 1, deformable_groups > 1 and the extra_offset_mask two-input
    # path are not implemented (module defaults are stride=1, deformable_groups=1,
    # extra_offset_mask=False).
    assert stride == 1
    N, C, H, W = x.shape
    K = kernel_size
    KK = K * K
    C_out = w_dcn.shape[0]
    HW = H * W

    x = x.astype(jnp.float32)

    # --- offset/mask conv: regular conv, kept as XLA glue ------------------------------
    om = jax.lax.conv_general_dilated(
        x, w_off.astype(jnp.float32), window_strides=(stride, stride),
        padding=((padding, padding), (padding, padding)),
        dimension_numbers=("NCHW", "OIHW", "NCHW"),
    ) + b_off.reshape(1, -1, 1, 1).astype(jnp.float32)        # (N, 3*KK, H, W)
    assert om.shape[2] == H and om.shape[3] == W

    # module semantics: chunk into o1 / o2 / mask, offset = cat(o1, o2),
    # then the DCNv2 op reads (dy_k, dx_k) = offset[2k], offset[2k+1].
    o1, o2, m_raw = om[:, :KK], om[:, KK:2 * KK], om[:, 2 * KK:]
    offset = jnp.concatenate([o1, o2], axis=1)                # (N, 2*KK, H, W)
    off_y = offset[:, 0::2].reshape(N, KK, HW)
    off_x = offset[:, 1::2].reshape(N, KK, HW)
    m_raw = m_raw.reshape(N, KK, HW)                          # pre-sigmoid mask

    # base sampling grid fused into the offsets here (XLA fuses the add into the conv
    # epilogue) -> kernel only sees absolute coordinates.
    hh = jnp.arange(H, dtype=jnp.float32)
    ww = jnp.arange(W, dtype=jnp.float32)
    pg_y = jnp.repeat(hh, W)
    pg_x = jnp.tile(ww, H)
    kh = jnp.repeat(jnp.arange(K, dtype=jnp.float32), K)
    kw = jnp.tile(jnp.arange(K, dtype=jnp.float32), K)
    base_y = pg_y[None, :] * stride - padding + kh[:, None] * dilation   # (KK, HW)
    base_x = pg_x[None, :] * stride - padding + kw[:, None] * dilation   # (KK, HW)
    py = base_y[None] + off_y                                 # (N, KK, HW)
    px = base_x[None] + off_x                                 # (N, KK, HW)

    # --- sizing: lane-dense pixel tile T, tap-group size g, channel padding ------------
    Cp = 8 * ((C + 7) // 8)                                   # 8-aligned channel slots
    HWp = 128 * ((HW + 127) // 128)                           # lane-dense pixel axis

    try:
        vmem_cap = int(pltpu.get_tpu_info().vmem_capacity_bytes)
    except Exception:
        vmem_cap = 64 * 2 ** 20                               # conservative (v7x)
    budget = vmem_cap // 2

    def model_bytes(T, g):
        KKp = ((KK + g - 1) // g) * g
        xr_b = Cp * H * W * 2 * 2                             # x (assume double-buffered)
        coord_b = 3 * KKp * T * 4 * 2                         # py/px/mraw, double-buffered
        out_b = C_out * T * 4 * 2
        w_b = C_out * KKp * Cp * 2
        samp_b = KKp * Cp * T * 2
        interm = (Cp * H + W + H + 2 * Cp) * g * T * 4        # t_im, wx, wy, s, slack
        return xr_b + coord_b + out_b + w_b + samp_b + int(1.5 * interm)

    T = 128
    for cand in (2048, 1024, 512, 256, 128):                  # bigger tiles on 128 MiB parts
        if HWp % cand == 0 and model_bytes(cand, 1) <= budget:
            T = cand
            break
    # v7x has 2 TensorCores: make sure the parallel grid exposes >= 2 steps when possible
    while N * (HWp // T) < 2 and T > 128 and HWp % (T // 2) == 0:
        T //= 2
    n_t = HWp // T

    g = 1
    for cand in range(KK, 0, -1):                             # widest tap batch that fits
        if model_bytes(T, cand) <= budget:
            g = cand
            break
    KKp = ((KK + g - 1) // g) * g
    n_groups = KKp // g
    vmem_limit = int(min(0.9 * vmem_cap, max(32 * 2 ** 20, 2 * model_bytes(T, g))))

    # --- kernel operand layout ----------------------------------------------------------
    # TODO(synk): for small W (< ~64) the separable design under-fills the MXU contraction
    # dim; an im2col+single-matmul path would be preferable for that size class.
    x_p = jnp.pad(x, ((0, 0), (0, Cp - C), (0, 0), (0, 0)))
    x_r = x_p.reshape(N, Cp * H, W).astype(jnp.bfloat16)      # (N, Cp*H, W)

    def group_layout(a):
        # (N, KK, HW) -> (N, n_groups, n_t*g*T), tap-major inside each pixel tile
        a = jnp.pad(a, ((0, 0), (0, KKp - KK), (0, HWp - HW)))
        a = a.reshape(N, n_groups, g, n_t, T)
        a = jnp.transpose(a, (0, 1, 3, 2, 4))
        return a.reshape(N, n_groups, n_t * g * T)

    py_l = group_layout(py)
    px_l = group_layout(px)
    mr_l = group_layout(m_raw)

    w_t = jnp.transpose(w_dcn, (0, 2, 3, 1)).reshape(C_out, KK, C)       # tap-major, c-minor
    w_t = jnp.pad(w_t, ((0, 0), (0, KKp - KK), (0, Cp - C)))             # zero padded taps/ch
    w_flat = w_t.reshape(C_out, KKp * Cp).astype(jnp.bfloat16)
    b_col = b_dcn.reshape(C_out, 1).astype(jnp.float32)

    kernel = functools.partial(_dcnv2_kernel, g, n_groups, Cp, H)

    def make_specs(single_buffer):
        def resident(block_shape, index_map):
            if single_buffer:
                return pl.BlockSpec(block_shape, index_map, pipeline_mode=pl.Buffered(1))
            return pl.BlockSpec(block_shape, index_map)
        return [
            resident((None, Cp * H, W), lambda n, t: (n, 0, 0)),            # x (per-n resident)
            pl.BlockSpec((None, n_groups, g * T), lambda n, t: (n, 0, t)),  # py
            pl.BlockSpec((None, n_groups, g * T), lambda n, t: (n, 0, t)),  # px
            pl.BlockSpec((None, n_groups, g * T), lambda n, t: (n, 0, t)),  # mask (pre-sigmoid)
            resident((C_out, KKp * Cp), lambda n, t: (0, 0)),               # dcn weight (fused)
            resident((C_out, 1), lambda n, t: (0, 0)),                      # dcn bias
        ]

    def run(single_buffer):
        return pl.pallas_call(
            kernel,
            out_shape=jax.ShapeDtypeStruct((N, C_out, HWp), jnp.float32),
            grid=(N, n_t),
            in_specs=make_specs(single_buffer),
            out_specs=pl.BlockSpec((None, C_out, T), lambda n, t: (n, 0, t)),
            scratch_shapes=[pltpu.VMEM((KKp * Cp, T), jnp.bfloat16)],       # bf16 sampled taps
            compiler_params=pltpu.CompilerParams(
                dimension_semantics=("parallel", "parallel"),
                vmem_limit_bytes=vmem_limit),
        )(x_r, py_l, px_l, mr_l, w_flat, b_col)

    try:
        out = run(single_buffer=True)        # reclaim the 2nd buffer of x / weights / bias
    except Exception:
        out = run(single_buffer=False)       # fallback if Buffered(1) is not supported

    return out[:, :, :HW].reshape(N, C_out, H, W)


def _reference(x, w_off, b_off, w_dcn, b_dcn, K=3, pad=1, dil=1, stride=1):
    """Pure-JAX reference (gather-based bilinear sampling + mask modulation)."""
    N, C, H, W = x.shape
    KK = K * K
    C_out = w_dcn.shape[0]
    om = jax.lax.conv_general_dilated(
        x, w_off, window_strides=(stride, stride),
        padding=((pad, pad), (pad, pad)),
        dimension_numbers=("NCHW", "OIHW", "NCHW"),
    ) + b_off.reshape(1, -1, 1, 1)
    o1, o2, m_raw = om[:, :KK], om[:, KK:2 * KK], om[:, 2 * KK:]
    offset = jnp.concatenate([o1, o2], axis=1)            # (N, 2*KK, H, W)
    mask = jax.nn.sigmoid(m_raw)                          # (N, KK, H, W)

    hh = jnp.arange(H, dtype=jnp.float32).reshape(1, H, 1)
    ww = jnp.arange(W, dtype=jnp.float32).reshape(1, 1, W)
    n_idx = jnp.arange(N)[:, None, None, None]
    c_idx = jnp.arange(C)[None, :, None, None]
    out = jnp.zeros((N, C_out, H, W), jnp.float32)
    for k in range(KK):
        kh, kw = k // K, k % K
        py = hh * stride - pad + kh * dil + offset[:, 2 * k]       # (N,H,W)
        px = ww * stride - pad + kw * dil + offset[:, 2 * k + 1]   # (N,H,W)
        y0 = jnp.floor(py)
        x0 = jnp.floor(px)
        sampled = jnp.zeros((N, C, H, W), jnp.float32)
        for oy in (0.0, 1.0):
            for ox in (0.0, 1.0):
                yy = y0 + oy
                xx = x0 + ox
                wgt = (1.0 - jnp.abs(py - yy)) * (1.0 - jnp.abs(px - xx))
                inb = (yy >= 0) & (yy < H) & (xx >= 0) & (xx < W)
                yc = jnp.clip(yy, 0, H - 1).astype(jnp.int32)
                xc = jnp.clip(xx, 0, W - 1).astype(jnp.int32)
                vals = x[n_idx, c_idx, yc[:, None], xc[:, None]]   # (N,C,H,W)
                sampled = sampled + jnp.where(inb[:, None], wgt[:, None] * vals, 0.0)
        sampled = sampled * mask[:, k][:, None]                    # DCNv2 modulation
        out = out + jnp.einsum("oc,nchw->nohw", w_dcn[:, :, kh, kw], sampled)
    return out + b_dcn.reshape(1, C_out, 1, 1)


if __name__ == "__main__":
    key = jax.random.PRNGKey(0)
    N, C_in, C_out, H, W, K = 2, 4, 8, 16, 16, 3
    k1, k2, k3, k4, k5 = jax.random.split(key, 5)

    x = jax.random.normal(k1, (N, C_in, H, W), dtype=jnp.float32)
    # conv_offset_mask: 3*K*K output channels (o1 | o2 | mask), bias=True
    w_off = 0.05 * jax.random.normal(k2, (3 * K * K, C_in, K, K), dtype=jnp.float32)
    b_off = 0.05 * jax.random.normal(k3, (3 * K * K,), dtype=jnp.float32)
    # dcnv2 weight + bias (bias=True default in the module)
    w_dcn = 0.10 * jax.random.normal(k4, (C_out, C_in, K, K), dtype=jnp.float32)
    b_dcn = 0.05 * jax.random.normal(k5, (C_out,), dtype=jnp.float32)

    out = modulated_deform_conv_with_off_and_mask(x, w_off, b_off, w_dcn, b_dcn)
    out = jax.block_until_ready(out)

    ref = _reference(x, w_off, b_off, w_dcn, b_dcn)
    assert out.shape == (N, C_out, H, W)
    # tolerance accounts for bf16 MXU inputs (f32 accumulation) inside the kernel
    np.testing.assert_allclose(np.asarray(out), np.asarray(ref), rtol=2e-2, atol=2e-2)
    print("KERNEL_OK")
</pallas_src>

<mosaic_0001>
module attributes {stable_mosaic.version = 11 : i64} {
  func.func @_dcnv2_kernel(%arg0: i32, %arg1: i32, %arg2: memref<1x128x16xbf16, #tpu.memory_space<vmem>>, %arg3: memref<1x1x2304xf32, #tpu.memory_space<vmem>>, %arg4: memref<1x1x2304xf32, #tpu.memory_space<vmem>>, %arg5: memref<1x1x2304xf32, #tpu.memory_space<vmem>>, %arg6: memref<8x72xbf16, #tpu.memory_space<vmem>>, %arg7: memref<8x1xf32, #tpu.memory_space<vmem>>, %arg8: memref<1x8x256xf32, #tpu.memory_space<vmem>>, %arg9: memref<72x256xbf16, #tpu.memory_space<vmem>>) attributes {dimension_semantics = [#tpu.dimension_semantics<parallel>, #tpu.dimension_semantics<parallel>], iteration_bounds = array<i64: 2, 1>, scalar_prefetch = 0 : i64, scratch_operands = 1 : i64, tpu.core_type = #tpu.core_type<tc>, window_params = [{pipeline_mode = #tpu.pipeline_mode<synchronous>, transform_indices = @transform_0, window_bounds = array<i64: 1, 128, 16>}, {transform_indices = @transform_1, window_bounds = array<i64: 1, 1, 2304>}, {transform_indices = @transform_2, window_bounds = array<i64: 1, 1, 2304>}, {transform_indices = @transform_3, window_bounds = array<i64: 1, 1, 2304>}, {pipeline_mode = #tpu.pipeline_mode<synchronous>, transform_indices = @transform_4, window_bounds = array<i64: 8, 72>}, {pipeline_mode = #tpu.pipeline_mode<synchronous>, transform_indices = @transform_5, window_bounds = array<i64: 8, 1>}, {transform_indices = @transform_6, window_bounds = array<i64: 1, 8, 256>}]} {
    %c0 = arith.constant 0 : index
    %c0_0 = arith.constant 0 : index
    %c0_1 = arith.constant 0 : index
    %0 = vector.load %arg2[%c0, %c0_0, %c0_1] : memref<1x128x16xbf16, #tpu.memory_space<vmem>>, vector<1x128x16xbf16>
    %1 = vector.shape_cast %0 : vector<1x128x16xbf16> to vector<128x16xbf16>
    %2 = tpu.iota {dimensions = array<i32: 0>} : vector<16x2304xi32>
    %3 = arith.sitofp %2 : vector<16x2304xi32> to vector<16x2304xf32>
    %4 = tpu.iota {dimensions = array<i32: 0>} : vector<16x2304xi32>
    %5 = arith.sitofp %4 : vector<16x2304xi32> to vector<16x2304xf32>
    %c0_2 = arith.constant 0 : index
    %c0_3 = arith.constant 0 : index
    %c0_4 = arith.constant 0 : index
    %6 = vector.load %arg3[%c0_2, %c0_3, %c0_4] : memref<1x1x2304xf32, #tpu.memory_space<vmem>>, vector<1x1x2304xf32>
    %7 = vector.shape_cast %6 : vector<1x1x2304xf32> to vector<1x2304xf32>
    %c0_5 = arith.constant 0 : index
    %c0_6 = arith.constant 0 : index
    %c0_7 = arith.constant 0 : index
    %8 = vector.load %arg4[%c0_5, %c0_6, %c0_7] : memref<1x1x2304xf32, #tpu.memory_space<vmem>>, vector<1x1x2304xf32>
    %9 = vector.shape_cast %8 : vector<1x1x2304xf32> to vector<1x2304xf32>
    %c0_8 = arith.constant 0 : index
    %c0_9 = arith.constant 0 : index
    %c0_10 = arith.constant 0 : index
    %10 = vector.load %arg5[%c0_8, %c0_9, %c0_10] : memref<1x1x2304xf32, #tpu.memory_space<vmem>>, vector<1x1x2304xf32>
    %11 = vector.shape_cast %10 : vector<1x1x2304xf32> to vector<1x2304xf32>
    %cst = arith.constant 0.000000e+00 : f32
    %12 = vector.broadcast %cst : f32 to vector<1x2304xf32>
    %13 = arith.subf %12, %11 : vector<1x2304xf32>
    %14 = math.exp %13 : vector<1x2304xf32>
    %cst_11 = arith.constant 1.000000e+00 : f32
    %15 = vector.broadcast %cst_11 : f32 to vector<1x2304xf32>
    %16 = arith.addf %15, %14 : vector<1x2304xf32>
    %17 = tpu.reciprocal %16 {approx = true} : vector<1x2304xf32> -> vector<1x2304xf32>
    %18 = vector.broadcast %9 : vector<1x2304xf32> to vector<16x2304xf32>
    %19 = arith.subf %5, %18 : vector<16x2304xf32>
    %20 = math.absf %19 : vector<16x2304xf32>
    %cst_12 = arith.constant 1.000000e+00 : f32
    %21 = vector.broadcast %cst_12 : f32 to vector<16x2304xf32>
    %22 = arith.subf %21, %20 : vector<16x2304xf32>
    %cst_13 = arith.constant 0.000000e+00 : f32
    %23 = vector.broadcast %cst_13 : f32 to vector<16x2304xf32>
    %24 = arith.maximumf %22, %23 : vector<16x2304xf32>
    %25 = vector.broadcast %7 : vector<1x2304xf32> to vector<16x2304xf32>
    %26 = arith.subf %3, %25 : vector<16x2304xf32>
    %27 = math.absf %26 : vector<16x2304xf32>
    %cst_14 = arith.constant 1.000000e+00 : f32
    %28 = vector.broadcast %cst_14 : f32 to vector<16x2304xf32>
    %29 = arith.subf %28, %27 : vector<16x2304xf32>
    %cst_15 = arith.constant 0.000000e+00 : f32
    %30 = vector.broadcast %cst_15 : f32 to vector<16x2304xf32>
    %31 = arith.maximumf %29, %30 : vector<16x2304xf32>
    %32 = vector.broadcast %17 : vector<1x2304xf32> to vector<16x2304xf32>
    %33 = arith.mulf %31, %32 : vector<16x2304xf32>
    %34 = arith.truncf %24 : vector<16x2304xf32> to vector<16x2304xbf16>
    %cst_16 = arith.constant dense<0.000000e+00> : vector<128x2304xf32>
    %35 = tpu.matmul %1, %34, %cst_16 {dimension_numbers = #tpu.dot_dimension_numbers<[1], [0], [0], [1], [0, 0, 1, 1], [], []>} : vector<128x16xbf16>, vector<16x2304xbf16>, vector<128x2304xf32> -> vector<128x2304xf32>
    %36 = vector.shape_cast %35 : vector<128x2304xf32> to vector<8x16x2304xf32>
    %37 = vector.shape_cast %33 : vector<16x2304xf32> to vector<1x16x2304xf32>
    %38 = vector.broadcast %37 : vector<1x16x2304xf32> to vector<8x16x2304xf32>
    %39 = arith.mulf %36, %38 : vector<8x16x2304xf32>
    %cst_17 = arith.constant dense<0.000000e+00> : vector<8x2304xf32>
    %40 = vector.multi_reduction <add>, %39, %cst_17 [1] : vector<8x16x2304xf32> to vector<8x2304xf32>
    %41 = arith.truncf %40 : vector<8x2304xf32> to vector<8x2304xbf16>
    %42 = vector.extract_strided_slice %41 {offsets = [0, 0], sizes = [8, 256], strides = [1, 1]} : vector<8x2304xbf16> to vector<8x256xbf16>
    %c0_18 = arith.constant 0 : index
    %c0_19 = arith.constant 0 : index
    %43 = vector.load %arg9[%c0_18, %c0_19] : memref<72x256xbf16, #tpu.memory_space<vmem>>, vector<8x256xbf16>
    tpu.vector_store %arg9[%c0_18, %c0_19], %42 {strides = array<i32>} : memref<72x256xbf16, #tpu.memory_space<vmem>>, vector<8x256xbf16>,
    %44 = vector.extract_strided_slice %41 {offsets = [0, 256], sizes = [8, 256], strides = [1, 1]} : vector<8x2304xbf16> to vector<8x256xbf16>
    %c8 = arith.constant 8 : index
    %c0_20 = arith.constant 0 : index
    %45 = vector.load %arg9[%c8, %c0_20] : memref<72x256xbf16, #tpu.memory_space<vmem>>, vector<8x256xbf16>
    tpu.vector_store %arg9[%c8, %c0_20], %44 {strides = array<i32>} : memref<72x256xbf16, #tpu.memory_space<vmem>>, vector<8x256xbf16>,
    %46 = vector.extract_strided_slice %41 {offsets = [0, 512], sizes = [8, 256], strides = [1, 1]} : vector<8x2304xbf16> to vector<8x256xbf16>
    %c16 = arith.constant 16 : index
    %c0_21 = arith.constant 0 : index
    %47 = vector.load %arg9[%c16, %c0_21] : memref<72x256xbf16, #tpu.memory_space<vmem>>, vector<8x256xbf16>
    tpu.vector_store %arg9[%c16, %c0_21], %46 {strides = array<i32>} : memref<72x256xbf16, #tpu.memory_space<vmem>>, vector<8x256xbf16>,
    %48 = vector.extract_strided_slice %41 {offsets = [0, 768], sizes = [8, 256], strides = [1, 1]} : vector<8x2304xbf16> to vector<8x256xbf16>
    %c24 = arith.constant 24 : index
    %c0_22 = arith.constant 0 : index
    %49 = vector.load %arg9[%c24, %c0_22] : memref<72x256xbf16, #tpu.memory_space<vmem>>, vector<8x256xbf16>
    tpu.vector_store %arg9[%c24, %c0_22], %48 {strides = array<i32>} : memref<72x256xbf16, #tpu.memory_space<vmem>>, vector<8x256xbf16>,
    %50 = vector.extract_strided_slice %41 {offsets = [0, 1024], sizes = [8, 256], strides = [1, 1]} : vector<8x2304xbf16> to vector<8x256xbf16>
    %c32 = arith.constant 32 : index
    %c0_23 = arith.constant 0 : index
    %51 = vector.load %arg9[%c32, %c0_23] : memref<72x256xbf16, #tpu.memory_space<vmem>>, vector<8x256xbf16>
    tpu.vector_store %arg9[%c32, %c0_23], %50 {strides = array<i32>} : memref<72x256xbf16, #tpu.memory_space<vmem>>, vector<8x256xbf16>,
    %52 = vector.extract_strided_slice %41 {offsets = [0, 1280], sizes = [8, 256], strides = [1, 1]} : vector<8x2304xbf16> to vector<8x256xbf16>
    %c40 = arith.constant 40 : index
    %c0_24 = arith.constant 0 : index
    %53 = vector.load %arg9[%c40, %c0_24] : memref<72x256xbf16, #tpu.memory_space<vmem>>, vector<8x256xbf16>
    tpu.vector_store %arg9[%c40, %c0_24], %52 {strides = array<i32>} : memref<72x256xbf16, #tpu.memory_space<vmem>>, vector<8x256xbf16>,
    %54 = vector.extract_strided_slice %41 {offsets = [0, 1536], sizes = [8, 256], strides = [1, 1]} : vector<8x2304xbf16> to vector<8x256xbf16>
    %c48 = arith.constant 48 : index
    %c0_25 = arith.constant 0 : index
    %55 = vector.load %arg9[%c48, %c0_25] : memref<72x256xbf16, #tpu.memory_space<vmem>>, vector<8x256xbf16>
    tpu.vector_store %arg9[%c48, %c0_25], %54 {strides = array<i32>} : memref<72x256xbf16, #tpu.memory_space<vmem>>, vector<8x256xbf16>,
    %56 = vector.extract_strided_slice %41 {offsets = [0, 1792], sizes = [8, 256], strides = [1, 1]} : vector<8x2304xbf16> to vector<8x256xbf16>
    %c56 = arith.constant 56 : index
    %c0_26 = arith.constant 0 : index
    %57 = vector.load %arg9[%c56, %c0_26] : memref<72x256xbf16, #tpu.memory_space<vmem>>, vector<8x256xbf16>
    tpu.vector_store %arg9[%c56, %c0_26], %56 {strides = array<i32>} : memref<72x256xbf16, #tpu.memory_space<vmem>>, vector<8x256xbf16>,
    %58 = vector.extract_strided_slice %41 {offsets = [0, 2048], sizes = [8, 256], strides = [1, 1]} : vector<8x2304xbf16> to vector<8x256xbf16>
    %c64 = arith.constant 64 : index
    %c0_27 = arith.constant 0 : index
    %59 = vector.load %arg9[%c64, %c0_27] : memref<72x256xbf16, #tpu.memory_space<vmem>>, vector<8x256xbf16>
    tpu.vector_store %arg9[%c64, %c0_27], %58 {strides = array<i32>} : memref<72x256xbf16, #tpu.memory_space<vmem>>, vector<8x256xbf16>,
    %c0_28 = arith.constant 0 : index
    %c0_29 = arith.constant 0 : index
    %60 = vector.load %arg6[%c0_28, %c0_29] : memref<8x72xbf16, #tpu.memory_space<vmem>>, vector<8x72xbf16>
    %c0_30 = arith.constant 0 : index
    %c0_31 = arith.constant 0 : index
    %61 = vector.load %arg9[%c0_30, %c0_31] : memref<72x256xbf16, #tpu.memory_space<vmem>>, vector<72x256xbf16>
    %cst_32 = arith.constant dense<0.000000e+00> : vector<8x256xf32>
    %62 = tpu.matmul %60, %61, %cst_32 {dimension_numbers = #tpu.dot_dimension_numbers<[1], [0], [0], [1], [0, 0, 1, 1], [], []>} : vector<8x72xbf16>, vector<72x256xbf16>, vector<8x256xf32> -> vector<8x256xf32>
    %c0_33 = arith.constant 0 : index
    %c0_34 = arith.constant 0 : index
    %63 = vector.load %arg7[%c0_33, %c0_34] : memref<8x1xf32, #tpu.memory_space<vmem>>, vector<8x1xf32>
    %64 = vector.broadcast %63 : vector<8x1xf32> to vector<8x256xf32>
    %65 = arith.addf %62, %64 : vector<8x256xf32>
    %c0_35 = arith.constant 0 : index
    %c0_36 = arith.constant 0 : index
    %c0_37 = arith.constant 0 : index
    %66 = vector.load %arg8[%c0_35, %c0_36, %c0_37] : memref<1x8x256xf32, #tpu.memory_space<vmem>>, vector<1x8x256xf32>
    %67 = vector.shape_cast %66 : vector<1x8x256xf32> to vector<8x256xf32>
    %68 = vector.shape_cast %65 : vector<8x256xf32> to vector<1x8x256xf32>
    tpu.vector_store %arg8[%c0_35, %c0_36, %c0_37], %68 {strides = array<i32>} : memref<1x8x256xf32, #tpu.memory_space<vmem>>, vector<1x8x256xf32>,
    return
  }
  func.func @transform_0(%arg0: i32, %arg1: i32) -> (i32, i32, i32) {
    %c0_i32 = arith.constant 0 : i32
    %c0_i32_0 = arith.constant 0 : i32
    %c0_i32_1 = arith.constant 0 : i32
    return %arg0, %c0_i32, %c0_i32_0 : i32, i32, i32
  }
  func.func @transform_1(%arg0: i32, %arg1: i32) -> (i32, i32, i32) {
    %c0_i32 = arith.constant 0 : i32
    %c0_i32_0 = arith.constant 0 : i32
    return %arg0, %c0_i32, %arg1 : i32, i32, i32
  }
  func.func @transform_2(%arg0: i32, %arg1: i32) -> (i32, i32, i32) {
    %c0_i32 = arith.constant 0 : i32
    %c0_i32_0 = arith.constant 0 : i32
    return %arg0, %c0_i32, %arg1 : i32, i32, i32
  }
  func.func @transform_3(%arg0: i32, %arg1: i32) -> (i32, i32, i32) {
    %c0_i32 = arith.constant 0 : i32
    %c0_i32_0 = arith.constant 0 : i32
    return %arg0, %c0_i32, %arg1 : i32, i32, i32
  }
  func.func @transform_4(%arg0: i32, %arg1: i32) -> (i32, i32) {
    %c0_i32 = arith.constant 0 : i32
    %c0_i32_0 = arith.constant 0 : i32
    %c0_i32_1 = arith.constant 0 : i32
    return %c0_i32, %c0_i32_0 : i32, i32
  }
  func.func @transform_5(%arg0: i32, %arg1: i32) -> (i32, i32) {
    %c0_i32 = arith.constant 0 : i32
    %c0_i32_0 = arith.constant 0 : i32
    %c0_i32_1 = arith.constant 0 : i32
    return %c0_i32, %c0_i32_0 : i32, i32
  }
  func.func @transform_6(%arg0: i32, %arg1: i32) -> (i32, i32, i32) {
    %c0_i32 = arith.constant 0 : i32
    %c0_i32_0 = arith.constant 0 : i32
    return %arg0, %c0_i32, %arg1 : i32, i32, i32
  }
}

module attributes {stable_mosaic.version = 11 : i64} {
  func.func @_dcnv2_kernel(%arg0: i32, %arg1: i32, %arg2: memref<1x128x16xbf16, #tpu.memory_space<vmem>>, %arg3: memref<1x1x2304xf32, #tpu.memory_space<vmem>>, %arg4: memref<1x1x2304xf32, #tpu.memory_space<vmem>>, %arg5: memref<1x1x2304xf32, #tpu.memory_space<vmem>>, %arg6: memref<8x72xbf16, #tpu.memory_space<vmem>>, %arg7: memref<8x1xf32, #tpu.memory_space<vmem>>, %arg8: memref<1x8x256xf32, #tpu.memory_space<vmem>>, %arg9: memref<72x256xbf16, #tpu.memory_space<vmem>>) attributes {dimension_semantics = [#tpu.dimension_semantics<parallel>, #tpu.dimension_semantics<parallel>], iteration_bounds = array<i64: 2, 1>, scalar_prefetch = 0 : i64, scratch_operands = 1 : i64, tpu.core_type = #tpu.core_type<tc>, window_params = [{transform_indices = @transform_0, window_bounds = array<i64: 1, 128, 16>}, {transform_indices = @transform_1, window_bounds = array<i64: 1, 1, 2304>}, {transform_indices = @transform_2, window_bounds = array<i64: 1, 1, 2304>}, {transform_indices = @transform_3, window_bounds = array<i64: 1, 1, 2304>}, {pipeline_mode = #tpu.pipeline_mode<synchronous>, transform_indices = @transform_4, window_bounds = array<i64: 8, 72>}, {pipeline_mode = #tpu.pipeline_mode<synchronous>, transform_indices = @transform_5, window_bounds = array<i64: 8, 1>}, {transform_indices = @transform_6, window_bounds = array<i64: 1, 8, 256>}]} {
    %c0 = arith.constant 0 : index
    %c0_0 = arith.constant 0 : index
    %c0_1 = arith.constant 0 : index
    %0 = vector.load %arg2[%c0, %c0_0, %c0_1] : memref<1x128x16xbf16, #tpu.memory_space<vmem>>, vector<1x128x16xbf16>
    %1 = vector.shape_cast %0 : vector<1x128x16xbf16> to vector<128x16xbf16>
    %2 = tpu.iota {dimensions = array<i32: 0>} : vector<16x2304xi32>
    %3 = arith.sitofp %2 : vector<16x2304xi32> to vector<16x2304xf32>
    %4 = tpu.iota {dimensions = array<i32: 0>} : vector<16x2304xi32>
    %5 = arith.sitofp %4 : vector<16x2304xi32> to vector<16x2304xf32>
    %c0_2 = arith.constant 0 : index
    %c0_3 = arith.constant 0 : index
    %c0_4 = arith.constant 0 : index
    %6 = vector.load %arg3[%c0_2, %c0_3, %c0_4] : memref<1x1x2304xf32, #tpu.memory_space<vmem>>, vector<1x1x2304xf32>
    %7 = vector.shape_cast %6 : vector<1x1x2304xf32> to vector<1x2304xf32>
    %c0_5 = arith.constant 0 : index
    %c0_6 = arith.constant 0 : index
    %c0_7 = arith.constant 0 : index
    %8 = vector.load %arg4[%c0_5, %c0_6, %c0_7] : memref<1x1x2304xf32, #tpu.memory_space<vmem>>, vector<1x1x2304xf32>
    %9 = vector.shape_cast %8 : vector<1x1x2304xf32> to vector<1x2304xf32>
    %c0_8 = arith.constant 0 : index
    %c0_9 = arith.constant 0 : index
    %c0_10 = arith.constant 0 : index
    %10 = vector.load %arg5[%c0_8, %c0_9, %c0_10] : memref<1x1x2304xf32, #tpu.memory_space<vmem>>, vector<1x1x2304xf32>
    %11 = vector.shape_cast %10 : vector<1x1x2304xf32> to vector<1x2304xf32>
    %cst = arith.constant 0.000000e+00 : f32
    %12 = vector.broadcast %cst : f32 to vector<1x2304xf32>
    %13 = arith.subf %12, %11 : vector<1x2304xf32>
    %14 = math.exp %13 : vector<1x2304xf32>
    %cst_11 = arith.constant 1.000000e+00 : f32
    %15 = vector.broadcast %cst_11 : f32 to vector<1x2304xf32>
    %16 = arith.addf %15, %14 : vector<1x2304xf32>
    %17 = tpu.reciprocal %16 {approx = true} : vector<1x2304xf32> -> vector<1x2304xf32>
    %18 = vector.broadcast %9 : vector<1x2304xf32> to vector<16x2304xf32>
    %19 = arith.subf %5, %18 : vector<16x2304xf32>
    %20 = math.absf %19 : vector<16x2304xf32>
    %cst_12 = arith.constant 1.000000e+00 : f32
    %21 = vector.broadcast %cst_12 : f32 to vector<16x2304xf32>
    %22 = arith.subf %21, %20 : vector<16x2304xf32>
    %cst_13 = arith.constant 0.000000e+00 : f32
    %23 = vector.broadcast %cst_13 : f32 to vector<16x2304xf32>
    %24 = arith.maximumf %22, %23 : vector<16x2304xf32>
    %25 = vector.broadcast %7 : vector<1x2304xf32> to vector<16x2304xf32>
    %26 = arith.subf %3, %25 : vector<16x2304xf32>
    %27 = math.absf %26 : vector<16x2304xf32>
    %cst_14 = arith.constant 1.000000e+00 : f32
    %28 = vector.broadcast %cst_14 : f32 to vector<16x2304xf32>
    %29 = arith.subf %28, %27 : vector<16x2304xf32>
    %cst_15 = arith.constant 0.000000e+00 : f32
    %30 = vector.broadcast %cst_15 : f32 to vector<16x2304xf32>
    %31 = arith.maximumf %29, %30 : vector<16x2304xf32>
    %32 = vector.broadcast %17 : vector<1x2304xf32> to vector<16x2304xf32>
    %33 = arith.mulf %31, %32 : vector<16x2304xf32>
    %34 = arith.truncf %24 : vector<16x2304xf32> to vector<16x2304xbf16>
    %cst_16 = arith.constant dense<0.000000e+00> : vector<128x2304xf32>
    %35 = tpu.matmul %1, %34, %cst_16 {dimension_numbers = #tpu.dot_dimension_numbers<[1], [0], [0], [1], [0, 0, 1, 1], [], []>} : vector<128x16xbf16>, vector<16x2304xbf16>, vector<128x2304xf32> -> vector<128x2304xf32>
    %36 = vector.shape_cast %35 : vector<128x2304xf32> to vector<8x16x2304xf32>
    %37 = vector.shape_cast %33 : vector<16x2304xf32> to vector<1x16x2304xf32>
    %38 = vector.broadcast %37 : vector<1x16x2304xf32> to vector<8x16x2304xf32>
    %39 = arith.mulf %36, %38 : vector<8x16x2304xf32>
    %cst_17 = arith.constant dense<0.000000e+00> : vector<8x2304xf32>
    %40 = vector.multi_reduction <add>, %39, %cst_17 [1] : vector<8x16x2304xf32> to vector<8x2304xf32>
    %41 = arith.truncf %40 : vector<8x2304xf32> to vector<8x2304xbf16>
    %42 = vector.extract_strided_slice %41 {offsets = [0, 0], sizes = [8, 256], strides = [1, 1]} : vector<8x2304xbf16> to vector<8x256xbf16>
    %c0_18 = arith.constant 0 : index
    %c0_19 = arith.constant 0 : index
    %43 = vector.load %arg9[%c0_18, %c0_19] : memref<72x256xbf16, #tpu.memory_space<vmem>>, vector<8x256xbf16>
    tpu.vector_store %arg9[%c0_18, %c0_19], %42 {strides = array<i32>} : memref<72x256xbf16, #tpu.memory_space<vmem>>, vector<8x256xbf16>,
    %44 = vector.extract_strided_slice %41 {offsets = [0, 256], sizes = [8, 256], strides = [1, 1]} : vector<8x2304xbf16> to vector<8x256xbf16>
    %c8 = arith.constant 8 : index
    %c0_20 = arith.constant 0 : index
    %45 = vector.load %arg9[%c8, %c0_20] : memref<72x256xbf16, #tpu.memory_space<vmem>>, vector<8x256xbf16>
    tpu.vector_store %arg9[%c8, %c0_20], %44 {strides = array<i32>} : memref<72x256xbf16, #tpu.memory_space<vmem>>, vector<8x256xbf16>,
    %46 = vector.extract_strided_slice %41 {offsets = [0, 512], sizes = [8, 256], strides = [1, 1]} : vector<8x2304xbf16> to vector<8x256xbf16>
    %c16 = arith.constant 16 : index
    %c0_21 = arith.constant 0 : index
    %47 = vector.load %arg9[%c16, %c0_21] : memref<72x256xbf16, #tpu.memory_space<vmem>>, vector<8x256xbf16>
    tpu.vector_store %arg9[%c16, %c0_21], %46 {strides = array<i32>} : memref<72x256xbf16, #tpu.memory_space<vmem>>, vector<8x256xbf16>,
    %48 = vector.extract_strided_slice %41 {offsets = [0, 768], sizes = [8, 256], strides = [1, 1]} : vector<8x2304xbf16> to vector<8x256xbf16>
    %c24 = arith.constant 24 : index
    %c0_22 = arith.constant 0 : index
    %49 = vector.load %arg9[%c24, %c0_22] : memref<72x256xbf16, #tpu.memory_space<vmem>>, vector<8x256xbf16>
    tpu.vector_store %arg9[%c24, %c0_22], %48 {strides = array<i32>} : memref<72x256xbf16, #tpu.memory_space<vmem>>, vector<8x256xbf16>,
    %50 = vector.extract_strided_slice %41 {offsets = [0, 1024], sizes = [8, 256], strides = [1, 1]} : vector<8x2304xbf16> to vector<8x256xbf16>
    %c32 = arith.constant 32 : index
    %c0_23 = arith.constant 0 : index
    %51 = vector.load %arg9[%c32, %c0_23] : memref<72x256xbf16, #tpu.memory_space<vmem>>, vector<8x256xbf16>
    tpu.vector_store %arg9[%c32, %c0_23], %50 {strides = array<i32>} : memref<72x256xbf16, #tpu.memory_space<vmem>>, vector<8x256xbf16>,
    %52 = vector.extract_strided_slice %41 {offsets = [0, 1280], sizes = [8, 256], strides = [1, 1]} : vector<8x2304xbf16> to vector<8x256xbf16>
    %c40 = arith.constant 40 : index
    %c0_24 = arith.constant 0 : index
    %53 = vector.load %arg9[%c40, %c0_24] : memref<72x256xbf16, #tpu.memory_space<vmem>>, vector<8x256xbf16>
    tpu.vector_store %arg9[%c40, %c0_24], %52 {strides = array<i32>} : memref<72x256xbf16, #tpu.memory_space<vmem>>, vector<8x256xbf16>,
    %54 = vector.extract_strided_slice %41 {offsets = [0, 1536], sizes = [8, 256], strides = [1, 1]} : vector<8x2304xbf16> to vector<8x256xbf16>
    %c48 = arith.constant 48 : index
    %c0_25 = arith.constant 0 : index
    %55 = vector.load %arg9[%c48, %c0_25] : memref<72x256xbf16, #tpu.memory_space<vmem>>, vector<8x256xbf16>
    tpu.vector_store %arg9[%c48, %c0_25], %54 {strides = array<i32>} : memref<72x256xbf16, #tpu.memory_space<vmem>>, vector<8x256xbf16>,
    %56 = vector.extract_strided_slice %41 {offsets = [0, 1792], sizes = [8, 256], strides = [1, 1]} : vector<8x2304xbf16> to vector<8x256xbf16>
    %c56 = arith.constant 56 : index
    %c0_26 = arith.constant 0 : index
    %57 = vector.load %arg9[%c56, %c0_26] : memref<72x256xbf16, #tpu.memory_space<vmem>>, vector<8x256xbf16>
    tpu.vector_store %arg9[%c56, %c0_26], %56 {strides = array<i32>} : memref<72x256xbf16, #tpu.memory_space<vmem>>, vector<8x256xbf16>,
    %58 = vector.extract_strided_slice %41 {offsets = [0, 2048], sizes = [8, 256], strides = [1, 1]} : vector<8x2304xbf16> to vector<8x256xbf16>
    %c64 = arith.constant 64 : index
    %c0_27 = arith.constant 0 : index
    %59 = vector.load %arg9[%c64, %c0_27] : memref<72x256xbf16, #tpu.memory_space<vmem>>, vector<8x256xbf16>
    tpu.vector_store %arg9[%c64, %c0_27], %58 {strides = array<i32>} : memref<72x256xbf16, #tpu.memory_space<vmem>>, vector<8x256xbf16>,
    %c0_28 = arith.constant 0 : index
    %c0_29 = arith.constant 0 : index
    %60 = vector.load %arg6[%c0_28, %c0_29] : memref<8x72xbf16, #tpu.memory_space<vmem>>, vector<8x72xbf16>
    %c0_30 = arith.constant 0 : index
    %c0_31 = arith.constant 0 : index
    %61 = vector.load %arg9[%c0_30, %c0_31] : memref<72x256xbf16, #tpu.memory_space<vmem>>, vector<72x256xbf16>
    %cst_32 = arith.constant dense<0.000000e+00> : vector<8x256xf32>
    %62 = tpu.matmul %60, %61, %cst_32 {dimension_numbers = #tpu.dot_dimension_numbers<[1], [0], [0], [1], [0, 0, 1, 1], [], []>} : vector<8x72xbf16>, vector<72x256xbf16>, vector<8x256xf32> -> vector<8x256xf32>
    %c0_33 = arith.constant 0 : index
    %c0_34 = arith.constant 0 : index
    %63 = vector.load %arg7[%c0_33, %c0_34] : memref<8x1xf32, #tpu.memory_space<vmem>>, vector<8x1xf32>
    %64 = vector.broadcast %63 : vector<8x1xf32> to vector<8x256xf32>
    %65 = arith.addf %62, %64 : vector<8x256xf32>
    %c0_35 = arith.constant 0 : index
    %c0_36 = arith.constant 0 : index
    %c0_37 = arith.constant 0 : index
    %66 = vector.load %arg8[%c0_35, %c0_36, %c0_37] : memref<1x8x256xf32, #tpu.memory_space<vmem>>, vector<1x8x256xf32>
    %67 = vector.shape_cast %66 : vector<1x8x256xf32> to vector<8x256xf32>
    %68 = vector.shape_cast %65 : vector<8x256xf32> to vector<1x8x256xf32>
    tpu.vector_store %arg8[%c0_35, %c0_36, %c0_37], %68 {strides = array<i32>} : memref<1x8x256xf32, #tpu.memory_space<vmem>>, vector<1x8x256xf32>,
    return
  }
  func.func @transform_0(%arg0: i32, %arg1: i32) -> (i32, i32, i32) {
    %c0_i32 = arith.constant 0 : i32
    %c0_i32_0 = arith.constant 0 : i32
    %c0_i32_1 = arith.constant 0 : i32
    return %arg0, %c0_i32, %c0_i32_0 : i32, i32, i32
  }
  func.func @transform_1(%arg0: i32, %arg1: i32) -> (i32, i32, i32) {
    %c0_i32 = arith.constant 0 : i32
    %c0_i32_0 = arith.constant 0 : i32
    return %arg0, %c0_i32, %arg1 : i32, i32, i32
  }
  func.func @transform_2(%arg0: i32, %arg1: i32) -> (i32, i32, i32) {
    %c0_i32 = arith.constant 0 : i32
    %c0_i32_0 = arith.constant 0 : i32
    return %arg0, %c0_i32, %arg1 : i32, i32, i32
  }
  func.func @transform_3(%arg0: i32, %arg1: i32) -> (i32, i32, i32) {
    %c0_i32 = arith.constant 0 : i32
    %c0_i32_0 = arith.constant 0 : i32
    return %arg0, %c0_i32, %arg1 : i32, i32, i32
  }
  func.func @transform_4(%arg0: i32, %arg1: i32) -> (i32, i32) {
    %c0_i32 = arith.constant 0 : i32
    %c0_i32_0 = arith.constant 0 : i32
    %c0_i32_1 = arith.constant 0 : i32
    return %c0_i32, %c0_i32_0 : i32, i32
  }
  func.func @transform_5(%arg0: i32, %arg1: i32) -> (i32, i32) {
    %c0_i32 = arith.constant 0 : i32
    %c0_i32_0 = arith.constant 0 : i32
    %c0_i32_1 = arith.constant 0 : i32
    return %c0_i32, %c0_i32_0 : i32, i32
  }
  func.func @transform_6(%arg0: i32, %arg1: i32) -> (i32, i32, i32) {
    %c0_i32 = arith.constant 0 : i32
    %c0_i32_0 = arith.constant 0 : i32
    return %arg0, %c0_i32, %arg1 : i32, i32, i32
  }
}

</mosaic_0001>

<llo_original>
// kernel: tpu_custom_call.1
$region0: #{tpu_custom_call.1}
  #allocation0 [shape = 'u32[]', space=smem, size = 0x4, offset = 0x4, fixed_abs, tag = 'smem constant byte address 0x4 - core index']
  #allocation1 [shape = 'u32[144,128]{1,0:T(1,128)}', space=vmem, size = 0x12000, scoped, tag = 'internal scratch']
  #allocation2 [shape = 'bf16[72,256]{1,0:T(8,128)(2,1)}', space=vmem, size = 0x9000, scoped, tag = 'scratch operand']
  %s0 = inlined_call_operand.vmem [shape: bf16[2,128,16], index: 0, kind: input, shape index: {}]
  %s1 = inlined_call_operand.vmem [shape: f32[2,1,2304], index: 1, kind: input, shape index: {}]
  %s2 = inlined_call_operand.vmem [shape: f32[2,1,2304], index: 2, kind: input, shape index: {}]
  %s3 = inlined_call_operand.vmem [shape: f32[2,1,2304], index: 3, kind: input, shape index: {}]
  %s4 = inlined_call_operand.vmem [shape: bf16[8,72], index: 4, kind: input, shape index: {}]
  %s5 = inlined_call_operand.vmem [shape: f32[8,1], index: 5, kind: input, shape index: {}]
  %s6 = inlined_call_operand.hbm [shape: f32[2,8,256], index: 6, kind: output, shape index: {}]
  %s7 = sld [smem:[#allocation0]]
  $region57: #{tpu_custom_call.1} parent=0
    _
  %s9 = ssub.s32 1, %s7
  %s10 = scalar_select 0, %s9, %s7
  $region1: #{tpu_custom_call.1} parent=0
    #allocation3 [shape = 'u8[16384]{0}', space=vmem, size = 0x4000, scoped, tag = 'output window, operand 0']
    #allocation4 [shape = 's32[2]{0}', space=sflag, size = 0x8, scoped, tag = 'scoped memory for tpu_custom_call.1']
    %11 = vsyncpa [#allocation4], 0
    %s12 = scalar_lea.sflag [#allocation4], 1
    %13 = vsyncpa %s12, 0
    loop: start=0, step=1, limit=4
    $region2: #{tpu_custom_call.1} parent=1 // loop_pre_header
      _
    $region3: #{tpu_custom_call.1} parent=1 // loop_header
      %s15 = sphi 0, %s19
      %p16 = scmp.ge.s32.totalorder %s15, 4
      %s22 = sphi 0, %s34
      %s23 = sphi 0, %s30
      %s24 = sphi 0, %s22
      %s25 = sphi 0, %s23
      %s26 = sphi 0, %s24
      %s27 = sphi 0, %s25
      %s37 = sphi 0, %s39
      %s40 = sphi 0, %s37
      %s41 = sphi 0, %s40
      %s57 = sphi 0, %s41
      %s65 = sphi 0, %s67
      %s68 = sphi 0, %s65
      %s69 = sphi 0, %s68
      %s85 = sphi 0, %s69
      %s93 = sphi 0, %s95
      %s96 = sphi 0, %s93
      %s97 = sphi 0, %s96
      %s113 = sphi 0, %s97
      %s121 = sphi 0, %s123
      %s124 = sphi 0, %s121
      %s125 = sphi 0, %s124
      %s141 = sphi 0, %s125
      %s145 = sphi 0, %s145
      %s147 = sphi 0, %s145
      %s148 = sphi 0, %s147
      %s162 = sphi 0, %s148
      %s166 = sphi 0, %s166
      %s168 = sphi 0, %s166
      %s169 = sphi 0, %s168
      %s183 = sphi 0, %s169
      %s191 = sphi 0, %s193
      %s194 = sphi 0, %s191
      %s195 = sphi 0, %s194
      %s211 = sphi 0, %s195
    $region4: #{tpu_custom_call.1} parent=1 // loop_header_branch
      %18 = sbr.rel (%p16) target = $region8
    $region5: #{tpu_custom_call.1} parent=1 // loop_body
      %s20 = ssub.s32 %s15, 1
      %s21 = ssub.s32 %s15, 2
      %s28 = sadd.s32 1, %s23
      %p29 = scmp.ge.s32.totalorder %s28, 1
      %s30 = scalar_select %p29, 0, %s28
      %s31 = sadd.s32 1, %s22
      %s32 = scalar_select %p29, %s31, %s22
      %p33 = scmp.ge.s32.totalorder %s32, 2
      %s34 = scalar_select %p33, 0, %s32
      %s35 = ssub.s32 %s22, %s34
      %p36 = scmp.eq.s32.totalorder %s35, 0
      %s38 = sadd.s32 %s37, 1
      %s39 = scalar_select %p36, %s37, %s38
      %p42 = pneg %p36
      %p43 = scmp.eq.s32.totalorder %s15, 1
      %p44 = por %p42, %p43
      %p45 = scmp.ne.s32.totalorder %s37, %s40
      %p46 = scmp.eq.s32.totalorder %s15, 0
      %p47 = por %p45, %p46
      %p48 = scmp.ne.s32.totalorder %s37, %s40
      %p49 = scmp.eq.s32.totalorder %s20, 1
      %p50 = por %p48, %p49
      %p51 = scmp.ne.s32.totalorder %s40, %s41
      %p52 = scmp.eq.s32.totalorder %s20, 0
      %p53 = por %p51, %p52
      %p54 = scmp.ne.s32.totalorder %s40, %s41
      %p55 = scmp.eq.s32.totalorder %s21, 1
      %p56 = por %p54, %p55
      %p58 = scmp.ne.s32.totalorder %s41, %s57
      %p59 = scmp.eq.s32.totalorder %s21, 0
      %p60 = por %p58, %p59
      %s61 = ssub.s32 %s22, %s34
      %s62 = ssub.s32 %s23, %s30
      %s63 = sor.u32 %s61, %s62
      %p64 = scmp.eq.s32.totalorder %s63, 0
      %s66 = sadd.s32 %s65, 1
      %s67 = scalar_select %p64, %s65, %s66
      %p70 = pneg %p64
      %p71 = scmp.eq.s32.totalorder %s15, 1
      %p72 = por %p70, %p71
      %p73 = scmp.ne.s32.totalorder %s65, %s68
      %p74 = scmp.eq.s32.totalorder %s15, 0
      %p75 = por %p73, %p74
      %p76 = scmp.ne.s32.totalorder %s65, %s68
      %p77 = scmp.eq.s32.totalorder %s20, 1
      %p78 = por %p76, %p77
      %p79 = scmp.ne.s32.totalorder %s68, %s69
      %p80 = scmp.eq.s32.totalorder %s20, 0
      %p81 = por %p79, %p80
      %p82 = scmp.ne.s32.totalorder %s68, %s69
      %p83 = scmp.eq.s32.totalorder %s21, 1
      %p84 = por %p82, %p83
      %p86 = scmp.ne.s32.totalorder %s69, %s85
      %p87 = scmp.eq.s32.totalorder %s21, 0
      %p88 = por %p86, %p87
      %s89 = ssub.s32 %s22, %s34
      %s90 = ssub.s32 %s23, %s30
      %s91 = sor.u32 %s89, %s90
      %p92 = scmp.eq.s32.totalorder %s91, 0
      %s94 = sadd.s32 %s93, 1
      %s95 = scalar_select %p92, %s93, %s94
      %p98 = pneg %p92
      %p99 = scmp.eq.s32.totalorder %s15, 1
      %p100 = por %p98, %p99
      %p101 = scmp.ne.s32.totalorder %s93, %s96
      %p102 = scmp.eq.s32.totalorder %s15, 0
      %p103 = por %p101, %p102
      %p104 = scmp.ne.s32.totalorder %s93, %s96
      %p105 = scmp.eq.s32.totalorder %s20, 1
      %p106 = por %p104, %p105
      %p107 = scmp.ne.s32.totalorder %s96, %s97
      %p108 = scmp.eq.s32.totalorder %s20, 0
      %p109 = por %p107, %p108
      %p110 = scmp.ne.s32.totalorder %s96, %s97
      %p111 = scmp.eq.s32.totalorder %s21, 1
      %p112 = por %p110, %p111
      %p114 = scmp.ne.s32.totalorder %s97, %s113
      %p115 = scmp.eq.s32.totalorder %s21, 0
      %p116 = por %p114, %p115
      %s117 = ssub.s32 %s22, %s34
      %s118 = ssub.s32 %s23, %s30
      %s119 = sor.u32 %s117, %s118
      %p120 = scmp.eq.s32.totalorder %s119, 0
      %s122 = sadd.s32 %s121, 1
      %s123 = scalar_select %p120, %s121, %s122
      %p126 = pneg %p120
      %p127 = scmp.eq.s32.totalorder %s15, 1
      %p128 = por %p126, %p127
      %p129 = scmp.ne.s32.totalorder %s121, %s124
      %p130 = scmp.eq.s32.totalorder %s15, 0
      %p131 = por %p129, %p130
      %p132 = scmp.ne.s32.totalorder %s121, %s124
      %p133 = scmp.eq.s32.totalorder %s20, 1
      %p134 = por %p132, %p133
      %p135 = scmp.ne.s32.totalorder %s124, %s125
      %p136 = scmp.eq.s32.totalorder %s20, 0
      %p137 = por %p135, %p136
      %p138 = scmp.ne.s32.totalorder %s124, %s125
      %p139 = scmp.eq.s32.totalorder %s21, 1
      %p140 = por %p138, %p139
      %p142 = scmp.ne.s32.totalorder %s125, %s141
      %p143 = scmp.eq.s32.totalorder %s21, 0
      %p144 = por %p142, %p143
      %s146 = sadd.s32 %s145, 1
      %p149 = scmp.eq.s32.totalorder %s15, 1
      %p150 = scmp.ne.s32.totalorder %s145, %s147
      %p151 = scmp.eq.s32.totalorder %s15, 0
      %p152 = por %p150, %p151
      %p153 = scmp.ne.s32.totalorder %s145, %s147
      %p154 = scmp.eq.s32.totalorder %s20, 1
      %p155 = por %p153, %p154
      %p156 = scmp.ne.s32.totalorder %s147, %s148
      %p157 = scmp.eq.s32.totalorder %s20, 0
      %p158 = por %p156, %p157
      %p159 = scmp.ne.s32.totalorder %s147, %s148
      %p160 = scmp.eq.s32.totalorder %s21, 1
      %p161 = por %p159, %p160
      %p163 = scmp.ne.s32.totalorder %s148, %s162
      %p164 = scmp.eq.s32.totalorder %s21, 0
      %p165 = por %p163, %p164
      %s167 = sadd.s32 %s166, 1
      %p170 = scmp.eq.s32.totalorder %s15, 1
      %p171 = scmp.ne.s32.totalorder %s166, %s168
      %p172 = scmp.eq.s32.totalorder %s15, 0
      %p173 = por %p171, %p172
      %p174 = scmp.ne.s32.totalorder %s166, %s168
      %p175 = scmp.eq.s32.totalorder %s20, 1
      %p176 = por %p174, %p175
      %p177 = scmp.ne.s32.totalorder %s168, %s169
      %p178 = scmp.eq.s32.totalorder %s20, 0
      %p179 = por %p177, %p178
      %p180 = scmp.ne.s32.totalorder %s168, %s169
      %p181 = scmp.eq.s32.totalorder %s21, 1
      %p182 = por %p180, %p181
      %p184 = scmp.ne.s32.totalorder %s169, %s183
      %p185 = scmp.eq.s32.totalorder %s21, 0
      %p186 = por %p184, %p185
      %s187 = ssub.s32 %s22, %s34
      %s188 = ssub.s32 %s23, %s30
      %s189 = sor.u32 %s187, %s188
      %p190 = scmp.eq.s32.totalorder %s189, 0
      %s192 = sadd.s32 %s191, 1
      %s193 = scalar_select %p190, %s191, %s192
      %p196 = pneg %p190
      %p197 = scmp.eq.s32.totalorder %s15, 1
      %p198 = por %p196, %p197
      %p199 = scmp.ne.s32.totalorder %s191, %s194
      %p200 = scmp.eq.s32.totalorder %s15, 0
      %p201 = por %p199, %p200
      %p202 = scmp.ne.s32.totalorder %s191, %s194
      %p203 = scmp.eq.s32.totalorder %s20, 1
      %p204 = por %p202, %p203
      %p205 = scmp.ne.s32.totalorder %s194, %s195
      %p206 = scmp.eq.s32.totalorder %s20, 0
      %p207 = por %p205, %p206
      %p208 = scmp.ne.s32.totalorder %s194, %s195
      %p209 = scmp.eq.s32.totalorder %s21, 1
      %p210 = por %p208, %p209
      %p212 = scmp.ne.s32.totalorder %s195, %s211
      %p213 = scmp.eq.s32.totalorder %s21, 0
      %p214 = por %p212, %p213
      %p215 = scmp.le.s32.totalorder 1, %s15
      %p216 = scmp.lt.s32.totalorder %s15, 3
      %p217 = pnand %p215, %p216
      %p218 = pneg %p217
      // Predicated region
      $region9: #{tpu_custom_call.1} parent=5 // pred_check
        _
      $region10: #{tpu_custom_call.1} parent=5 // pred_check_branch
        %220 = sbr.rel (%p217) target = $region12
      $region11: #{tpu_custom_call.1} parent=5 // pred_region
        %s221 = ssub.s32 %s15, 1
        // Predicated region
        $region13: #{tpu_custom_call.1} parent=11 // pred_check
          %p222 = pneg %p53
        $region14: #{tpu_custom_call.1} parent=11 // pred_check_branch
          %224 = sbr.rel (%p222) target = $region16
        $region15: #{tpu_custom_call.1} parent=11 // pred_region
          %p225 = scmp.lt.s32.totalorder %s24, 1
          %s226 = scalar_select %p225, %s24, 1
          %s227 = smul.addr %s226, 16
          %s228 = smul.addr %s227, 4
          %s229 = scalar_lea.vmem %s0, %s228
        $region16: #{tpu_custom_call.1} parent=11 // pred_fallthru
          _
        // Predicated region
        $region17: #{tpu_custom_call.1} parent=11 // pred_check
          %p230 = pneg %p158
        $region18: #{tpu_custom_call.1} parent=11 // pred_check_branch
          %232 = sbr.rel (%p230) target = $region20
        $region19: #{tpu_custom_call.1} parent=11 // pred_region
          _
        $region20: #{tpu_custom_call.1} parent=11 // pred_fallthru
          _
        // Predicated region
        $region21: #{tpu_custom_call.1} parent=11 // pred_check
          %p233 = pneg %p179
        $region22: #{tpu_custom_call.1} parent=11 // pred_check_branch
          %235 = sbr.rel (%p233) target = $region24
        $region23: #{tpu_custom_call.1} parent=11 // pred_region
          _
        $region24: #{tpu_custom_call.1} parent=11 // pred_fallthru
          _
      $region12: #{tpu_custom_call.1} parent=5 // pred_fallthru
        _
      %p236 = scmp.lt.s32.totalorder %s15, 2
      // Predicated region
      $region25: #{tpu_custom_call.1} parent=5 // pred_check
        %p237 = pneg %p236
      $region26: #{tpu_custom_call.1} parent=5 // pred_check_branch
        %239 = sbr.rel (%p237) target = $region28
      $region27: #{tpu_custom_call.1} parent=5 // pred_region
        // Predicated region
        $region29: #{tpu_custom_call.1} parent=27 // pred_check
          %p240 = pneg %p75
        $region30: #{tpu_custom_call.1} parent=27 // pred_check_branch
          %242 = sbr.rel (%p240) target = $region32
        $region31: #{tpu_custom_call.1} parent=27 // pred_region
          %s243 = smul.u32 18, %s23
          %p244 = scmp.lt.s32.totalorder %s22, 1
          %s245 = scalar_select %p244, %s22, 1
          %p246 = scmp.lt.s32.totalorder %s243, 17
          %s247 = scalar_select %p246, %s243, 17
          %s248 = smul.addr %s245, 18
          %s249 = sadd.s32 %s247, %s248
          %s250 = scalar_lea.vmem %s1, %s249
          %s251 = smul.u32 18, %s23
        $region32: #{tpu_custom_call.1} parent=27 // pred_fallthru
          _
        // Predicated region
        $region33: #{tpu_custom_call.1} parent=27 // pred_check
          %p252 = pneg %p103
        $region34: #{tpu_custom_call.1} parent=27 // pred_check_branch
          %254 = sbr.rel (%p252) target = $region36
        $region35: #{tpu_custom_call.1} parent=27 // pred_region
          %s255 = smul.u32 18, %s23
          %p256 = scmp.lt.s32.totalorder %s22, 1
          %s257 = scalar_select %p256, %s22, 1
          %p258 = scmp.lt.s32.totalorder %s255, 17
          %s259 = scalar_select %p258, %s255, 17
          %s260 = smul.addr %s257, 18
          %s261 = sadd.s32 %s259, %s260
          %s262 = scalar_lea.vmem %s2, %s261
          %s263 = smul.u32 18, %s23
        $region36: #{tpu_custom_call.1} parent=27 // pred_fallthru
          _
        // Predicated region
        $region37: #{tpu_custom_call.1} parent=27 // pred_check
          %p264 = pneg %p131
        $region38: #{tpu_custom_call.1} parent=27 // pred_check_branch
          %266 = sbr.rel (%p264) target = $region40
        $region39: #{tpu_custom_call.1} parent=27 // pred_region
          %s267 = smul.u32 18, %s23
          %p268 = scmp.lt.s32.totalorder %s22, 1
          %s269 = scalar_select %p268, %s22, 1
          %p270 = scmp.lt.s32.totalorder %s267, 17
          %s271 = scalar_select %p270, %s267, 17
          %s272 = smul.addr %s269, 18
          %s273 = sadd.s32 %s271, %s272
          %s274 = scalar_lea.vmem %s3, %s273
          %s275 = smul.u32 18, %s23
        $region40: #{tpu_custom_call.1} parent=27 // pred_fallthru
          _
      $region28: #{tpu_custom_call.1} parent=5 // pred_fallthru
        _
      %p276 = scmp.le.s32.totalorder 1, %s15
      %p277 = scmp.lt.s32.totalorder %s15, 3
      %p278 = pnand %p276, %p277
      %p279 = pneg %p278
      // Predicated region
      $region41: #{tpu_custom_call.1} parent=5 // pred_check
        _
      $region42: #{tpu_custom_call.1} parent=5 // pred_check_branch
        %281 = sbr.rel (%p278) target = $region44
      $region43: #{tpu_custom_call.1} parent=5 // pred_region
        %s282 = ssub.s32 %s15, 1
        %p283 = scmp.lt.s32.totalorder %s24, 1
        %s284 = scalar_select %p283, %s24, 1
        %s285 = smul.addr %s284, 16
        %s286 = smul.addr %s285, 4
        %s287 = scalar_lea.vmem %s0, %s286
        %p288 = pneg %p53
        %p289 = pneg %p50
        %s290 = smul.u32 18, %s25
        %p291 = scmp.lt.s32.totalorder %s24, 1
        %s292 = scalar_select %p291, %s24, 1
        %p293 = scmp.lt.s32.totalorder %s290, 17
        %s294 = scalar_select %p293, %s290, 17
        %s295 = smul.addr %s292, 18
        %s296 = sadd.s32 %s294, %s295
        %s297 = scalar_lea.vmem %s1, %s296
        %p298 = pneg %p81
        %p299 = pneg %p78
        %s300 = smul.u32 18, %s25
        %p301 = scmp.lt.s32.totalorder %s24, 1
        %s302 = scalar_select %p301, %s24, 1
        %p303 = scmp.lt.s32.totalorder %s300, 17
        %s304 = scalar_select %p303, %s300, 17
        %s305 = smul.addr %s302, 18
        %s306 = sadd.s32 %s304, %s305
        %s307 = scalar_lea.vmem %s2, %s306
        %p308 = pneg %p109
        %p309 = pneg %p106
        %s310 = smul.u32 18, %s25
        %p311 = scmp.lt.s32.totalorder %s24, 1
        %s312 = scalar_select %p311, %s24, 1
        %p313 = scmp.lt.s32.totalorder %s310, 17
        %s314 = scalar_select %p313, %s310, 17
        %s315 = smul.addr %s312, 18
        %s316 = sadd.s32 %s314, %s315
        %s317 = scalar_lea.vmem %s3, %s316
        %p318 = pneg %p137
        %p319 = pneg %p134
        %p320 = pneg %p158
        %p321 = pneg %p155
        %p322 = pneg %p179
        %p323 = pneg %p176
        %p324 = pneg %p207
        %p325 = pneg %p204
        %s326 = sand.u32 %s194, 1
        %s327 = scalar_lea.sflag [#allocation4], %s326
        %s328 = sand.u32 %s194, 1
        %s329 = smul.addr %s328, 16
        %s330 = scalar_lea.vmem [#allocation3], %s329
        %p331 = scmp.lt.s32.totalorder %s24, 1
        %s332 = scalar_select %p331, %s24, 1
        %s333 = smul.addr %s332, 16
        %s334 = smul.addr %s333, 4
        %s335 = scalar_lea.vmem %s0, %s334
        %s336 = smul.u32 18, %s25
        %p337 = scmp.lt.s32.totalorder %s24, 1
        %s338 = scalar_select %p337, %s24, 1
        %p339 = scmp.lt.s32.totalorder %s336, 17
        %s340 = scalar_select %p339, %s336, 17
        %s341 = smul.addr %s338, 18
        %s342 = sadd.s32 %s340, %s341
        %s343 = scalar_lea.vmem %s1, %s342
        %s344 = smul.u32 18, %s25
        %s345 = smul.u32 18, %s25
        %p346 = scmp.lt.s32.totalorder %s24, 1
        %s347 = scalar_select %p346, %s24, 1
        %p348 = scmp.lt.s32.totalorder %s345, 17
        %s349 = scalar_select %p348, %s345, 17
        %s350 = smul.addr %s347, 18
        %s351 = sadd.s32 %s349, %s350
        %s352 = scalar_lea.vmem %s2, %s351
        %s353 = smul.u32 18, %s25
        %s354 = smul.u32 18, %s25
        %p355 = scmp.lt.s32.totalorder %s24, 1
        %s356 = scalar_select %p355, %s24, 1
        %p357 = scmp.lt.s32.totalorder %s354, 17
        %s358 = scalar_select %p357, %s354, 17
        %s359 = smul.addr %s356, 18
        %s360 = sadd.s32 %s358, %s359
        %s361 = scalar_lea.vmem %s3, %s360
        %s362 = smul.u32 18, %s25
        %s363 = smul.u32 2, %s25
        %v365 = vld [vmem:[%s335] sm:$0xf]
        %v366 = vld [vmem:[%s335 + $0x4] sm:$0xf]
        %v367 = vld [vmem:[%s335 + $0x8] sm:$0xf]
        %v368 = vld [vmem:[%s335 + $0xc] sm:$0xf]
        %v369 = vld [vmem:[%s335 + $0x10] sm:$0xf]
        %v370 = vld [vmem:[%s335 + $0x14] sm:$0xf]
        %v371 = vld [vmem:[%s335 + $0x18] sm:$0xf]
        %v372 = vld [vmem:[%s335 + $0x1c] sm:$0xf]
        %v373 = vld [vmem:[%s335 + $0x20] sm:$0xf]
        %v374 = vld [vmem:[%s335 + $0x24] sm:$0xf]
        %v375 = vld [vmem:[%s335 + $0x28] sm:$0xf]
        %v376 = vld [vmem:[%s335 + $0x2c] sm:$0xf]
        %v377 = vld [vmem:[%s335 + $0x30] sm:$0xf]
        %v378 = vld [vmem:[%s335 + $0x34] sm:$0xf]
        %v379 = vld [vmem:[%s335 + $0x38] sm:$0xf]
        %v380 = vld [vmem:[%s335 + $0x3c] sm:$0xf]
        %v381 = vlaneseq
        %v382 = vshrl.u32 %v381, 7
        %v383 = vadd.s32 %v382, 8
        %v384 = vcvt.s32.f32 %v382
        %v385 = vcvt.s32.f32 %v383
        %v386 = vld [vmem:[%s343] sm:$0xff]
        %v387 = vld [vmem:[%s343 + $0x8] sm:$0xff]
        %v388 = vld [vmem:[%s343 + $0x10] sm:$0x3]
        %v389 = vld [vmem:[%s352] sm:$0xff]
        %v390 = vld [vmem:[%s352 + $0x8] sm:$0xff]
        %v391 = vld [vmem:[%s352 + $0x10] sm:$0x3]
        %v392 = vld [vmem:[%s361] sm:$0xff]
        %v393 = vld [vmem:[%s361 + $0x8] sm:$0xff]
        %v394 = vld [vmem:[%s361 + $0x10] sm:$0x3]
        %v395 = vsub.f32 0.0, %v392
        %v396 = vsub.f32 0.0, %v393
        %v397 = vsub.f32 0.0, %v394
        %v398 = vmul.f32 %v395, 1.442695
        %v399 = vpow.pop %v398
        %v400 = vmul.f32 %v396, 1.442695
        %v401 = vpow.pop %v400
        %v402 = vmul.f32 %v397, 1.442695
        %v403 = vpow.pop %v402
        %v404 = vadd.f32 %v399, 1.0
        %v405 = vadd.f32 %v401, 1.0
        %v406 = vadd.f32 %v403, 1.0
        %v407 = vrcp.pop %v404
        %v408 = vrcp.pop %v405
        %v409 = vrcp.pop %v406
        %v413 = vlaneseq
        %v414 = vshrl.u32 %v413, 7
        %v415 = vsub.s32 0, %v414
        %v416 = vrot.slane %v389, %v415
        %v417 = vlaneseq
        %v418 = vshrl.u32 %v417, 7
        %v419 = vsub.s32 1, %v418
        %v420 = vrot.slane %v389, %v419
        %v421 = vlaneseq
        %v422 = vshrl.u32 %v421, 7
        %v423 = vsub.s32 2, %v422
        %v424 = vrot.slane %v389, %v423
        %v425 = vlaneseq
        %v426 = vshrl.u32 %v425, 7
        %v427 = vsub.s32 3, %v426
        %v428 = vrot.slane %v389, %v427
        %v429 = vlaneseq
        %v430 = vshrl.u32 %v429, 7
        %v431 = vsub.s32 4, %v430
        %v432 = vrot.slane %v389, %v431
        %v433 = vlaneseq
        %v434 = vshrl.u32 %v433, 7
        %v435 = vsub.s32 5, %v434
        %v436 = vrot.slane %v389, %v435
        %v437 = vlaneseq
        %v438 = vshrl.u32 %v437, 7
        %v439 = vsub.s32 6, %v438
        %v440 = vrot.slane %v389, %v439
        %v441 = vlaneseq
        %v442 = vshrl.u32 %v441, 7
        %v443 = vsub.s32 7, %v442
        %v444 = vrot.slane %v389, %v443
        %v445 = vlaneseq
        %v446 = vshrl.u32 %v445, 7
        %v447 = vsub.s32 0, %v446
        %v448 = vrot.slane %v390, %v447
        %v449 = vlaneseq
        %v450 = vshrl.u32 %v449, 7
        %v451 = vsub.s32 1, %v450
        %v452 = vrot.slane %v390, %v451
        %v453 = vlaneseq
        %v454 = vshrl.u32 %v453, 7
        %v455 = vsub.s32 2, %v454
        %v456 = vrot.slane %v390, %v455
        %v457 = vlaneseq
        %v458 = vshrl.u32 %v457, 7
        %v459 = vsub.s32 3, %v458
        %v460 = vrot.slane %v390, %v459
        %v461 = vlaneseq
        %v462 = vshrl.u32 %v461, 7
        %v463 = vsub.s32 4, %v462
        %v464 = vrot.slane %v390, %v463
        %v465 = vlaneseq
        %v466 = vshrl.u32 %v465, 7
        %v467 = vsub.s32 5, %v466
        %v468 = vrot.slane %v390, %v467
        %v469 = vlaneseq
        %v470 = vshrl.u32 %v469, 7
        %v471 = vsub.s32 6, %v470
        %v472 = vrot.slane %v390, %v471
        %v473 = vlaneseq
        %v474 = vshrl.u32 %v473, 7
        %v475 = vsub.s32 7, %v474
        %v476 = vrot.slane %v390, %v475
        %v477 = vlaneseq
        %v478 = vshrl.u32 %v477, 7
        %v479 = vsub.s32 0, %v478
        %v480 = vrot.slane %v391, %v479
        %v481 = vlaneseq
        %v482 = vshrl.u32 %v481, 7
        %v483 = vsub.s32 1, %v482
        %v484 = vrot.slane %v391, %v483
        %v503 = vsub.f32 %v384, %v416
        %v504 = vsub.f32 %v384, %v420
        %v505 = vsub.f32 %v384, %v424
        %v506 = vsub.f32 %v384, %v428
        %v507 = vsub.f32 %v384, %v432
        %v508 = vsub.f32 %v384, %v436
        %v509 = vsub.f32 %v384, %v440
        %v510 = vsub.f32 %v384, %v444
        %v511 = vsub.f32 %v384, %v448
        %v512 = vsub.f32 %v384, %v452
        %v513 = vsub.f32 %v384, %v456
        %v514 = vsub.f32 %v384, %v460
        %v515 = vsub.f32 %v384, %v464
        %v516 = vsub.f32 %v384, %v468
        %v517 = vsub.f32 %v384, %v472
        %v518 = vsub.f32 %v384, %v476
        %v519 = vsub.f32 %v384, %v480
        %v520 = vsub.f32 %v384, %v484
        %v521 = vsub.f32 %v385, %v416
        %v522 = vsub.f32 %v385, %v420
        %v523 = vsub.f32 %v385, %v424
        %v524 = vsub.f32 %v385, %v428
        %v525 = vsub.f32 %v385, %v432
        %v526 = vsub.f32 %v385, %v436
        %v527 = vsub.f32 %v385, %v440
        %v528 = vsub.f32 %v385, %v444
        %v529 = vsub.f32 %v385, %v448
        %v530 = vsub.f32 %v385, %v452
        %v531 = vsub.f32 %v385, %v456
        %v532 = vsub.f32 %v385, %v460
        %v533 = vsub.f32 %v385, %v464
        %v534 = vsub.f32 %v385, %v468
        %v535 = vsub.f32 %v385, %v472
        %v536 = vsub.f32 %v385, %v476
        %v537 = vsub.f32 %v385, %v480
        %v538 = vsub.f32 %v385, %v484
        %v539 = vand.u32 2147483647, %v503
        %v540 = vand.u32 2147483647, %v504
        %v541 = vand.u32 2147483647, %v505
        %v542 = vand.u32 2147483647, %v506
        %v543 = vand.u32 2147483647, %v507
        %v544 = vand.u32 2147483647, %v508
        %v545 = vand.u32 2147483647, %v509
        %v546 = vand.u32 2147483647, %v510
        %v547 = vand.u32 2147483647, %v511
        %v548 = vand.u32 2147483647, %v512
        %v549 = vand.u32 2147483647, %v513
        %v550 = vand.u32 2147483647, %v514
        %v551 = vand.u32 2147483647, %v515
        %v552 = vand.u32 2147483647, %v516
        %v553 = vand.u32 2147483647, %v517
        %v554 = vand.u32 2147483647, %v518
        %v555 = vand.u32 2147483647, %v519
        %v556 = vand.u32 2147483647, %v520
        %v557 = vand.u32 2147483647, %v521
        %v558 = vand.u32 2147483647, %v522
        %v559 = vand.u32 2147483647, %v523
        %v560 = vand.u32 2147483647, %v524
        %v561 = vand.u32 2147483647, %v525
        %v562 = vand.u32 2147483647, %v526
        %v563 = vand.u32 2147483647, %v527
        %v564 = vand.u32 2147483647, %v528
        %v565 = vand.u32 2147483647, %v529
        %v566 = vand.u32 2147483647, %v530
        %v567 = vand.u32 2147483647, %v531
        %v568 = vand.u32 2147483647, %v532
        %v569 = vand.u32 2147483647, %v533
        %v570 = vand.u32 2147483647, %v534
        %v571 = vand.u32 2147483647, %v535
        %v572 = vand.u32 2147483647, %v536
        %v573 = vand.u32 2147483647, %v537
        %v574 = vand.u32 2147483647, %v538
        %v575 = vsub.f32 1.0, %v539
        %v576 = vsub.f32 1.0, %v540
        %v577 = vsub.f32 1.0, %v541
        %v578 = vsub.f32 1.0, %v542
        %v579 = vsub.f32 1.0, %v543
        %v580 = vsub.f32 1.0, %v544
        %v581 = vsub.f32 1.0, %v545
        %v582 = vsub.f32 1.0, %v546
        %v583 = vsub.f32 1.0, %v547
        %v584 = vsub.f32 1.0, %v548
        %v585 = vsub.f32 1.0, %v549
        %v586 = vsub.f32 1.0, %v550
        %v587 = vsub.f32 1.0, %v551
        %v588 = vsub.f32 1.0, %v552
        %v589 = vsub.f32 1.0, %v553
        %v590 = vsub.f32 1.0, %v554
        %v591 = vsub.f32 1.0, %v555
        %v592 = vsub.f32 1.0, %v556
        %v593 = vsub.f32 1.0, %v557
        %v594 = vsub.f32 1.0, %v558
        %v595 = vsub.f32 1.0, %v559
        %v596 = vsub.f32 1.0, %v560
        %v597 = vsub.f32 1.0, %v561
        %v598 = vsub.f32 1.0, %v562
        %v599 = vsub.f32 1.0, %v563
        %v600 = vsub.f32 1.0, %v564
        %v601 = vsub.f32 1.0, %v565
        %v602 = vsub.f32 1.0, %v566
        %v603 = vsub.f32 1.0, %v567
        %v604 = vsub.f32 1.0, %v568
        %v605 = vsub.f32 1.0, %v569
        %v606 = vsub.f32 1.0, %v570
        %v607 = vsub.f32 1.0, %v571
        %v608 = vsub.f32 1.0, %v572
        %v609 = vsub.f32 1.0, %v573
        %v610 = vsub.f32 1.0, %v574
        %v611 = vmax.f32 %v575, 0.0
        %v612 = vmax.f32 %v576, 0.0
        %v613 = vmax.f32 %v577, 0.0
        %v614 = vmax.f32 %v578, 0.0
        %v615 = vmax.f32 %v579, 0.0
        %v616 = vmax.f32 %v580, 0.0
        %v617 = vmax.f32 %v581, 0.0
        %v618 = vmax.f32 %v582, 0.0
        %v619 = vmax.f32 %v583, 0.0
        %v620 = vmax.f32 %v584, 0.0
        %v621 = vmax.f32 %v585, 0.0
        %v622 = vmax.f32 %v586, 0.0
        %v623 = vmax.f32 %v587, 0.0
        %v624 = vmax.f32 %v588, 0.0
        %v625 = vmax.f32 %v589, 0.0
        %v626 = vmax.f32 %v590, 0.0
        %v627 = vmax.f32 %v591, 0.0
        %v628 = vmax.f32 %v592, 0.0
        %v629 = vmax.f32 %v593, 0.0
        %v630 = vmax.f32 %v594, 0.0
        %v631 = vmax.f32 %v595, 0.0
        %v632 = vmax.f32 %v596, 0.0
        %v633 = vmax.f32 %v597, 0.0
        %v634 = vmax.f32 %v598, 0.0
        %v635 = vmax.f32 %v599, 0.0
        %v636 = vmax.f32 %v600, 0.0
        %v637 = vmax.f32 %v601, 0.0
        %v638 = vmax.f32 %v602, 0.0
        %v639 = vmax.f32 %v603, 0.0
        %v640 = vmax.f32 %v604, 0.0
        %v641 = vmax.f32 %v605, 0.0
        %v642 = vmax.f32 %v606, 0.0
        %v643 = vmax.f32 %v607, 0.0
        %v644 = vmax.f32 %v608, 0.0
        %v645 = vmax.f32 %v609, 0.0
        %v646 = vmax.f32 %v610, 0.0
        %v650 = vlaneseq
        %v651 = vshrl.u32 %v650, 7
        %v652 = vsub.s32 0, %v651
        %v653 = vrot.slane %v386, %v652
        %v654 = vlaneseq
        %v655 = vshrl.u32 %v654, 7
        %v656 = vsub.s32 1, %v655
        %v657 = vrot.slane %v386, %v656
        %v658 = vlaneseq
        %v659 = vshrl.u32 %v658, 7
        %v660 = vsub.s32 2, %v659
        %v661 = vrot.slane %v386, %v660
        %v662 = vlaneseq
        %v663 = vshrl.u32 %v662, 7
        %v664 = vsub.s32 3, %v663
        %v665 = vrot.slane %v386, %v664
        %v666 = vlaneseq
        %v667 = vshrl.u32 %v666, 7
        %v668 = vsub.s32 4, %v667
        %v669 = vrot.slane %v386, %v668
        %v670 = vlaneseq
        %v671 = vshrl.u32 %v670, 7
        %v672 = vsub.s32 5, %v671
        %v673 = vrot.slane %v386, %v672
        %v674 = vlaneseq
        %v675 = vshrl.u32 %v674, 7
        %v676 = vsub.s32 6, %v675
        %v677 = vrot.slane %v386, %v676
        %v678 = vlaneseq
        %v679 = vshrl.u32 %v678, 7
        %v680 = vsub.s32 7, %v679
        %v681 = vrot.slane %v386, %v680
        %v682 = vlaneseq
        %v683 = vshrl.u32 %v682, 7
        %v684 = vsub.s32 0, %v683
        %v685 = vrot.slane %v387, %v684
        %v686 = vlaneseq
        %v687 = vshrl.u32 %v686, 7
        %v688 = vsub.s32 1, %v687
        %v689 = vrot.slane %v387, %v688
        %v690 = vlaneseq
        %v691 = vshrl.u32 %v690, 7
        %v692 = vsub.s32 2, %v691
        %v693 = vrot.slane %v387, %v692
        %v694 = vlaneseq
        %v695 = vshrl.u32 %v694, 7
        %v696 = vsub.s32 3, %v695
        %v697 = vrot.slane %v387, %v696
        %v698 = vlaneseq
        %v699 = vshrl.u32 %v698, 7
        %v700 = vsub.s32 4, %v699
        %v701 = vrot.slane %v387, %v700
        %v702 = vlaneseq
        %v703 = vshrl.u32 %v702, 7
        %v704 = vsub.s32 5, %v703
        %v705 = vrot.slane %v387, %v704
        %v706 = vlaneseq
        %v707 = vshrl.u32 %v706, 7
        %v708 = vsub.s32 6, %v707
        %v709 = vrot.slane %v387, %v708
        %v710 = vlaneseq
        %v711 = vshrl.u32 %v710, 7
        %v712 = vsub.s32 7, %v711
        %v713 = vrot.slane %v387, %v712
        %v714 = vlaneseq
        %v715 = vshrl.u32 %v714, 7
        %v716 = vsub.s32 0, %v715
        %v717 = vrot.slane %v388, %v716
        %v718 = vlaneseq
        %v719 = vshrl.u32 %v718, 7
        %v720 = vsub.s32 1, %v719
        %v721 = vrot.slane %v388, %v720
        %v740 = vsub.f32 %v384, %v653
        %v741 = vsub.f32 %v384, %v657
        %v742 = vsub.f32 %v384, %v661
        %v743 = vsub.f32 %v384, %v665
        %v744 = vsub.f32 %v384, %v669
        %v745 = vsub.f32 %v384, %v673
        %v746 = vsub.f32 %v384, %v677
        %v747 = vsub.f32 %v384, %v681
        %v748 = vsub.f32 %v384, %v685
        %v749 = vsub.f32 %v384, %v689
        %v750 = vsub.f32 %v384, %v693
        %v751 = vsub.f32 %v384, %v697
        %v752 = vsub.f32 %v384, %v701
        %v753 = vsub.f32 %v384, %v705
        %v754 = vsub.f32 %v384, %v709
        %v755 = vsub.f32 %v384, %v713
        %v756 = vsub.f32 %v384, %v717
        %v757 = vsub.f32 %v384, %v721
        %v758 = vsub.f32 %v385, %v653
        %v759 = vsub.f32 %v385, %v657
        %v760 = vsub.f32 %v385, %v661
        %v761 = vsub.f32 %v385, %v665
        %v762 = vsub.f32 %v385, %v669
        %v763 = vsub.f32 %v385, %v673
        %v764 = vsub.f32 %v385, %v677
        %v765 = vsub.f32 %v385, %v681
        %v766 = vsub.f32 %v385, %v685
        %v767 = vsub.f32 %v385, %v689
        %v768 = vsub.f32 %v385, %v693
        %v769 = vsub.f32 %v385, %v697
        %v770 = vsub.f32 %v385, %v701
        %v771 = vsub.f32 %v385, %v705
        %v772 = vsub.f32 %v385, %v709
        %v773 = vsub.f32 %v385, %v713
        %v774 = vsub.f32 %v385, %v717
        %v775 = vsub.f32 %v385, %v721
        %v776 = vand.u32 2147483647, %v740
        %v777 = vand.u32 2147483647, %v741
        %v778 = vand.u32 2147483647, %v742
        %v779 = vand.u32 2147483647, %v743
        %v780 = vand.u32 2147483647, %v744
        %v781 = vand.u32 2147483647, %v745
        %v782 = vand.u32 2147483647, %v746
        %v783 = vand.u32 2147483647, %v747
        %v784 = vand.u32 2147483647, %v748
        %v785 = vand.u32 2147483647, %v749
        %v786 = vand.u32 2147483647, %v750
        %v787 = vand.u32 2147483647, %v751
        %v788 = vand.u32 2147483647, %v752
        %v789 = vand.u32 2147483647, %v753
        %v790 = vand.u32 2147483647, %v754
        %v791 = vand.u32 2147483647, %v755
        %v792 = vand.u32 2147483647, %v756
        %v793 = vand.u32 2147483647, %v757
        %v794 = vand.u32 2147483647, %v758
        %v795 = vand.u32 2147483647, %v759
        %v796 = vand.u32 2147483647, %v760
        %v797 = vand.u32 2147483647, %v761
        %v798 = vand.u32 2147483647, %v762
        %v799 = vand.u32 2147483647, %v763
        %v800 = vand.u32 2147483647, %v764
        %v801 = vand.u32 2147483647, %v765
        %v802 = vand.u32 2147483647, %v766
        %v803 = vand.u32 2147483647, %v767
        %v804 = vand.u32 2147483647, %v768
        %v805 = vand.u32 2147483647, %v769
        %v806 = vand.u32 2147483647, %v770
        %v807 = vand.u32 2147483647, %v771
        %v808 = vand.u32 2147483647, %v772
        %v809 = vand.u32 2147483647, %v773
        %v810 = vand.u32 2147483647, %v774
        %v811 = vand.u32 2147483647, %v775
        %v812 = vsub.f32 1.0, %v776
        %v813 = vsub.f32 1.0, %v777
        %v814 = vsub.f32 1.0, %v778
        %v815 = vsub.f32 1.0, %v779
        %v816 = vsub.f32 1.0, %v780
        %v817 = vsub.f32 1.0, %v781
        %v818 = vsub.f32 1.0, %v782
        %v819 = vsub.f32 1.0, %v783
        %v820 = vsub.f32 1.0, %v784
        %v821 = vsub.f32 1.0, %v785
        %v822 = vsub.f32 1.0, %v786
        %v823 = vsub.f32 1.0, %v787
        %v824 = vsub.f32 1.0, %v788
        %v825 = vsub.f32 1.0, %v789
        %v826 = vsub.f32 1.0, %v790
        %v827 = vsub.f32 1.0, %v791
        %v828 = vsub.f32 1.0, %v792
        %v829 = vsub.f32 1.0, %v793
        %v830 = vsub.f32 1.0, %v794
        %v831 = vsub.f32 1.0, %v795
        %v832 = vsub.f32 1.0, %v796
        %v833 = vsub.f32 1.0, %v797
        %v834 = vsub.f32 1.0, %v798
        %v835 = vsub.f32 1.0, %v799
        %v836 = vsub.f32 1.0, %v800
        %v837 = vsub.f32 1.0, %v801
        %v838 = vsub.f32 1.0, %v802
        %v839 = vsub.f32 1.0, %v803
        %v840 = vsub.f32 1.0, %v804
        %v841 = vsub.f32 1.0, %v805
        %v842 = vsub.f32 1.0, %v806
        %v843 = vsub.f32 1.0, %v807
        %v844 = vsub.f32 1.0, %v808
        %v845 = vsub.f32 1.0, %v809
        %v846 = vsub.f32 1.0, %v810
        %v847 = vsub.f32 1.0, %v811
        %v848 = vmax.f32 %v812, 0.0
        %v849 = vmax.f32 %v813, 0.0
        %v850 = vmax.f32 %v814, 0.0
        %v851 = vmax.f32 %v815, 0.0
        %v852 = vmax.f32 %v816, 0.0
        %v853 = vmax.f32 %v817, 0.0
        %v854 = vmax.f32 %v818, 0.0
        %v855 = vmax.f32 %v819, 0.0
        %v856 = vmax.f32 %v820, 0.0
        %v857 = vmax.f32 %v821, 0.0
        %v858 = vmax.f32 %v822, 0.0
        %v859 = vmax.f32 %v823, 0.0
        %v860 = vmax.f32 %v824, 0.0
        %v861 = vmax.f32 %v825, 0.0
        %v862 = vmax.f32 %v826, 0.0
        %v863 = vmax.f32 %v827, 0.0
        %v864 = vmax.f32 %v828, 0.0
        %v865 = vmax.f32 %v829, 0.0
        %v866 = vmax.f32 %v830, 0.0
        %v867 = vmax.f32 %v831, 0.0
        %v868 = vmax.f32 %v832, 0.0
        %v869 = vmax.f32 %v833, 0.0
        %v870 = vmax.f32 %v834, 0.0
        %v871 = vmax.f32 %v835, 0.0
        %v872 = vmax.f32 %v836, 0.0
        %v873 = vmax.f32 %v837, 0.0
        %v874 = vmax.f32 %v838, 0.0
        %v875 = vmax.f32 %v839, 0.0
        %v876 = vmax.f32 %v840, 0.0
        %v877 = vmax.f32 %v841, 0.0
        %v878 = vmax.f32 %v842, 0.0
        %v879 = vmax.f32 %v843, 0.0
        %v880 = vmax.f32 %v844, 0.0
        %v881 = vmax.f32 %v845, 0.0
        %v882 = vmax.f32 %v846, 0.0
        %v883 = vmax.f32 %v847, 0.0
        %v887 = vlaneseq
        %v888 = vshrl.u32 %v887, 7
        %v889 = vsub.s32 0, %v888
        %v890 = vrot.slane %v407, %v889
        %v891 = vlaneseq
        %v892 = vshrl.u32 %v891, 7
        %v893 = vsub.s32 1, %v892
        %v894 = vrot.slane %v407, %v893
        %v895 = vlaneseq
        %v896 = vshrl.u32 %v895, 7
        %v897 = vsub.s32 2, %v896
        %v898 = vrot.slane %v407, %v897
        %v899 = vlaneseq
        %v900 = vshrl.u32 %v899, 7
        %v901 = vsub.s32 3, %v900
        %v902 = vrot.slane %v407, %v901
        %v903 = vlaneseq
        %v904 = vshrl.u32 %v903, 7
        %v905 = vsub.s32 4, %v904
        %v906 = vrot.slane %v407, %v905
        %v907 = vlaneseq
        %v908 = vshrl.u32 %v907, 7
        %v909 = vsub.s32 5, %v908
        %v910 = vrot.slane %v407, %v909
        %v911 = vlaneseq
        %v912 = vshrl.u32 %v911, 7
        %v913 = vsub.s32 6, %v912
        %v914 = vrot.slane %v407, %v913
        %v915 = vlaneseq
        %v916 = vshrl.u32 %v915, 7
        %v917 = vsub.s32 7, %v916
        %v918 = vrot.slane %v407, %v917
        %v919 = vlaneseq
        %v920 = vshrl.u32 %v919, 7
        %v921 = vsub.s32 0, %v920
        %v922 = vrot.slane %v408, %v921
        %v923 = vlaneseq
        %v924 = vshrl.u32 %v923, 7
        %v925 = vsub.s32 1, %v924
        %v926 = vrot.slane %v408, %v925
        %v927 = vlaneseq
        %v928 = vshrl.u32 %v927, 7
        %v929 = vsub.s32 2, %v928
        %v930 = vrot.slane %v408, %v929
        %v931 = vlaneseq
        %v932 = vshrl.u32 %v931, 7
        %v933 = vsub.s32 3, %v932
        %v934 = vrot.slane %v408, %v933
        %v935 = vlaneseq
        %v936 = vshrl.u32 %v935, 7
        %v937 = vsub.s32 4, %v936
        %v938 = vrot.slane %v408, %v937
        %v939 = vlaneseq
        %v940 = vshrl.u32 %v939, 7
        %v941 = vsub.s32 5, %v940
        %v942 = vrot.slane %v408, %v941
        %v943 = vlaneseq
        %v944 = vshrl.u32 %v943, 7
        %v945 = vsub.s32 6, %v944
        %v946 = vrot.slane %v408, %v945
        %v947 = vlaneseq
        %v948 = vshrl.u32 %v947, 7
        %v949 = vsub.s32 7, %v948
        %v950 = vrot.slane %v408, %v949
        %v951 = vlaneseq
        %v952 = vshrl.u32 %v951, 7
        %v953 = vsub.s32 0, %v952
        %v954 = vrot.slane %v409, %v953
        %v955 = vlaneseq
        %v956 = vshrl.u32 %v955, 7
        %v957 = vsub.s32 1, %v956
        %v958 = vrot.slane %v409, %v957
        %v977 = vmul.f32 %v848, %v890
        %v978 = vmul.f32 %v849, %v894
        %v979 = vmul.f32 %v850, %v898
        %v980 = vmul.f32 %v851, %v902
        %v981 = vmul.f32 %v852, %v906
        %v982 = vmul.f32 %v853, %v910
        %v983 = vmul.f32 %v854, %v914
        %v984 = vmul.f32 %v855, %v918
        %v985 = vmul.f32 %v856, %v922
        %v986 = vmul.f32 %v857, %v926
        %v987 = vmul.f32 %v858, %v930
        %v988 = vmul.f32 %v859, %v934
        %v989 = vmul.f32 %v860, %v938
        %v990 = vmul.f32 %v861, %v942
        %v991 = vmul.f32 %v862, %v946
        %v992 = vmul.f32 %v863, %v950
        %v993 = vmul.f32 %v864, %v954
        %v994 = vmul.f32 %v865, %v958
        %v995 = vmul.f32 %v866, %v890
        %v996 = vmul.f32 %v867, %v894
        %v997 = vmul.f32 %v868, %v898
        %v998 = vmul.f32 %v869, %v902
        %v999 = vmul.f32 %v870, %v906
        %v1000 = vmul.f32 %v871, %v910
        %v1001 = vmul.f32 %v872, %v914
        %v1002 = vmul.f32 %v873, %v918
        %v1003 = vmul.f32 %v874, %v922
        %v1004 = vmul.f32 %v875, %v926
        %v1005 = vmul.f32 %v876, %v930
        %v1006 = vmul.f32 %v877, %v934
        %v1007 = vmul.f32 %v878, %v938
        %v1008 = vmul.f32 %v879, %v942
        %v1009 = vmul.f32 %v880, %v946
        %v1010 = vmul.f32 %v881, %v950
        %v1011 = vmul.f32 %v882, %v954
        %v1012 = vmul.f32 %v883, %v958
        %v1013 = vpack.c.bf16 %v629, %v611
        %v1014 = vpack.c.bf16 %v630, %v612
        %v1015 = vpack.c.bf16 %v631, %v613
        %v1016 = vpack.c.bf16 %v632, %v614
        %v1017 = vpack.c.bf16 %v633, %v615
        %v1018 = vpack.c.bf16 %v634, %v616
        %v1019 = vpack.c.bf16 %v635, %v617
        %v1020 = vpack.c.bf16 %v636, %v618
        %v1021 = vpack.c.bf16 %v637, %v619
        %v1022 = vpack.c.bf16 %v638, %v620
        %v1023 = vpack.c.bf16 %v639, %v621
        %v1024 = vpack.c.bf16 %v640, %v622
        %v1025 = vpack.c.bf16 %v641, %v623
        %v1026 = vpack.c.bf16 %v642, %v624
        %v1027 = vpack.c.bf16 %v643, %v625
        %v1028 = vpack.c.bf16 %v644, %v626
        %v1029 = vpack.c.bf16 %v645, %v627
        %v1030 = vpack.c.bf16 %v646, %v628
        %v1047 = vunpack.c.l.b16 %v365
        %v1048 = vunpack.c.l.b16 %v366
        %v1049 = vunpack.c.l.b16 %v367
        %v1050 = vunpack.c.l.b16 %v368
        %v1051 = vunpack.c.l.b16 %v369
        %v1052 = vunpack.c.l.b16 %v370
        %v1053 = vunpack.c.l.b16 %v371
        %v1054 = vunpack.c.l.b16 %v372
        %v1055 = vunpack.c.l.b16 %v373
        %v1056 = vunpack.c.l.b16 %v374
        %v1057 = vunpack.c.l.b16 %v375
        %v1058 = vunpack.c.l.b16 %v376
        %v1059 = vunpack.c.l.b16 %v377
        %v1060 = vunpack.c.l.b16 %v378
        %v1061 = vunpack.c.l.b16 %v379
        %v1062 = vunpack.c.l.b16 %v380
        %v1063 = vpack.c.b16 %v1048, %v1047
        %v1064 = vpack.c.b16 %v1050, %v1049
        %v1065 = vpack.c.b16 %v1052, %v1051
        %v1066 = vpack.c.b16 %v1054, %v1053
        %v1067 = vpack.c.b16 %v1056, %v1055
        %v1068 = vpack.c.b16 %v1058, %v1057
        %v1069 = vpack.c.b16 %v1060, %v1059
        %v1070 = vpack.c.b16 %v1062, %v1061
        %vm1071 = vcmask 130048
        %v1073 = vsel %vm1071, %v1063, 0
        %v1076 = vsel %vm1071, %v1064, 0
        %v1079 = vsel %vm1071, %v1065, 0
        %v1082 = vsel %vm1071, %v1066, 0
        %v1085 = vsel %vm1071, %v1067, 0
        %v1088 = vsel %vm1071, %v1068, 0
        %v1091 = vsel %vm1071, %v1069, 0
        %v1094 = vsel %vm1071, %v1070, 0
        %1096 = vmatprep.subr.bf16.mxu0 %v1014
        %1097 = vmatpush1.bf16.msra.mxu0 %v1013
        %1098 = vmatprep.subr.bf16.mxu0 0
        %1099 = vmatpush1.bf16.msra.mxu0 0
        %1100 = vmatprep.subr.bf16.mxu0 0
        %1101 = vmatpush1.bf16.msra.mxu0 0
        %1102 = vmatprep.subr.bf16.mxu0 0
        %1103 = vmatpush1.bf16.msra.mxu0 0
        %1104 = vmatprep.subr.bf16.mxu0 0
        %1105 = vmatpush1.bf16.msra.mxu0 0
        %1106 = vmatprep.subr.bf16.mxu0 0
        %1107 = vmatpush1.bf16.msra.mxu0 0
        %1108 = vmatprep.subr.bf16.mxu0 0
        %1109 = vmatpush1.bf16.msra.mxu0 0
        %1110 = vmatprep.subr.bf16.mxu0 0
        %1111 = vmatpush1.bf16.msra.mxu0 0
        %1112 = vmatprep.subr.bf16.mxu0 0
        %1113 = vmatpush1.bf16.msra.mxu0 0
        %1114 = vmatprep.subr.bf16.mxu0 0
        %1115 = vmatpush1.bf16.msra.mxu0 0
        %1116 = vmatprep.subr.bf16.mxu0 0
        %1117 = vmatpush1.bf16.msra.mxu0 0
        %1118 = vmatprep.subr.bf16.mxu0 0
        %1119 = vmatpush1.bf16.msra.mxu0 0
        %1120 = vmatprep.subr.bf16.mxu0 0
        %1121 = vmatpush1.bf16.msra.mxu0 0
        %1122 = vmatprep.subr.bf16.mxu0 0
        %1123 = vmatpush1.bf16.msra.mxu0 0
        %1124 = vmatprep.subr.bf16.mxu0 0
        %1125 = vmatpush1.bf16.msra.mxu0 0
        %1126 = vmatprep.subr.bf16.mxu0 0
        %1127 = vmatpush1.bf16.msra.mxu0 0
        %1128 = vmatprep.mubr.bf16.mxu0 0
        %1129 = vmatmul.mubr.bf16.gmra.mrb[0].mxu0 %v1073
        %v1130 = vpop.f32.mrb[0].mxu0
        %v1131 = vadd.f32 0.0, %v1130
        %v1132 = vpop.f32.mrb[0].mxu0
        %v1133 = vadd.f32 0.0, %v1132
        %v1134 = vpop.f32.mrb[0].mxu0
        %v1135 = vadd.f32 0.0, %v1134
        %v1136 = vpop.f32.mrb[0].mxu0
        %v1137 = vadd.f32 0.0, %v1136
        %1138 = vmatprep.mubr.bf16.mxu0 0
        %1139 = vmatmul.mubr.bf16.gmra.mrb[0].mxu0 %v1076
        %v1140 = vpop.f32.mrb[0].mxu0
        %v1141 = vadd.f32 0.0, %v1140
        %v1142 = vpop.f32.mrb[0].mxu0
        %v1143 = vadd.f32 0.0, %v1142
        %v1144 = vpop.f32.mrb[0].mxu0
        %v1145 = vadd.f32 0.0, %v1144
        %v1146 = vpop.f32.mrb[0].mxu0
        %v1147 = vadd.f32 0.0, %v1146
        %1148 = vmatprep.mubr.bf16.mxu0 0
        %1149 = vmatmul.mubr.bf16.gmra.mrb[0].mxu0 %v1079
        %v1150 = vpop.f32.mrb[0].mxu0
        %v1151 = vadd.f32 0.0, %v1150
        %v1152 = vpop.f32.mrb[0].mxu0
        %v1153 = vadd.f32 0.0, %v1152
        %v1154 = vpop.f32.mrb[0].mxu0
        %v1155 = vadd.f32 0.0, %v1154
        %v1156 = vpop.f32.mrb[0].mxu0
        %v1157 = vadd.f32 0.0, %v1156
        %1158 = vmatprep.mubr.bf16.mxu0 0
        %1159 = vmatmul.mubr.bf16.gmra.mrb[0].mxu0 %v1082
        %v1160 = vpop.f32.mrb[0].mxu0
        %v1161 = vadd.f32 0.0, %v1160
        %v1162 = vpop.f32.mrb[0].mxu0
        %v1163 = vadd.f32 0.0, %v1162
        %v1164 = vpop.f32.mrb[0].mxu0
        %v1165 = vadd.f32 0.0, %v1164
        %v1166 = vpop.f32.mrb[0].mxu0
        %v1167 = vadd.f32 0.0, %v1166
        %1168 = vmatprep.mubr.bf16.mxu0 0
        %1169 = vmatmul.mubr.bf16.gmra.mrb[0].mxu0 %v1085
        %v1170 = vpop.f32.mrb[0].mxu0
        %v1171 = vadd.f32 0.0, %v1170
        %v1172 = vpop.f32.mrb[0].mxu0
        %v1173 = vadd.f32 0.0, %v1172
        %v1174 = vpop.f32.mrb[0].mxu0
        %v1175 = vadd.f32 0.0, %v1174
        %v1176 = vpop.f32.mrb[0].mxu0
        %v1177 = vadd.f32 0.0, %v1176
        %1178 = vmatprep.mubr.bf16.mxu0 0
        %1179 = vmatmul.mubr.bf16.gmra.mrb[0].mxu0 %v1088
        %v1180 = vpop.f32.mrb[0].mxu0
        %v1181 = vadd.f32 0.0, %v1180
        %v1182 = vpop.f32.mrb[0].mxu0
        %v1183 = vadd.f32 0.0, %v1182
        %v1184 = vpop.f32.mrb[0].mxu0
        %v1185 = vadd.f32 0.0, %v1184
        %v1186 = vpop.f32.mrb[0].mxu0
        %v1187 = vadd.f32 0.0, %v1186
        %1188 = vmatprep.mubr.bf16.mxu0 0
        %1189 = vmatmul.mubr.bf16.gmra.mrb[0].mxu0 %v1091
        %v1190 = vpop.f32.mrb[0].mxu0
        %v1191 = vadd.f32 0.0, %v1190
        %v1192 = vpop.f32.mrb[0].mxu0
        %v1193 = vadd.f32 0.0, %v1192
        %v1194 = vpop.f32.mrb[0].mxu0
        %v1195 = vadd.f32 0.0, %v1194
        %v1196 = vpop.f32.mrb[0].mxu0
        %v1197 = vadd.f32 0.0, %v1196
        %1198 = vmatprep.mubr.bf16.mxu0 0
        %1199 = vmatmul.mubr.bf16.gmra.mrb[0].mxu0 %v1094
        %v1200 = vpop.f32.mrb[0].mxu0
        %v1201 = vadd.f32 0.0, %v1200
        %v1202 = vpop.f32.mrb[0].mxu0
        %v1203 = vadd.f32 0.0, %v1202
        %v1204 = vpop.f32.mrb[0].mxu0
        %v1205 = vadd.f32 0.0, %v1204
        %v1206 = vpop.f32.mrb[0].mxu0
        %v1207 = vadd.f32 0.0, %v1206
        %1208 = vdwg.mxu0
        %1209 = vmatprep.subr.bf16.mxu0 %v1016
        %1210 = vmatpush1.bf16.msra.mxu0 %v1015
        %1211 = vmatprep.subr.bf16.mxu0 0
        %1212 = vmatpush1.bf16.msra.mxu0 0
        %1213 = vmatprep.subr.bf16.mxu0 0
        %1214 = vmatpush1.bf16.msra.mxu0 0
        %1215 = vmatprep.subr.bf16.mxu0 0
        %1216 = vmatpush1.bf16.msra.mxu0 0
        %1217 = vmatprep.subr.bf16.mxu0 0
        %1218 = vmatpush1.bf16.msra.mxu0 0
        %1219 = vmatprep.subr.bf16.mxu0 0
        %1220 = vmatpush1.bf16.msra.mxu0 0
        %1221 = vmatprep.subr.bf16.mxu0 0
        %1222 = vmatpush1.bf16.msra.mxu0 0
        %1223 = vmatprep.subr.bf16.mxu0 0
        %1224 = vmatpush1.bf16.msra.mxu0 0
        %1225 = vmatprep.subr.bf16.mxu0 0
        %1226 = vmatpush1.bf16.msra.mxu0 0
        %1227 = vmatprep.subr.bf16.mxu0 0
        %1228 = vmatpush1.bf16.msra.mxu0 0
        %1229 = vmatprep.subr.bf16.mxu0 0
        %1230 = vmatpush1.bf16.msra.mxu0 0
        %1231 = vmatprep.subr.bf16.mxu0 0
        %1232 = vmatpush1.bf16.msra.mxu0 0
        %1233 = vmatprep.subr.bf16.mxu0 0
        %1234 = vmatpush1.bf16.msra.mxu0 0
        %1235 = vmatprep.subr.bf16.mxu0 0
        %1236 = vmatpush1.bf16.msra.mxu0 0
        %1237 = vmatprep.subr.bf16.mxu0 0
        %1238 = vmatpush1.bf16.msra.mxu0 0
        %1239 = vmatprep.subr.bf16.mxu0 0
        %1240 = vmatpush1.bf16.msra.mxu0 0
        %1241 = vmatprep.mubr.bf16.mxu0 0
        %1242 = vmatmul.mubr.bf16.gmra.mrb[0].mxu0 %v1073
        %v1243 = vpop.f32.mrb[0].mxu0
        %v1244 = vadd.f32 0.0, %v1243
        %v1245 = vpop.f32.mrb[0].mxu0
        %v1246 = vadd.f32 0.0, %v1245
        %v1247 = vpop.f32.mrb[0].mxu0
        %v1248 = vadd.f32 0.0, %v1247
        %v1249 = vpop.f32.mrb[0].mxu0
        %v1250 = vadd.f32 0.0, %v1249
        %1251 = vmatprep.mubr.bf16.mxu0 0
        %1252 = vmatmul.mubr.bf16.gmra.mrb[0].mxu0 %v1076
        %v1253 = vpop.f32.mrb[0].mxu0
        %v1254 = vadd.f32 0.0, %v1253
        %v1255 = vpop.f32.mrb[0].mxu0
        %v1256 = vadd.f32 0.0, %v1255
        %v1257 = vpop.f32.mrb[0].mxu0
        %v1258 = vadd.f32 0.0, %v1257
        %v1259 = vpop.f32.mrb[0].mxu0
        %v1260 = vadd.f32 0.0, %v1259
        %1261 = vmatprep.mubr.bf16.mxu0 0
        %1262 = vmatmul.mubr.bf16.gmra.mrb[0].mxu0 %v1079
        %v1263 = vpop.f32.mrb[0].mxu0
        %v1264 = vadd.f32 0.0, %v1263
        %v1265 = vpop.f32.mrb[0].mxu0
        %v1266 = vadd.f32 0.0, %v1265
        %v1267 = vpop.f32.mrb[0].mxu0
        %v1268 = vadd.f32 0.0, %v1267
        %v1269 = vpop.f32.mrb[0].mxu0
        %v1270 = vadd.f32 0.0, %v1269
        %1271 = vmatprep.mubr.bf16.mxu0 0
        %1272 = vmatmul.mubr.bf16.gmra.mrb[0].mxu0 %v1082
        %v1273 = vpop.f32.mrb[0].mxu0
        %v1274 = vadd.f32 0.0, %v1273
        %v1275 = vpop.f32.mrb[0].mxu0
        %v1276 = vadd.f32 0.0, %v1275
        %v1277 = vpop.f32.mrb[0].mxu0
        %v1278 = vadd.f32 0.0, %v1277
        %v1279 = vpop.f32.mrb[0].mxu0
        %v1280 = vadd.f32 0.0, %v1279
        %1281 = vmatprep.mubr.bf16.mxu0 0
        %1282 = vmatmul.mubr.bf16.gmra.mrb[0].mxu0 %v1085
        %v1283 = vpop.f32.mrb[0].mxu0
        %v1284 = vadd.f32 0.0, %v1283
        %v1285 = vpop.f32.mrb[0].mxu0
        %v1286 = vadd.f32 0.0, %v1285
        %v1287 = vpop.f32.mrb[0].mxu0
        %v1288 = vadd.f32 0.0, %v1287
        %v1289 = vpop.f32.mrb[0].mxu0
        %v1290 = vadd.f32 0.0, %v1289
        %1291 = vmatprep.mubr.bf16.mxu0 0
        %1292 = vmatmul.mubr.bf16.gmra.mrb[0].mxu0 %v1088
        %v1293 = vpop.f32.mrb[0].mxu0
        %v1294 = vadd.f32 0.0, %v1293
        %v1295 = vpop.f32.mrb[0].mxu0
        %v1296 = vadd.f32 0.0, %v1295
        %v1297 = vpop.f32.mrb[0].mxu0
        %v1298 = vadd.f32 0.0, %v1297
        %v1299 = vpop.f32.mrb[0].mxu0
        %v1300 = vadd.f32 0.0, %v1299
        %1301 = vmatprep.mubr.bf16.mxu0 0
        %1302 = vmatmul.mubr.bf16.gmra.mrb[0].mxu0 %v1091
        %v1303 = vpop.f32.mrb[0].mxu0
        %v1304 = vadd.f32 0.0, %v1303
        %v1305 = vpop.f32.mrb[0].mxu0
        %v1306 = vadd.f32 0.0, %v1305
        %v1307 = vpop.f32.mrb[0].mxu0
        %v1308 = vadd.f32 0.0, %v1307
        %v1309 = vpop.f32.mrb[0].mxu0
        %v1310 = vadd.f32 0.0, %v1309
        %1311 = vmatprep.mubr.bf16.mxu0 0
        %1312 = vmatmul.mubr.bf16.gmra.mrb[0].mxu0 %v1094
        %v1313 = vpop.f32.mrb[0].mxu0
        %v1314 = vadd.f32 0.0, %v1313
        %v1315 = vpop.f32.mrb[0].mxu0
        %v1316 = vadd.f32 0.0, %v1315
        %v1317 = vpop.f32.mrb[0].mxu0
        %v1318 = vadd.f32 0.0, %v1317
        %v1319 = vpop.f32.mrb[0].mxu0
        %v1320 = vadd.f32 0.0, %v1319
        %1321 = vdwg.mxu0
        %1322 = vmatprep.subr.bf16.mxu0 %v1018
        %1323 = vmatpush1.bf16.msra.mxu0 %v1017
        %1324 = vmatprep.subr.bf16.mxu0 0
        %1325 = vmatpush1.bf16.msra.mxu0 0
        %1326 = vmatprep.subr.bf16.mxu0 0
        %1327 = vmatpush1.bf16.msra.mxu0 0
        %1328 = vmatprep.subr.bf16.mxu0 0
        %1329 = vmatpush1.bf16.msra.mxu0 0
        %1330 = vmatprep.subr.bf16.mxu0 0
        %1331 = vmatpush1.bf16.msra.mxu0 0
        %1332 = vmatprep.subr.bf16.mxu0 0
        %1333 = vmatpush1.bf16.msra.mxu0 0
        %1334 = vmatprep.subr.bf16.mxu0 0
        %1335 = vmatpush1.bf16.msra.mxu0 0
        %1336 = vmatprep.subr.bf16.mxu0 0
        %1337 = vmatpush1.bf16.msra.mxu0 0
        %1338 = vmatprep.subr.bf16.mxu0 0
        %1339 = vmatpush1.bf16.msra.mxu0 0
        %1340 = vmatprep.subr.bf16.mxu0 0
        %1341 = vmatpush1.bf16.msra.mxu0 0
        %1342 = vmatprep.subr.bf16.mxu0 0
        %1343 = vmatpush1.bf16.msra.mxu0 0
        %1344 = vmatprep.subr.bf16.mxu0 0
        %1345 = vmatpush1.bf16.msra.mxu0 0
        %1346 = vmatprep.subr.bf16.mxu0 0
        %1347 = vmatpush1.bf16.msra.mxu0 0
        %1348 = vmatprep.subr.bf16.mxu0 0
        %1349 = vmatpush1.bf16.msra.mxu0 0
        %1350 = vmatprep.subr.bf16.mxu0 0
        %1351 = vmatpush1.bf16.msra.mxu0 0
        %1352 = vmatprep.subr.bf16.mxu0 0
        %1353 = vmatpush1.bf16.msra.mxu0 0
        %1354 = vmatprep.mubr.bf16.mxu0 0
        %1355 = vmatmul.mubr.bf16.gmra.mrb[0].mxu0 %v1073
        %v1356 = vpop.f32.mrb[0].mxu0
        %v1357 = vadd.f32 0.0, %v1356
        %v1358 = vpop.f32.mrb[0].mxu0
        %v1359 = vadd.f32 0.0, %v1358
        %v1360 = vpop.f32.mrb[0].mxu0
        %v1361 = vadd.f32 0.0, %v1360
        %v1362 = vpop.f32.mrb[0].mxu0
        %v1363 = vadd.f32 0.0, %v1362
        %1364 = vmatprep.mubr.bf16.mxu0 0
        %1365 = vmatmul.mubr.bf16.gmra.mrb[0].mxu0 %v1076
        %v1366 = vpop.f32.mrb[0].mxu0
        %v1367 = vadd.f32 0.0, %v1366
        %v1368 = vpop.f32.mrb[0].mxu0
        %v1369 = vadd.f32 0.0, %v1368
        %v1370 = vpop.f32.mrb[0].mxu0
        %v1371 = vadd.f32 0.0, %v1370
        %v1372 = vpop.f32.mrb[0].mxu0
        %v1373 = vadd.f32 0.0, %v1372
        %1374 = vmatprep.mubr.bf16.mxu0 0
        %1375 = vmatmul.mubr.bf16.gmra.mrb[0].mxu0 %v1079
        %v1376 = vpop.f32.mrb[0].mxu0
        %v1377 = vadd.f32 0.0, %v1376
        %v1378 = vpop.f32.mrb[0].mxu0
        %v1379 = vadd.f32 0.0, %v1378
        %v1380 = vpop.f32.mrb[0].mxu0
        %v1381 = vadd.f32 0.0, %v1380
        %v1382 = vpop.f32.mrb[0].mxu0
        %v1383 = vadd.f32 0.0, %v1382
        %1384 = vmatprep.mubr.bf16.mxu0 0
        %1385 = vmatmul.mubr.bf16.gmra.mrb[0].mxu0 %v1082
        %v1386 = vpop.f32.mrb[0].mxu0
        %v1387 = vadd.f32 0.0, %v1386
        %v1388 = vpop.f32.mrb[0].mxu0
        %v1389 = vadd.f32 0.0, %v1388
        %v1390 = vpop.f32.mrb[0].mxu0
        %v1391 = vadd.f32 0.0, %v1390
        %v1392 = vpop.f32.mrb[0].mxu0
        %v1393 = vadd.f32 0.0, %v1392
        %1394 = vmatprep.mubr.bf16.mxu0 0
        %1395 = vmatmul.mubr.bf16.gmra.mrb[0].mxu0 %v1085
        %v1396 = vpop.f32.mrb[0].mxu0
        %v1397 = vadd.f32 0.0, %v1396
        %v1398 = vpop.f32.mrb[0].mxu0
        %v1399 = vadd.f32 0.0, %v1398
        %v1400 = vpop.f32.mrb[0].mxu0
        %v1401 = vadd.f32 0.0, %v1400
        %v1402 = vpop.f32.mrb[0].mxu0
        %v1403 = vadd.f32 0.0, %v1402
        %1404 = vmatprep.mubr.bf16.mxu0 0
        %1405 = vmatmul.mubr.bf16.gmra.mrb[0].mxu0 %v1088
        %v1406 = vpop.f32.mrb[0].mxu0
        %v1407 = vadd.f32 0.0, %v1406
        %v1408 = vpop.f32.mrb[0].mxu0
        %v1409 = vadd.f32 0.0, %v1408
        %v1410 = vpop.f32.mrb[0].mxu0
        %v1411 = vadd.f32 0.0, %v1410
        %v1412 = vpop.f32.mrb[0].mxu0
        %v1413 = vadd.f32 0.0, %v1412
        %1414 = vmatprep.mubr.bf16.mxu0 0
        %1415 = vmatmul.mubr.bf16.gmra.mrb[0].mxu0 %v1091
        %v1416 = vpop.f32.mrb[0].mxu0
        %v1417 = vadd.f32 0.0, %v1416
        %v1418 = vpop.f32.mrb[0].mxu0
        %v1419 = vadd.f32 0.0, %v1418
        %v1420 = vpop.f32.mrb[0].mxu0
        %v1421 = vadd.f32 0.0, %v1420
        %v1422 = vpop.f32.mrb[0].mxu0
        %v1423 = vadd.f32 0.0, %v1422
        %1424 = vmatprep.mubr.bf16.mxu0 0
        %1425 = vmatmul.mubr.bf16.gmra.mrb[0].mxu0 %v1094
        %v1426 = vpop.f32.mrb[0].mxu0
        %v1427 = vadd.f32 0.0, %v1426
        %v1428 = vpop.f32.mrb[0].mxu0
        %v1429 = vadd.f32 0.0, %v1428
        %v1430 = vpop.f32.mrb[0].mxu0
        %v1431 = vadd.f32 0.0, %v1430
        %v1432 = vpop.f32.mrb[0].mxu0
        %v1433 = vadd.f32 0.0, %v1432
        %1434 = vdwg.mxu0
        %1435 = vmatprep.subr.bf16.mxu0 %v1020
        %1436 = vmatpush1.bf16.msra.mxu0 %v1019
        %1437 = vmatprep.subr.bf16.mxu0 0
        %1438 = vmatpush1.bf16.msra.mxu0 0
        %1439 = vmatprep.subr.bf16.mxu0 0
        %1440 = vmatpush1.bf16.msra.mxu0 0
        %1441 = vmatprep.subr.bf16.mxu0 0
        %1442 = vmatpush1.bf16.msra.mxu0 0
        %1443 = vmatprep.subr.bf16.mxu0 0
        %1444 = vmatpush1.bf16.msra.mxu0 0
        %1445 = vmatprep.subr.bf16.mxu0 0
        %1446 = vmatpush1.bf16.msra.mxu0 0
        %1447 = vmatprep.subr.bf16.mxu0 0
        %1448 = vmatpush1.bf16.msra.mxu0 0
        %1449 = vmatprep.subr.bf16.mxu0 0
        %1450 = vmatpush1.bf16.msra.mxu0 0
        %1451 = vmatprep.subr.bf16.mxu0 0
        %1452 = vmatpush1.bf16.msra.mxu0 0
        %1453 = vmatprep.subr.bf16.mxu0 0
        %1454 = vmatpush1.bf16.msra.mxu0 0
        %1455 = vmatprep.subr.bf16.mxu0 0
        %1456 = vmatpush1.bf16.msra.mxu0 0
        %1457 = vmatprep.subr.bf16.mxu0 0
        %1458 = vmatpush1.bf16.msra.mxu0 0
        %1459 = vmatprep.subr.bf16.mxu0 0
        %1460 = vmatpush1.bf16.msra.mxu0 0
        %1461 = vmatprep.subr.bf16.mxu0 0
        %1462 = vmatpush1.bf16.msra.mxu0 0
        %1463 = vmatprep.subr.bf16.mxu0 0
        %1464 = vmatpush1.bf16.msra.mxu0 0
        %1465 = vmatprep.subr.bf16.mxu0 0
        %1466 = vmatpush1.bf16.msra.mxu0 0
        %1467 = vmatprep.mubr.bf16.mxu0 0
        %1468 = vmatmul.mubr.bf16.gmra.mrb[0].mxu0 %v1073
        %v1469 = vpop.f32.mrb[0].mxu0
        %v1470 = vadd.f32 0.0, %v1469
        %v1471 = vpop.f32.mrb[0].mxu0
        %v1472 = vadd.f32 0.0, %v1471
        %v1473 = vpop.f32.mrb[0].mxu0
        %v1474 = vadd.f32 0.0, %v1473
        %v1475 = vpop.f32.mrb[0].mxu0
        %v1476 = vadd.f32 0.0, %v1475
        %1477 = vmatprep.mubr.bf16.mxu0 0
        %1478 = vmatmul.mubr.bf16.gmra.mrb[0].mxu0 %v1076
        %v1479 = vpop.f32.mrb[0].mxu0
        %v1480 = vadd.f32 0.0, %v1479
        %v1481 = vpop.f32.mrb[0].mxu0
        %v1482 = vadd.f32 0.0, %v1481
        %v1483 = vpop.f32.mrb[0].mxu0
        %v1484 = vadd.f32 0.0, %v1483
        %v1485 = vpop.f32.mrb[0].mxu0
        %v1486 = vadd.f32 0.0, %v1485
        %1487 = vmatprep.mubr.bf16.mxu0 0
        %1488 = vmatmul.mubr.bf16.gmra.mrb[0].mxu0 %v1079
        %v1489 = vpop.f32.mrb[0].mxu0
        %v1490 = vadd.f32 0.0, %v1489
        %v1491 = vpop.f32.mrb[0].mxu0
        %v1492 = vadd.f32 0.0, %v1491
        %v1493 = vpop.f32.mrb[0].mxu0
        %v1494 = vadd.f32 0.0, %v1493
        %v1495 = vpop.f32.mrb[0].mxu0
        %v1496 = vadd.f32 0.0, %v1495
        %1497 = vmatprep.mubr.bf16.mxu0 0
        %1498 = vmatmul.mubr.bf16.gmra.mrb[0].mxu0 %v1082
        %v1499 = vpop.f32.mrb[0].mxu0
        %v1500 = vadd.f32 0.0, %v1499
        %v1501 = vpop.f32.mrb[0].mxu0
        %v1502 = vadd.f32 0.0, %v1501
        %v1503 = vpop.f32.mrb[0].mxu0
        %v1504 = vadd.f32 0.0, %v1503
        %v1505 = vpop.f32.mrb[0].mxu0
        %v1506 = vadd.f32 0.0, %v1505
        %1507 = vmatprep.mubr.bf16.mxu0 0
        %1508 = vmatmul.mubr.bf16.gmra.mrb[0].mxu0 %v1085
        %v1509 = vpop.f32.mrb[0].mxu0
        %v1510 = vadd.f32 0.0, %v1509
        %v1511 = vpop.f32.mrb[0].mxu0
        %v1512 = vadd.f32 0.0, %v1511
        %v1513 = vpop.f32.mrb[0].mxu0
        %v1514 = vadd.f32 0.0, %v1513
        %v1515 = vpop.f32.mrb[0].mxu0
        %v1516 = vadd.f32 0.0, %v1515
        %1517 = vmatprep.mubr.bf16.mxu0 0
        %1518 = vmatmul.mubr.bf16.gmra.mrb[0].mxu0 %v1088
        %v1519 = vpop.f32.mrb[0].mxu0
        %v1520 = vadd.f32 0.0, %v1519
        %v1521 = vpop.f32.mrb[0].mxu0
        %v1522 = vadd.f32 0.0, %v1521
        %v1523 = vpop.f32.mrb[0].mxu0
        %v1524 = vadd.f32 0.0, %v1523
        %v1525 = vpop.f32.mrb[0].mxu0
        %v1526 = vadd.f32 0.0, %v1525
        %1527 = vmatprep.mubr.bf16.mxu0 0
        %1528 = vmatmul.mubr.bf16.gmra.mrb[0].mxu0 %v1091
        %v1529 = vpop.f32.mrb[0].mxu0
        %v1530 = vadd.f32 0.0, %v1529
        %v1531 = vpop.f32.mrb[0].mxu0
        %v1532 = vadd.f32 0.0, %v1531
        %v1533 = vpop.f32.mrb[0].mxu0
        %v1534 = vadd.f32 0.0, %v1533
        %v1535 = vpop.f32.mrb[0].mxu0
        %v1536 = vadd.f32 0.0, %v1535
        %1537 = vmatprep.mubr.bf16.mxu0 0
        %1538 = vmatmul.mubr.bf16.gmra.mrb[0].mxu0 %v1094
        %v1539 = vpop.f32.mrb[0].mxu0
        %v1540 = vadd.f32 0.0, %v1539
        %v1541 = vpop.f32.mrb[0].mxu0
        %v1542 = vadd.f32 0.0, %v1541
        %v1543 = vpop.f32.mrb[0].mxu0
        %v1544 = vadd.f32 0.0, %v1543
        %v1545 = vpop.f32.mrb[0].mxu0
        %v1546 = vadd.f32 0.0, %v1545
        %1547 = vdwg.mxu0
        %1548 = vmatprep.subr.bf16.mxu0 %v1022
        %1549 = vmatpush1.bf16.msra.mxu0 %v1021
        %1550 = vmatprep.subr.bf16.mxu0 0
        %1551 = vmatpush1.bf16.msra.mxu0 0
        %1552 = vmatprep.subr.bf16.mxu0 0
        %1553 = vmatpush1.bf16.msra.mxu0 0
        %1554 = vmatprep.subr.bf16.mxu0 0
        %1555 = vmatpush1.bf16.msra.mxu0 0
        %1556 = vmatprep.subr.bf16.mxu0 0
        %1557 = vmatpush1.bf16.msra.mxu0 0
        %1558 = vmatprep.subr.bf16.mxu0 0
        %1559 = vmatpush1.bf16.msra.mxu0 0
        %1560 = vmatprep.subr.bf16.mxu0 0
        %1561 = vmatpush1.bf16.msra.mxu0 0
        %1562 = vmatprep.subr.bf16.mxu0 0
        %1563 = vmatpush1.bf16.msra.mxu0 0
        %1564 = vmatprep.subr.bf16.mxu0 0
        %1565 = vmatpush1.bf16.msra.mxu0 0
        %1566 = vmatprep.subr.bf16.mxu0 0
        %1567 = vmatpush1.bf16.msra.mxu0 0
        %1568 = vmatprep.subr.bf16.mxu0 0
        %1569 = vmatpush1.bf16.msra.mxu0 0
        %1570 = vmatprep.subr.bf16.mxu0 0
        %1571 = vmatpush1.bf16.msra.mxu0 0
        %1572 = vmatprep.subr.bf16.mxu0 0
        %1573 = vmatpush1.bf16.msra.mxu0 0
        %1574 = vmatprep.subr.bf16.mxu0 0
        %1575 = vmatpush1.bf16.msra.mxu0 0
        %1576 = vmatprep.subr.bf16.mxu0 0
        %1577 = vmatpush1.bf16.msra.mxu0 0
        %1578 = vmatprep.subr.bf16.mxu0 0
        %1579 = vmatpush1.bf16.msra.mxu0 0
        %1580 = vmatprep.mubr.bf16.mxu0 0
        %1581 = vmatmul.mubr.bf16.gmra.mrb[0].mxu0 %v1073
        %v1582 = vpop.f32.mrb[0].mxu0
        %v1583 = vadd.f32 0.0, %v1582
        %v1584 = vpop.f32.mrb[0].mxu0
        %v1585 = vadd.f32 0.0, %v1584
        %v1586 = vpop.f32.mrb[0].mxu0
        %v1587 = vadd.f32 0.0, %v1586
        %v1588 = vpop.f32.mrb[0].mxu0
        %v1589 = vadd.f32 0.0, %v1588
        %1590 = vmatprep.mubr.bf16.mxu0 0
        %1591 = vmatmul.mubr.bf16.gmra.mrb[0].mxu0 %v1076
        %v1592 = vpop.f32.mrb[0].mxu0
        %v1593 = vadd.f32 0.0, %v1592
        %v1594 = vpop.f32.mrb[0].mxu0
        %v1595 = vadd.f32 0.0, %v1594
        %v1596 = vpop.f32.mrb[0].mxu0
        %v1597 = vadd.f32 0.0, %v1596
        %v1598 = vpop.f32.mrb[0].mxu0
        %v1599 = vadd.f32 0.0, %v1598
        %1600 = vmatprep.mubr.bf16.mxu0 0
        %1601 = vmatmul.mubr.bf16.gmra.mrb[0].mxu0 %v1079
        %v1602 = vpop.f32.mrb[0].mxu0
        %v1603 = vadd.f32 0.0, %v1602
        %v1604 = vpop.f32.mrb[0].mxu0
        %v1605 = vadd.f32 0.0, %v1604
        %v1606 = vpop.f32.mrb[0].mxu0
        %v1607 = vadd.f32 0.0, %v1606
        %v1608 = vpop.f32.mrb[0].mxu0
        %v1609 = vadd.f32 0.0, %v1608
        %1610 = vmatprep.mubr.bf16.mxu0 0
        %1611 = vmatmul.mubr.bf16.gmra.mrb[0].mxu0 %v1082
        %v1612 = vpop.f32.mrb[0].mxu0
        %v1613 = vadd.f32 0.0, %v1612
        %v1614 = vpop.f32.mrb[0].mxu0
        %v1615 = vadd.f32 0.0, %v1614
        %v1616 = vpop.f32.mrb[0].mxu0
        %v1617 = vadd.f32 0.0, %v1616
        %v1618 = vpop.f32.mrb[0].mxu0
        %v1619 = vadd.f32 0.0, %v1618
        %1620 = vmatprep.mubr.bf16.mxu0 0
        %1621 = vmatmul.mubr.bf16.gmra.mrb[0].mxu0 %v1085
        %v1622 = vpop.f32.mrb[0].mxu0
        %v1623 = vadd.f32 0.0, %v1622
        %v1624 = vpop.f32.mrb[0].mxu0
        %v1625 = vadd.f32 0.0, %v1624
        %v1626 = vpop.f32.mrb[0].mxu0
        %v1627 = vadd.f32 0.0, %v1626
        %v1628 = vpop.f32.mrb[0].mxu0
        %v1629 = vadd.f32 0.0, %v1628
        %1630 = vmatprep.mubr.bf16.mxu0 0
        %1631 = vmatmul.mubr.bf16.gmra.mrb[0].mxu0 %v1088
        %v1632 = vpop.f32.mrb[0].mxu0
        %v1633 = vadd.f32 0.0, %v1632
        %v1634 = vpop.f32.mrb[0].mxu0
        %v1635 = vadd.f32 0.0, %v1634
        %v1636 = vpop.f32.mrb[0].mxu0
        %v1637 = vadd.f32 0.0, %v1636
        %v1638 = vpop.f32.mrb[0].mxu0
        %v1639 = vadd.f32 0.0, %v1638
        %1640 = vmatprep.mubr.bf16.mxu0 0
        %1641 = vmatmul.mubr.bf16.gmra.mrb[0].mxu0 %v1091
        %v1642 = vpop.f32.mrb[0].mxu0
        %v1643 = vadd.f32 0.0, %v1642
        %v1644 = vpop.f32.mrb[0].mxu0
        %v1645 = vadd.f32 0.0, %v1644
        %v1646 = vpop.f32.mrb[0].mxu0
        %v1647 = vadd.f32 0.0, %v1646
        %v1648 = vpop.f32.mrb[0].mxu0
        %v1649 = vadd.f32 0.0, %v1648
        %1650 = vmatprep.mubr.bf16.mxu0 0
        %1651 = vmatmul.mubr.bf16.gmra.mrb[0].mxu0 %v1094
        %v1652 = vpop.f32.mrb[0].mxu0
        %v1653 = vadd.f32 0.0, %v1652
        %v1654 = vpop.f32.mrb[0].mxu0
        %v1655 = vadd.f32 0.0, %v1654
        %v1656 = vpop.f32.mrb[0].mxu0
        %v1657 = vadd.f32 0.0, %v1656
        %v1658 = vpop.f32.mrb[0].mxu0
        %v1659 = vadd.f32 0.0, %v1658
        %1660 = vdwg.mxu0
        %1661 = vmatprep.subr.bf16.mxu0 %v1024
        %1662 = vmatpush1.bf16.msra.mxu0 %v1023
        %1663 = vmatprep.subr.bf16.mxu0 0
        %1664 = vmatpush1.bf16.msra.mxu0 0
        %1665 = vmatprep.subr.bf16.mxu0 0
        %1666 = vmatpush1.bf16.msra.mxu0 0
        %1667 = vmatprep.subr.bf16.mxu0 0
        %1668 = vmatpush1.bf16.msra.mxu0 0
        %1669 = vmatprep.subr.bf16.mxu0 0
        %1670 = vmatpush1.bf16.msra.mxu0 0
        %1671 = vmatprep.subr.bf16.mxu0 0
        %1672 = vmatpush1.bf16.msra.mxu0 0
        %1673 = vmatprep.subr.bf16.mxu0 0
        %1674 = vmatpush1.bf16.msra.mxu0 0
        %1675 = vmatprep.subr.bf16.mxu0 0
        %1676 = vmatpush1.bf16.msra.mxu0 0
        %1677 = vmatprep.subr.bf16.mxu0 0
        %1678 = vmatpush1.bf16.msra.mxu0 0
        %1679 = vmatprep.subr.bf16.mxu0 0
        %1680 = vmatpush1.bf16.msra.mxu0 0
        %1681 = vmatprep.subr.bf16.mxu0 0
        %1682 = vmatpush1.bf16.msra.mxu0 0
        %1683 = vmatprep.subr.bf16.mxu0 0
        %1684 = vmatpush1.bf16.msra.mxu0 0
        %1685 = vmatprep.subr.bf16.mxu0 0
        %1686 = vmatpush1.bf16.msra.mxu0 0
        %1687 = vmatprep.subr.bf16.mxu0 0
        %1688 = vmatpush1.bf16.msra.mxu0 0
        %1689 = vmatprep.subr.bf16.mxu0 0
        %1690 = vmatpush1.bf16.msra.mxu0 0
        %1691 = vmatprep.subr.bf16.mxu0 0
        %1692 = vmatpush1.bf16.msra.mxu0 0
        %1693 = vmatprep.mubr.bf16.mxu0 0
        %1694 = vmatmul.mubr.bf16.gmra.mrb[0].mxu0 %v1073
        %v1695 = vpop.f32.mrb[0].mxu0
        %v1696 = vadd.f32 0.0, %v1695
        %v1697 = vpop.f32.mrb[0].mxu0
        %v1698 = vadd.f32 0.0, %v1697
        %v1699 = vpop.f32.mrb[0].mxu0
        %v1700 = vadd.f32 0.0, %v1699
        %v1701 = vpop.f32.mrb[0].mxu0
        %v1702 = vadd.f32 0.0, %v1701
        %1703 = vmatprep.mubr.bf16.mxu0 0
        %1704 = vmatmul.mubr.bf16.gmra.mrb[0].mxu0 %v1076
        %v1705 = vpop.f32.mrb[0].mxu0
        %v1706 = vadd.f32 0.0, %v1705
        %v1707 = vpop.f32.mrb[0].mxu0
        %v1708 = vadd.f32 0.0, %v1707
        %v1709 = vpop.f32.mrb[0].mxu0
        %v1710 = vadd.f32 0.0, %v1709
        %v1711 = vpop.f32.mrb[0].mxu0
        %v1712 = vadd.f32 0.0, %v1711
        %1713 = vmatprep.mubr.bf16.mxu0 0
        %1714 = vmatmul.mubr.bf16.gmra.mrb[0].mxu0 %v1079
        %v1715 = vpop.f32.mrb[0].mxu0
        %v1716 = vadd.f32 0.0, %v1715
        %v1717 = vpop.f32.mrb[0].mxu0
        %v1718 = vadd.f32 0.0, %v1717
        %v1719 = vpop.f32.mrb[0].mxu0
        %v1720 = vadd.f32 0.0, %v1719
        %v1721 = vpop.f32.mrb[0].mxu0
        %v1722 = vadd.f32 0.0, %v1721
        %1723 = vmatprep.mubr.bf16.mxu0 0
        %1724 = vmatmul.mubr.bf16.gmra.mrb[0].mxu0 %v1082
        %v1725 = vpop.f32.mrb[0].mxu0
        %v1726 = vadd.f32 0.0, %v1725
        %v1727 = vpop.f32.mrb[0].mxu0
        %v1728 = vadd.f32 0.0, %v1727
        %v1729 = vpop.f32.mrb[0].mxu0
        %v1730 = vadd.f32 0.0, %v1729
        %v1731 = vpop.f32.mrb[0].mxu0
        %v1732 = vadd.f32 0.0, %v1731
        %1733 = vmatprep.mubr.bf16.mxu0 0
        %1734 = vmatmul.mubr.bf16.gmra.mrb[0].mxu0 %v1085
        %v1735 = vpop.f32.mrb[0].mxu0
        %v1736 = vadd.f32 0.0, %v1735
        %v1737 = vpop.f32.mrb[0].mxu0
        %v1738 = vadd.f32 0.0, %v1737
        %v1739 = vpop.f32.mrb[0].mxu0
        %v1740 = vadd.f32 0.0, %v1739
        %v1741 = vpop.f32.mrb[0].mxu0
        %v1742 = vadd.f32 0.0, %v1741
        %1743 = vmatprep.mubr.bf16.mxu0 0
        %1744 = vmatmul.mubr.bf16.gmra.mrb[0].mxu0 %v1088
        %v1745 = vpop.f32.mrb[0].mxu0
        %v1746 = vadd.f32 0.0, %v1745
        %v1747 = vpop.f32.mrb[0].mxu0
        %v1748 = vadd.f32 0.0, %v1747
        %v1749 = vpop.f32.mrb[0].mxu0
        %v1750 = vadd.f32 0.0, %v1749
        %v1751 = vpop.f32.mrb[0].mxu0
        %v1752 = vadd.f32 0.0, %v1751
        %1753 = vmatprep.mubr.bf16.mxu0 0
        %1754 = vmatmul.mubr.bf16.gmra.mrb[0].mxu0 %v1091
        %v1755 = vpop.f32.mrb[0].mxu0
        %v1756 = vadd.f32 0.0, %v1755
        %v1757 = vpop.f32.mrb[0].mxu0
        %v1758 = vadd.f32 0.0, %v1757
        %v1759 = vpop.f32.mrb[0].mxu0
        %v1760 = vadd.f32 0.0, %v1759
        %v1761 = vpop.f32.mrb[0].mxu0
        %v1762 = vadd.f32 0.0, %v1761
        %1763 = vmatprep.mubr.bf16.mxu0 0
        %1764 = vmatmul.mubr.bf16.gmra.mrb[0].mxu0 %v1094
        %v1765 = vpop.f32.mrb[0].mxu0
        %v1766 = vadd.f32 0.0, %v1765
        %v1767 = vpop.f32.mrb[0].mxu0
        %v1768 = vadd.f32 0.0, %v1767
        %v1769 = vpop.f32.mrb[0].mxu0
        %v1770 = vadd.f32 0.0, %v1769
        %v1771 = vpop.f32.mrb[0].mxu0
        %v1772 = vadd.f32 0.0, %v1771
        %1773 = vdwg.mxu0
        %1774 = vmatprep.subr.bf16.mxu0 %v1026
        %1775 = vmatpush1.bf16.msra.mxu0 %v1025
        %1776 = vmatprep.subr.bf16.mxu0 0
        %1777 = vmatpush1.bf16.msra.mxu0 0
        %1778 = vmatprep.subr.bf16.mxu0 0
        %1779 = vmatpush1.bf16.msra.mxu0 0
        %1780 = vmatprep.subr.bf16.mxu0 0
        %1781 = vmatpush1.bf16.msra.mxu0 0
        %1782 = vmatprep.subr.bf16.mxu0 0
        %1783 = vmatpush1.bf16.msra.mxu0 0
        %1784 = vmatprep.subr.bf16.mxu0 0
        %1785 = vmatpush1.bf16.msra.mxu0 0
        %1786 = vmatprep.subr.bf16.mxu0 0
        %1787 = vmatpush1.bf16.msra.mxu0 0
        %1788 = vmatprep.subr.bf16.mxu0 0
        %1789 = vmatpush1.bf16.msra.mxu0 0
        %1790 = vmatprep.subr.bf16.mxu0 0
        %1791 = vmatpush1.bf16.msra.mxu0 0
        %1792 = vmatprep.subr.bf16.mxu0 0
        %1793 = vmatpush1.bf16.msra.mxu0 0
        %1794 = vmatprep.subr.bf16.mxu0 0
        %1795 = vmatpush1.bf16.msra.mxu0 0
        %1796 = vmatprep.subr.bf16.mxu0 0
        %1797 = vmatpush1.bf16.msra.mxu0 0
        %1798 = vmatprep.subr.bf16.mxu0 0
        %1799 = vmatpush1.bf16.msra.mxu0 0
        %1800 = vmatprep.subr.bf16.mxu0 0
        %1801 = vmatpush1.bf16.msra.mxu0 0
        %1802 = vmatprep.subr.bf16.mxu0 0
        %1803 = vmatpush1.bf16.msra.mxu0 0
        %1804 = vmatprep.subr.bf16.mxu0 0
        %1805 = vmatpush1.bf16.msra.mxu0 0
        %1806 = vmatprep.mubr.bf16.mxu0 0
        %1807 = vmatmul.mubr.bf16.gmra.mrb[0].mxu0 %v1073
        %v1808 = vpop.f32.mrb[0].mxu0
        %v1809 = vadd.f32 0.0, %v1808
        %v1810 = vpop.f32.mrb[0].mxu0
        %v1811 = vadd.f32 0.0, %v1810
        %v1812 = vpop.f32.mrb[0].mxu0
        %v1813 = vadd.f32 0.0, %v1812
        %v1814 = vpop.f32.mrb[0].mxu0
        %v1815 = vadd.f32 0.0, %v1814
        %1816 = vmatprep.mubr.bf16.mxu0 0
        %1817 = vmatmul.mubr.bf16.gmra.mrb[0].mxu0 %v1076
        %v1818 = vpop.f32.mrb[0].mxu0
        %v1819 = vadd.f32 0.0, %v1818
        %v1820 = vpop.f32.mrb[0].mxu0
        %v1821 = vadd.f32 0.0, %v1820
        %v1822 = vpop.f32.mrb[0].mxu0
        %v1823 = vadd.f32 0.0, %v1822
        %v1824 = vpop.f32.mrb[0].mxu0
        %v1825 = vadd.f32 0.0, %v1824
        %1826 = vmatprep.mubr.bf16.mxu0 0
        %1827 = vmatmul.mubr.bf16.gmra.mrb[0].mxu0 %v1079
        %v1828 = vpop.f32.mrb[0].mxu0
        %v1829 = vadd.f32 0.0, %v1828
        %v1830 = vpop.f32.mrb[0].mxu0
        %v1831 = vadd.f32 0.0, %v1830
        %v1832 = vpop.f32.mrb[0].mxu0
        %v1833 = vadd.f32 0.0, %v1832
        %v1834 = vpop.f32.mrb[0].mxu0
        %v1835 = vadd.f32 0.0, %v1834
        %1836 = vmatprep.mubr.bf16.mxu0 0
        %1837 = vmatmul.mubr.bf16.gmra.mrb[0].mxu0 %v1082
        %v1838 = vpop.f32.mrb[0].mxu0
        %v1839 = vadd.f32 0.0, %v1838
        %v1840 = vpop.f32.mrb[0].mxu0
        %v1841 = vadd.f32 0.0, %v1840
        %v1842 = vpop.f32.mrb[0].mxu0
        %v1843 = vadd.f32 0.0, %v1842
        %v1844 = vpop.f32.mrb[0].mxu0
        %v1845 = vadd.f32 0.0, %v1844
        %1846 = vmatprep.mubr.bf16.mxu0 0
        %1847 = vmatmul.mubr.bf16.gmra.mrb[0].mxu0 %v1085
        %v1848 = vpop.f32.mrb[0].mxu0
        %v1849 = vadd.f32 0.0, %v1848
        %v1850 = vpop.f32.mrb[0].mxu0
        %v1851 = vadd.f32 0.0, %v1850
        %v1852 = vpop.f32.mrb[0].mxu0
        %v1853 = vadd.f32 0.0, %v1852
        %v1854 = vpop.f32.mrb[0].mxu0
        %v1855 = vadd.f32 0.0, %v1854
        %1856 = vmatprep.mubr.bf16.mxu0 0
        %1857 = vmatmul.mubr.bf16.gmra.mrb[0].mxu0 %v1088
        %v1858 = vpop.f32.mrb[0].mxu0
        %v1859 = vadd.f32 0.0, %v1858
        %v1860 = vpop.f32.mrb[0].mxu0
        %v1861 = vadd.f32 0.0, %v1860
        %v1862 = vpop.f32.mrb[0].mxu0
        %v1863 = vadd.f32 0.0, %v1862
        %v1864 = vpop.f32.mrb[0].mxu0
        %v1865 = vadd.f32 0.0, %v1864
        %1866 = vmatprep.mubr.bf16.mxu0 0
        %1867 = vmatmul.mubr.bf16.gmra.mrb[0].mxu0 %v1091
        %v1868 = vpop.f32.mrb[0].mxu0
        %v1869 = vadd.f32 0.0, %v1868
        %v1870 = vpop.f32.mrb[0].mxu0
        %v1871 = vadd.f32 0.0, %v1870
        %v1872 = vpop.f32.mrb[0].mxu0
        %v1873 = vadd.f32 0.0, %v1872
        %v1874 = vpop.f32.mrb[0].mxu0
        %v1875 = vadd.f32 0.0, %v1874
        %1876 = vmatprep.mubr.bf16.mxu0 0
        %1877 = vmatmul.mubr.bf16.gmra.mrb[0].mxu0 %v1094
        %v1878 = vpop.f32.mrb[0].mxu0
        %v1879 = vadd.f32 0.0, %v1878
        %v1880 = vpop.f32.mrb[0].mxu0
        %v1881 = vadd.f32 0.0, %v1880
        %v1882 = vpop.f32.mrb[0].mxu0
        %v1883 = vadd.f32 0.0, %v1882
        %v1884 = vpop.f32.mrb[0].mxu0
        %v1885 = vadd.f32 0.0, %v1884
        %1886 = vdwg.mxu0
        %1887 = vmatprep.subr.bf16.mxu0 %v1028
        %1888 = vmatpush1.bf16.msra.mxu0 %v1027
        %1889 = vmatprep.subr.bf16.mxu0 0
        %1890 = vmatpush1.bf16.msra.mxu0 0
        %1891 = vmatprep.subr.bf16.mxu0 0
        %1892 = vmatpush1.bf16.msra.mxu0 0
        %1893 = vmatprep.subr.bf16.mxu0 0
        %1894 = vmatpush1.bf16.msra.mxu0 0
        %1895 = vmatprep.subr.bf16.mxu0 0
        %1896 = vmatpush1.bf16.msra.mxu0 0
        %1897 = vmatprep.subr.bf16.mxu0 0
        %1898 = vmatpush1.bf16.msra.mxu0 0
        %1899 = vmatprep.subr.bf16.mxu0 0
        %1900 = vmatpush1.bf16.msra.mxu0 0
        %1901 = vmatprep.subr.bf16.mxu0 0
        %1902 = vmatpush1.bf16.msra.mxu0 0
        %1903 = vmatprep.subr.bf16.mxu0 0
        %1904 = vmatpush1.bf16.msra.mxu0 0
        %1905 = vmatprep.subr.bf16.mxu0 0
        %1906 = vmatpush1.bf16.msra.mxu0 0
        %1907 = vmatprep.subr.bf16.mxu0 0
        %1908 = vmatpush1.bf16.msra.mxu0 0
        %1909 = vmatprep.subr.bf16.mxu0 0
        %1910 = vmatpush1.bf16.msra.mxu0 0
        %1911 = vmatprep.subr.bf16.mxu0 0
        %1912 = vmatpush1.bf16.msra.mxu0 0
        %1913 = vmatprep.subr.bf16.mxu0 0
        %1914 = vmatpush1.bf16.msra.mxu0 0
        %1915 = vmatprep.subr.bf16.mxu0 0
        %1916 = vmatpush1.bf16.msra.mxu0 0
        %1917 = vmatprep.subr.bf16.mxu0 0
        %1918 = vmatpush1.bf16.msra.mxu0 0
        %1919 = vmatprep.mubr.bf16.mxu0 0
        %1920 = vmatmul.mubr.bf16.gmra.mrb[0].mxu0 %v1073
        %v1921 = vpop.f32.mrb[0].mxu0
        %v1922 = vadd.f32 0.0, %v1921
        %v1923 = vpop.f32.mrb[0].mxu0
        %v1924 = vadd.f32 0.0, %v1923
        %v1925 = vpop.f32.mrb[0].mxu0
        %v1926 = vadd.f32 0.0, %v1925
        %v1927 = vpop.f32.mrb[0].mxu0
        %v1928 = vadd.f32 0.0, %v1927
        %1929 = vmatprep.mubr.bf16.mxu0 0
        %1930 = vmatmul.mubr.bf16.gmra.mrb[0].mxu0 %v1076
        %v1931 = vpop.f32.mrb[0].mxu0
        %v1932 = vadd.f32 0.0, %v1931
        %v1933 = vpop.f32.mrb[0].mxu0
        %v1934 = vadd.f32 0.0, %v1933
        %v1935 = vpop.f32.mrb[0].mxu0
        %v1936 = vadd.f32 0.0, %v1935
        %v1937 = vpop.f32.mrb[0].mxu0
        %v1938 = vadd.f32 0.0, %v1937
        %1939 = vmatprep.mubr.bf16.mxu0 0
        %1940 = vmatmul.mubr.bf16.gmra.mrb[0].mxu0 %v1079
        %v1941 = vpop.f32.mrb[0].mxu0
        %v1942 = vadd.f32 0.0, %v1941
        %v1943 = vpop.f32.mrb[0].mxu0
        %v1944 = vadd.f32 0.0, %v1943
        %v1945 = vpop.f32.mrb[0].mxu0
        %v1946 = vadd.f32 0.0, %v1945
        %v1947 = vpop.f32.mrb[0].mxu0
        %v1948 = vadd.f32 0.0, %v1947
        %1949 = vmatprep.mubr.bf16.mxu0 0
        %1950 = vmatmul.mubr.bf16.gmra.mrb[0].mxu0 %v1082
        %v1951 = vpop.f32.mrb[0].mxu0
        %v1952 = vadd.f32 0.0, %v1951
        %v1953 = vpop.f32.mrb[0].mxu0
        %v1954 = vadd.f32 0.0, %v1953
        %v1955 = vpop.f32.mrb[0].mxu0
        %v1956 = vadd.f32 0.0, %v1955
        %v1957 = vpop.f32.mrb[0].mxu0
        %v1958 = vadd.f32 0.0, %v1957
        %1959 = vmatprep.mubr.bf16.mxu0 0
        %1960 = vmatmul.mubr.bf16.gmra.mrb[0].mxu0 %v1085
        %v1961 = vpop.f32.mrb[0].mxu0
        %v1962 = vadd.f32 0.0, %v1961
        %v1963 = vpop.f32.mrb[0].mxu0
        %v1964 = vadd.f32 0.0, %v1963
        %v1965 = vpop.f32.mrb[0].mxu0
        %v1966 = vadd.f32 0.0, %v1965
        %v1967 = vpop.f32.mrb[0].mxu0
        %v1968 = vadd.f32 0.0, %v1967
        %1969 = vmatprep.mubr.bf16.mxu0 0
        %1970 = vmatmul.mubr.bf16.gmra.mrb[0].mxu0 %v1088
        %v1971 = vpop.f32.mrb[0].mxu0
        %v1972 = vadd.f32 0.0, %v1971
        %v1973 = vpop.f32.mrb[0].mxu0
        %v1974 = vadd.f32 0.0, %v1973
        %v1975 = vpop.f32.mrb[0].mxu0
        %v1976 = vadd.f32 0.0, %v1975
        %v1977 = vpop.f32.mrb[0].mxu0
        %v1978 = vadd.f32 0.0, %v1977
        %1979 = vmatprep.mubr.bf16.mxu0 0
        %1980 = vmatmul.mubr.bf16.gmra.mrb[0].mxu0 %v1091
        %v1981 = vpop.f32.mrb[0].mxu0
        %v1982 = vadd.f32 0.0, %v1981
        %v1983 = vpop.f32.mrb[0].mxu0
        %v1984 = vadd.f32 0.0, %v1983
        %v1985 = vpop.f32.mrb[0].mxu0
        %v1986 = vadd.f32 0.0, %v1985
        %v1987 = vpop.f32.mrb[0].mxu0
        %v1988 = vadd.f32 0.0, %v1987
        %1989 = vmatprep.mubr.bf16.mxu0 0
        %1990 = vmatmul.mubr.bf16.gmra.mrb[0].mxu0 %v1094
        %v1991 = vpop.f32.mrb[0].mxu0
        %v1992 = vadd.f32 0.0, %v1991
        %v1993 = vpop.f32.mrb[0].mxu0
        %v1994 = vadd.f32 0.0, %v1993
        %v1995 = vpop.f32.mrb[0].mxu0
        %v1996 = vadd.f32 0.0, %v1995
        %v1997 = vpop.f32.mrb[0].mxu0
        %v1998 = vadd.f32 0.0, %v1997
        %1999 = vdwg.mxu0
        %2000 = vmatprep.subr.bf16.mxu0 %v1030
        %2001 = vmatpush1.bf16.msra.mxu0 %v1029
        %2002 = vmatprep.subr.bf16.mxu0 0
        %2003 = vmatpush1.bf16.msra.mxu0 0
        %2004 = vmatprep.subr.bf16.mxu0 0
        %2005 = vmatpush1.bf16.msra.mxu0 0
        %2006 = vmatprep.subr.bf16.mxu0 0
        %2007 = vmatpush1.bf16.msra.mxu0 0
        %2008 = vmatprep.subr.bf16.mxu0 0
        %2009 = vmatpush1.bf16.msra.mxu0 0
        %2010 = vmatprep.subr.bf16.mxu0 0
        %2011 = vmatpush1.bf16.msra.mxu0 0
        %2012 = vmatprep.subr.bf16.mxu0 0
        %2013 = vmatpush1.bf16.msra.mxu0 0
        %2014 = vmatprep.subr.bf16.mxu0 0
        %2015 = vmatpush1.bf16.msra.mxu0 0
        %2016 = vmatprep.subr.bf16.mxu0 0
        %2017 = vmatpush1.bf16.msra.mxu0 0
        %2018 = vmatprep.subr.bf16.mxu0 0
        %2019 = vmatpush1.bf16.msra.mxu0 0
        %2020 = vmatprep.subr.bf16.mxu0 0
        %2021 = vmatpush1.bf16.msra.mxu0 0
        %2022 = vmatprep.subr.bf16.mxu0 0
        %2023 = vmatpush1.bf16.msra.mxu0 0
        %2024 = vmatprep.subr.bf16.mxu0 0
        %2025 = vmatpush1.bf16.msra.mxu0 0
        %2026 = vmatprep.subr.bf16.mxu0 0
        %2027 = vmatpush1.bf16.msra.mxu0 0
        %2028 = vmatprep.subr.bf16.mxu0 0
        %2029 = vmatpush1.bf16.msra.mxu0 0
        %2030 = vmatprep.subr.bf16.mxu0 0
        %2031 = vmatpush1.bf16.msra.mxu0 0
        %2032 = vmatprep.mubr.bf16.mxu0 0
        %2033 = vmatmul.mubr.bf16.gmra.mrb[0].mxu0 %v1073
        %v2034 = vpop.f32.mrb[0].mxu0
        %v2035 = vadd.f32 0.0, %v2034
        %v2036 = vpop.f32.mrb[0].mxu0
        %v2037 = vadd.f32 0.0, %v2036
        %v2038 = vpop.f32.mrb[0].mxu0
        %v2039 = vadd.f32 0.0, %v2038
        %v2040 = vpop.f32.mrb[0].mxu0
        %v2041 = vadd.f32 0.0, %v2040
        %2042 = vmatprep.mubr.bf16.mxu0 0
        %2043 = vmatmul.mubr.bf16.gmra.mrb[0].mxu0 %v1076
        %v2044 = vpop.f32.mrb[0].mxu0
        %v2045 = vadd.f32 0.0, %v2044
        %v2046 = vpop.f32.mrb[0].mxu0
        %v2047 = vadd.f32 0.0, %v2046
        %v2048 = vpop.f32.mrb[0].mxu0
        %v2049 = vadd.f32 0.0, %v2048
        %v2050 = vpop.f32.mrb[0].mxu0
        %v2051 = vadd.f32 0.0, %v2050
        %2052 = vmatprep.mubr.bf16.mxu0 0
        %2053 = vmatmul.mubr.bf16.gmra.mrb[0].mxu0 %v1079
        %v2054 = vpop.f32.mrb[0].mxu0
        %v2055 = vadd.f32 0.0, %v2054
        %v2056 = vpop.f32.mrb[0].mxu0
        %v2057 = vadd.f32 0.0, %v2056
        %v2058 = vpop.f32.mrb[0].mxu0
        %v2059 = vadd.f32 0.0, %v2058
        %v2060 = vpop.f32.mrb[0].mxu0
        %v2061 = vadd.f32 0.0, %v2060
        %2062 = vmatprep.mubr.bf16.mxu0 0
        %2063 = vmatmul.mubr.bf16.gmra.mrb[0].mxu0 %v1082
        %v2064 = vpop.f32.mrb[0].mxu0
        %v2065 = vadd.f32 0.0, %v2064
        %v2066 = vpop.f32.mrb[0].mxu0
        %v2067 = vadd.f32 0.0, %v2066
        %v2068 = vpop.f32.mrb[0].mxu0
        %v2069 = vadd.f32 0.0, %v2068
        %v2070 = vpop.f32.mrb[0].mxu0
        %v2071 = vadd.f32 0.0, %v2070
        %2072 = vmatprep.mubr.bf16.mxu0 0
        %2073 = vmatmul.mubr.bf16.gmra.mrb[0].mxu0 %v1085
        %v2074 = vpop.f32.mrb[0].mxu0
        %v2075 = vadd.f32 0.0, %v2074
        %v2076 = vpop.f32.mrb[0].mxu0
        %v2077 = vadd.f32 0.0, %v2076
        %v2078 = vpop.f32.mrb[0].mxu0
        %v2079 = vadd.f32 0.0, %v2078
        %v2080 = vpop.f32.mrb[0].mxu0
        %v2081 = vadd.f32 0.0, %v2080
        %2082 = vmatprep.mubr.bf16.mxu0 0
        %2083 = vmatmul.mubr.bf16.gmra.mrb[0].mxu0 %v1088
        %v2084 = vpop.f32.mrb[0].mxu0
        %v2085 = vadd.f32 0.0, %v2084
        %v2086 = vpop.f32.mrb[0].mxu0
        %v2087 = vadd.f32 0.0, %v2086
        %v2088 = vpop.f32.mrb[0].mxu0
        %v2089 = vadd.f32 0.0, %v2088
        %v2090 = vpop.f32.mrb[0].mxu0
        %v2091 = vadd.f32 0.0, %v2090
        %2092 = vmatprep.mubr.bf16.mxu0 0
        %2093 = vmatmul.mubr.bf16.gmra.mrb[0].mxu0 %v1091
        %v2094 = vpop.f32.mrb[0].mxu0
        %v2095 = vadd.f32 0.0, %v2094
        %v2096 = vpop.f32.mrb[0].mxu0
        %v2097 = vadd.f32 0.0, %v2096
        %v2098 = vpop.f32.mrb[0].mxu0
        %v2099 = vadd.f32 0.0, %v2098
        %v2100 = vpop.f32.mrb[0].mxu0
        %v2101 = vadd.f32 0.0, %v2100
        %2102 = vmatprep.mubr.bf16.mxu0 0
        %2103 = vmatmul.mubr.bf16.gmra.mrb[0].mxu0 %v1094
        %v2104 = vpop.f32.mrb[0].mxu0
        %v2105 = vadd.f32 0.0, %v2104
        %v2106 = vpop.f32.mrb[0].mxu0
        %v2107 = vadd.f32 0.0, %v2106
        %v2108 = vpop.f32.mrb[0].mxu0
        %v2109 = vadd.f32 0.0, %v2108
        %v2110 = vpop.f32.mrb[0].mxu0
        %v2111 = vadd.f32 0.0, %v2110
        %2112 = vdwg.mxu0
        %v2113 = vmul.f32 %v1131, %v977
        %v2114 = vmul.f32 %v1133, %v978
        %v2115 = vmul.f32 %v1244, %v979
        %v2116 = vmul.f32 %v1246, %v980
        %v2117 = vmul.f32 %v1357, %v981
        %v2118 = vmul.f32 %v1359, %v982
        %v2119 = vmul.f32 %v1470, %v983
        %v2120 = vmul.f32 %v1472, %v984
        %v2121 = vmul.f32 %v1583, %v985
        %v2122 = vmul.f32 %v1585, %v986
        %v2123 = vmul.f32 %v1696, %v987
        %v2124 = vmul.f32 %v1698, %v988
        %v2125 = vmul.f32 %v1809, %v989
        %v2126 = vmul.f32 %v1811, %v990
        %v2127 = vmul.f32 %v1922, %v991
        %v2128 = vmul.f32 %v1924, %v992
        %v2129 = vmul.f32 %v2035, %v993
        %v2130 = vmul.f32 %v2037, %v994
        %v2131 = vmul.f32 %v1135, %v995
        %v2132 = vmul.f32 %v1137, %v996
        %v2133 = vmul.f32 %v1248, %v997
        %v2134 = vmul.f32 %v1250, %v998
        %v2135 = vmul.f32 %v1361, %v999
        %v2136 = vmul.f32 %v1363, %v1000
        %v2137 = vmul.f32 %v1474, %v1001
        %v2138 = vmul.f32 %v1476, %v1002
        %v2139 = vmul.f32 %v1587, %v1003
        %v2140 = vmul.f32 %v1589, %v1004
        %v2141 = vmul.f32 %v1700, %v1005
        %v2142 = vmul.f32 %v1702, %v1006
        %v2143 = vmul.f32 %v1813, %v1007
        %v2144 = vmul.f32 %v1815, %v1008
        %v2145 = vmul.f32 %v1926, %v1009
        %v2146 = vmul.f32 %v1928, %v1010
        %v2147 = vmul.f32 %v2039, %v1011
        %v2148 = vmul.f32 %v2041, %v1012
        %v2149 = vmul.f32 %v1141, %v977
        %v2150 = vmul.f32 %v1143, %v978
        %v2151 = vmul.f32 %v1254, %v979
        %v2152 = vmul.f32 %v1256, %v980
        %v2153 = vmul.f32 %v1367, %v981
        %v2154 = vmul.f32 %v1369, %v982
        %v2155 = vmul.f32 %v1480, %v983
        %v2156 = vmul.f32 %v1482, %v984
        %v2157 = vmul.f32 %v1593, %v985
        %v2158 = vmul.f32 %v1595, %v986
        %v2159 = vmul.f32 %v1706, %v987
        %v2160 = vmul.f32 %v1708, %v988
        %v2161 = vmul.f32 %v1819, %v989
        %v2162 = vmul.f32 %v1821, %v990
        %v2163 = vmul.f32 %v1932, %v991
        %v2164 = vmul.f32 %v1934, %v992
        %v2165 = vmul.f32 %v2045, %v993
        %v2166 = vmul.f32 %v2047, %v994
        %v2167 = vmul.f32 %v1145, %v995
        %v2168 = vmul.f32 %v1147, %v996
        %v2169 = vmul.f32 %v1258, %v997
        %v2170 = vmul.f32 %v1260, %v998
        %v2171 = vmul.f32 %v1371, %v999
        %v2172 = vmul.f32 %v1373, %v1000
        %v2173 = vmul.f32 %v1484, %v1001
        %v2174 = vmul.f32 %v1486, %v1002
        %v2175 = vmul.f32 %v1597, %v1003
        %v2176 = vmul.f32 %v1599, %v1004
        %v2177 = vmul.f32 %v1710, %v1005
        %v2178 = vmul.f32 %v1712, %v1006
        %v2179 = vmul.f32 %v1823, %v1007
        %v2180 = vmul.f32 %v1825, %v1008
        %v2181 = vmul.f32 %v1936, %v1009
        %v2182 = vmul.f32 %v1938, %v1010
        %v2183 = vmul.f32 %v2049, %v1011
        %v2184 = vmul.f32 %v2051, %v1012
        %v2185 = vmul.f32 %v1151, %v977
        %v2186 = vmul.f32 %v1153, %v978
        %v2187 = vmul.f32 %v1264, %v979
        %v2188 = vmul.f32 %v1266, %v980
        %v2189 = vmul.f32 %v1377, %v981
        %v2190 = vmul.f32 %v1379, %v982
        %v2191 = vmul.f32 %v1490, %v983
        %v2192 = vmul.f32 %v1492, %v984
        %v2193 = vmul.f32 %v1603, %v985
        %v2194 = vmul.f32 %v1605, %v986
        %v2195 = vmul.f32 %v1716, %v987
        %v2196 = vmul.f32 %v1718, %v988
        %v2197 = vmul.f32 %v1829, %v989
        %v2198 = vmul.f32 %v1831, %v990
        %v2199 = vmul.f32 %v1942, %v991
        %v2200 = vmul.f32 %v1944, %v992
        %v2201 = vmul.f32 %v2055, %v993
        %v2202 = vmul.f32 %v2057, %v994
        %v2203 = vmul.f32 %v1155, %v995
        %v2204 = vmul.f32 %v1157, %v996
        %v2205 = vmul.f32 %v1268, %v997
        %v2206 = vmul.f32 %v1270, %v998
        %v2207 = vmul.f32 %v1381, %v999
        %v2208 = vmul.f32 %v1383, %v1000
        %v2209 = vmul.f32 %v1494, %v1001
        %v2210 = vmul.f32 %v1496, %v1002
        %v2211 = vmul.f32 %v1607, %v1003
        %v2212 = vmul.f32 %v1609, %v1004
        %v2213 = vmul.f32 %v1720, %v1005
        %v2214 = vmul.f32 %v1722, %v1006
        %v2215 = vmul.f32 %v1833, %v1007
        %v2216 = vmul.f32 %v1835, %v1008
        %v2217 = vmul.f32 %v1946, %v1009
        %v2218 = vmul.f32 %v1948, %v1010
        %v2219 = vmul.f32 %v2059, %v1011
        %v2220 = vmul.f32 %v2061, %v1012
        %v2221 = vmul.f32 %v1161, %v977
        %v2222 = vmul.f32 %v1163, %v978
        %v2223 = vmul.f32 %v1274, %v979
        %v2224 = vmul.f32 %v1276, %v980
        %v2225 = vmul.f32 %v1387, %v981
        %v2226 = vmul.f32 %v1389, %v982
        %v2227 = vmul.f32 %v1500, %v983
        %v2228 = vmul.f32 %v1502, %v984
        %v2229 = vmul.f32 %v1613, %v985
        %v2230 = vmul.f32 %v1615, %v986
        %v2231 = vmul.f32 %v1726, %v987
        %v2232 = vmul.f32 %v1728, %v988
        %v2233 = vmul.f32 %v1839, %v989
        %v2234 = vmul.f32 %v1841, %v990
        %v2235 = vmul.f32 %v1952, %v991
        %v2236 = vmul.f32 %v1954, %v992
        %v2237 = vmul.f32 %v2065, %v993
        %v2238 = vmul.f32 %v2067, %v994
        %v2239 = vmul.f32 %v1165, %v995
        %v2240 = vmul.f32 %v1167, %v996
        %v2241 = vmul.f32 %v1278, %v997
        %v2242 = vmul.f32 %v1280, %v998
        %v2243 = vmul.f32 %v1391, %v999
        %v2244 = vmul.f32 %v1393, %v1000
        %v2245 = vmul.f32 %v1504, %v1001
        %v2246 = vmul.f32 %v1506, %v1002
        %v2247 = vmul.f32 %v1617, %v1003
        %v2248 = vmul.f32 %v1619, %v1004
        %v2249 = vmul.f32 %v1730, %v1005
        %v2250 = vmul.f32 %v1732, %v1006
        %v2251 = vmul.f32 %v1843, %v1007
        %v2252 = vmul.f32 %v1845, %v1008
        %v2253 = vmul.f32 %v1956, %v1009
        %v2254 = vmul.f32 %v1958, %v1010
        %v2255 = vmul.f32 %v2069, %v1011
        %v2256 = vmul.f32 %v2071, %v1012
        %v2257 = vmul.f32 %v1171, %v977
        %v2258 = vmul.f32 %v1173, %v978
        %v2259 = vmul.f32 %v1284, %v979
        %v2260 = vmul.f32 %v1286, %v980
        %v2261 = vmul.f32 %v1397, %v981
        %v2262 = vmul.f32 %v1399, %v982
        %v2263 = vmul.f32 %v1510, %v983
        %v2264 = vmul.f32 %v1512, %v984
        %v2265 = vmul.f32 %v1623, %v985
        %v2266 = vmul.f32 %v1625, %v986
        %v2267 = vmul.f32 %v1736, %v987
        %v2268 = vmul.f32 %v1738, %v988
        %v2269 = vmul.f32 %v1849, %v989
        %v2270 = vmul.f32 %v1851, %v990
        %v2271 = vmul.f32 %v1962, %v991
        %v2272 = vmul.f32 %v1964, %v992
        %v2273 = vmul.f32 %v2075, %v993
        %v2274 = vmul.f32 %v2077, %v994
        %v2275 = vmul.f32 %v1175, %v995
        %v2276 = vmul.f32 %v1177, %v996
        %v2277 = vmul.f32 %v1288, %v997
        %v2278 = vmul.f32 %v1290, %v998
        %v2279 = vmul.f32 %v1401, %v999
        %v2280 = vmul.f32 %v1403, %v1000
        %v2281 = vmul.f32 %v1514, %v1001
        %v2282 = vmul.f32 %v1516, %v1002
        %v2283 = vmul.f32 %v1627, %v1003
        %v2284 = vmul.f32 %v1629, %v1004
        %v2285 = vmul.f32 %v1740, %v1005
        %v2286 = vmul.f32 %v1742, %v1006
        %v2287 = vmul.f32 %v1853, %v1007
        %v2288 = vmul.f32 %v1855, %v1008
        %v2289 = vmul.f32 %v1966, %v1009
        %v2290 = vmul.f32 %v1968, %v1010
        %v2291 = vmul.f32 %v2079, %v1011
        %v2292 = vmul.f32 %v2081, %v1012
        %v2293 = vmul.f32 %v1181, %v977
        %v2294 = vmul.f32 %v1183, %v978
        %v2295 = vmul.f32 %v1294, %v979
        %v2296 = vmul.f32 %v1296, %v980
        %v2297 = vmul.f32 %v1407, %v981
        %v2298 = vmul.f32 %v1409, %v982
        %v2299 = vmul.f32 %v1520, %v983
        %v2300 = vmul.f32 %v1522, %v984
        %v2301 = vmul.f32 %v1633, %v985
        %v2302 = vmul.f32 %v1635, %v986
        %v2303 = vmul.f32 %v1746, %v987
        %v2304 = vmul.f32 %v1748, %v988
        %v2305 = vmul.f32 %v1859, %v989
        %v2306 = vmul.f32 %v1861, %v990
        %v2307 = vmul.f32 %v1972, %v991
        %v2308 = vmul.f32 %v1974, %v992
        %v2309 = vmul.f32 %v2085, %v993
        %v2310 = vmul.f32 %v2087, %v994
        %v2311 = vmul.f32 %v1185, %v995
        %v2312 = vmul.f32 %v1187, %v996
        %v2313 = vmul.f32 %v1298, %v997
        %v2314 = vmul.f32 %v1300, %v998
        %v2315 = vmul.f32 %v1411, %v999
        %v2316 = vmul.f32 %v1413, %v1000
        %v2317 = vmul.f32 %v1524, %v1001
        %v2318 = vmul.f32 %v1526, %v1002
        %v2319 = vmul.f32 %v1637, %v1003
        %v2320 = vmul.f32 %v1639, %v1004
        %v2321 = vmul.f32 %v1750, %v1005
        %v2322 = vmul.f32 %v1752, %v1006
        %v2323 = vmul.f32 %v1863, %v1007
        %v2324 = vmul.f32 %v1865, %v1008
        %v2325 = vmul.f32 %v1976, %v1009
        %v2326 = vmul.f32 %v1978, %v1010
        %v2327 = vmul.f32 %v2089, %v1011
        %v2328 = vmul.f32 %v2091, %v1012
        %v2329 = vmul.f32 %v1191, %v977
        %v2330 = vmul.f32 %v1193, %v978
        %v2331 = vmul.f32 %v1304, %v979
        %v2332 = vmul.f32 %v1306, %v980
        %v2333 = vmul.f32 %v1417, %v981
        %v2334 = vmul.f32 %v1419, %v982
        %v2335 = vmul.f32 %v1530, %v983
        %v2336 = vmul.f32 %v1532, %v984
        %v2337 = vmul.f32 %v1643, %v985
        %v2338 = vmul.f32 %v1645, %v986
        %v2339 = vmul.f32 %v1756, %v987
        %v2340 = vmul.f32 %v1758, %v988
        %v2341 = vmul.f32 %v1869, %v989
        %v2342 = vmul.f32 %v1871, %v990
        %v2343 = vmul.f32 %v1982, %v991
        %v2344 = vmul.f32 %v1984, %v992
        %v2345 = vmul.f32 %v2095, %v993
        %v2346 = vmul.f32 %v2097, %v994
        %v2347 = vmul.f32 %v1195, %v995
        %v2348 = vmul.f32 %v1197, %v996
        %v2349 = vmul.f32 %v1308, %v997
        %v2350 = vmul.f32 %v1310, %v998
        %v2351 = vmul.f32 %v1421, %v999
        %v2352 = vmul.f32 %v1423, %v1000
        %v2353 = vmul.f32 %v1534, %v1001
        %v2354 = vmul.f32 %v1536, %v1002
        %v2355 = vmul.f32 %v1647, %v1003
        %v2356 = vmul.f32 %v1649, %v1004
        %v2357 = vmul.f32 %v1760, %v1005
        %v2358 = vmul.f32 %v1762, %v1006
        %v2359 = vmul.f32 %v1873, %v1007
        %v2360 = vmul.f32 %v1875, %v1008
        %v2361 = vmul.f32 %v1986, %v1009
        %v2362 = vmul.f32 %v1988, %v1010
        %v2363 = vmul.f32 %v2099, %v1011
        %v2364 = vmul.f32 %v2101, %v1012
        %v2365 = vmul.f32 %v1201, %v977
        %v2366 = vmul.f32 %v1203, %v978
        %v2367 = vmul.f32 %v1314, %v979
        %v2368 = vmul.f32 %v1316, %v980
        %v2369 = vmul.f32 %v1427, %v981
        %v2370 = vmul.f32 %v1429, %v982
        %v2371 = vmul.f32 %v1540, %v983
        %v2372 = vmul.f32 %v1542, %v984
        %v2373 = vmul.f32 %v1653, %v985
        %v2374 = vmul.f32 %v1655, %v986
        %v2375 = vmul.f32 %v1766, %v987
        %v2376 = vmul.f32 %v1768, %v988
        %v2377 = vmul.f32 %v1879, %v989
        %v2378 = vmul.f32 %v1881, %v990
        %v2379 = vmul.f32 %v1992, %v991
        %v2380 = vmul.f32 %v1994, %v992
        %v2381 = vmul.f32 %v2105, %v993
        %v2382 = vmul.f32 %v2107, %v994
        %v2383 = vmul.f32 %v1205, %v995
        %v2384 = vmul.f32 %v1207, %v996
        %v2385 = vmul.f32 %v1318, %v997
        %v2386 = vmul.f32 %v1320, %v998
        %v2387 = vmul.f32 %v1431, %v999
        %v2388 = vmul.f32 %v1433, %v1000
        %v2389 = vmul.f32 %v1544, %v1001
        %v2390 = vmul.f32 %v1546, %v1002
        %v2391 = vmul.f32 %v1657, %v1003
        %v2392 = vmul.f32 %v1659, %v1004
        %v2393 = vmul.f32 %v1770, %v1005
        %v2394 = vmul.f32 %v1772, %v1006
        %v2395 = vmul.f32 %v1883, %v1007
        %v2396 = vmul.f32 %v1885, %v1008
        %v2397 = vmul.f32 %v1996, %v1009
        %v2398 = vmul.f32 %v1998, %v1010
        %v2399 = vmul.f32 %v2109, %v1011
        %v2400 = vmul.f32 %v2111, %v1012
        %v2401 = vadd.f32 %v2113, %v2131
        %v2402 = vrot.slane %v2401, 4
        %v2403 = vadd.f32 %v2401, %v2402
        %v2404 = vrot.slane %v2403, 2
        %v2405 = vadd.f32 %v2403, %v2404
        %v2406 = vrot.slane %v2405, 1
        %v2407 = vadd.f32 %v2405, %v2406
        %v2408 = vadd.f32 %v2114, %v2132
        %v2409 = vrot.slane %v2408, 4
        %v2410 = vadd.f32 %v2408, %v2409
        %v2411 = vrot.slane %v2410, 2
        %v2412 = vadd.f32 %v2410, %v2411
        %v2413 = vrot.slane %v2412, 1
        %v2414 = vadd.f32 %v2412, %v2413
        %v2415 = vadd.f32 %v2115, %v2133
        %v2416 = vrot.slane %v2415, 4
        %v2417 = vadd.f32 %v2415, %v2416
        %v2418 = vrot.slane %v2417, 2
        %v2419 = vadd.f32 %v2417, %v2418
        %v2420 = vrot.slane %v2419, 1
        %v2421 = vadd.f32 %v2419, %v2420
        %v2422 = vadd.f32 %v2116, %v2134
        %v2423 = vrot.slane %v2422, 4
        %v2424 = vadd.f32 %v2422, %v2423
        %v2425 = vrot.slane %v2424, 2
        %v2426 = vadd.f32 %v2424, %v2425
        %v2427 = vrot.slane %v2426, 1
        %v2428 = vadd.f32 %v2426, %v2427
        %v2429 = vadd.f32 %v2117, %v2135
        %v2430 = vrot.slane %v2429, 4
        %v2431 = vadd.f32 %v2429, %v2430
        %v2432 = vrot.slane %v2431, 2
        %v2433 = vadd.f32 %v2431, %v2432
        %v2434 = vrot.slane %v2433, 1
        %v2435 = vadd.f32 %v2433, %v2434
        %v2436 = vadd.f32 %v2118, %v2136
        %v2437 = vrot.slane %v2436, 4
        %v2438 = vadd.f32 %v2436, %v2437
        %v2439 = vrot.slane %v2438, 2
        %v2440 = vadd.f32 %v2438, %v2439
        %v2441 = vrot.slane %v2440, 1
        %v2442 = vadd.f32 %v2440, %v2441
        %v2443 = vadd.f32 %v2119, %v2137
        %v2444 = vrot.slane %v2443, 4
        %v2445 = vadd.f32 %v2443, %v2444
        %v2446 = vrot.slane %v2445, 2
        %v2447 = vadd.f32 %v2445, %v2446
        %v2448 = vrot.slane %v2447, 1
        %v2449 = vadd.f32 %v2447, %v2448
        %v2450 = vadd.f32 %v2120, %v2138
        %v2451 = vrot.slane %v2450, 4
        %v2452 = vadd.f32 %v2450, %v2451
        %v2453 = vrot.slane %v2452, 2
        %v2454 = vadd.f32 %v2452, %v2453
        %v2455 = vrot.slane %v2454, 1
        %v2456 = vadd.f32 %v2454, %v2455
        %v2457 = vadd.f32 %v2121, %v2139
        %v2458 = vrot.slane %v2457, 4
        %v2459 = vadd.f32 %v2457, %v2458
        %v2460 = vrot.slane %v2459, 2
        %v2461 = vadd.f32 %v2459, %v2460
        %v2462 = vrot.slane %v2461, 1
        %v2463 = vadd.f32 %v2461, %v2462
        %v2464 = vadd.f32 %v2122, %v2140
        %v2465 = vrot.slane %v2464, 4
        %v2466 = vadd.f32 %v2464, %v2465
        %v2467 = vrot.slane %v2466, 2
        %v2468 = vadd.f32 %v2466, %v2467
        %v2469 = vrot.slane %v2468, 1
        %v2470 = vadd.f32 %v2468, %v2469
        %v2471 = vadd.f32 %v2123, %v2141
        %v2472 = vrot.slane %v2471, 4
        %v2473 = vadd.f32 %v2471, %v2472
        %v2474 = vrot.slane %v2473, 2
        %v2475 = vadd.f32 %v2473, %v2474
        %v2476 = vrot.slane %v2475, 1
        %v2477 = vadd.f32 %v2475, %v2476
        %v2478 = vadd.f32 %v2124, %v2142
        %v2479 = vrot.slane %v2478, 4
        %v2480 = vadd.f32 %v2478, %v2479
        %v2481 = vrot.slane %v2480, 2
        %v2482 = vadd.f32 %v2480, %v2481
        %v2483 = vrot.slane %v2482, 1
        %v2484 = vadd.f32 %v2482, %v2483
        %v2485 = vadd.f32 %v2125, %v2143
        %v2486 = vrot.slane %v2485, 4
        %v2487 = vadd.f32 %v2485, %v2486
        %v2488 = vrot.slane %v2487, 2
        %v2489 = vadd.f32 %v2487, %v2488
        %v2490 = vrot.slane %v2489, 1
        %v2491 = vadd.f32 %v2489, %v2490
        %v2492 = vadd.f32 %v2126, %v2144
        %v2493 = vrot.slane %v2492, 4
        %v2494 = vadd.f32 %v2492, %v2493
        %v2495 = vrot.slane %v2494, 2
        %v2496 = vadd.f32 %v2494, %v2495
        %v2497 = vrot.slane %v2496, 1
        %v2498 = vadd.f32 %v2496, %v2497
        %v2499 = vadd.f32 %v2127, %v2145
        %v2500 = vrot.slane %v2499, 4
        %v2501 = vadd.f32 %v2499, %v2500
        %v2502 = vrot.slane %v2501, 2
        %v2503 = vadd.f32 %v2501, %v2502
        %v2504 = vrot.slane %v2503, 1
        %v2505 = vadd.f32 %v2503, %v2504
        %v2506 = vadd.f32 %v2128, %v2146
        %v2507 = vrot.slane %v2506, 4
        %v2508 = vadd.f32 %v2506, %v2507
        %v2509 = vrot.slane %v2508, 2
        %v2510 = vadd.f32 %v2508, %v2509
        %v2511 = vrot.slane %v2510, 1
        %v2512 = vadd.f32 %v2510, %v2511
        %v2513 = vadd.f32 %v2129, %v2147
        %v2514 = vrot.slane %v2513, 4
        %v2515 = vadd.f32 %v2513, %v2514
        %v2516 = vrot.slane %v2515, 2
        %v2517 = vadd.f32 %v2515, %v2516
        %v2518 = vrot.slane %v2517, 1
        %v2519 = vadd.f32 %v2517, %v2518
        %v2520 = vadd.f32 %v2130, %v2148
        %v2521 = vrot.slane %v2520, 4
        %v2522 = vadd.f32 %v2520, %v2521
        %v2523 = vrot.slane %v2522, 2
        %v2524 = vadd.f32 %v2522, %v2523
        %v2525 = vrot.slane %v2524, 1
        %v2526 = vadd.f32 %v2524, %v2525
        %v2527 = vadd.f32 %v2149, %v2167
        %v2528 = vrot.slane %v2527, 4
        %v2529 = vadd.f32 %v2527, %v2528
        %v2530 = vrot.slane %v2529, 2
        %v2531 = vadd.f32 %v2529, %v2530
        %v2532 = vrot.slane %v2531, 1
        %v2533 = vadd.f32 %v2531, %v2532
        %v2534 = vadd.f32 %v2150, %v2168
        %v2535 = vrot.slane %v2534, 4
        %v2536 = vadd.f32 %v2534, %v2535
        %v2537 = vrot.slane %v2536, 2
        %v2538 = vadd.f32 %v2536, %v2537
        %v2539 = vrot.slane %v2538, 1
        %v2540 = vadd.f32 %v2538, %v2539
        %v2541 = vadd.f32 %v2151, %v2169
        %v2542 = vrot.slane %v2541, 4
        %v2543 = vadd.f32 %v2541, %v2542
        %v2544 = vrot.slane %v2543, 2
        %v2545 = vadd.f32 %v2543, %v2544
        %v2546 = vrot.slane %v2545, 1
        %v2547 = vadd.f32 %v2545, %v2546
        %v2548 = vadd.f32 %v2152, %v2170
        %v2549 = vrot.slane %v2548, 4
        %v2550 = vadd.f32 %v2548, %v2549
        %v2551 = vrot.slane %v2550, 2
        %v2552 = vadd.f32 %v2550, %v2551
        %v2553 = vrot.slane %v2552, 1
        %v2554 = vadd.f32 %v2552, %v2553
        %v2555 = vadd.f32 %v2153, %v2171
        %v2556 = vrot.slane %v2555, 4
        %v2557 = vadd.f32 %v2555, %v2556
        %v2558 = vrot.slane %v2557, 2
        %v2559 = vadd.f32 %v2557, %v2558
        %v2560 = vrot.slane %v2559, 1
        %v2561 = vadd.f32 %v2559, %v2560
        %v2562 = vadd.f32 %v2154, %v2172
        %v2563 = vrot.slane %v2562, 4
        %v2564 = vadd.f32 %v2562, %v2563
        %v2565 = vrot.slane %v2564, 2
        %v2566 = vadd.f32 %v2564, %v2565
        %v2567 = vrot.slane %v2566, 1
        %v2568 = vadd.f32 %v2566, %v2567
        %v2569 = vadd.f32 %v2155, %v2173
        %v2570 = vrot.slane %v2569, 4
        %v2571 = vadd.f32 %v2569, %v2570
        %v2572 = vrot.slane %v2571, 2
        %v2573 = vadd.f32 %v2571, %v2572
        %v2574 = vrot.slane %v2573, 1
        %v2575 = vadd.f32 %v2573, %v2574
        %v2576 = vadd.f32 %v2156, %v2174
        %v2577 = vrot.slane %v2576, 4
        %v2578 = vadd.f32 %v2576, %v2577
        %v2579 = vrot.slane %v2578, 2
        %v2580 = vadd.f32 %v2578, %v2579
        %v2581 = vrot.slane %v2580, 1
        %v2582 = vadd.f32 %v2580, %v2581
        %v2583 = vadd.f32 %v2157, %v2175
        %v2584 = vrot.slane %v2583, 4
        %v2585 = vadd.f32 %v2583, %v2584
        %v2586 = vrot.slane %v2585, 2
        %v2587 = vadd.f32 %v2585, %v2586
        %v2588 = vrot.slane %v2587, 1
        %v2589 = vadd.f32 %v2587, %v2588
        %v2590 = vadd.f32 %v2158, %v2176
        %v2591 = vrot.slane %v2590, 4
        %v2592 = vadd.f32 %v2590, %v2591
        %v2593 = vrot.slane %v2592, 2
        %v2594 = vadd.f32 %v2592, %v2593
        %v2595 = vrot.slane %v2594, 1
        %v2596 = vadd.f32 %v2594, %v2595
        %v2597 = vadd.f32 %v2159, %v2177
        %v2598 = vrot.slane %v2597, 4
        %v2599 = vadd.f32 %v2597, %v2598
        %v2600 = vrot.slane %v2599, 2
        %v2601 = vadd.f32 %v2599, %v2600
        %v2602 = vrot.slane %v2601, 1
        %v2603 = vadd.f32 %v2601, %v2602
        %v2604 = vadd.f32 %v2160, %v2178
        %v2605 = vrot.slane %v2604, 4
        %v2606 = vadd.f32 %v2604, %v2605
        %v2607 = vrot.slane %v2606, 2
        %v2608 = vadd.f32 %v2606, %v2607
        %v2609 = vrot.slane %v2608, 1
        %v2610 = vadd.f32 %v2608, %v2609
        %v2611 = vadd.f32 %v2161, %v2179
        %v2612 = vrot.slane %v2611, 4
        %v2613 = vadd.f32 %v2611, %v2612
        %v2614 = vrot.slane %v2613, 2
        %v2615 = vadd.f32 %v2613, %v2614
        %v2616 = vrot.slane %v2615, 1
        %v2617 = vadd.f32 %v2615, %v2616
        %v2618 = vadd.f32 %v2162, %v2180
        %v2619 = vrot.slane %v2618, 4
        %v2620 = vadd.f32 %v2618, %v2619
        %v2621 = vrot.slane %v2620, 2
        %v2622 = vadd.f32 %v2620, %v2621
        %v2623 = vrot.slane %v2622, 1
        %v2624 = vadd.f32 %v2622, %v2623
        %v2625 = vadd.f32 %v2163, %v2181
        %v2626 = vrot.slane %v2625, 4
        %v2627 = vadd.f32 %v2625, %v2626
        %v2628 = vrot.slane %v2627, 2
        %v2629 = vadd.f32 %v2627, %v2628
        %v2630 = vrot.slane %v2629, 1
        %v2631 = vadd.f32 %v2629, %v2630
        %v2632 = vadd.f32 %v2164, %v2182
        %v2633 = vrot.slane %v2632, 4
        %v2634 = vadd.f32 %v2632, %v2633
        %v2635 = vrot.slane %v2634, 2
        %v2636 = vadd.f32 %v2634, %v2635
        %v2637 = vrot.slane %v2636, 1
        %v2638 = vadd.f32 %v2636, %v2637
        %v2639 = vadd.f32 %v2165, %v2183
        %v2640 = vrot.slane %v2639, 4
        %v2641 = vadd.f32 %v2639, %v2640
        %v2642 = vrot.slane %v2641, 2
        %v2643 = vadd.f32 %v2641, %v2642
        %v2644 = vrot.slane %v2643, 1
        %v2645 = vadd.f32 %v2643, %v2644
        %v2646 = vadd.f32 %v2166, %v2184
        %v2647 = vrot.slane %v2646, 4
        %v2648 = vadd.f32 %v2646, %v2647
        %v2649 = vrot.slane %v2648, 2
        %v2650 = vadd.f32 %v2648, %v2649
        %v2651 = vrot.slane %v2650, 1
        %v2652 = vadd.f32 %v2650, %v2651
        %v2653 = vadd.f32 %v2185, %v2203
        %v2654 = vrot.slane %v2653, 4
        %v2655 = vadd.f32 %v2653, %v2654
        %v2656 = vrot.slane %v2655, 2
        %v2657 = vadd.f32 %v2655, %v2656
        %v2658 = vrot.slane %v2657, 1
        %v2659 = vadd.f32 %v2657, %v2658
        %v2660 = vadd.f32 %v2186, %v2204
        %v2661 = vrot.slane %v2660, 4
        %v2662 = vadd.f32 %v2660, %v2661
        %v2663 = vrot.slane %v2662, 2
        %v2664 = vadd.f32 %v2662, %v2663
        %v2665 = vrot.slane %v2664, 1
        %v2666 = vadd.f32 %v2664, %v2665
        %v2667 = vadd.f32 %v2187, %v2205
        %v2668 = vrot.slane %v2667, 4
        %v2669 = vadd.f32 %v2667, %v2668
        %v2670 = vrot.slane %v2669, 2
        %v2671 = vadd.f32 %v2669, %v2670
        %v2672 = vrot.slane %v2671, 1
        %v2673 = vadd.f32 %v2671, %v2672
        %v2674 = vadd.f32 %v2188, %v2206
        %v2675 = vrot.slane %v2674, 4
        %v2676 = vadd.f32 %v2674, %v2675
        %v2677 = vrot.slane %v2676, 2
        %v2678 = vadd.f32 %v2676, %v2677
        %v2679 = vrot.slane %v2678, 1
        %v2680 = vadd.f32 %v2678, %v2679
        %v2681 = vadd.f32 %v2189, %v2207
        %v2682 = vrot.slane %v2681, 4
        %v2683 = vadd.f32 %v2681, %v2682
        %v2684 = vrot.slane %v2683, 2
        %v2685 = vadd.f32 %v2683, %v2684
        %v2686 = vrot.slane %v2685, 1
        %v2687 = vadd.f32 %v2685, %v2686
        %v2688 = vadd.f32 %v2190, %v2208
        %v2689 = vrot.slane %v2688, 4
        %v2690 = vadd.f32 %v2688, %v2689
        %v2691 = vrot.slane %v2690, 2
        %v2692 = vadd.f32 %v2690, %v2691
        %v2693 = vrot.slane %v2692, 1
        %v2694 = vadd.f32 %v2692, %v2693
        %v2695 = vadd.f32 %v2191, %v2209
        %v2696 = vrot.slane %v2695, 4
        %v2697 = vadd.f32 %v2695, %v2696
        %v2698 = vrot.slane %v2697, 2
        %v2699 = vadd.f32 %v2697, %v2698
        %v2700 = vrot.slane %v2699, 1
        %v2701 = vadd.f32 %v2699, %v2700
        %v2702 = vadd.f32 %v2192, %v2210
        %v2703 = vrot.slane %v2702, 4
        %v2704 = vadd.f32 %v2702, %v2703
        %v2705 = vrot.slane %v2704, 2
        %v2706 = vadd.f32 %v2704, %v2705
        %v2707 = vrot.slane %v2706, 1
        %v2708 = vadd.f32 %v2706, %v2707
        %v2709 = vadd.f32 %v2193, %v2211
        %v2710 = vrot.slane %v2709, 4
        %v2711 = vadd.f32 %v2709, %v2710
        %v2712 = vrot.slane %v2711, 2
        %v2713 = vadd.f32 %v2711, %v2712
        %v2714 = vrot.slane %v2713, 1
        %v2715 = vadd.f32 %v2713, %v2714
        %v2716 = vadd.f32 %v2194, %v2212
        %v2717 = vrot.slane %v2716, 4
        %v2718 = vadd.f32 %v2716, %v2717
        %v2719 = vrot.slane %v2718, 2
        %v2720 = vadd.f32 %v2718, %v2719
        %v2721 = vrot.slane %v2720, 1
        %v2722 = vadd.f32 %v2720, %v2721
        %v2723 = vadd.f32 %v2195, %v2213
        %v2724 = vrot.slane %v2723, 4
        %v2725 = vadd.f32 %v2723, %v2724
        %v2726 = vrot.slane %v2725, 2
        %v2727 = vadd.f32 %v2725, %v2726
        %v2728 = vrot.slane %v2727, 1
        %v2729 = vadd.f32 %v2727, %v2728
        %v2730 = vadd.f32 %v2196, %v2214
        %v2731 = vrot.slane %v2730, 4
        %v2732 = vadd.f32 %v2730, %v2731
        %v2733 = vrot.slane %v2732, 2
        %v2734 = vadd.f32 %v2732, %v2733
        %v2735 = vrot.slane %v2734, 1
        %v2736 = vadd.f32 %v2734, %v2735
        %v2737 = vadd.f32 %v2197, %v2215
        %v2738 = vrot.slane %v2737, 4
        %v2739 = vadd.f32 %v2737, %v2738
        %v2740 = vrot.slane %v2739, 2
        %v2741 = vadd.f32 %v2739, %v2740
        %v2742 = vrot.slane %v2741, 1
        %v2743 = vadd.f32 %v2741, %v2742
        %v2744 = vadd.f32 %v2198, %v2216
        %v2745 = vrot.slane %v2744, 4
        %v2746 = vadd.f32 %v2744, %v2745
        %v2747 = vrot.slane %v2746, 2
        %v2748 = vadd.f32 %v2746, %v2747
        %v2749 = vrot.slane %v2748, 1
        %v2750 = vadd.f32 %v2748, %v2749
        %v2751 = vadd.f32 %v2199, %v2217
        %v2752 = vrot.slane %v2751, 4
        %v2753 = vadd.f32 %v2751, %v2752
        %v2754 = vrot.slane %v2753, 2
        %v2755 = vadd.f32 %v2753, %v2754
        %v2756 = vrot.slane %v2755, 1
        %v2757 = vadd.f32 %v2755, %v2756
        %v2758 = vadd.f32 %v2200, %v2218
        %v2759 = vrot.slane %v2758, 4
        %v2760 = vadd.f32 %v2758, %v2759
        %v2761 = vrot.slane %v2760, 2
        %v2762 = vadd.f32 %v2760, %v2761
        %v2763 = vrot.slane %v2762, 1
        %v2764 = vadd.f32 %v2762, %v2763
        %v2765 = vadd.f32 %v2201, %v2219
        %v2766 = vrot.slane %v2765, 4
        %v2767 = vadd.f32 %v2765, %v2766
        %v2768 = vrot.slane %v2767, 2
        %v2769 = vadd.f32 %v2767, %v2768
        %v2770 = vrot.slane %v2769, 1
        %v2771 = vadd.f32 %v2769, %v2770
        %v2772 = vadd.f32 %v2202, %v2220
        %v2773 = vrot.slane %v2772, 4
        %v2774 = vadd.f32 %v2772, %v2773
        %v2775 = vrot.slane %v2774, 2
        %v2776 = vadd.f32 %v2774, %v2775
        %v2777 = vrot.slane %v2776, 1
        %v2778 = vadd.f32 %v2776, %v2777
        %v2779 = vadd.f32 %v2221, %v2239
        %v2780 = vrot.slane %v2779, 4
        %v2781 = vadd.f32 %v2779, %v2780
        %v2782 = vrot.slane %v2781, 2
        %v2783 = vadd.f32 %v2781, %v2782
        %v2784 = vrot.slane %v2783, 1
        %v2785 = vadd.f32 %v2783, %v2784
        %v2786 = vadd.f32 %v2222, %v2240
        %v2787 = vrot.slane %v2786, 4
        %v2788 = vadd.f32 %v2786, %v2787
        %v2789 = vrot.slane %v2788, 2
        %v2790 = vadd.f32 %v2788, %v2789
        %v2791 = vrot.slane %v2790, 1
        %v2792 = vadd.f32 %v2790, %v2791
        %v2793 = vadd.f32 %v2223, %v2241
        %v2794 = vrot.slane %v2793, 4
        %v2795 = vadd.f32 %v2793, %v2794
        %v2796 = vrot.slane %v2795, 2
        %v2797 = vadd.f32 %v2795, %v2796
        %v2798 = vrot.slane %v2797, 1
        %v2799 = vadd.f32 %v2797, %v2798
        %v2800 = vadd.f32 %v2224, %v2242
        %v2801 = vrot.slane %v2800, 4
        %v2802 = vadd.f32 %v2800, %v2801
        %v2803 = vrot.slane %v2802, 2
        %v2804 = vadd.f32 %v2802, %v2803
        %v2805 = vrot.slane %v2804, 1
        %v2806 = vadd.f32 %v2804, %v2805
        %v2807 = vadd.f32 %v2225, %v2243
        %v2808 = vrot.slane %v2807, 4
        %v2809 = vadd.f32 %v2807, %v2808
        %v2810 = vrot.slane %v2809, 2
        %v2811 = vadd.f32 %v2809, %v2810
        %v2812 = vrot.slane %v2811, 1
        %v2813 = vadd.f32 %v2811, %v2812
        %v2814 = vadd.f32 %v2226, %v2244
        %v2815 = vrot.slane %v2814, 4
        %v2816 = vadd.f32 %v2814, %v2815
        %v2817 = vrot.slane %v2816, 2
        %v2818 = vadd.f32 %v2816, %v2817
        %v2819 = vrot.slane %v2818, 1
        %v2820 = vadd.f32 %v2818, %v2819
        %v2821 = vadd.f32 %v2227, %v2245
        %v2822 = vrot.slane %v2821, 4
        %v2823 = vadd.f32 %v2821, %v2822
        %v2824 = vrot.slane %v2823, 2
        %v2825 = vadd.f32 %v2823, %v2824
        %v2826 = vrot.slane %v2825, 1
        %v2827 = vadd.f32 %v2825, %v2826
        %v2828 = vadd.f32 %v2228, %v2246
        %v2829 = vrot.slane %v2828, 4
        %v2830 = vadd.f32 %v2828, %v2829
        %v2831 = vrot.slane %v2830, 2
        %v2832 = vadd.f32 %v2830, %v2831
        %v2833 = vrot.slane %v2832, 1
        %v2834 = vadd.f32 %v2832, %v2833
        %v2835 = vadd.f32 %v2229, %v2247
        %v2836 = vrot.slane %v2835, 4
        %v2837 = vadd.f32 %v2835, %v2836
        %v2838 = vrot.slane %v2837, 2
        %v2839 = vadd.f32 %v2837, %v2838
        %v2840 = vrot.slane %v2839, 1
        %v2841 = vadd.f32 %v2839, %v2840
        %v2842 = vadd.f32 %v2230, %v2248
        %v2843 = vrot.slane %v2842, 4
        %v2844 = vadd.f32 %v2842, %v2843
        %v2845 = vrot.slane %v2844, 2
        %v2846 = vadd.f32 %v2844, %v2845
        %v2847 = vrot.slane %v2846, 1
        %v2848 = vadd.f32 %v2846, %v2847
        %v2849 = vadd.f32 %v2231, %v2249
        %v2850 = vrot.slane %v2849, 4
        %v2851 = vadd.f32 %v2849, %v2850
        %v2852 = vrot.slane %v2851, 2
        %v2853 = vadd.f32 %v2851, %v2852
        %v2854 = vrot.slane %v2853, 1
        %v2855 = vadd.f32 %v2853, %v2854
        %v2856 = vadd.f32 %v2232, %v2250
        %v2857 = vrot.slane %v2856, 4
        %v2858 = vadd.f32 %v2856, %v2857
        %v2859 = vrot.slane %v2858, 2
        %v2860 = vadd.f32 %v2858, %v2859
        %v2861 = vrot.slane %v2860, 1
        %v2862 = vadd.f32 %v2860, %v2861
        %v2863 = vadd.f32 %v2233, %v2251
        %v2864 = vrot.slane %v2863, 4
        %v2865 = vadd.f32 %v2863, %v2864
        %v2866 = vrot.slane %v2865, 2
        %v2867 = vadd.f32 %v2865, %v2866
        %v2868 = vrot.slane %v2867, 1
        %v2869 = vadd.f32 %v2867, %v2868
        %v2870 = vadd.f32 %v2234, %v2252
        %v2871 = vrot.slane %v2870, 4
        %v2872 = vadd.f32 %v2870, %v2871
        %v2873 = vrot.slane %v2872, 2
        %v2874 = vadd.f32 %v2872, %v2873
        %v2875 = vrot.slane %v2874, 1
        %v2876 = vadd.f32 %v2874, %v2875
        %v2877 = vadd.f32 %v2235, %v2253
        %v2878 = vrot.slane %v2877, 4
        %v2879 = vadd.f32 %v2877, %v2878
        %v2880 = vrot.slane %v2879, 2
        %v2881 = vadd.f32 %v2879, %v2880
        %v2882 = vrot.slane %v2881, 1
        %v2883 = vadd.f32 %v2881, %v2882
        %v2884 = vadd.f32 %v2236, %v2254
        %v2885 = vrot.slane %v2884, 4
        %v2886 = vadd.f32 %v2884, %v2885
        %v2887 = vrot.slane %v2886, 2
        %v2888 = vadd.f32 %v2886, %v2887
        %v2889 = vrot.slane %v2888, 1
        %v2890 = vadd.f32 %v2888, %v2889
        %v2891 = vadd.f32 %v2237, %v2255
        %v2892 = vrot.slane %v2891, 4
        %v2893 = vadd.f32 %v2891, %v2892
        %v2894 = vrot.slane %v2893, 2
        %v2895 = vadd.f32 %v2893, %v2894
        %v2896 = vrot.slane %v2895, 1
        %v2897 = vadd.f32 %v2895, %v2896
        %v2898 = vadd.f32 %v2238, %v2256
        %v2899 = vrot.slane %v2898, 4
        %v2900 = vadd.f32 %v2898, %v2899
        %v2901 = vrot.slane %v2900, 2
        %v2902 = vadd.f32 %v2900, %v2901
        %v2903 = vrot.slane %v2902, 1
        %v2904 = vadd.f32 %v2902, %v2903
        %v2905 = vadd.f32 %v2257, %v2275
        %v2906 = vrot.slane %v2905, 4
        %v2907 = vadd.f32 %v2905, %v2906
        %v2908 = vrot.slane %v2907, 2
        %v2909 = vadd.f32 %v2907, %v2908
        %v2910 = vrot.slane %v2909, 1
        %v2911 = vadd.f32 %v2909, %v2910
        %v2912 = vadd.f32 %v2258, %v2276
        %v2913 = vrot.slane %v2912, 4
        %v2914 = vadd.f32 %v2912, %v2913
        %v2915 = vrot.slane %v2914, 2
        %v2916 = vadd.f32 %v2914, %v2915
        %v2917 = vrot.slane %v2916, 1
        %v2918 = vadd.f32 %v2916, %v2917
        %v2919 = vadd.f32 %v2259, %v2277
        %v2920 = vrot.slane %v2919, 4
        %v2921 = vadd.f32 %v2919, %v2920
        %v2922 = vrot.slane %v2921, 2
        %v2923 = vadd.f32 %v2921, %v2922
        %v2924 = vrot.slane %v2923, 1
        %v2925 = vadd.f32 %v2923, %v2924
        %v2926 = vadd.f32 %v2260, %v2278
        %v2927 = vrot.slane %v2926, 4
        %v2928 = vadd.f32 %v2926, %v2927
        %v2929 = vrot.slane %v2928, 2
        %v2930 = vadd.f32 %v2928, %v2929
        %v2931 = vrot.slane %v2930, 1
        %v2932 = vadd.f32 %v2930, %v2931
        %v2933 = vadd.f32 %v2261, %v2279
        %v2934 = vrot.slane %v2933, 4
        %v2935 = vadd.f32 %v2933, %v2934
        %v2936 = vrot.slane %v2935, 2
        %v2937 = vadd.f32 %v2935, %v2936
        %v2938 = vrot.slane %v2937, 1
        %v2939 = vadd.f32 %v2937, %v2938
        %v2940 = vadd.f32 %v2262, %v2280
        %v2941 = vrot.slane %v2940, 4
        %v2942 = vadd.f32 %v2940, %v2941
        %v2943 = vrot.slane %v2942, 2
        %v2944 = vadd.f32 %v2942, %v2943
        %v2945 = vrot.slane %v2944, 1
        %v2946 = vadd.f32 %v2944, %v2945
        %v2947 = vadd.f32 %v2263, %v2281
        %v2948 = vrot.slane %v2947, 4
        %v2949 = vadd.f32 %v2947, %v2948
        %v2950 = vrot.slane %v2949, 2
        %v2951 = vadd.f32 %v2949, %v2950
        %v2952 = vrot.slane %v2951, 1
        %v2953 = vadd.f32 %v2951, %v2952
        %v2954 = vadd.f32 %v2264, %v2282
        %v2955 = vrot.slane %v2954, 4
        %v2956 = vadd.f32 %v2954, %v2955
        %v2957 = vrot.slane %v2956, 2
        %v2958 = vadd.f32 %v2956, %v2957
        %v2959 = vrot.slane %v2958, 1
        %v2960 = vadd.f32 %v2958, %v2959
        %v2961 = vadd.f32 %v2265, %v2283
        %v2962 = vrot.slane %v2961, 4
        %v2963 = vadd.f32 %v2961, %v2962
        %v2964 = vrot.slane %v2963, 2
        %v2965 = vadd.f32 %v2963, %v2964
        %v2966 = vrot.slane %v2965, 1
        %v2967 = vadd.f32 %v2965, %v2966
        %v2968 = vadd.f32 %v2266, %v2284
        %v2969 = vrot.slane %v2968, 4
        %v2970 = vadd.f32 %v2968, %v2969
        %v2971 = vrot.slane %v2970, 2
        %v2972 = vadd.f32 %v2970, %v2971
        %v2973 = vrot.slane %v2972, 1
        %v2974 = vadd.f32 %v2972, %v2973
        %v2975 = vadd.f32 %v2267, %v2285
        %v2976 = vrot.slane %v2975, 4
        %v2977 = vadd.f32 %v2975, %v2976
        %v2978 = vrot.slane %v2977, 2
        %v2979 = vadd.f32 %v2977, %v2978
        %v2980 = vrot.slane %v2979, 1
        %v2981 = vadd.f32 %v2979, %v2980
        %v2982 = vadd.f32 %v2268, %v2286
        %v2983 = vrot.slane %v2982, 4
        %v2984 = vadd.f32 %v2982, %v2983
        %v2985 = vrot.slane %v2984, 2
        %v2986 = vadd.f32 %v2984, %v2985
        %v2987 = vrot.slane %v2986, 1
        %v2988 = vadd.f32 %v2986, %v2987
        %v2989 = vadd.f32 %v2269, %v2287
        %v2990 = vrot.slane %v2989, 4
        %v2991 = vadd.f32 %v2989, %v2990
        %v2992 = vrot.slane %v2991, 2
        %v2993 = vadd.f32 %v2991, %v2992
        %v2994 = vrot.slane %v2993, 1
        %v2995 = vadd.f32 %v2993, %v2994
        %v2996 = vadd.f32 %v2270, %v2288
        %v2997 = vrot.slane %v2996, 4
        %v2998 = vadd.f32 %v2996, %v2997
        %v2999 = vrot.slane %v2998, 2
        %v3000 = vadd.f32 %v2998, %v2999
        %v3001 = vrot.slane %v3000, 1
        %v3002 = vadd.f32 %v3000, %v3001
        %v3003 = vadd.f32 %v2271, %v2289
        %v3004 = vrot.slane %v3003, 4
        %v3005 = vadd.f32 %v3003, %v3004
        %v3006 = vrot.slane %v3005, 2
        %v3007 = vadd.f32 %v3005, %v3006
        %v3008 = vrot.slane %v3007, 1
        %v3009 = vadd.f32 %v3007, %v3008
        %v3010 = vadd.f32 %v2272, %v2290
        %v3011 = vrot.slane %v3010, 4
        %v3012 = vadd.f32 %v3010, %v3011
        %v3013 = vrot.slane %v3012, 2
        %v3014 = vadd.f32 %v3012, %v3013
        %v3015 = vrot.slane %v3014, 1
        %v3016 = vadd.f32 %v3014, %v3015
        %v3017 = vadd.f32 %v2273, %v2291
        %v3018 = vrot.slane %v3017, 4
        %v3019 = vadd.f32 %v3017, %v3018
        %v3020 = vrot.slane %v3019, 2
        %v3021 = vadd.f32 %v3019, %v3020
        %v3022 = vrot.slane %v3021, 1
        %v3023 = vadd.f32 %v3021, %v3022
        %v3024 = vadd.f32 %v2274, %v2292
        %v3025 = vrot.slane %v3024, 4
        %v3026 = vadd.f32 %v3024, %v3025
        %v3027 = vrot.slane %v3026, 2
        %v3028 = vadd.f32 %v3026, %v3027
        %v3029 = vrot.slane %v3028, 1
        %v3030 = vadd.f32 %v3028, %v3029
        %v3031 = vadd.f32 %v2293, %v2311
        %v3032 = vrot.slane %v3031, 4
        %v3033 = vadd.f32 %v3031, %v3032
        %v3034 = vrot.slane %v3033, 2
        %v3035 = vadd.f32 %v3033, %v3034
        %v3036 = vrot.slane %v3035, 1
        %v3037 = vadd.f32 %v3035, %v3036
        %v3038 = vadd.f32 %v2294, %v2312
        %v3039 = vrot.slane %v3038, 4
        %v3040 = vadd.f32 %v3038, %v3039
        %v3041 = vrot.slane %v3040, 2
        %v3042 = vadd.f32 %v3040, %v3041
        %v3043 = vrot.slane %v3042, 1
        %v3044 = vadd.f32 %v3042, %v3043
        %v3045 = vadd.f32 %v2295, %v2313
        %v3046 = vrot.slane %v3045, 4
        %v3047 = vadd.f32 %v3045, %v3046
        %v3048 = vrot.slane %v3047, 2
        %v3049 = vadd.f32 %v3047, %v3048
        %v3050 = vrot.slane %v3049, 1
        %v3051 = vadd.f32 %v3049, %v3050
        %v3052 = vadd.f32 %v2296, %v2314
        %v3053 = vrot.slane %v3052, 4
        %v3054 = vadd.f32 %v3052, %v3053
        %v3055 = vrot.slane %v3054, 2
        %v3056 = vadd.f32 %v3054, %v3055
        %v3057 = vrot.slane %v3056, 1
        %v3058 = vadd.f32 %v3056, %v3057
        %v3059 = vadd.f32 %v2297, %v2315
        %v3060 = vrot.slane %v3059, 4
        %v3061 = vadd.f32 %v3059, %v3060
        %v3062 = vrot.slane %v3061, 2
        %v3063 = vadd.f32 %v3061, %v3062
        %v3064 = vrot.slane %v3063, 1
        %v3065 = vadd.f32 %v3063, %v3064
        %v3066 = vadd.f32 %v2298, %v2316
        %v3067 = vrot.slane %v3066, 4
        %v3068 = vadd.f32 %v3066, %v3067
        %v3069 = vrot.slane %v3068, 2
        %v3070 = vadd.f32 %v3068, %v3069
        %v3071 = vrot.slane %v3070, 1
        %v3072 = vadd.f32 %v3070, %v3071
        %v3073 = vadd.f32 %v2299, %v2317
        %v3074 = vrot.slane %v3073, 4
        %v3075 = vadd.f32 %v3073, %v3074
        %v3076 = vrot.slane %v3075, 2
        %v3077 = vadd.f32 %v3075, %v3076
        %v3078 = vrot.slane %v3077, 1
        %v3079 = vadd.f32 %v3077, %v3078
        %v3080 = vadd.f32 %v2300, %v2318
        %v3081 = vrot.slane %v3080, 4
        %v3082 = vadd.f32 %v3080, %v3081
        %v3083 = vrot.slane %v3082, 2
        %v3084 = vadd.f32 %v3082, %v3083
        %v3085 = vrot.slane %v3084, 1
        %v3086 = vadd.f32 %v3084, %v3085
        %v3087 = vadd.f32 %v2301, %v2319
        %v3088 = vrot.slane %v3087, 4
        %v3089 = vadd.f32 %v3087, %v3088
        %v3090 = vrot.slane %v3089, 2
        %v3091 = vadd.f32 %v3089, %v3090
        %v3092 = vrot.slane %v3091, 1
        %v3093 = vadd.f32 %v3091, %v3092
        %v3094 = vadd.f32 %v2302, %v2320
        %v3095 = vrot.slane %v3094, 4
        %v3096 = vadd.f32 %v3094, %v3095
        %v3097 = vrot.slane %v3096, 2
        %v3098 = vadd.f32 %v3096, %v3097
        %v3099 = vrot.slane %v3098, 1
        %v3100 = vadd.f32 %v3098, %v3099
        %v3101 = vadd.f32 %v2303, %v2321
        %v3102 = vrot.slane %v3101, 4
        %v3103 = vadd.f32 %v3101, %v3102
        %v3104 = vrot.slane %v3103, 2
        %v3105 = vadd.f32 %v3103, %v3104
        %v3106 = vrot.slane %v3105, 1
        %v3107 = vadd.f32 %v3105, %v3106
        %v3108 = vadd.f32 %v2304, %v2322
        %v3109 = vrot.slane %v3108, 4
        %v3110 = vadd.f32 %v3108, %v3109
        %v3111 = vrot.slane %v3110, 2
        %v3112 = vadd.f32 %v3110, %v3111
        %v3113 = vrot.slane %v3112, 1
        %v3114 = vadd.f32 %v3112, %v3113
        %v3115 = vadd.f32 %v2305, %v2323
        %v3116 = vrot.slane %v3115, 4
        %v3117 = vadd.f32 %v3115, %v3116
        %v3118 = vrot.slane %v3117, 2
        %v3119 = vadd.f32 %v3117, %v3118
        %v3120 = vrot.slane %v3119, 1
        %v3121 = vadd.f32 %v3119, %v3120
        %v3122 = vadd.f32 %v2306, %v2324
        %v3123 = vrot.slane %v3122, 4
        %v3124 = vadd.f32 %v3122, %v3123
        %v3125 = vrot.slane %v3124, 2
        %v3126 = vadd.f32 %v3124, %v3125
        %v3127 = vrot.slane %v3126, 1
        %v3128 = vadd.f32 %v3126, %v3127
        %v3129 = vadd.f32 %v2307, %v2325
        %v3130 = vrot.slane %v3129, 4
        %v3131 = vadd.f32 %v3129, %v3130
        %v3132 = vrot.slane %v3131, 2
        %v3133 = vadd.f32 %v3131, %v3132
        %v3134 = vrot.slane %v3133, 1
        %v3135 = vadd.f32 %v3133, %v3134
        %v3136 = vadd.f32 %v2308, %v2326
        %v3137 = vrot.slane %v3136, 4
        %v3138 = vadd.f32 %v3136, %v3137
        %v3139 = vrot.slane %v3138, 2
        %v3140 = vadd.f32 %v3138, %v3139
        %v3141 = vrot.slane %v3140, 1
        %v3142 = vadd.f32 %v3140, %v3141
        %v3143 = vadd.f32 %v2309, %v2327
        %v3144 = vrot.slane %v3143, 4
        %v3145 = vadd.f32 %v3143, %v3144
        %v3146 = vrot.slane %v3145, 2
        %v3147 = vadd.f32 %v3145, %v3146
        %v3148 = vrot.slane %v3147, 1
        %v3149 = vadd.f32 %v3147, %v3148
        %v3150 = vadd.f32 %v2310, %v2328
        %v3151 = vrot.slane %v3150, 4
        %v3152 = vadd.f32 %v3150, %v3151
        %v3153 = vrot.slane %v3152, 2
        %v3154 = vadd.f32 %v3152, %v3153
        %v3155 = vrot.slane %v3154, 1
        %v3156 = vadd.f32 %v3154, %v3155
        %v3157 = vadd.f32 %v2329, %v2347
        %v3158 = vrot.slane %v3157, 4
        %v3159 = vadd.f32 %v3157, %v3158
        %v3160 = vrot.slane %v3159, 2
        %v3161 = vadd.f32 %v3159, %v3160
        %v3162 = vrot.slane %v3161, 1
        %v3163 = vadd.f32 %v3161, %v3162
        %v3164 = vadd.f32 %v2330, %v2348
        %v3165 = vrot.slane %v3164, 4
        %v3166 = vadd.f32 %v3164, %v3165
        %v3167 = vrot.slane %v3166, 2
        %v3168 = vadd.f32 %v3166, %v3167
        %v3169 = vrot.slane %v3168, 1
        %v3170 = vadd.f32 %v3168, %v3169
        %v3171 = vadd.f32 %v2331, %v2349
        %v3172 = vrot.slane %v3171, 4
        %v3173 = vadd.f32 %v3171, %v3172
        %v3174 = vrot.slane %v3173, 2
        %v3175 = vadd.f32 %v3173, %v3174
        %v3176 = vrot.slane %v3175, 1
        %v3177 = vadd.f32 %v3175, %v3176
        %v3178 = vadd.f32 %v2332, %v2350
        %v3179 = vrot.slane %v3178, 4
        %v3180 = vadd.f32 %v3178, %v3179
        %v3181 = vrot.slane %v3180, 2
        %v3182 = vadd.f32 %v3180, %v3181
        %v3183 = vrot.slane %v3182, 1
        %v3184 = vadd.f32 %v3182, %v3183
        %v3185 = vadd.f32 %v2333, %v2351
        %v3186 = vrot.slane %v3185, 4
        %v3187 = vadd.f32 %v3185, %v3186
        %v3188 = vrot.slane %v3187, 2
        %v3189 = vadd.f32 %v3187, %v3188
        %v3190 = vrot.slane %v3189, 1
        %v3191 = vadd.f32 %v3189, %v3190
        %v3192 = vadd.f32 %v2334, %v2352
        %v3193 = vrot.slane %v3192, 4
        %v3194 = vadd.f32 %v3192, %v3193
        %v3195 = vrot.slane %v3194, 2
        %v3196 = vadd.f32 %v3194, %v3195
        %v3197 = vrot.slane %v3196, 1
        %v3198 = vadd.f32 %v3196, %v3197
        %v3199 = vadd.f32 %v2335, %v2353
        %v3200 = vrot.slane %v3199, 4
        %v3201 = vadd.f32 %v3199, %v3200
        %v3202 = vrot.slane %v3201, 2
        %v3203 = vadd.f32 %v3201, %v3202
        %v3204 = vrot.slane %v3203, 1
        %v3205 = vadd.f32 %v3203, %v3204
        %v3206 = vadd.f32 %v2336, %v2354
        %v3207 = vrot.slane %v3206, 4
        %v3208 = vadd.f32 %v3206, %v3207
        %v3209 = vrot.slane %v3208, 2
        %v3210 = vadd.f32 %v3208, %v3209
        %v3211 = vrot.slane %v3210, 1
        %v3212 = vadd.f32 %v3210, %v3211
        %v3213 = vadd.f32 %v2337, %v2355
        %v3214 = vrot.slane %v3213, 4
        %v3215 = vadd.f32 %v3213, %v3214
        %v3216 = vrot.slane %v3215, 2
        %v3217 = vadd.f32 %v3215, %v3216
        %v3218 = vrot.slane %v3217, 1
        %v3219 = vadd.f32 %v3217, %v3218
        %v3220 = vadd.f32 %v2338, %v2356
        %v3221 = vrot.slane %v3220, 4
        %v3222 = vadd.f32 %v3220, %v3221
        %v3223 = vrot.slane %v3222, 2
        %v3224 = vadd.f32 %v3222, %v3223
        %v3225 = vrot.slane %v3224, 1
        %v3226 = vadd.f32 %v3224, %v3225
        %v3227 = vadd.f32 %v2339, %v2357
        %v3228 = vrot.slane %v3227, 4
        %v3229 = vadd.f32 %v3227, %v3228
        %v3230 = vrot.slane %v3229, 2
        %v3231 = vadd.f32 %v3229, %v3230
        %v3232 = vrot.slane %v3231, 1
        %v3233 = vadd.f32 %v3231, %v3232
        %v3234 = vadd.f32 %v2340, %v2358
        %v3235 = vrot.slane %v3234, 4
        %v3236 = vadd.f32 %v3234, %v3235
        %v3237 = vrot.slane %v3236, 2
        %v3238 = vadd.f32 %v3236, %v3237
        %v3239 = vrot.slane %v3238, 1
        %v3240 = vadd.f32 %v3238, %v3239
        %v3241 = vadd.f32 %v2341, %v2359
        %v3242 = vrot.slane %v3241, 4
        %v3243 = vadd.f32 %v3241, %v3242
        %v3244 = vrot.slane %v3243, 2
        %v3245 = vadd.f32 %v3243, %v3244
        %v3246 = vrot.slane %v3245, 1
        %v3247 = vadd.f32 %v3245, %v3246
        %v3248 = vadd.f32 %v2342, %v2360
        %v3249 = vrot.slane %v3248, 4
        %v3250 = vadd.f32 %v3248, %v3249
        %v3251 = vrot.slane %v3250, 2
        %v3252 = vadd.f32 %v3250, %v3251
        %v3253 = vrot.slane %v3252, 1
        %v3254 = vadd.f32 %v3252, %v3253
        %v3255 = vadd.f32 %v2343, %v2361
        %v3256 = vrot.slane %v3255, 4
        %v3257 = vadd.f32 %v3255, %v3256
        %v3258 = vrot.slane %v3257, 2
        %v3259 = vadd.f32 %v3257, %v3258
        %v3260 = vrot.slane %v3259, 1
        %v3261 = vadd.f32 %v3259, %v3260
        %v3262 = vadd.f32 %v2344, %v2362
        %v3263 = vrot.slane %v3262, 4
        %v3264 = vadd.f32 %v3262, %v3263
        %v3265 = vrot.slane %v3264, 2
        %v3266 = vadd.f32 %v3264, %v3265
        %v3267 = vrot.slane %v3266, 1
        %v3268 = vadd.f32 %v3266, %v3267
        %v3269 = vadd.f32 %v2345, %v2363
        %v3270 = vrot.slane %v3269, 4
        %v3271 = vadd.f32 %v3269, %v3270
        %v3272 = vrot.slane %v3271, 2
        %v3273 = vadd.f32 %v3271, %v3272
        %v3274 = vrot.slane %v3273, 1
        %v3275 = vadd.f32 %v3273, %v3274
        %v3276 = vadd.f32 %v2346, %v2364
        %v3277 = vrot.slane %v3276, 4
        %v3278 = vadd.f32 %v3276, %v3277
        %v3279 = vrot.slane %v3278, 2
        %v3280 = vadd.f32 %v3278, %v3279
        %v3281 = vrot.slane %v3280, 1
        %v3282 = vadd.f32 %v3280, %v3281
        %v3283 = vadd.f32 %v2365, %v2383
        %v3284 = vrot.slane %v3283, 4
        %v3285 = vadd.f32 %v3283, %v3284
        %v3286 = vrot.slane %v3285, 2
        %v3287 = vadd.f32 %v3285, %v3286
        %v3288 = vrot.slane %v3287, 1
        %v3289 = vadd.f32 %v3287, %v3288
        %v3290 = vadd.f32 %v2366, %v2384
        %v3291 = vrot.slane %v3290, 4
        %v3292 = vadd.f32 %v3290, %v3291
        %v3293 = vrot.slane %v3292, 2
        %v3294 = vadd.f32 %v3292, %v3293
        %v3295 = vrot.slane %v3294, 1
        %v3296 = vadd.f32 %v3294, %v3295
        %v3297 = vadd.f32 %v2367, %v2385
        %v3298 = vrot.slane %v3297, 4
        %v3299 = vadd.f32 %v3297, %v3298
        %v3300 = vrot.slane %v3299, 2
        %v3301 = vadd.f32 %v3299, %v3300
        %v3302 = vrot.slane %v3301, 1
        %v3303 = vadd.f32 %v3301, %v3302
        %v3304 = vadd.f32 %v2368, %v2386
        %v3305 = vrot.slane %v3304, 4
        %v3306 = vadd.f32 %v3304, %v3305
        %v3307 = vrot.slane %v3306, 2
        %v3308 = vadd.f32 %v3306, %v3307
        %v3309 = vrot.slane %v3308, 1
        %v3310 = vadd.f32 %v3308, %v3309
        %v3311 = vadd.f32 %v2369, %v2387
        %v3312 = vrot.slane %v3311, 4
        %v3313 = vadd.f32 %v3311, %v3312
        %v3314 = vrot.slane %v3313, 2
        %v3315 = vadd.f32 %v3313, %v3314
        %v3316 = vrot.slane %v3315, 1
        %v3317 = vadd.f32 %v3315, %v3316
        %v3318 = vadd.f32 %v2370, %v2388
        %v3319 = vrot.slane %v3318, 4
        %v3320 = vadd.f32 %v3318, %v3319
        %v3321 = vrot.slane %v3320, 2
        %v3322 = vadd.f32 %v3320, %v3321
        %v3323 = vrot.slane %v3322, 1
        %v3324 = vadd.f32 %v3322, %v3323
        %v3325 = vadd.f32 %v2371, %v2389
        %v3326 = vrot.slane %v3325, 4
        %v3327 = vadd.f32 %v3325, %v3326
        %v3328 = vrot.slane %v3327, 2
        %v3329 = vadd.f32 %v3327, %v3328
        %v3330 = vrot.slane %v3329, 1
        %v3331 = vadd.f32 %v3329, %v3330
        %v3332 = vadd.f32 %v2372, %v2390
        %v3333 = vrot.slane %v3332, 4
        %v3334 = vadd.f32 %v3332, %v3333
        %v3335 = vrot.slane %v3334, 2
        %v3336 = vadd.f32 %v3334, %v3335
        %v3337 = vrot.slane %v3336, 1
        %v3338 = vadd.f32 %v3336, %v3337
        %v3339 = vadd.f32 %v2373, %v2391
        %v3340 = vrot.slane %v3339, 4
        %v3341 = vadd.f32 %v3339, %v3340
        %v3342 = vrot.slane %v3341, 2
        %v3343 = vadd.f32 %v3341, %v3342
        %v3344 = vrot.slane %v3343, 1
        %v3345 = vadd.f32 %v3343, %v3344
        %v3346 = vadd.f32 %v2374, %v2392
        %v3347 = vrot.slane %v3346, 4
        %v3348 = vadd.f32 %v3346, %v3347
        %v3349 = vrot.slane %v3348, 2
        %v3350 = vadd.f32 %v3348, %v3349
        %v3351 = vrot.slane %v3350, 1
        %v3352 = vadd.f32 %v3350, %v3351
        %v3353 = vadd.f32 %v2375, %v2393
        %v3354 = vrot.slane %v3353, 4
        %v3355 = vadd.f32 %v3353, %v3354
        %v3356 = vrot.slane %v3355, 2
        %v3357 = vadd.f32 %v3355, %v3356
        %v3358 = vrot.slane %v3357, 1
        %v3359 = vadd.f32 %v3357, %v3358
        %v3360 = vadd.f32 %v2376, %v2394
        %v3361 = vrot.slane %v3360, 4
        %v3362 = vadd.f32 %v3360, %v3361
        %v3363 = vrot.slane %v3362, 2
        %v3364 = vadd.f32 %v3362, %v3363
        %v3365 = vrot.slane %v3364, 1
        %v3366 = vadd.f32 %v3364, %v3365
        %v3367 = vadd.f32 %v2377, %v2395
        %v3368 = vrot.slane %v3367, 4
        %v3369 = vadd.f32 %v3367, %v3368
        %v3370 = vrot.slane %v3369, 2
        %v3371 = vadd.f32 %v3369, %v3370
        %v3372 = vrot.slane %v3371, 1
        %v3373 = vadd.f32 %v3371, %v3372
        %v3374 = vadd.f32 %v2378, %v2396
        %v3375 = vrot.slane %v3374, 4
        %v3376 = vadd.f32 %v3374, %v3375
        %v3377 = vrot.slane %v3376, 2
        %v3378 = vadd.f32 %v3376, %v3377
        %v3379 = vrot.slane %v3378, 1
        %v3380 = vadd.f32 %v3378, %v3379
        %v3381 = vadd.f32 %v2379, %v2397
        %v3382 = vrot.slane %v3381, 4
        %v3383 = vadd.f32 %v3381, %v3382
        %v3384 = vrot.slane %v3383, 2
        %v3385 = vadd.f32 %v3383, %v3384
        %v3386 = vrot.slane %v3385, 1
        %v3387 = vadd.f32 %v3385, %v3386
        %v3388 = vadd.f32 %v2380, %v2398
        %v3389 = vrot.slane %v3388, 4
        %v3390 = vadd.f32 %v3388, %v3389
        %v3391 = vrot.slane %v3390, 2
        %v3392 = vadd.f32 %v3390, %v3391
        %v3393 = vrot.slane %v3392, 1
        %v3394 = vadd.f32 %v3392, %v3393
        %v3395 = vadd.f32 %v2381, %v2399
        %v3396 = vrot.slane %v3395, 4
        %v3397 = vadd.f32 %v3395, %v3396
        %v3398 = vrot.slane %v3397, 2
        %v3399 = vadd.f32 %v3397, %v3398
        %v3400 = vrot.slane %v3399, 1
        %v3401 = vadd.f32 %v3399, %v3400
        %v3402 = vadd.f32 %v2382, %v2400
        %v3403 = vrot.slane %v3402, 4
        %v3404 = vadd.f32 %v3402, %v3403
        %v3405 = vrot.slane %v3404, 2
        %v3406 = vadd.f32 %v3404, %v3405
        %v3407 = vrot.slane %v3406, 1
        %v3408 = vadd.f32 %v3406, %v3407
        %v3409 = vpack.c.bf16 %v2407, %v2407
        %v3410 = vpack.c.bf16 %v2414, %v2414
        %v3411 = vpack.c.bf16 %v2421, %v2421
        %v3412 = vpack.c.bf16 %v2428, %v2428
        %v3413 = vpack.c.bf16 %v2435, %v2435
        %v3414 = vpack.c.bf16 %v2442, %v2442
        %v3415 = vpack.c.bf16 %v2449, %v2449
        %v3416 = vpack.c.bf16 %v2456, %v2456
        %v3417 = vpack.c.bf16 %v2463, %v2463
        %v3418 = vpack.c.bf16 %v2470, %v2470
        %v3419 = vpack.c.bf16 %v2477, %v2477
        %v3420 = vpack.c.bf16 %v2484, %v2484
        %v3421 = vpack.c.bf16 %v2491, %v2491
        %v3422 = vpack.c.bf16 %v2498, %v2498
        %v3423 = vpack.c.bf16 %v2505, %v2505
        %v3424 = vpack.c.bf16 %v2512, %v2512
        %v3425 = vpack.c.bf16 %v2519, %v2519
        %v3426 = vpack.c.bf16 %v2526, %v2526
        %v3427 = vpack.c.bf16 %v2533, %v2533
        %v3428 = vpack.c.bf16 %v2540, %v2540
        %v3429 = vpack.c.bf16 %v2547, %v2547
        %v3430 = vpack.c.bf16 %v2554, %v2554
        %v3431 = vpack.c.bf16 %v2561, %v2561
        %v3432 = vpack.c.bf16 %v2568, %v2568
        %v3433 = vpack.c.bf16 %v2575, %v2575
        %v3434 = vpack.c.bf16 %v2582, %v2582
        %v3435 = vpack.c.bf16 %v2589, %v2589
        %v3436 = vpack.c.bf16 %v2596, %v2596
        %v3437 = vpack.c.bf16 %v2603, %v2603
        %v3438 = vpack.c.bf16 %v2610, %v2610
        %v3439 = vpack.c.bf16 %v2617, %v2617
        %v3440 = vpack.c.bf16 %v2624, %v2624
        %v3441 = vpack.c.bf16 %v2631, %v2631
        %v3442 = vpack.c.bf16 %v2638, %v2638
        %v3443 = vpack.c.bf16 %v2645, %v2645
        %v3444 = vpack.c.bf16 %v2652, %v2652
        %v3445 = vpack.c.bf16 %v2659, %v2659
        %v3446 = vpack.c.bf16 %v2666, %v2666
        %v3447 = vpack.c.bf16 %v2673, %v2673
        %v3448 = vpack.c.bf16 %v2680, %v2680
        %v3449 = vpack.c.bf16 %v2687, %v2687
        %v3450 = vpack.c.bf16 %v2694, %v2694
        %v3451 = vpack.c.bf16 %v2701, %v2701
        %v3452 = vpack.c.bf16 %v2708, %v2708
        %v3453 = vpack.c.bf16 %v2715, %v2715
        %v3454 = vpack.c.bf16 %v2722, %v2722
        %v3455 = vpack.c.bf16 %v2729, %v2729
        %v3456 = vpack.c.bf16 %v2736, %v2736
        %v3457 = vpack.c.bf16 %v2743, %v2743
        %v3458 = vpack.c.bf16 %v2750, %v2750
        %v3459 = vpack.c.bf16 %v2757, %v2757
        %v3460 = vpack.c.bf16 %v2764, %v2764
        %v3461 = vpack.c.bf16 %v2771, %v2771
        %v3462 = vpack.c.bf16 %v2778, %v2778
        %v3463 = vpack.c.bf16 %v2785, %v2785
        %v3464 = vpack.c.bf16 %v2792, %v2792
        %v3465 = vpack.c.bf16 %v2799, %v2799
        %v3466 = vpack.c.bf16 %v2806, %v2806
        %v3467 = vpack.c.bf16 %v2813, %v2813
        %v3468 = vpack.c.bf16 %v2820, %v2820
        %v3469 = vpack.c.bf16 %v2827, %v2827
        %v3470 = vpack.c.bf16 %v2834, %v2834
        %v3471 = vpack.c.bf16 %v2841, %v2841
        %v3472 = vpack.c.bf16 %v2848, %v2848
        %v3473 = vpack.c.bf16 %v2855, %v2855
        %v3474 = vpack.c.bf16 %v2862, %v2862
        %v3475 = vpack.c.bf16 %v2869, %v2869
        %v3476 = vpack.c.bf16 %v2876, %v2876
        %v3477 = vpack.c.bf16 %v2883, %v2883
        %v3478 = vpack.c.bf16 %v2890, %v2890
        %v3479 = vpack.c.bf16 %v2897, %v2897
        %v3480 = vpack.c.bf16 %v2904, %v2904
        %v3481 = vpack.c.bf16 %v2911, %v2911
        %v3482 = vpack.c.bf16 %v2918, %v2918
        %v3483 = vpack.c.bf16 %v2925, %v2925
        %v3484 = vpack.c.bf16 %v2932, %v2932
        %v3485 = vpack.c.bf16 %v2939, %v2939
        %v3486 = vpack.c.bf16 %v2946, %v2946
        %v3487 = vpack.c.bf16 %v2953, %v2953
        %v3488 = vpack.c.bf16 %v2960, %v2960
        %v3489 = vpack.c.bf16 %v2967, %v2967
        %v3490 = vpack.c.bf16 %v2974, %v2974
        %v3491 = vpack.c.bf16 %v2981, %v2981
        %v3492 = vpack.c.bf16 %v2988, %v2988
        %v3493 = vpack.c.bf16 %v2995, %v2995
        %v3494 = vpack.c.bf16 %v3002, %v3002
        %v3495 = vpack.c.bf16 %v3009, %v3009
        %v3496 = vpack.c.bf16 %v3016, %v3016
        %v3497 = vpack.c.bf16 %v3023, %v3023
        %v3498 = vpack.c.bf16 %v3030, %v3030
        %v3499 = vpack.c.bf16 %v3037, %v3037
        %v3500 = vpack.c.bf16 %v3044, %v3044
        %v3501 = vpack.c.bf16 %v3051, %v3051
        %v3502 = vpack.c.bf16 %v3058, %v3058
        %v3503 = vpack.c.bf16 %v3065, %v3065
        %v3504 = vpack.c.bf16 %v3072, %v3072
        %v3505 = vpack.c.bf16 %v3079, %v3079
        %v3506 = vpack.c.bf16 %v3086, %v3086
        %v3507 = vpack.c.bf16 %v3093, %v3093
        %v3508 = vpack.c.bf16 %v3100, %v3100
        %v3509 = vpack.c.bf16 %v3107, %v3107
        %v3510 = vpack.c.bf16 %v3114, %v3114
        %v3511 = vpack.c.bf16 %v3121, %v3121
        %v3512 = vpack.c.bf16 %v3128, %v3128
        %v3513 = vpack.c.bf16 %v3135, %v3135
        %v3514 = vpack.c.bf16 %v3142, %v3142
        %v3515 = vpack.c.bf16 %v3149, %v3149
        %v3516 = vpack.c.bf16 %v3156, %v3156
        %v3517 = vpack.c.bf16 %v3163, %v3163
        %v3518 = vpack.c.bf16 %v3170, %v3170
        %v3519 = vpack.c.bf16 %v3177, %v3177
        %v3520 = vpack.c.bf16 %v3184, %v3184
        %v3521 = vpack.c.bf16 %v3191, %v3191
        %v3522 = vpack.c.bf16 %v3198, %v3198
        %v3523 = vpack.c.bf16 %v3205, %v3205
        %v3524 = vpack.c.bf16 %v3212, %v3212
        %v3525 = vpack.c.bf16 %v3219, %v3219
        %v3526 = vpack.c.bf16 %v3226, %v3226
        %v3527 = vpack.c.bf16 %v3233, %v3233
        %v3528 = vpack.c.bf16 %v3240, %v3240
        %v3529 = vpack.c.bf16 %v3247, %v3247
        %v3530 = vpack.c.bf16 %v3254, %v3254
        %v3531 = vpack.c.bf16 %v3261, %v3261
        %v3532 = vpack.c.bf16 %v3268, %v3268
        %v3533 = vpack.c.bf16 %v3275, %v3275
        %v3534 = vpack.c.bf16 %v3282, %v3282
        %v3535 = vpack.c.bf16 %v3289, %v3289
        %v3536 = vpack.c.bf16 %v3296, %v3296
        %v3537 = vpack.c.bf16 %v3303, %v3303
        %v3538 = vpack.c.bf16 %v3310, %v3310
        %v3539 = vpack.c.bf16 %v3317, %v3317
        %v3540 = vpack.c.bf16 %v3324, %v3324
        %v3541 = vpack.c.bf16 %v3331, %v3331
        %v3542 = vpack.c.bf16 %v3338, %v3338
        %v3543 = vpack.c.bf16 %v3345, %v3345
        %v3544 = vpack.c.bf16 %v3352, %v3352
        %v3545 = vpack.c.bf16 %v3359, %v3359
        %v3546 = vpack.c.bf16 %v3366, %v3366
        %v3547 = vpack.c.bf16 %v3373, %v3373
        %v3548 = vpack.c.bf16 %v3380, %v3380
        %v3549 = vpack.c.bf16 %v3387, %v3387
        %v3550 = vpack.c.bf16 %v3394, %v3394
        %v3551 = vpack.c.bf16 %v3401, %v3401
        %v3552 = vpack.c.bf16 %v3408, %v3408
        %v3569 = vunpack.c.l.b16 %v3409
        %v3570 = vunpack.c.l.b16 %v3410
        %v3571 = vunpack.c.l.b16 %v3427
        %v3572 = vunpack.c.l.b16 %v3428
        %v3573 = vunpack.c.l.b16 %v3445
        %v3574 = vunpack.c.l.b16 %v3446
        %v3575 = vunpack.c.l.b16 %v3463
        %v3576 = vunpack.c.l.b16 %v3464
        %v3577 = vunpack.c.l.b16 %v3481
        %v3578 = vunpack.c.l.b16 %v3482
        %v3579 = vunpack.c.l.b16 %v3499
        %v3580 = vunpack.c.l.b16 %v3500
        %v3581 = vunpack.c.l.b16 %v3517
        %v3582 = vunpack.c.l.b16 %v3518
        %v3583 = vunpack.c.l.b16 %v3535
        %v3584 = vunpack.c.l.b16 %v3536
        %v3585 = vpack.c.b16 %v3570, %v3569
        %v3586 = vpack.c.b16 %v3572, %v3571
        %v3587 = vpack.c.b16 %v3574, %v3573
        %v3588 = vpack.c.b16 %v3576, %v3575
        %v3589 = vpack.c.b16 %v3578, %v3577
        %v3590 = vpack.c.b16 %v3580, %v3579
        %v3591 = vpack.c.b16 %v3582, %v3581
        %v3592 = vpack.c.b16 %v3584, %v3583
        %v3593 = vunpack.c.l.b16 %v3585
        %v3594 = vunpack.c.h.b16 %v3585
        %v3595 = vunpack.c.l.b16 %v3586
        %v3596 = vunpack.c.h.b16 %v3586
        %v3597 = vunpack.c.l.b16 %v3587
        %v3598 = vunpack.c.h.b16 %v3587
        %v3599 = vunpack.c.l.b16 %v3588
        %v3600 = vunpack.c.h.b16 %v3588
        %v3601 = vunpack.c.l.b16 %v3589
        %v3602 = vunpack.c.h.b16 %v3589
        %v3603 = vunpack.c.l.b16 %v3590
        %v3604 = vunpack.c.h.b16 %v3590
        %v3605 = vunpack.c.l.b16 %v3591
        %v3606 = vunpack.c.h.b16 %v3591
        %v3607 = vunpack.c.l.b16 %v3592
        %v3608 = vunpack.c.h.b16 %v3592
        %vm3609 = vcmask 1041409
        %v3610 = vsel %vm3609, %v3595, %v3593
        %vm3611 = vcmask 1042434
        %v3612 = vsel %vm3611, %v3597, %v3610
        %vm3613 = vcmask 1043459
        %v3614 = vsel %vm3613, %v3599, %v3612
        %vm3615 = vcmask 1044484
        %v3616 = vsel %vm3615, %v3601, %v3614
        %vm3617 = vcmask 1045509
        %v3618 = vsel %vm3617, %v3603, %v3616
        %vm3619 = vcmask 1046534
        %v3620 = vsel %vm3619, %v3605, %v3618
        %vm3621 = vcmask 1047559
        %v3622 = vsel %vm3621, %v3607, %v3620
        %v3623 = vsel %vm3609, %v3596, %v3594
        %v3624 = vsel %vm3611, %v3598, %v3623
        %v3625 = vsel %vm3613, %v3600, %v3624
        %v3626 = vsel %vm3615, %v3602, %v3625
        %v3627 = vsel %vm3617, %v3604, %v3626
        %v3628 = vsel %vm3619, %v3606, %v3627
        %v3629 = vsel %vm3621, %v3608, %v3628
        %v3630 = vpack.c.b16 %v3629, %v3622
        %3632 = vst [vmem:[#allocation2] sm:$0xff] %v3630
        %v3649 = vunpack.c.l.b16 %v3411
        %v3650 = vunpack.c.l.b16 %v3412
        %v3651 = vunpack.c.l.b16 %v3429
        %v3652 = vunpack.c.l.b16 %v3430
        %v3653 = vunpack.c.l.b16 %v3447
        %v3654 = vunpack.c.l.b16 %v3448
        %v3655 = vunpack.c.l.b16 %v3465
        %v3656 = vunpack.c.l.b16 %v3466
        %v3657 = vunpack.c.l.b16 %v3483
        %v3658 = vunpack.c.l.b16 %v3484
        %v3659 = vunpack.c.l.b16 %v3501
        %v3660 = vunpack.c.l.b16 %v3502
        %v3661 = vunpack.c.l.b16 %v3519
        %v3662 = vunpack.c.l.b16 %v3520
        %v3663 = vunpack.c.l.b16 %v3537
        %v3664 = vunpack.c.l.b16 %v3538
        %v3665 = vpack.c.b16 %v3650, %v3649
        %v3666 = vpack.c.b16 %v3652, %v3651
        %v3667 = vpack.c.b16 %v3654, %v3653
        %v3668 = vpack.c.b16 %v3656, %v3655
        %v3669 = vpack.c.b16 %v3658, %v3657
        %v3670 = vpack.c.b16 %v3660, %v3659
        %v3671 = vpack.c.b16 %v3662, %v3661
        %v3672 = vpack.c.b16 %v3664, %v3663
        %v3673 = vunpack.c.l.b16 %v3665
        %v3674 = vunpack.c.h.b16 %v3665
        %v3675 = vunpack.c.l.b16 %v3666
        %v3676 = vunpack.c.h.b16 %v3666
        %v3677 = vunpack.c.l.b16 %v3667
        %v3678 = vunpack.c.h.b16 %v3667
        %v3679 = vunpack.c.l.b16 %v3668
        %v3680 = vunpack.c.h.b16 %v3668
        %v3681 = vunpack.c.l.b16 %v3669
        %v3682 = vunpack.c.h.b16 %v3669
        %v3683 = vunpack.c.l.b16 %v3670
        %v3684 = vunpack.c.h.b16 %v3670
        %v3685 = vunpack.c.l.b16 %v3671
        %v3686 = vunpack.c.h.b16 %v3671
        %v3687 = vunpack.c.l.b16 %v3672
        %v3688 = vunpack.c.h.b16 %v3672
        %v3689 = vsel %vm3609, %v3675, %v3673
        %v3690 = vsel %vm3611, %v3677, %v3689
        %v3691 = vsel %vm3613, %v3679, %v3690
        %v3692 = vsel %vm3615, %v3681, %v3691
        %v3693 = vsel %vm3617, %v3683, %v3692
        %v3694 = vsel %vm3619, %v3685, %v3693
        %v3695 = vsel %vm3621, %v3687, %v3694
        %v3696 = vsel %vm3609, %v3676, %v3674
        %v3697 = vsel %vm3611, %v3678, %v3696
        %v3698 = vsel %vm3613, %v3680, %v3697
        %v3699 = vsel %vm3615, %v3682, %v3698
        %v3700 = vsel %vm3617, %v3684, %v3699
        %v3701 = vsel %vm3619, %v3686, %v3700
        %v3702 = vsel %vm3621, %v3688, %v3701
        %v3703 = vpack.c.b16 %v3702, %v3695
        %3705 = vst [vmem:[#allocation2 + $0x8] sm:$0xff] %v3703
        %v3722 = vunpack.c.l.b16 %v3413
        %v3723 = vunpack.c.l.b16 %v3414
        %v3724 = vunpack.c.l.b16 %v3431
        %v3725 = vunpack.c.l.b16 %v3432
        %v3726 = vunpack.c.l.b16 %v3449
        %v3727 = vunpack.c.l.b16 %v3450
        %v3728 = vunpack.c.l.b16 %v3467
        %v3729 = vunpack.c.l.b16 %v3468
        %v3730 = vunpack.c.l.b16 %v3485
        %v3731 = vunpack.c.l.b16 %v3486
        %v3732 = vunpack.c.l.b16 %v3503
        %v3733 = vunpack.c.l.b16 %v3504
        %v3734 = vunpack.c.l.b16 %v3521
        %v3735 = vunpack.c.l.b16 %v3522
        %v3736 = vunpack.c.l.b16 %v3539
        %v3737 = vunpack.c.l.b16 %v3540
        %v3738 = vpack.c.b16 %v3723, %v3722
        %v3739 = vpack.c.b16 %v3725, %v3724
        %v3740 = vpack.c.b16 %v3727, %v3726
        %v3741 = vpack.c.b16 %v3729, %v3728
        %v3742 = vpack.c.b16 %v3731, %v3730
        %v3743 = vpack.c.b16 %v3733, %v3732
        %v3744 = vpack.c.b16 %v3735, %v3734
        %v3745 = vpack.c.b16 %v3737, %v3736
        %v3746 = vunpack.c.l.b16 %v3738
        %v3747 = vunpack.c.h.b16 %v3738
        %v3748 = vunpack.c.l.b16 %v3739
        %v3749 = vunpack.c.h.b16 %v3739
        %v3750 = vunpack.c.l.b16 %v3740
        %v3751 = vunpack.c.h.b16 %v3740
        %v3752 = vunpack.c.l.b16 %v3741
        %v3753 = vunpack.c.h.b16 %v3741
        %v3754 = vunpack.c.l.b16 %v3742
        %v3755 = vunpack.c.h.b16 %v3742
        %v3756 = vunpack.c.l.b16 %v3743
        %v3757 = vunpack.c.h.b16 %v3743
        %v3758 = vunpack.c.l.b16 %v3744
        %v3759 = vunpack.c.h.b16 %v3744
        %v3760 = vunpack.c.l.b16 %v3745
        %v3761 = vunpack.c.h.b16 %v3745
        %v3762 = vsel %vm3609, %v3748, %v3746
        %v3763 = vsel %vm3611, %v3750, %v3762
        %v3764 = vsel %vm3613, %v3752, %v3763
        %v3765 = vsel %vm3615, %v3754, %v3764
        %v3766 = vsel %vm3617, %v3756, %v3765
        %v3767 = vsel %vm3619, %v3758, %v3766
        %v3768 = vsel %vm3621, %v3760, %v3767
        %v3769 = vsel %vm3609, %v3749, %v3747
        %v3770 = vsel %vm3611, %v3751, %v3769
        %v3771 = vsel %vm3613, %v3753, %v3770
        %v3772 = vsel %vm3615, %v3755, %v3771
        %v3773 = vsel %vm3617, %v3757, %v3772
        %v3774 = vsel %vm3619, %v3759, %v3773
        %v3775 = vsel %vm3621, %v3761, %v3774
        %v3776 = vpack.c.b16 %v3775, %v3768
        %3778 = vst [vmem:[#allocation2 + $0x10] sm:$0xff] %v3776
        %v3795 = vunpack.c.l.b16 %v3415
        %v3796 = vunpack.c.l.b16 %v3416
        %v3797 = vunpack.c.l.b16 %v3433
        %v3798 = vunpack.c.l.b16 %v3434
        %v3799 = vunpack.c.l.b16 %v3451
        %v3800 = vunpack.c.l.b16 %v3452
        %v3801 = vunpack.c.l.b16 %v3469
        %v3802 = vunpack.c.l.b16 %v3470
        %v3803 = vunpack.c.l.b16 %v3487
        %v3804 = vunpack.c.l.b16 %v3488
        %v3805 = vunpack.c.l.b16 %v3505
        %v3806 = vunpack.c.l.b16 %v3506
        %v3807 = vunpack.c.l.b16 %v3523
        %v3808 = vunpack.c.l.b16 %v3524
        %v3809 = vunpack.c.l.b16 %v3541
        %v3810 = vunpack.c.l.b16 %v3542
        %v3811 = vpack.c.b16 %v3796, %v3795
        %v3812 = vpack.c.b16 %v3798, %v3797
        %v3813 = vpack.c.b16 %v3800, %v3799
        %v3814 = vpack.c.b16 %v3802, %v3801
        %v3815 = vpack.c.b16 %v3804, %v3803
        %v3816 = vpack.c.b16 %v3806, %v3805
        %v3817 = vpack.c.b16 %v3808, %v3807
        %v3818 = vpack.c.b16 %v3810, %v3809
        %v3819 = vunpack.c.l.b16 %v3811
        %v3820 = vunpack.c.h.b16 %v3811
        %v3821 = vunpack.c.l.b16 %v3812
        %v3822 = vunpack.c.h.b16 %v3812
        %v3823 = vunpack.c.l.b16 %v3813
        %v3824 = vunpack.c.h.b16 %v3813
        %v3825 = vunpack.c.l.b16 %v3814
        %v3826 = vunpack.c.h.b16 %v3814
        %v3827 = vunpack.c.l.b16 %v3815
        %v3828 = vunpack.c.h.b16 %v3815
        %v3829 = vunpack.c.l.b16 %v3816
        %v3830 = vunpack.c.h.b16 %v3816
        %v3831 = vunpack.c.l.b16 %v3817
        %v3832 = vunpack.c.h.b16 %v3817
        %v3833 = vunpack.c.l.b16 %v3818
        %v3834 = vunpack.c.h.b16 %v3818
        %v3835 = vsel %vm3609, %v3821, %v3819
        %v3836 = vsel %vm3611, %v3823, %v3835
        %v3837 = vsel %vm3613, %v3825, %v3836
        %v3838 = vsel %vm3615, %v3827, %v3837
        %v3839 = vsel %vm3617, %v3829, %v3838
        %v3840 = vsel %vm3619, %v3831, %v3839
        %v3841 = vsel %vm3621, %v3833, %v3840
        %v3842 = vsel %vm3609, %v3822, %v3820
        %v3843 = vsel %vm3611, %v3824, %v3842
        %v3844 = vsel %vm3613, %v3826, %v3843
        %v3845 = vsel %vm3615, %v3828, %v3844
        %v3846 = vsel %vm3617, %v3830, %v3845
        %v3847 = vsel %vm3619, %v3832, %v3846
        %v3848 = vsel %vm3621, %v3834, %v3847
        %v3849 = vpack.c.b16 %v3848, %v3841
        %3851 = vst [vmem:[#allocation2 + $0x18] sm:$0xff] %v3849
        %v3868 = vunpack.c.l.b16 %v3417
        %v3869 = vunpack.c.l.b16 %v3418
        %v3870 = vunpack.c.l.b16 %v3435
        %v3871 = vunpack.c.l.b16 %v3436
        %v3872 = vunpack.c.l.b16 %v3453
        %v3873 = vunpack.c.l.b16 %v3454
        %v3874 = vunpack.c.l.b16 %v3471
        %v3875 = vunpack.c.l.b16 %v3472
        %v3876 = vunpack.c.l.b16 %v3489
        %v3877 = vunpack.c.l.b16 %v3490
        %v3878 = vunpack.c.l.b16 %v3507
        %v3879 = vunpack.c.l.b16 %v3508
        %v3880 = vunpack.c.l.b16 %v3525
        %v3881 = vunpack.c.l.b16 %v3526
        %v3882 = vunpack.c.l.b16 %v3543
        %v3883 = vunpack.c.l.b16 %v3544
        %v3884 = vpack.c.b16 %v3869, %v3868
        %v3885 = vpack.c.b16 %v3871, %v3870
        %v3886 = vpack.c.b16 %v3873, %v3872
        %v3887 = vpack.c.b16 %v3875, %v3874
        %v3888 = vpack.c.b16 %v3877, %v3876
        %v3889 = vpack.c.b16 %v3879, %v3878
        %v3890 = vpack.c.b16 %v3881, %v3880
        %v3891 = vpack.c.b16 %v3883, %v3882
        %v3892 = vunpack.c.l.b16 %v3884
        %v3893 = vunpack.c.h.b16 %v3884
        %v3894 = vunpack.c.l.b16 %v3885
        %v3895 = vunpack.c.h.b16 %v3885
        %v3896 = vunpack.c.l.b16 %v3886
        %v3897 = vunpack.c.h.b16 %v3886
        %v3898 = vunpack.c.l.b16 %v3887
        %v3899 = vunpack.c.h.b16 %v3887
        %v3900 = vunpack.c.l.b16 %v3888
        %v3901 = vunpack.c.h.b16 %v3888
        %v3902 = vunpack.c.l.b16 %v3889
        %v3903 = vunpack.c.h.b16 %v3889
        %v3904 = vunpack.c.l.b16 %v3890
        %v3905 = vunpack.c.h.b16 %v3890
        %v3906 = vunpack.c.l.b16 %v3891
        %v3907 = vunpack.c.h.b16 %v3891
        %v3908 = vsel %vm3609, %v3894, %v3892
        %v3909 = vsel %vm3611, %v3896, %v3908
        %v3910 = vsel %vm3613, %v3898, %v3909
        %v3911 = vsel %vm3615, %v3900, %v3910
        %v3912 = vsel %vm3617, %v3902, %v3911
        %v3913 = vsel %vm3619, %v3904, %v3912
        %v3914 = vsel %vm3621, %v3906, %v3913
        %v3915 = vsel %vm3609, %v3895, %v3893
        %v3916 = vsel %vm3611, %v3897, %v3915
        %v3917 = vsel %vm3613, %v3899, %v3916
        %v3918 = vsel %vm3615, %v3901, %v3917
        %v3919 = vsel %vm3617, %v3903, %v3918
        %v3920 = vsel %vm3619, %v3905, %v3919
        %v3921 = vsel %vm3621, %v3907, %v3920
        %v3922 = vpack.c.b16 %v3921, %v3914
        %3924 = vst [vmem:[#allocation2 + $0x20] sm:$0xff] %v3922
        %v3941 = vunpack.c.l.b16 %v3419
        %v3942 = vunpack.c.l.b16 %v3420
        %v3943 = vunpack.c.l.b16 %v3437
        %v3944 = vunpack.c.l.b16 %v3438
        %v3945 = vunpack.c.l.b16 %v3455
        %v3946 = vunpack.c.l.b16 %v3456
        %v3947 = vunpack.c.l.b16 %v3473
        %v3948 = vunpack.c.l.b16 %v3474
        %v3949 = vunpack.c.l.b16 %v3491
        %v3950 = vunpack.c.l.b16 %v3492
        %v3951 = vunpack.c.l.b16 %v3509
        %v3952 = vunpack.c.l.b16 %v3510
        %v3953 = vunpack.c.l.b16 %v3527
        %v3954 = vunpack.c.l.b16 %v3528
        %v3955 = vunpack.c.l.b16 %v3545
        %v3956 = vunpack.c.l.b16 %v3546
        %v3957 = vpack.c.b16 %v3942, %v3941
        %v3958 = vpack.c.b16 %v3944, %v3943
        %v3959 = vpack.c.b16 %v3946, %v3945
        %v3960 = vpack.c.b16 %v3948, %v3947
        %v3961 = vpack.c.b16 %v3950, %v3949
        %v3962 = vpack.c.b16 %v3952, %v3951
        %v3963 = vpack.c.b16 %v3954, %v3953
        %v3964 = vpack.c.b16 %v3956, %v3955
        %v3965 = vunpack.c.l.b16 %v3957
        %v3966 = vunpack.c.h.b16 %v3957
        %v3967 = vunpack.c.l.b16 %v3958
        %v3968 = vunpack.c.h.b16 %v3958
        %v3969 = vunpack.c.l.b16 %v3959
        %v3970 = vunpack.c.h.b16 %v3959
        %v3971 = vunpack.c.l.b16 %v3960
        %v3972 = vunpack.c.h.b16 %v3960
        %v3973 = vunpack.c.l.b16 %v3961
        %v3974 = vunpack.c.h.b16 %v3961
        %v3975 = vunpack.c.l.b16 %v3962
        %v3976 = vunpack.c.h.b16 %v3962
        %v3977 = vunpack.c.l.b16 %v3963
        %v3978 = vunpack.c.h.b16 %v3963
        %v3979 = vunpack.c.l.b16 %v3964
        %v3980 = vunpack.c.h.b16 %v3964
        %v3981 = vsel %vm3609, %v3967, %v3965
        %v3982 = vsel %vm3611, %v3969, %v3981
        %v3983 = vsel %vm3613, %v3971, %v3982
        %v3984 = vsel %vm3615, %v3973, %v3983
        %v3985 = vsel %vm3617, %v3975, %v3984
        %v3986 = vsel %vm3619, %v3977, %v3985
        %v3987 = vsel %vm3621, %v3979, %v3986
        %v3988 = vsel %vm3609, %v3968, %v3966
        %v3989 = vsel %vm3611, %v3970, %v3988
        %v3990 = vsel %vm3613, %v3972, %v3989
        %v3991 = vsel %vm3615, %v3974, %v3990
        %v3992 = vsel %vm3617, %v3976, %v3991
        %v3993 = vsel %vm3619, %v3978, %v3992
        %v3994 = vsel %vm3621, %v3980, %v3993
        %v3995 = vpack.c.b16 %v3994, %v3987
        %3997 = vst [vmem:[#allocation2 + $0x28] sm:$0xff] %v3995
        %v4014 = vunpack.c.l.b16 %v3421
        %v4015 = vunpack.c.l.b16 %v3422
        %v4016 = vunpack.c.l.b16 %v3439
        %v4017 = vunpack.c.l.b16 %v3440
        %v4018 = vunpack.c.l.b16 %v3457
        %v4019 = vunpack.c.l.b16 %v3458
        %v4020 = vunpack.c.l.b16 %v3475
        %v4021 = vunpack.c.l.b16 %v3476
        %v4022 = vunpack.c.l.b16 %v3493
        %v4023 = vunpack.c.l.b16 %v3494
        %v4024 = vunpack.c.l.b16 %v3511
        %v4025 = vunpack.c.l.b16 %v3512
        %v4026 = vunpack.c.l.b16 %v3529
        %v4027 = vunpack.c.l.b16 %v3530
        %v4028 = vunpack.c.l.b16 %v3547
        %v4029 = vunpack.c.l.b16 %v3548
        %v4030 = vpack.c.b16 %v4015, %v4014
        %v4031 = vpack.c.b16 %v4017, %v4016
        %v4032 = vpack.c.b16 %v4019, %v4018
        %v4033 = vpack.c.b16 %v4021, %v4020
        %v4034 = vpack.c.b16 %v4023, %v4022
        %v4035 = vpack.c.b16 %v4025, %v4024
        %v4036 = vpack.c.b16 %v4027, %v4026
        %v4037 = vpack.c.b16 %v4029, %v4028
        %v4038 = vunpack.c.l.b16 %v4030
        %v4039 = vunpack.c.h.b16 %v4030
        %v4040 = vunpack.c.l.b16 %v4031
        %v4041 = vunpack.c.h.b16 %v4031
        %v4042 = vunpack.c.l.b16 %v4032
        %v4043 = vunpack.c.h.b16 %v4032
        %v4044 = vunpack.c.l.b16 %v4033
        %v4045 = vunpack.c.h.b16 %v4033
        %v4046 = vunpack.c.l.b16 %v4034
        %v4047 = vunpack.c.h.b16 %v4034
        %v4048 = vunpack.c.l.b16 %v4035
        %v4049 = vunpack.c.h.b16 %v4035
        %v4050 = vunpack.c.l.b16 %v4036
        %v4051 = vunpack.c.h.b16 %v4036
        %v4052 = vunpack.c.l.b16 %v4037
        %v4053 = vunpack.c.h.b16 %v4037
        %v4054 = vsel %vm3609, %v4040, %v4038
        %v4055 = vsel %vm3611, %v4042, %v4054
        %v4056 = vsel %vm3613, %v4044, %v4055
        %v4057 = vsel %vm3615, %v4046, %v4056
        %v4058 = vsel %vm3617, %v4048, %v4057
        %v4059 = vsel %vm3619, %v4050, %v4058
        %v4060 = vsel %vm3621, %v4052, %v4059
        %v4061 = vsel %vm3609, %v4041, %v4039
        %v4062 = vsel %vm3611, %v4043, %v4061
        %v4063 = vsel %vm3613, %v4045, %v4062
        %v4064 = vsel %vm3615, %v4047, %v4063
        %v4065 = vsel %vm3617, %v4049, %v4064
        %v4066 = vsel %vm3619, %v4051, %v4065
        %v4067 = vsel %vm3621, %v4053, %v4066
        %v4068 = vpack.c.b16 %v4067, %v4060
        %4070 = vst [vmem:[#allocation2 + $0x30] sm:$0xff] %v4068
        %v4087 = vunpack.c.l.b16 %v3423
        %v4088 = vunpack.c.l.b16 %v3424
        %v4089 = vunpack.c.l.b16 %v3441
        %v4090 = vunpack.c.l.b16 %v3442
        %v4091 = vunpack.c.l.b16 %v3459
        %v4092 = vunpack.c.l.b16 %v3460
        %v4093 = vunpack.c.l.b16 %v3477
        %v4094 = vunpack.c.l.b16 %v3478
        %v4095 = vunpack.c.l.b16 %v3495
        %v4096 = vunpack.c.l.b16 %v3496
        %v4097 = vunpack.c.l.b16 %v3513
        %v4098 = vunpack.c.l.b16 %v3514
        %v4099 = vunpack.c.l.b16 %v3531
        %v4100 = vunpack.c.l.b16 %v3532
        %v4101 = vunpack.c.l.b16 %v3549
        %v4102 = vunpack.c.l.b16 %v3550
        %v4103 = vpack.c.b16 %v4088, %v4087
        %v4104 = vpack.c.b16 %v4090, %v4089
        %v4105 = vpack.c.b16 %v4092, %v4091
        %v4106 = vpack.c.b16 %v4094, %v4093
        %v4107 = vpack.c.b16 %v4096, %v4095
        %v4108 = vpack.c.b16 %v4098, %v4097
        %v4109 = vpack.c.b16 %v4100, %v4099
        %v4110 = vpack.c.b16 %v4102, %v4101
        %v4111 = vunpack.c.l.b16 %v4103
        %v4112 = vunpack.c.h.b16 %v4103
        %v4113 = vunpack.c.l.b16 %v4104
        %v4114 = vunpack.c.h.b16 %v4104
        %v4115 = vunpack.c.l.b16 %v4105
        %v4116 = vunpack.c.h.b16 %v4105
        %v4117 = vunpack.c.l.b16 %v4106
        %v4118 = vunpack.c.h.b16 %v4106
        %v4119 = vunpack.c.l.b16 %v4107
        %v4120 = vunpack.c.h.b16 %v4107
        %v4121 = vunpack.c.l.b16 %v4108
        %v4122 = vunpack.c.h.b16 %v4108
        %v4123 = vunpack.c.l.b16 %v4109
        %v4124 = vunpack.c.h.b16 %v4109
        %v4125 = vunpack.c.l.b16 %v4110
        %v4126 = vunpack.c.h.b16 %v4110
        %v4127 = vsel %vm3609, %v4113, %v4111
        %v4128 = vsel %vm3611, %v4115, %v4127
        %v4129 = vsel %vm3613, %v4117, %v4128
        %v4130 = vsel %vm3615, %v4119, %v4129
        %v4131 = vsel %vm3617, %v4121, %v4130
        %v4132 = vsel %vm3619, %v4123, %v4131
        %v4133 = vsel %vm3621, %v4125, %v4132
        %v4134 = vsel %vm3609, %v4114, %v4112
        %v4135 = vsel %vm3611, %v4116, %v4134
        %v4136 = vsel %vm3613, %v4118, %v4135
        %v4137 = vsel %vm3615, %v4120, %v4136
        %v4138 = vsel %vm3617, %v4122, %v4137
        %v4139 = vsel %vm3619, %v4124, %v4138
        %v4140 = vsel %vm3621, %v4126, %v4139
        %v4141 = vpack.c.b16 %v4140, %v4133
        %4143 = vst [vmem:[#allocation2 + $0x38] sm:$0xff] %v4141
        %v4160 = vunpack.c.l.b16 %v3425
        %v4161 = vunpack.c.l.b16 %v3426
        %v4162 = vunpack.c.l.b16 %v3443
        %v4163 = vunpack.c.l.b16 %v3444
        %v4164 = vunpack.c.l.b16 %v3461
        %v4165 = vunpack.c.l.b16 %v3462
        %v4166 = vunpack.c.l.b16 %v3479
        %v4167 = vunpack.c.l.b16 %v3480
        %v4168 = vunpack.c.l.b16 %v3497
        %v4169 = vunpack.c.l.b16 %v3498
        %v4170 = vunpack.c.l.b16 %v3515
        %v4171 = vunpack.c.l.b16 %v3516
        %v4172 = vunpack.c.l.b16 %v3533
        %v4173 = vunpack.c.l.b16 %v3534
        %v4174 = vunpack.c.l.b16 %v3551
        %v4175 = vunpack.c.l.b16 %v3552
        %v4176 = vpack.c.b16 %v4161, %v4160
        %v4177 = vpack.c.b16 %v4163, %v4162
        %v4178 = vpack.c.b16 %v4165, %v4164
        %v4179 = vpack.c.b16 %v4167, %v4166
        %v4180 = vpack.c.b16 %v4169, %v4168
        %v4181 = vpack.c.b16 %v4171, %v4170
        %v4182 = vpack.c.b16 %v4173, %v4172
        %v4183 = vpack.c.b16 %v4175, %v4174
        %v4184 = vunpack.c.l.b16 %v4176
        %v4185 = vunpack.c.h.b16 %v4176
        %v4186 = vunpack.c.l.b16 %v4177
        %v4187 = vunpack.c.h.b16 %v4177
        %v4188 = vunpack.c.l.b16 %v4178
        %v4189 = vunpack.c.h.b16 %v4178
        %v4190 = vunpack.c.l.b16 %v4179
        %v4191 = vunpack.c.h.b16 %v4179
        %v4192 = vunpack.c.l.b16 %v4180
        %v4193 = vunpack.c.h.b16 %v4180
        %v4194 = vunpack.c.l.b16 %v4181
        %v4195 = vunpack.c.h.b16 %v4181
        %v4196 = vunpack.c.l.b16 %v4182
        %v4197 = vunpack.c.h.b16 %v4182
        %v4198 = vunpack.c.l.b16 %v4183
        %v4199 = vunpack.c.h.b16 %v4183
        %v4200 = vsel %vm3609, %v4186, %v4184
        %v4201 = vsel %vm3611, %v4188, %v4200
        %v4202 = vsel %vm3613, %v4190, %v4201
        %v4203 = vsel %vm3615, %v4192, %v4202
        %v4204 = vsel %vm3617, %v4194, %v4203
        %v4205 = vsel %vm3619, %v4196, %v4204
        %v4206 = vsel %vm3621, %v4198, %v4205
        %v4207 = vsel %vm3609, %v4187, %v4185
        %v4208 = vsel %vm3611, %v4189, %v4207
        %v4209 = vsel %vm3613, %v4191, %v4208
        %v4210 = vsel %vm3615, %v4193, %v4209
        %v4211 = vsel %vm3617, %v4195, %v4210
        %v4212 = vsel %vm3619, %v4197, %v4211
        %v4213 = vsel %vm3621, %v4199, %v4212
        %v4214 = vpack.c.b16 %v4213, %v4206
        %4216 = vst [vmem:[#allocation2 + $0x40] sm:$0xff] %v4214
        %v4217 = vld [vmem:[%s4] sm:$0xf]
        %v4218 = vld [vmem:[#allocation2] sm:$0xff]
        %v4219 = vld [vmem:[#allocation2 + $0x8] sm:$0xff]
        %v4220 = vld [vmem:[#allocation2 + $0x10] sm:$0xff]
        %v4221 = vld [vmem:[#allocation2 + $0x18] sm:$0xff]
        %v4222 = vld [vmem:[#allocation2 + $0x20] sm:$0xff]
        %v4223 = vld [vmem:[#allocation2 + $0x28] sm:$0xff]
        %v4224 = vld [vmem:[#allocation2 + $0x30] sm:$0xff]
        %v4225 = vld [vmem:[#allocation2 + $0x38] sm:$0xff]
        %v4226 = vld [vmem:[#allocation2 + $0x40] sm:$0xff]
        %v4227 = vld [vmem:[%s5] sm:$0xff]
        %4229 = vset.pattern.permute.xlu0 0
        %4230 = vperm.xlu0 %4229, %v4227
        %v4231 = vpop.permute.xlu0 %4230
        %v4242 = vunpack.c.l.b16 %v4218
        %v4243 = vunpack.c.h.b16 %v4218
        %v4244 = vunpack.c.l.b16 %v4219
        %v4245 = vunpack.c.h.b16 %v4219
        %v4246 = vunpack.c.l.b16 %v4220
        %v4247 = vunpack.c.h.b16 %v4220
        %v4248 = vunpack.c.l.b16 %v4221
        %v4249 = vunpack.c.h.b16 %v4221
        %v4250 = vunpack.c.l.b16 %v4222
        %v4251 = vunpack.c.h.b16 %v4222
        %v4252 = vunpack.c.l.b16 %v4223
        %v4253 = vunpack.c.h.b16 %v4223
        %v4254 = vunpack.c.l.b16 %v4224
        %v4255 = vunpack.c.h.b16 %v4224
        %v4256 = vunpack.c.l.b16 %v4225
        %v4257 = vunpack.c.h.b16 %v4225
        %v4258 = vunpack.c.l.b16 %v4226
        %v4259 = vunpack.c.h.b16 %v4226
        %v4260 = vpack.c.b16 %v4244, %v4242
        %v4261 = vpack.c.b16 %v4245, %v4243
        %v4262 = vpack.c.b16 %v4248, %v4246
        %v4263 = vpack.c.b16 %v4249, %v4247
        %v4264 = vpack.c.b16 %v4252, %v4250
        %v4265 = vpack.c.b16 %v4253, %v4251
        %v4266 = vpack.c.b16 %v4256, %v4254
        %v4267 = vpack.c.b16 %v4257, %v4255
        %v4268 = vpack.c.b16 %v4258, %v4258
        %v4269 = vpack.c.b16 %v4259, %v4259
        %vm4278 = vcmask 588800
        %v4280 = vsel %vm4278, %v4217, 0
        %vm4282 = vcmask 1043456
        %v4284 = vsel %vm4282, %v4268, 0
        %v4287 = vsel %vm4282, %v4269, 0
        %4289 = vmatprep.subr.bf16.mxu0 %v4261
        %4290 = vmatpush1.bf16.msra.mxu0 %v4260
        %4291 = vmatprep.subr.bf16.mxu0 %v4263
        %4292 = vmatpush1.bf16.msra.mxu0 %v4262
        %4293 = vmatprep.subr.bf16.mxu0 %v4265
        %4294 = vmatpush1.bf16.msra.mxu0 %v4264
        %4295 = vmatprep.subr.bf16.mxu0 %v4267
        %4296 = vmatpush1.bf16.msra.mxu0 %v4266
        %4297 = vmatprep.subr.bf16.mxu0 %v4287
        %4298 = vmatpush1.bf16.msra.mxu0 %v4284
        %4299 = vmatprep.subr.bf16.mxu0 0
        %4300 = vmatpush1.bf16.msra.mxu0 0
        %4301 = vmatprep.subr.bf16.mxu0 0
        %4302 = vmatpush1.bf16.msra.mxu0 0
        %4303 = vmatprep.subr.bf16.mxu0 0
        %4304 = vmatpush1.bf16.msra.mxu0 0
        %4305 = vmatprep.subr.bf16.mxu0 0
        %4306 = vmatpush1.bf16.msra.mxu0 0
        %4307 = vmatprep.subr.bf16.mxu0 0
        %4308 = vmatpush1.bf16.msra.mxu0 0
        %4309 = vmatprep.subr.bf16.mxu0 0
        %4310 = vmatpush1.bf16.msra.mxu0 0
        %4311 = vmatprep.subr.bf16.mxu0 0
        %4312 = vmatpush1.bf16.msra.mxu0 0
        %4313 = vmatprep.subr.bf16.mxu0 0
        %4314 = vmatpush1.bf16.msra.mxu0 0
        %4315 = vmatprep.subr.bf16.mxu0 0
        %4316 = vmatpush1.bf16.msra.mxu0 0
        %4317 = vmatprep.subr.bf16.mxu0 0
        %4318 = vmatpush1.bf16.msra.mxu0 0
        %4319 = vmatprep.subr.bf16.mxu0 0
        %4320 = vmatpush1.bf16.msra.mxu0 0
        %4321 = vmatprep.mubr.bf16.mxu0 0
        %4322 = vmatmul.mubr.bf16.gmra.mrb[0].mxu0 %v4280
        %v4323 = vpop.f32.mrb[0].mxu0
        %v4324 = vadd.f32 %v4231, %v4323
        %v4325 = vpop.f32.mrb[0].mxu0
        %v4326 = vadd.f32 %v4231, %v4325
        %v4327 = vpop.f32.mrb[0].mxu0
        %v4328 = vpop.f32.mrb[0].mxu0
        %4329 = vdwg.mxu0
        %4330 = vst [vmem:[%s330] sm:$0xff] %v4324
        %4331 = vst [vmem:[%s330 + $0x8] sm:$0xff] %v4326
        %s4332 = sand.u32 %s194, 1
        %s4333 = scalar_lea.sflag [#allocation4], %s4332
        %s4334 = sand.u32 %s194, 1
        %s4335 = smul.addr %s4334, 16
        %s4336 = scalar_lea.vmem [#allocation3], %s4335
        // Predicated region
        $region45: #{tpu_custom_call.1} parent=43 // pred_check
          %p4337 = pneg %p204
        $region46: #{tpu_custom_call.1} parent=43 // pred_check_branch
          %4339 = sbr.rel (%p4337) target = $region48
        $region47: #{tpu_custom_call.1} parent=43 // pred_region
          %s4340 = smul.u32 2, %s25
          %s4342 = ssub.s32 256, 256
          %4343 = vsyncadd %s4333, %s4342
          %s4344 = smul.addr %s24, 2
          %s4345 = sadd.s32 %s4340, %s4344
          %s4346 = smul.addr %s4345, 128
          %s4347 = scalar_lea.hbm %s6, %s4346
          %s4349 = sshll.u32 %s4336, 4
          %s4350 = int_to_ptr.vmem [resolvable:$true] %s4349
          %4352 = dma.vmem_to_hbm [thread:$0]  %s4350, 256, %s4347, %s4333
        $region48: #{tpu_custom_call.1} parent=43 // pred_fallthru
          _
      $region44: #{tpu_custom_call.1} parent=5 // pred_fallthru
        _
      %p4353 = scmp.le.s32.totalorder 2, %s15
      // Predicated region
      $region49: #{tpu_custom_call.1} parent=5 // pred_check
        %p4354 = pneg %p4353
      $region50: #{tpu_custom_call.1} parent=5 // pred_check_branch
        %4356 = sbr.rel (%p4354) target = $region52
      $region51: #{tpu_custom_call.1} parent=5 // pred_region
        %s4357 = ssub.s32 %s15, 2
        // Predicated region
        $region53: #{tpu_custom_call.1} parent=51 // pred_check
          %p4358 = pneg %p210
        $region54: #{tpu_custom_call.1} parent=51 // pred_check_branch
          %4360 = sbr.rel (%p4358) target = $region56
        $region55: #{tpu_custom_call.1} parent=51 // pred_region
          %s4361 = sand.u32 %s195, 1
          %s4362 = scalar_lea.sflag [#allocation4], %s4361
          %s4363 = sand.u32 %s195, 1
          %s4364 = smul.addr %s4363, 16
          %s4365 = scalar_lea.vmem [#allocation3], %s4364
          %4366 = dma.done %s4362, 256
        $region56: #{tpu_custom_call.1} parent=51 // pred_fallthru
          _
      $region52: #{tpu_custom_call.1} parent=5 // pred_fallthru
        _
    $region6: #{tpu_custom_call.1} parent=1 // loop_footer
      %s19 = sadd.s32 1, %s15
    $region7: #{tpu_custom_call.1} parent=1 // loop_footer_branch
      %14 = sbr.rel target = $region3
    $region8: #{tpu_custom_call.1} parent=1 // loop_exit
      _
    %4367 = vsyncpa [#allocation4], 1
    %s4368 = scalar_lea.sflag [#allocation4], 1
    %4369 = vsyncpa %s4368, 1

// kernel: tpu_custom_call.1
$region0: #{tpu_custom_call.1}
  #allocation0 [shape = 'u32[]', space=smem, size = 0x4, offset = 0x4, fixed_abs, tag = 'smem constant byte address 0x4 - core index']
  #allocation1 [shape = 'u32[144,128]{1,0:T(1,128)}', space=vmem, size = 0x12000, scoped, tag = 'internal scratch']
  #allocation2 [shape = 'bf16[72,256]{1,0:T(8,128)(2,1)}', space=vmem, size = 0x9000, scoped, tag = 'scratch operand']
  %s0 = inlined_call_operand.vmem [shape: bf16[2,128,16], index: 0, kind: input, shape index: {}]
  %s1 = inlined_call_operand.vmem [shape: f32[2,1,2304], index: 1, kind: input, shape index: {}]
  %s2 = inlined_call_operand.vmem [shape: f32[2,1,2304], index: 2, kind: input, shape index: {}]
  %s3 = inlined_call_operand.vmem [shape: f32[2,1,2304], index: 3, kind: input, shape index: {}]
  %s4 = inlined_call_operand.vmem [shape: bf16[8,72], index: 4, kind: input, shape index: {}]
  %s5 = inlined_call_operand.vmem [shape: f32[8,1], index: 5, kind: input, shape index: {}]
  %s6 = inlined_call_operand.hbm [shape: f32[2,8,256], index: 6, kind: output, shape index: {}]
  %s7 = sld [smem:[#allocation0]]
  $region57: #{tpu_custom_call.1} parent=0
    _
  %s9 = ssub.s32 1, %s7
  %s10 = scalar_select 0, %s9, %s7
  $region1: #{tpu_custom_call.1} parent=0
    #allocation3 [shape = 'u8[16384]{0}', space=vmem, size = 0x4000, scoped, tag = 'output window, operand 0']
    #allocation4 [shape = 's32[2]{0}', space=sflag, size = 0x8, scoped, tag = 'scoped memory for tpu_custom_call.1']
    %11 = vsyncpa [#allocation4], 0
    %s12 = scalar_lea.sflag [#allocation4], 1
    %13 = vsyncpa %s12, 0
    loop: start=0, step=1, limit=4
    $region2: #{tpu_custom_call.1} parent=1 // loop_pre_header
      _
    $region3: #{tpu_custom_call.1} parent=1 // loop_header
      %s15 = sphi 0, %s19
      %p16 = scmp.ge.s32.totalorder %s15, 4
      %s22 = sphi 0, %s34
      %s23 = sphi 0, %s30
      %s24 = sphi 0, %s22
      %s25 = sphi 0, %s23
      %s26 = sphi 0, %s24
      %s27 = sphi 0, %s25
      %s37 = sphi 0, %s39
      %s40 = sphi 0, %s37
      %s41 = sphi 0, %s40
      %s57 = sphi 0, %s41
      %s65 = sphi 0, %s67
      %s68 = sphi 0, %s65
      %s69 = sphi 0, %s68
      %s85 = sphi 0, %s69
      %s93 = sphi 0, %s95
      %s96 = sphi 0, %s93
      %s97 = sphi 0, %s96
      %s113 = sphi 0, %s97
      %s121 = sphi 0, %s123
      %s124 = sphi 0, %s121
      %s125 = sphi 0, %s124
      %s141 = sphi 0, %s125
      %s145 = sphi 0, %s145
      %s147 = sphi 0, %s145
      %s148 = sphi 0, %s147
      %s162 = sphi 0, %s148
      %s166 = sphi 0, %s166
      %s168 = sphi 0, %s166
      %s169 = sphi 0, %s168
      %s183 = sphi 0, %s169
      %s191 = sphi 0, %s193
      %s194 = sphi 0, %s191
      %s195 = sphi 0, %s194
      %s211 = sphi 0, %s195
    $region4: #{tpu_custom_call.1} parent=1 // loop_header_branch
      %18 = sbr.rel (%p16) target = $region8
    $region5: #{tpu_custom_call.1} parent=1 // loop_body
      %s20 = ssub.s32 %s15, 1
      %s21 = ssub.s32 %s15, 2
      %s28 = sadd.s32 1, %s23
      %p29 = scmp.ge.s32.totalorder %s28, 1
      %s30 = scalar_select %p29, 0, %s28
      %s31 = sadd.s32 1, %s22
      %s32 = scalar_select %p29, %s31, %s22
      %p33 = scmp.ge.s32.totalorder %s32, 2
      %s34 = scalar_select %p33, 0, %s32
      %s35 = ssub.s32 %s22, %s34
      %p36 = scmp.eq.s32.totalorder %s35, 0
      %s38 = sadd.s32 %s37, 1
      %s39 = scalar_select %p36, %s37, %s38
      %p42 = pneg %p36
      %p43 = scmp.eq.s32.totalorder %s15, 1
      %p44 = por %p42, %p43
      %p45 = scmp.ne.s32.totalorder %s37, %s40
      %p46 = scmp.eq.s32.totalorder %s15, 0
      %p47 = por %p45, %p46
      %p48 = scmp.ne.s32.totalorder %s37, %s40
      %p49 = scmp.eq.s32.totalorder %s20, 1
      %p50 = por %p48, %p49
      %p51 = scmp.ne.s32.totalorder %s40, %s41
      %p52 = scmp.eq.s32.totalorder %s20, 0
      %p53 = por %p51, %p52
      %p54 = scmp.ne.s32.totalorder %s40, %s41
      %p55 = scmp.eq.s32.totalorder %s21, 1
      %p56 = por %p54, %p55
      %p58 = scmp.ne.s32.totalorder %s41, %s57
      %p59 = scmp.eq.s32.totalorder %s21, 0
      %p60 = por %p58, %p59
      %s61 = ssub.s32 %s22, %s34
      %s62 = ssub.s32 %s23, %s30
      %s63 = sor.u32 %s61, %s62
      %p64 = scmp.eq.s32.totalorder %s63, 0
      %s66 = sadd.s32 %s65, 1
      %s67 = scalar_select %p64, %s65, %s66
      %p70 = pneg %p64
      %p71 = scmp.eq.s32.totalorder %s15, 1
      %p72 = por %p70, %p71
      %p73 = scmp.ne.s32.totalorder %s65, %s68
      %p74 = scmp.eq.s32.totalorder %s15, 0
      %p75 = por %p73, %p74
      %p76 = scmp.ne.s32.totalorder %s65, %s68
      %p77 = scmp.eq.s32.totalorder %s20, 1
      %p78 = por %p76, %p77
      %p79 = scmp.ne.s32.totalorder %s68, %s69
      %p80 = scmp.eq.s32.totalorder %s20, 0
      %p81 = por %p79, %p80
      %p82 = scmp.ne.s32.totalorder %s68, %s69
      %p83 = scmp.eq.s32.totalorder %s21, 1
      %p84 = por %p82, %p83
      %p86 = scmp.ne.s32.totalorder %s69, %s85
      %p87 = scmp.eq.s32.totalorder %s21, 0
      %p88 = por %p86, %p87
      %s89 = ssub.s32 %s22, %s34
      %s90 = ssub.s32 %s23, %s30
      %s91 = sor.u32 %s89, %s90
      %p92 = scmp.eq.s32.totalorder %s91, 0
      %s94 = sadd.s32 %s93, 1
      %s95 = scalar_select %p92, %s93, %s94
      %p98 = pneg %p92
      %p99 = scmp.eq.s32.totalorder %s15, 1
      %p100 = por %p98, %p99
      %p101 = scmp.ne.s32.totalorder %s93, %s96
      %p102 = scmp.eq.s32.totalorder %s15, 0
      %p103 = por %p101, %p102
      %p104 = scmp.ne.s32.totalorder %s93, %s96
      %p105 = scmp.eq.s32.totalorder %s20, 1
      %p106 = por %p104, %p105
      %p107 = scmp.ne.s32.totalorder %s96, %s97
      %p108 = scmp.eq.s32.totalorder %s20, 0
      %p109 = por %p107, %p108
      %p110 = scmp.ne.s32.totalorder %s96, %s97
      %p111 = scmp.eq.s32.totalorder %s21, 1
      %p112 = por %p110, %p111
      %p114 = scmp.ne.s32.totalorder %s97, %s113
      %p115 = scmp.eq.s32.totalorder %s21, 0
      %p116 = por %p114, %p115
      %s117 = ssub.s32 %s22, %s34
      %s118 = ssub.s32 %s23, %s30
      %s119 = sor.u32 %s117, %s118
      %p120 = scmp.eq.s32.totalorder %s119, 0
      %s122 = sadd.s32 %s121, 1
      %s123 = scalar_select %p120, %s121, %s122
      %p126 = pneg %p120
      %p127 = scmp.eq.s32.totalorder %s15, 1
      %p128 = por %p126, %p127
      %p129 = scmp.ne.s32.totalorder %s121, %s124
      %p130 = scmp.eq.s32.totalorder %s15, 0
      %p131 = por %p129, %p130
      %p132 = scmp.ne.s32.totalorder %s121, %s124
      %p133 = scmp.eq.s32.totalorder %s20, 1
      %p134 = por %p132, %p133
      %p135 = scmp.ne.s32.totalorder %s124, %s125
      %p136 = scmp.eq.s32.totalorder %s20, 0
      %p137 = por %p135, %p136
      %p138 = scmp.ne.s32.totalorder %s124, %s125
      %p139 = scmp.eq.s32.totalorder %s21, 1
      %p140 = por %p138, %p139
      %p142 = scmp.ne.s32.totalorder %s125, %s141
      %p143 = scmp.eq.s32.totalorder %s21, 0
      %p144 = por %p142, %p143
      %s146 = sadd.s32 %s145, 1
      %p149 = scmp.eq.s32.totalorder %s15, 1
      %p150 = scmp.ne.s32.totalorder %s145, %s147
      %p151 = scmp.eq.s32.totalorder %s15, 0
      %p152 = por %p150, %p151
      %p153 = scmp.ne.s32.totalorder %s145, %s147
      %p154 = scmp.eq.s32.totalorder %s20, 1
      %p155 = por %p153, %p154
      %p156 = scmp.ne.s32.totalorder %s147, %s148
      %p157 = scmp.eq.s32.totalorder %s20, 0
      %p158 = por %p156, %p157
      %p159 = scmp.ne.s32.totalorder %s147, %s148
      %p160 = scmp.eq.s32.totalorder %s21, 1
      %p161 = por %p159, %p160
      %p163 = scmp.ne.s32.totalorder %s148, %s162
      %p164 = scmp.eq.s32.totalorder %s21, 0
      %p165 = por %p163, %p164
      %s167 = sadd.s32 %s166, 1
      %p170 = scmp.eq.s32.totalorder %s15, 1
      %p171 = scmp.ne.s32.totalorder %s166, %s168
      %p172 = scmp.eq.s32.totalorder %s15, 0
      %p173 = por %p171, %p172
      %p174 = scmp.ne.s32.totalorder %s166, %s168
      %p175 = scmp.eq.s32.totalorder %s20, 1
      %p176 = por %p174, %p175
      %p177 = scmp.ne.s32.totalorder %s168, %s169
      %p178 = scmp.eq.s32.totalorder %s20, 0
      %p179 = por %p177, %p178
      %p180 = scmp.ne.s32.totalorder %s168, %s169
      %p181 = scmp.eq.s32.totalorder %s21, 1
      %p182 = por %p180, %p181
      %p184 = scmp.ne.s32.totalorder %s169, %s183
      %p185 = scmp.eq.s32.totalorder %s21, 0
      %p186 = por %p184, %p185
      %s187 = ssub.s32 %s22, %s34
      %s188 = ssub.s32 %s23, %s30
      %s189 = sor.u32 %s187, %s188
      %p190 = scmp.eq.s32.totalorder %s189, 0
      %s192 = sadd.s32 %s191, 1
      %s193 = scalar_select %p190, %s191, %s192
      %p196 = pneg %p190
      %p197 = scmp.eq.s32.totalorder %s15, 1
      %p198 = por %p196, %p197
      %p199 = scmp.ne.s32.totalorder %s191, %s194
      %p200 = scmp.eq.s32.totalorder %s15, 0
      %p201 = por %p199, %p200
      %p202 = scmp.ne.s32.totalorder %s191, %s194
      %p203 = scmp.eq.s32.totalorder %s20, 1
      %p204 = por %p202, %p203
      %p205 = scmp.ne.s32.totalorder %s194, %s195
      %p206 = scmp.eq.s32.totalorder %s20, 0
      %p207 = por %p205, %p206
      %p208 = scmp.ne.s32.totalorder %s194, %s195
      %p209 = scmp.eq.s32.totalorder %s21, 1
      %p210 = por %p208, %p209
      %p212 = scmp.ne.s32.totalorder %s195, %s211
      %p213 = scmp.eq.s32.totalorder %s21, 0
      %p214 = por %p212, %p213
      %p215 = scmp.le.s32.totalorder 1, %s15
      %p216 = scmp.lt.s32.totalorder %s15, 3
      %p217 = pnand %p215, %p216
      %p218 = pneg %p217
      // Predicated region
      $region9: #{tpu_custom_call.1} parent=5 // pred_check
        _
      $region10: #{tpu_custom_call.1} parent=5 // pred_check_branch
        %220 = sbr.rel (%p217) target = $region12
      $region11: #{tpu_custom_call.1} parent=5 // pred_region
        %s221 = ssub.s32 %s15, 1
        // Predicated region
        $region13: #{tpu_custom_call.1} parent=11 // pred_check
          %p222 = pneg %p158
        $region14: #{tpu_custom_call.1} parent=11 // pred_check_branch
          %224 = sbr.rel (%p222) target = $region16
        $region15: #{tpu_custom_call.1} parent=11 // pred_region
          _
        $region16: #{tpu_custom_call.1} parent=11 // pred_fallthru
          _
        // Predicated region
        $region17: #{tpu_custom_call.1} parent=11 // pred_check
          %p225 = pneg %p179
        $region18: #{tpu_custom_call.1} parent=11 // pred_check_branch
          %227 = sbr.rel (%p225) target = $region20
        $region19: #{tpu_custom_call.1} parent=11 // pred_region
          _
        $region20: #{tpu_custom_call.1} parent=11 // pred_fallthru
          _
      $region12: #{tpu_custom_call.1} parent=5 // pred_fallthru
        _
      %p228 = scmp.lt.s32.totalorder %s15, 2
      // Predicated region
      $region21: #{tpu_custom_call.1} parent=5 // pred_check
        %p229 = pneg %p228
      $region22: #{tpu_custom_call.1} parent=5 // pred_check_branch
        %231 = sbr.rel (%p229) target = $region24
      $region23: #{tpu_custom_call.1} parent=5 // pred_region
        // Predicated region
        $region25: #{tpu_custom_call.1} parent=23 // pred_check
          %p232 = pneg %p47
        $region26: #{tpu_custom_call.1} parent=23 // pred_check_branch
          %234 = sbr.rel (%p232) target = $region28
        $region27: #{tpu_custom_call.1} parent=23 // pred_region
          %p235 = scmp.lt.s32.totalorder %s22, 1
          %s236 = scalar_select %p235, %s22, 1
          %s237 = smul.addr %s236, 16
          %s238 = smul.addr %s237, 4
          %s239 = scalar_lea.vmem %s0, %s238
        $region28: #{tpu_custom_call.1} parent=23 // pred_fallthru
          _
        // Predicated region
        $region29: #{tpu_custom_call.1} parent=23 // pred_check
          %p240 = pneg %p75
        $region30: #{tpu_custom_call.1} parent=23 // pred_check_branch
          %242 = sbr.rel (%p240) target = $region32
        $region31: #{tpu_custom_call.1} parent=23 // pred_region
          %s243 = smul.u32 18, %s23
          %p244 = scmp.lt.s32.totalorder %s22, 1
          %s245 = scalar_select %p244, %s22, 1
          %p246 = scmp.lt.s32.totalorder %s243, 17
          %s247 = scalar_select %p246, %s243, 17
          %s248 = smul.addr %s245, 18
          %s249 = sadd.s32 %s247, %s248
          %s250 = scalar_lea.vmem %s1, %s249
          %s251 = smul.u32 18, %s23
        $region32: #{tpu_custom_call.1} parent=23 // pred_fallthru
          _
        // Predicated region
        $region33: #{tpu_custom_call.1} parent=23 // pred_check
          %p252 = pneg %p103
        $region34: #{tpu_custom_call.1} parent=23 // pred_check_branch
          %254 = sbr.rel (%p252) target = $region36
        $region35: #{tpu_custom_call.1} parent=23 // pred_region
          %s255 = smul.u32 18, %s23
          %p256 = scmp.lt.s32.totalorder %s22, 1
          %s257 = scalar_select %p256, %s22, 1
          %p258 = scmp.lt.s32.totalorder %s255, 17
          %s259 = scalar_select %p258, %s255, 17
          %s260 = smul.addr %s257, 18
          %s261 = sadd.s32 %s259, %s260
          %s262 = scalar_lea.vmem %s2, %s261
          %s263 = smul.u32 18, %s23
        $region36: #{tpu_custom_call.1} parent=23 // pred_fallthru
          _
        // Predicated region
        $region37: #{tpu_custom_call.1} parent=23 // pred_check
          %p264 = pneg %p131
        $region38: #{tpu_custom_call.1} parent=23 // pred_check_branch
          %266 = sbr.rel (%p264) target = $region40
        $region39: #{tpu_custom_call.1} parent=23 // pred_region
          %s267 = smul.u32 18, %s23
          %p268 = scmp.lt.s32.totalorder %s22, 1
          %s269 = scalar_select %p268, %s22, 1
          %p270 = scmp.lt.s32.totalorder %s267, 17
          %s271 = scalar_select %p270, %s267, 17
          %s272 = smul.addr %s269, 18
          %s273 = sadd.s32 %s271, %s272
          %s274 = scalar_lea.vmem %s3, %s273
          %s275 = smul.u32 18, %s23
        $region40: #{tpu_custom_call.1} parent=23 // pred_fallthru
          _
      $region24: #{tpu_custom_call.1} parent=5 // pred_fallthru
        _
      %p276 = scmp.le.s32.totalorder 1, %s15
      %p277 = scmp.lt.s32.totalorder %s15, 3
      %p278 = pnand %p276, %p277
      %p279 = pneg %p278
      // Predicated region
      $region41: #{tpu_custom_call.1} parent=5 // pred_check
        _
      $region42: #{tpu_custom_call.1} parent=5 // pred_check_branch
        %281 = sbr.rel (%p278) target = $region44
      $region43: #{tpu_custom_call.1} parent=5 // pred_region
        %s282 = ssub.s32 %s15, 1
        %p283 = scmp.lt.s32.totalorder %s24, 1
        %s284 = scalar_select %p283, %s24, 1
        %s285 = smul.addr %s284, 16
        %s286 = smul.addr %s285, 4
        %s287 = scalar_lea.vmem %s0, %s286
        %p288 = pneg %p53
        %p289 = pneg %p50
        %s290 = smul.u32 18, %s25
        %p291 = scmp.lt.s32.totalorder %s24, 1
        %s292 = scalar_select %p291, %s24, 1
        %p293 = scmp.lt.s32.totalorder %s290, 17
        %s294 = scalar_select %p293, %s290, 17
        %s295 = smul.addr %s292, 18
        %s296 = sadd.s32 %s294, %s295
        %s297 = scalar_lea.vmem %s1, %s296
        %p298 = pneg %p81
        %p299 = pneg %p78
        %s300 = smul.u32 18, %s25
        %p301 = scmp.lt.s32.totalorder %s24, 1
        %s302 = scalar_select %p301, %s24, 1
        %p303 = scmp.lt.s32.totalorder %s300, 17
        %s304 = scalar_select %p303, %s300, 17
        %s305 = smul.addr %s302, 18
        %s306 = sadd.s32 %s304, %s305
        %s307 = scalar_lea.vmem %s2, %s306
        %p308 = pneg %p109
        %p309 = pneg %p106
        %s310 = smul.u32 18, %s25
        %p311 = scmp.lt.s32.totalorder %s24, 1
        %s312 = scalar_select %p311, %s24, 1
        %p313 = scmp.lt.s32.totalorder %s310, 17
        %s314 = scalar_select %p313, %s310, 17
        %s315 = smul.addr %s312, 18
        %s316 = sadd.s32 %s314, %s315
        %s317 = scalar_lea.vmem %s3, %s316
        %p318 = pneg %p137
        %p319 = pneg %p134
        %p320 = pneg %p158
        %p321 = pneg %p155
        %p322 = pneg %p179
        %p323 = pneg %p176
        %p324 = pneg %p207
        %p325 = pneg %p204
        %s326 = sand.u32 %s194, 1
        %s327 = scalar_lea.sflag [#allocation4], %s326
        %s328 = sand.u32 %s194, 1
        %s329 = smul.addr %s328, 16
        %s330 = scalar_lea.vmem [#allocation3], %s329
        %p331 = scmp.lt.s32.totalorder %s24, 1
        %s332 = scalar_select %p331, %s24, 1
        %s333 = smul.addr %s332, 16
        %s334 = smul.addr %s333, 4
        %s335 = scalar_lea.vmem %s0, %s334
        %s336 = smul.u32 18, %s25
        %p337 = scmp.lt.s32.totalorder %s24, 1
        %s338 = scalar_select %p337, %s24, 1
        %p339 = scmp.lt.s32.totalorder %s336, 17
        %s340 = scalar_select %p339, %s336, 17
        %s341 = smul.addr %s338, 18
        %s342 = sadd.s32 %s340, %s341
        %s343 = scalar_lea.vmem %s1, %s342
        %s344 = smul.u32 18, %s25
        %s345 = smul.u32 18, %s25
        %p346 = scmp.lt.s32.totalorder %s24, 1
        %s347 = scalar_select %p346, %s24, 1
        %p348 = scmp.lt.s32.totalorder %s345, 17
        %s349 = scalar_select %p348, %s345, 17
        %s350 = smul.addr %s347, 18
        %s351 = sadd.s32 %s349, %s350
        %s352 = scalar_lea.vmem %s2, %s351
        %s353 = smul.u32 18, %s25
        %s354 = smul.u32 18, %s25
        %p355 = scmp.lt.s32.totalorder %s24, 1
        %s356 = scalar_select %p355, %s24, 1
        %p357 = scmp.lt.s32.totalorder %s354, 17
        %s358 = scalar_select %p357, %s354, 17
        %s359 = smul.addr %s356, 18
        %s360 = sadd.s32 %s358, %s359
        %s361 = scalar_lea.vmem %s3, %s360
        %s362 = smul.u32 18, %s25
        %s363 = smul.u32 2, %s25
        %v365 = vld [vmem:[%s335] sm:$0xf]
        %v366 = vld [vmem:[%s335 + $0x4] sm:$0xf]
        %v367 = vld [vmem:[%s335 + $0x8] sm:$0xf]
        %v368 = vld [vmem:[%s335 + $0xc] sm:$0xf]
        %v369 = vld [vmem:[%s335 + $0x10] sm:$0xf]
        %v370 = vld [vmem:[%s335 + $0x14] sm:$0xf]
        %v371 = vld [vmem:[%s335 + $0x18] sm:$0xf]
        %v372 = vld [vmem:[%s335 + $0x1c] sm:$0xf]
        %v373 = vld [vmem:[%s335 + $0x20] sm:$0xf]
        %v374 = vld [vmem:[%s335 + $0x24] sm:$0xf]
        %v375 = vld [vmem:[%s335 + $0x28] sm:$0xf]
        %v376 = vld [vmem:[%s335 + $0x2c] sm:$0xf]
        %v377 = vld [vmem:[%s335 + $0x30] sm:$0xf]
        %v378 = vld [vmem:[%s335 + $0x34] sm:$0xf]
        %v379 = vld [vmem:[%s335 + $0x38] sm:$0xf]
        %v380 = vld [vmem:[%s335 + $0x3c] sm:$0xf]
        %v381 = vlaneseq
        %v382 = vshrl.u32 %v381, 7
        %v383 = vadd.s32 %v382, 8
        %v384 = vcvt.s32.f32 %v382
        %v385 = vcvt.s32.f32 %v383
        %v386 = vld [vmem:[%s343] sm:$0xff]
        %v387 = vld [vmem:[%s343 + $0x8] sm:$0xff]
        %v388 = vld [vmem:[%s343 + $0x10] sm:$0x3]
        %v389 = vld [vmem:[%s352] sm:$0xff]
        %v390 = vld [vmem:[%s352 + $0x8] sm:$0xff]
        %v391 = vld [vmem:[%s352 + $0x10] sm:$0x3]
        %v392 = vld [vmem:[%s361] sm:$0xff]
        %v393 = vld [vmem:[%s361 + $0x8] sm:$0xff]
        %v394 = vld [vmem:[%s361 + $0x10] sm:$0x3]
        %v395 = vsub.f32 0.0, %v392
        %v396 = vsub.f32 0.0, %v393
        %v397 = vsub.f32 0.0, %v394
        %v398 = vmul.f32 %v395, 1.442695
        %v399 = vpow.pop %v398
        %v400 = vmul.f32 %v396, 1.442695
        %v401 = vpow.pop %v400
        %v402 = vmul.f32 %v397, 1.442695
        %v403 = vpow.pop %v402
        %v404 = vadd.f32 %v399, 1.0
        %v405 = vadd.f32 %v401, 1.0
        %v406 = vadd.f32 %v403, 1.0
        %v407 = vrcp.pop %v404
        %v408 = vrcp.pop %v405
        %v409 = vrcp.pop %v406
        %v413 = vlaneseq
        %v414 = vshrl.u32 %v413, 7
        %v415 = vsub.s32 0, %v414
        %v416 = vrot.slane %v389, %v415
        %v417 = vlaneseq
        %v418 = vshrl.u32 %v417, 7
        %v419 = vsub.s32 1, %v418
        %v420 = vrot.slane %v389, %v419
        %v421 = vlaneseq
        %v422 = vshrl.u32 %v421, 7
        %v423 = vsub.s32 2, %v422
        %v424 = vrot.slane %v389, %v423
        %v425 = vlaneseq
        %v426 = vshrl.u32 %v425, 7
        %v427 = vsub.s32 3, %v426
        %v428 = vrot.slane %v389, %v427
        %v429 = vlaneseq
        %v430 = vshrl.u32 %v429, 7
        %v431 = vsub.s32 4, %v430
        %v432 = vrot.slane %v389, %v431
        %v433 = vlaneseq
        %v434 = vshrl.u32 %v433, 7
        %v435 = vsub.s32 5, %v434
        %v436 = vrot.slane %v389, %v435
        %v437 = vlaneseq
        %v438 = vshrl.u32 %v437, 7
        %v439 = vsub.s32 6, %v438
        %v440 = vrot.slane %v389, %v439
        %v441 = vlaneseq
        %v442 = vshrl.u32 %v441, 7
        %v443 = vsub.s32 7, %v442
        %v444 = vrot.slane %v389, %v443
        %v445 = vlaneseq
        %v446 = vshrl.u32 %v445, 7
        %v447 = vsub.s32 0, %v446
        %v448 = vrot.slane %v390, %v447
        %v449 = vlaneseq
        %v450 = vshrl.u32 %v449, 7
        %v451 = vsub.s32 1, %v450
        %v452 = vrot.slane %v390, %v451
        %v453 = vlaneseq
        %v454 = vshrl.u32 %v453, 7
        %v455 = vsub.s32 2, %v454
        %v456 = vrot.slane %v390, %v455
        %v457 = vlaneseq
        %v458 = vshrl.u32 %v457, 7
        %v459 = vsub.s32 3, %v458
        %v460 = vrot.slane %v390, %v459
        %v461 = vlaneseq
        %v462 = vshrl.u32 %v461, 7
        %v463 = vsub.s32 4, %v462
        %v464 = vrot.slane %v390, %v463
        %v465 = vlaneseq
        %v466 = vshrl.u32 %v465, 7
        %v467 = vsub.s32 5, %v466
        %v468 = vrot.slane %v390, %v467
        %v469 = vlaneseq
        %v470 = vshrl.u32 %v469, 7
        %v471 = vsub.s32 6, %v470
        %v472 = vrot.slane %v390, %v471
        %v473 = vlaneseq
        %v474 = vshrl.u32 %v473, 7
        %v475 = vsub.s32 7, %v474
        %v476 = vrot.slane %v390, %v475
        %v477 = vlaneseq
        %v478 = vshrl.u32 %v477, 7
        %v479 = vsub.s32 0, %v478
        %v480 = vrot.slane %v391, %v479
        %v481 = vlaneseq
        %v482 = vshrl.u32 %v481, 7
        %v483 = vsub.s32 1, %v482
        %v484 = vrot.slane %v391, %v483
        %v503 = vsub.f32 %v384, %v416
        %v504 = vsub.f32 %v384, %v420
        %v505 = vsub.f32 %v384, %v424
        %v506 = vsub.f32 %v384, %v428
        %v507 = vsub.f32 %v384, %v432
        %v508 = vsub.f32 %v384, %v436
        %v509 = vsub.f32 %v384, %v440
        %v510 = vsub.f32 %v384, %v444
        %v511 = vsub.f32 %v384, %v448
        %v512 = vsub.f32 %v384, %v452
        %v513 = vsub.f32 %v384, %v456
        %v514 = vsub.f32 %v384, %v460
        %v515 = vsub.f32 %v384, %v464
        %v516 = vsub.f32 %v384, %v468
        %v517 = vsub.f32 %v384, %v472
        %v518 = vsub.f32 %v384, %v476
        %v519 = vsub.f32 %v384, %v480
        %v520 = vsub.f32 %v384, %v484
        %v521 = vsub.f32 %v385, %v416
        %v522 = vsub.f32 %v385, %v420
        %v523 = vsub.f32 %v385, %v424
        %v524 = vsub.f32 %v385, %v428
        %v525 = vsub.f32 %v385, %v432
        %v526 = vsub.f32 %v385, %v436
        %v527 = vsub.f32 %v385, %v440
        %v528 = vsub.f32 %v385, %v444
        %v529 = vsub.f32 %v385, %v448
        %v530 = vsub.f32 %v385, %v452
        %v531 = vsub.f32 %v385, %v456
        %v532 = vsub.f32 %v385, %v460
        %v533 = vsub.f32 %v385, %v464
        %v534 = vsub.f32 %v385, %v468
        %v535 = vsub.f32 %v385, %v472
        %v536 = vsub.f32 %v385, %v476
        %v537 = vsub.f32 %v385, %v480
        %v538 = vsub.f32 %v385, %v484
        %v539 = vand.u32 2147483647, %v503
        %v540 = vand.u32 2147483647, %v504
        %v541 = vand.u32 2147483647, %v505
        %v542 = vand.u32 2147483647, %v506
        %v543 = vand.u32 2147483647, %v507
        %v544 = vand.u32 2147483647, %v508
        %v545 = vand.u32 2147483647, %v509
        %v546 = vand.u32 2147483647, %v510
        %v547 = vand.u32 2147483647, %v511
        %v548 = vand.u32 2147483647, %v512
        %v549 = vand.u32 2147483647, %v513
        %v550 = vand.u32 2147483647, %v514
        %v551 = vand.u32 2147483647, %v515
        %v552 = vand.u32 2147483647, %v516
        %v553 = vand.u32 2147483647, %v517
        %v554 = vand.u32 2147483647, %v518
        %v555 = vand.u32 2147483647, %v519
        %v556 = vand.u32 2147483647, %v520
        %v557 = vand.u32 2147483647, %v521
        %v558 = vand.u32 2147483647, %v522
        %v559 = vand.u32 2147483647, %v523
        %v560 = vand.u32 2147483647, %v524
        %v561 = vand.u32 2147483647, %v525
        %v562 = vand.u32 2147483647, %v526
        %v563 = vand.u32 2147483647, %v527
        %v564 = vand.u32 2147483647, %v528
        %v565 = vand.u32 2147483647, %v529
        %v566 = vand.u32 2147483647, %v530
        %v567 = vand.u32 2147483647, %v531
        %v568 = vand.u32 2147483647, %v532
        %v569 = vand.u32 2147483647, %v533
        %v570 = vand.u32 2147483647, %v534
        %v571 = vand.u32 2147483647, %v535
        %v572 = vand.u32 2147483647, %v536
        %v573 = vand.u32 2147483647, %v537
        %v574 = vand.u32 2147483647, %v538
        %v575 = vsub.f32 1.0, %v539
        %v576 = vsub.f32 1.0, %v540
        %v577 = vsub.f32 1.0, %v541
        %v578 = vsub.f32 1.0, %v542
        %v579 = vsub.f32 1.0, %v543
        %v580 = vsub.f32 1.0, %v544
        %v581 = vsub.f32 1.0, %v545
        %v582 = vsub.f32 1.0, %v546
        %v583 = vsub.f32 1.0, %v547
        %v584 = vsub.f32 1.0, %v548
        %v585 = vsub.f32 1.0, %v549
        %v586 = vsub.f32 1.0, %v550
        %v587 = vsub.f32 1.0, %v551
        %v588 = vsub.f32 1.0, %v552
        %v589 = vsub.f32 1.0, %v553
        %v590 = vsub.f32 1.0, %v554
        %v591 = vsub.f32 1.0, %v555
        %v592 = vsub.f32 1.0, %v556
        %v593 = vsub.f32 1.0, %v557
        %v594 = vsub.f32 1.0, %v558
        %v595 = vsub.f32 1.0, %v559
        %v596 = vsub.f32 1.0, %v560
        %v597 = vsub.f32 1.0, %v561
        %v598 = vsub.f32 1.0, %v562
        %v599 = vsub.f32 1.0, %v563
        %v600 = vsub.f32 1.0, %v564
        %v601 = vsub.f32 1.0, %v565
        %v602 = vsub.f32 1.0, %v566
        %v603 = vsub.f32 1.0, %v567
        %v604 = vsub.f32 1.0, %v568
        %v605 = vsub.f32 1.0, %v569
        %v606 = vsub.f32 1.0, %v570
        %v607 = vsub.f32 1.0, %v571
        %v608 = vsub.f32 1.0, %v572
        %v609 = vsub.f32 1.0, %v573
        %v610 = vsub.f32 1.0, %v574
        %v611 = vmax.f32 %v575, 0.0
        %v612 = vmax.f32 %v576, 0.0
        %v613 = vmax.f32 %v577, 0.0
        %v614 = vmax.f32 %v578, 0.0
        %v615 = vmax.f32 %v579, 0.0
        %v616 = vmax.f32 %v580, 0.0
        %v617 = vmax.f32 %v581, 0.0
        %v618 = vmax.f32 %v582, 0.0
        %v619 = vmax.f32 %v583, 0.0
        %v620 = vmax.f32 %v584, 0.0
        %v621 = vmax.f32 %v585, 0.0
        %v622 = vmax.f32 %v586, 0.0
        %v623 = vmax.f32 %v587, 0.0
        %v624 = vmax.f32 %v588, 0.0
        %v625 = vmax.f32 %v589, 0.0
        %v626 = vmax.f32 %v590, 0.0
        %v627 = vmax.f32 %v591, 0.0
        %v628 = vmax.f32 %v592, 0.0
        %v629 = vmax.f32 %v593, 0.0
        %v630 = vmax.f32 %v594, 0.0
        %v631 = vmax.f32 %v595, 0.0
        %v632 = vmax.f32 %v596, 0.0
        %v633 = vmax.f32 %v597, 0.0
        %v634 = vmax.f32 %v598, 0.0
        %v635 = vmax.f32 %v599, 0.0
        %v636 = vmax.f32 %v600, 0.0
        %v637 = vmax.f32 %v601, 0.0
        %v638 = vmax.f32 %v602, 0.0
        %v639 = vmax.f32 %v603, 0.0
        %v640 = vmax.f32 %v604, 0.0
        %v641 = vmax.f32 %v605, 0.0
        %v642 = vmax.f32 %v606, 0.0
        %v643 = vmax.f32 %v607, 0.0
        %v644 = vmax.f32 %v608, 0.0
        %v645 = vmax.f32 %v609, 0.0
        %v646 = vmax.f32 %v610, 0.0
        %v650 = vlaneseq
        %v651 = vshrl.u32 %v650, 7
        %v652 = vsub.s32 0, %v651
        %v653 = vrot.slane %v386, %v652
        %v654 = vlaneseq
        %v655 = vshrl.u32 %v654, 7
        %v656 = vsub.s32 1, %v655
        %v657 = vrot.slane %v386, %v656
        %v658 = vlaneseq
        %v659 = vshrl.u32 %v658, 7
        %v660 = vsub.s32 2, %v659
        %v661 = vrot.slane %v386, %v660
        %v662 = vlaneseq
        %v663 = vshrl.u32 %v662, 7
        %v664 = vsub.s32 3, %v663
        %v665 = vrot.slane %v386, %v664
        %v666 = vlaneseq
        %v667 = vshrl.u32 %v666, 7
        %v668 = vsub.s32 4, %v667
        %v669 = vrot.slane %v386, %v668
        %v670 = vlaneseq
        %v671 = vshrl.u32 %v670, 7
        %v672 = vsub.s32 5, %v671
        %v673 = vrot.slane %v386, %v672
        %v674 = vlaneseq
        %v675 = vshrl.u32 %v674, 7
        %v676 = vsub.s32 6, %v675
        %v677 = vrot.slane %v386, %v676
        %v678 = vlaneseq
        %v679 = vshrl.u32 %v678, 7
        %v680 = vsub.s32 7, %v679
        %v681 = vrot.slane %v386, %v680
        %v682 = vlaneseq
        %v683 = vshrl.u32 %v682, 7
        %v684 = vsub.s32 0, %v683
        %v685 = vrot.slane %v387, %v684
        %v686 = vlaneseq
        %v687 = vshrl.u32 %v686, 7
        %v688 = vsub.s32 1, %v687
        %v689 = vrot.slane %v387, %v688
        %v690 = vlaneseq
        %v691 = vshrl.u32 %v690, 7
        %v692 = vsub.s32 2, %v691
        %v693 = vrot.slane %v387, %v692
        %v694 = vlaneseq
        %v695 = vshrl.u32 %v694, 7
        %v696 = vsub.s32 3, %v695
        %v697 = vrot.slane %v387, %v696
        %v698 = vlaneseq
        %v699 = vshrl.u32 %v698, 7
        %v700 = vsub.s32 4, %v699
        %v701 = vrot.slane %v387, %v700
        %v702 = vlaneseq
        %v703 = vshrl.u32 %v702, 7
        %v704 = vsub.s32 5, %v703
        %v705 = vrot.slane %v387, %v704
        %v706 = vlaneseq
        %v707 = vshrl.u32 %v706, 7
        %v708 = vsub.s32 6, %v707
        %v709 = vrot.slane %v387, %v708
        %v710 = vlaneseq
        %v711 = vshrl.u32 %v710, 7
        %v712 = vsub.s32 7, %v711
        %v713 = vrot.slane %v387, %v712
        %v714 = vlaneseq
        %v715 = vshrl.u32 %v714, 7
        %v716 = vsub.s32 0, %v715
        %v717 = vrot.slane %v388, %v716
        %v718 = vlaneseq
        %v719 = vshrl.u32 %v718, 7
        %v720 = vsub.s32 1, %v719
        %v721 = vrot.slane %v388, %v720
        %v740 = vsub.f32 %v384, %v653
        %v741 = vsub.f32 %v384, %v657
        %v742 = vsub.f32 %v384, %v661
        %v743 = vsub.f32 %v384, %v665
        %v744 = vsub.f32 %v384, %v669
        %v745 = vsub.f32 %v384, %v673
        %v746 = vsub.f32 %v384, %v677
        %v747 = vsub.f32 %v384, %v681
        %v748 = vsub.f32 %v384, %v685
        %v749 = vsub.f32 %v384, %v689
        %v750 = vsub.f32 %v384, %v693
        %v751 = vsub.f32 %v384, %v697
        %v752 = vsub.f32 %v384, %v701
        %v753 = vsub.f32 %v384, %v705
        %v754 = vsub.f32 %v384, %v709
        %v755 = vsub.f32 %v384, %v713
        %v756 = vsub.f32 %v384, %v717
        %v757 = vsub.f32 %v384, %v721
        %v758 = vsub.f32 %v385, %v653
        %v759 = vsub.f32 %v385, %v657
        %v760 = vsub.f32 %v385, %v661
        %v761 = vsub.f32 %v385, %v665
        %v762 = vsub.f32 %v385, %v669
        %v763 = vsub.f32 %v385, %v673
        %v764 = vsub.f32 %v385, %v677
        %v765 = vsub.f32 %v385, %v681
        %v766 = vsub.f32 %v385, %v685
        %v767 = vsub.f32 %v385, %v689
        %v768 = vsub.f32 %v385, %v693
        %v769 = vsub.f32 %v385, %v697
        %v770 = vsub.f32 %v385, %v701
        %v771 = vsub.f32 %v385, %v705
        %v772 = vsub.f32 %v385, %v709
        %v773 = vsub.f32 %v385, %v713
        %v774 = vsub.f32 %v385, %v717
        %v775 = vsub.f32 %v385, %v721
        %v776 = vand.u32 2147483647, %v740
        %v777 = vand.u32 2147483647, %v741
        %v778 = vand.u32 2147483647, %v742
        %v779 = vand.u32 2147483647, %v743
        %v780 = vand.u32 2147483647, %v744
        %v781 = vand.u32 2147483647, %v745
        %v782 = vand.u32 2147483647, %v746
        %v783 = vand.u32 2147483647, %v747
        %v784 = vand.u32 2147483647, %v748
        %v785 = vand.u32 2147483647, %v749
        %v786 = vand.u32 2147483647, %v750
        %v787 = vand.u32 2147483647, %v751
        %v788 = vand.u32 2147483647, %v752
        %v789 = vand.u32 2147483647, %v753
        %v790 = vand.u32 2147483647, %v754
        %v791 = vand.u32 2147483647, %v755
        %v792 = vand.u32 2147483647, %v756
        %v793 = vand.u32 2147483647, %v757
        %v794 = vand.u32 2147483647, %v758
        %v795 = vand.u32 2147483647, %v759
        %v796 = vand.u32 2147483647, %v760
        %v797 = vand.u32 2147483647, %v761
        %v798 = vand.u32 2147483647, %v762
        %v799 = vand.u32 2147483647, %v763
        %v800 = vand.u32 2147483647, %v764
        %v801 = vand.u32 2147483647, %v765
        %v802 = vand.u32 2147483647, %v766
        %v803 = vand.u32 2147483647, %v767
        %v804 = vand.u32 2147483647, %v768
        %v805 = vand.u32 2147483647, %v769
        %v806 = vand.u32 2147483647, %v770
        %v807 = vand.u32 2147483647, %v771
        %v808 = vand.u32 2147483647, %v772
        %v809 = vand.u32 2147483647, %v773
        %v810 = vand.u32 2147483647, %v774
        %v811 = vand.u32 2147483647, %v775
        %v812 = vsub.f32 1.0, %v776
        %v813 = vsub.f32 1.0, %v777
        %v814 = vsub.f32 1.0, %v778
        %v815 = vsub.f32 1.0, %v779
        %v816 = vsub.f32 1.0, %v780
        %v817 = vsub.f32 1.0, %v781
        %v818 = vsub.f32 1.0, %v782
        %v819 = vsub.f32 1.0, %v783
        %v820 = vsub.f32 1.0, %v784
        %v821 = vsub.f32 1.0, %v785
        %v822 = vsub.f32 1.0, %v786
        %v823 = vsub.f32 1.0, %v787
        %v824 = vsub.f32 1.0, %v788
        %v825 = vsub.f32 1.0, %v789
        %v826 = vsub.f32 1.0, %v790
        %v827 = vsub.f32 1.0, %v791
        %v828 = vsub.f32 1.0, %v792
        %v829 = vsub.f32 1.0, %v793
        %v830 = vsub.f32 1.0, %v794
        %v831 = vsub.f32 1.0, %v795
        %v832 = vsub.f32 1.0, %v796
        %v833 = vsub.f32 1.0, %v797
        %v834 = vsub.f32 1.0, %v798
        %v835 = vsub.f32 1.0, %v799
        %v836 = vsub.f32 1.0, %v800
        %v837 = vsub.f32 1.0, %v801
        %v838 = vsub.f32 1.0, %v802
        %v839 = vsub.f32 1.0, %v803
        %v840 = vsub.f32 1.0, %v804
        %v841 = vsub.f32 1.0, %v805
        %v842 = vsub.f32 1.0, %v806
        %v843 = vsub.f32 1.0, %v807
        %v844 = vsub.f32 1.0, %v808
        %v845 = vsub.f32 1.0, %v809
        %v846 = vsub.f32 1.0, %v810
        %v847 = vsub.f32 1.0, %v811
        %v848 = vmax.f32 %v812, 0.0
        %v849 = vmax.f32 %v813, 0.0
        %v850 = vmax.f32 %v814, 0.0
        %v851 = vmax.f32 %v815, 0.0
        %v852 = vmax.f32 %v816, 0.0
        %v853 = vmax.f32 %v817, 0.0
        %v854 = vmax.f32 %v818, 0.0
        %v855 = vmax.f32 %v819, 0.0
        %v856 = vmax.f32 %v820, 0.0
        %v857 = vmax.f32 %v821, 0.0
        %v858 = vmax.f32 %v822, 0.0
        %v859 = vmax.f32 %v823, 0.0
        %v860 = vmax.f32 %v824, 0.0
        %v861 = vmax.f32 %v825, 0.0
        %v862 = vmax.f32 %v826, 0.0
        %v863 = vmax.f32 %v827, 0.0
        %v864 = vmax.f32 %v828, 0.0
        %v865 = vmax.f32 %v829, 0.0
        %v866 = vmax.f32 %v830, 0.0
        %v867 = vmax.f32 %v831, 0.0
        %v868 = vmax.f32 %v832, 0.0
        %v869 = vmax.f32 %v833, 0.0
        %v870 = vmax.f32 %v834, 0.0
        %v871 = vmax.f32 %v835, 0.0
        %v872 = vmax.f32 %v836, 0.0
        %v873 = vmax.f32 %v837, 0.0
        %v874 = vmax.f32 %v838, 0.0
        %v875 = vmax.f32 %v839, 0.0
        %v876 = vmax.f32 %v840, 0.0
        %v877 = vmax.f32 %v841, 0.0
        %v878 = vmax.f32 %v842, 0.0
        %v879 = vmax.f32 %v843, 0.0
        %v880 = vmax.f32 %v844, 0.0
        %v881 = vmax.f32 %v845, 0.0
        %v882 = vmax.f32 %v846, 0.0
        %v883 = vmax.f32 %v847, 0.0
        %v887 = vlaneseq
        %v888 = vshrl.u32 %v887, 7
        %v889 = vsub.s32 0, %v888
        %v890 = vrot.slane %v407, %v889
        %v891 = vlaneseq
        %v892 = vshrl.u32 %v891, 7
        %v893 = vsub.s32 1, %v892
        %v894 = vrot.slane %v407, %v893
        %v895 = vlaneseq
        %v896 = vshrl.u32 %v895, 7
        %v897 = vsub.s32 2, %v896
        %v898 = vrot.slane %v407, %v897
        %v899 = vlaneseq
        %v900 = vshrl.u32 %v899, 7
        %v901 = vsub.s32 3, %v900
        %v902 = vrot.slane %v407, %v901
        %v903 = vlaneseq
        %v904 = vshrl.u32 %v903, 7
        %v905 = vsub.s32 4, %v904
        %v906 = vrot.slane %v407, %v905
        %v907 = vlaneseq
        %v908 = vshrl.u32 %v907, 7
        %v909 = vsub.s32 5, %v908
        %v910 = vrot.slane %v407, %v909
        %v911 = vlaneseq
        %v912 = vshrl.u32 %v911, 7
        %v913 = vsub.s32 6, %v912
        %v914 = vrot.slane %v407, %v913
        %v915 = vlaneseq
        %v916 = vshrl.u32 %v915, 7
        %v917 = vsub.s32 7, %v916
        %v918 = vrot.slane %v407, %v917
        %v919 = vlaneseq
        %v920 = vshrl.u32 %v919, 7
        %v921 = vsub.s32 0, %v920
        %v922 = vrot.slane %v408, %v921
        %v923 = vlaneseq
        %v924 = vshrl.u32 %v923, 7
        %v925 = vsub.s32 1, %v924
        %v926 = vrot.slane %v408, %v925
        %v927 = vlaneseq
        %v928 = vshrl.u32 %v927, 7
        %v929 = vsub.s32 2, %v928
        %v930 = vrot.slane %v408, %v929
        %v931 = vlaneseq
        %v932 = vshrl.u32 %v931, 7
        %v933 = vsub.s32 3, %v932
        %v934 = vrot.slane %v408, %v933
        %v935 = vlaneseq
        %v936 = vshrl.u32 %v935, 7
        %v937 = vsub.s32 4, %v936
        %v938 = vrot.slane %v408, %v937
        %v939 = vlaneseq
        %v940 = vshrl.u32 %v939, 7
        %v941 = vsub.s32 5, %v940
        %v942 = vrot.slane %v408, %v941
        %v943 = vlaneseq
        %v944 = vshrl.u32 %v943, 7
        %v945 = vsub.s32 6, %v944
        %v946 = vrot.slane %v408, %v945
        %v947 = vlaneseq
        %v948 = vshrl.u32 %v947, 7
        %v949 = vsub.s32 7, %v948
        %v950 = vrot.slane %v408, %v949
        %v951 = vlaneseq
        %v952 = vshrl.u32 %v951, 7
        %v953 = vsub.s32 0, %v952
        %v954 = vrot.slane %v409, %v953
        %v955 = vlaneseq
        %v956 = vshrl.u32 %v955, 7
        %v957 = vsub.s32 1, %v956
        %v958 = vrot.slane %v409, %v957
        %v977 = vmul.f32 %v848, %v890
        %v978 = vmul.f32 %v849, %v894
        %v979 = vmul.f32 %v850, %v898
        %v980 = vmul.f32 %v851, %v902
        %v981 = vmul.f32 %v852, %v906
        %v982 = vmul.f32 %v853, %v910
        %v983 = vmul.f32 %v854, %v914
        %v984 = vmul.f32 %v855, %v918
        %v985 = vmul.f32 %v856, %v922
        %v986 = vmul.f32 %v857, %v926
        %v987 = vmul.f32 %v858, %v930
        %v988 = vmul.f32 %v859, %v934
        %v989 = vmul.f32 %v860, %v938
        %v990 = vmul.f32 %v861, %v942
        %v991 = vmul.f32 %v862, %v946
        %v992 = vmul.f32 %v863, %v950
        %v993 = vmul.f32 %v864, %v954
        %v994 = vmul.f32 %v865, %v958
        %v995 = vmul.f32 %v866, %v890
        %v996 = vmul.f32 %v867, %v894
        %v997 = vmul.f32 %v868, %v898
        %v998 = vmul.f32 %v869, %v902
        %v999 = vmul.f32 %v870, %v906
        %v1000 = vmul.f32 %v871, %v910
        %v1001 = vmul.f32 %v872, %v914
        %v1002 = vmul.f32 %v873, %v918
        %v1003 = vmul.f32 %v874, %v922
        %v1004 = vmul.f32 %v875, %v926
        %v1005 = vmul.f32 %v876, %v930
        %v1006 = vmul.f32 %v877, %v934
        %v1007 = vmul.f32 %v878, %v938
        %v1008 = vmul.f32 %v879, %v942
        %v1009 = vmul.f32 %v880, %v946
        %v1010 = vmul.f32 %v881, %v950
        %v1011 = vmul.f32 %v882, %v954
        %v1012 = vmul.f32 %v883, %v958
        %v1013 = vpack.c.bf16 %v629, %v611
        %v1014 = vpack.c.bf16 %v630, %v612
        %v1015 = vpack.c.bf16 %v631, %v613
        %v1016 = vpack.c.bf16 %v632, %v614
        %v1017 = vpack.c.bf16 %v633, %v615
        %v1018 = vpack.c.bf16 %v634, %v616
        %v1019 = vpack.c.bf16 %v635, %v617
        %v1020 = vpack.c.bf16 %v636, %v618
        %v1021 = vpack.c.bf16 %v637, %v619
        %v1022 = vpack.c.bf16 %v638, %v620
        %v1023 = vpack.c.bf16 %v639, %v621
        %v1024 = vpack.c.bf16 %v640, %v622
        %v1025 = vpack.c.bf16 %v641, %v623
        %v1026 = vpack.c.bf16 %v642, %v624
        %v1027 = vpack.c.bf16 %v643, %v625
        %v1028 = vpack.c.bf16 %v644, %v626
        %v1029 = vpack.c.bf16 %v645, %v627
        %v1030 = vpack.c.bf16 %v646, %v628
        %v1047 = vunpack.c.l.b16 %v365
        %v1048 = vunpack.c.l.b16 %v366
        %v1049 = vunpack.c.l.b16 %v367
        %v1050 = vunpack.c.l.b16 %v368
        %v1051 = vunpack.c.l.b16 %v369
        %v1052 = vunpack.c.l.b16 %v370
        %v1053 = vunpack.c.l.b16 %v371
        %v1054 = vunpack.c.l.b16 %v372
        %v1055 = vunpack.c.l.b16 %v373
        %v1056 = vunpack.c.l.b16 %v374
        %v1057 = vunpack.c.l.b16 %v375
        %v1058 = vunpack.c.l.b16 %v376
        %v1059 = vunpack.c.l.b16 %v377
        %v1060 = vunpack.c.l.b16 %v378
        %v1061 = vunpack.c.l.b16 %v379
        %v1062 = vunpack.c.l.b16 %v380
        %v1063 = vpack.c.b16 %v1048, %v1047
        %v1064 = vpack.c.b16 %v1050, %v1049
        %v1065 = vpack.c.b16 %v1052, %v1051
        %v1066 = vpack.c.b16 %v1054, %v1053
        %v1067 = vpack.c.b16 %v1056, %v1055
        %v1068 = vpack.c.b16 %v1058, %v1057
        %v1069 = vpack.c.b16 %v1060, %v1059
        %v1070 = vpack.c.b16 %v1062, %v1061
        %vm1071 = vcmask 130048
        %v1073 = vsel %vm1071, %v1063, 0
        %v1076 = vsel %vm1071, %v1064, 0
        %v1079 = vsel %vm1071, %v1065, 0
        %v1082 = vsel %vm1071, %v1066, 0
        %v1085 = vsel %vm1071, %v1067, 0
        %v1088 = vsel %vm1071, %v1068, 0
        %v1091 = vsel %vm1071, %v1069, 0
        %v1094 = vsel %vm1071, %v1070, 0
        %1096 = vmatprep.subr.bf16.mxu0 %v1014
        %1097 = vmatpush1.bf16.msra.mxu0 %v1013
        %1098 = vmatprep.subr.bf16.mxu0 0
        %1099 = vmatpush1.bf16.msra.mxu0 0
        %1100 = vmatprep.subr.bf16.mxu0 0
        %1101 = vmatpush1.bf16.msra.mxu0 0
        %1102 = vmatprep.subr.bf16.mxu0 0
        %1103 = vmatpush1.bf16.msra.mxu0 0
        %1104 = vmatprep.subr.bf16.mxu0 0
        %1105 = vmatpush1.bf16.msra.mxu0 0
        %1106 = vmatprep.subr.bf16.mxu0 0
        %1107 = vmatpush1.bf16.msra.mxu0 0
        %1108 = vmatprep.subr.bf16.mxu0 0
        %1109 = vmatpush1.bf16.msra.mxu0 0
        %1110 = vmatprep.subr.bf16.mxu0 0
        %1111 = vmatpush1.bf16.msra.mxu0 0
        %1112 = vmatprep.subr.bf16.mxu0 0
        %1113 = vmatpush1.bf16.msra.mxu0 0
        %1114 = vmatprep.subr.bf16.mxu0 0
        %1115 = vmatpush1.bf16.msra.mxu0 0
        %1116 = vmatprep.subr.bf16.mxu0 0
        %1117 = vmatpush1.bf16.msra.mxu0 0
        %1118 = vmatprep.subr.bf16.mxu0 0
        %1119 = vmatpush1.bf16.msra.mxu0 0
        %1120 = vmatprep.subr.bf16.mxu0 0
        %1121 = vmatpush1.bf16.msra.mxu0 0
        %1122 = vmatprep.subr.bf16.mxu0 0
        %1123 = vmatpush1.bf16.msra.mxu0 0
        %1124 = vmatprep.subr.bf16.mxu0 0
        %1125 = vmatpush1.bf16.msra.mxu0 0
        %1126 = vmatprep.subr.bf16.mxu0 0
        %1127 = vmatpush1.bf16.msra.mxu0 0
        %1128 = vmatprep.mubr.bf16.mxu0 0
        %1129 = vmatmul.mubr.bf16.gmra.mrb[0].mxu0 %v1073
        %v1130 = vpop.f32.mrb[0].mxu0
        %v1131 = vadd.f32 0.0, %v1130
        %v1132 = vpop.f32.mrb[0].mxu0
        %v1133 = vadd.f32 0.0, %v1132
        %v1134 = vpop.f32.mrb[0].mxu0
        %v1135 = vadd.f32 0.0, %v1134
        %v1136 = vpop.f32.mrb[0].mxu0
        %v1137 = vadd.f32 0.0, %v1136
        %1138 = vmatprep.mubr.bf16.mxu0 0
        %1139 = vmatmul.mubr.bf16.gmra.mrb[0].mxu0 %v1076
        %v1140 = vpop.f32.mrb[0].mxu0
        %v1141 = vadd.f32 0.0, %v1140
        %v1142 = vpop.f32.mrb[0].mxu0
        %v1143 = vadd.f32 0.0, %v1142
        %v1144 = vpop.f32.mrb[0].mxu0
        %v1145 = vadd.f32 0.0, %v1144
        %v1146 = vpop.f32.mrb[0].mxu0
        %v1147 = vadd.f32 0.0, %v1146
        %1148 = vmatprep.mubr.bf16.mxu0 0
        %1149 = vmatmul.mubr.bf16.gmra.mrb[0].mxu0 %v1079
        %v1150 = vpop.f32.mrb[0].mxu0
        %v1151 = vadd.f32 0.0, %v1150
        %v1152 = vpop.f32.mrb[0].mxu0
        %v1153 = vadd.f32 0.0, %v1152
        %v1154 = vpop.f32.mrb[0].mxu0
        %v1155 = vadd.f32 0.0, %v1154
        %v1156 = vpop.f32.mrb[0].mxu0
        %v1157 = vadd.f32 0.0, %v1156
        %1158 = vmatprep.mubr.bf16.mxu0 0
        %1159 = vmatmul.mubr.bf16.gmra.mrb[0].mxu0 %v1082
        %v1160 = vpop.f32.mrb[0].mxu0
        %v1161 = vadd.f32 0.0, %v1160
        %v1162 = vpop.f32.mrb[0].mxu0
        %v1163 = vadd.f32 0.0, %v1162
        %v1164 = vpop.f32.mrb[0].mxu0
        %v1165 = vadd.f32 0.0, %v1164
        %v1166 = vpop.f32.mrb[0].mxu0
        %v1167 = vadd.f32 0.0, %v1166
        %1168 = vmatprep.mubr.bf16.mxu0 0
        %1169 = vmatmul.mubr.bf16.gmra.mrb[0].mxu0 %v1085
        %v1170 = vpop.f32.mrb[0].mxu0
        %v1171 = vadd.f32 0.0, %v1170
        %v1172 = vpop.f32.mrb[0].mxu0
        %v1173 = vadd.f32 0.0, %v1172
        %v1174 = vpop.f32.mrb[0].mxu0
        %v1175 = vadd.f32 0.0, %v1174
        %v1176 = vpop.f32.mrb[0].mxu0
        %v1177 = vadd.f32 0.0, %v1176
        %1178 = vmatprep.mubr.bf16.mxu0 0
        %1179 = vmatmul.mubr.bf16.gmra.mrb[0].mxu0 %v1088
        %v1180 = vpop.f32.mrb[0].mxu0
        %v1181 = vadd.f32 0.0, %v1180
        %v1182 = vpop.f32.mrb[0].mxu0
        %v1183 = vadd.f32 0.0, %v1182
        %v1184 = vpop.f32.mrb[0].mxu0
        %v1185 = vadd.f32 0.0, %v1184
        %v1186 = vpop.f32.mrb[0].mxu0
        %v1187 = vadd.f32 0.0, %v1186
        %1188 = vmatprep.mubr.bf16.mxu0 0
        %1189 = vmatmul.mubr.bf16.gmra.mrb[0].mxu0 %v1091
        %v1190 = vpop.f32.mrb[0].mxu0
        %v1191 = vadd.f32 0.0, %v1190
        %v1192 = vpop.f32.mrb[0].mxu0
        %v1193 = vadd.f32 0.0, %v1192
        %v1194 = vpop.f32.mrb[0].mxu0
        %v1195 = vadd.f32 0.0, %v1194
        %v1196 = vpop.f32.mrb[0].mxu0
        %v1197 = vadd.f32 0.0, %v1196
        %1198 = vmatprep.mubr.bf16.mxu0 0
        %1199 = vmatmul.mubr.bf16.gmra.mrb[0].mxu0 %v1094
        %v1200 = vpop.f32.mrb[0].mxu0
        %v1201 = vadd.f32 0.0, %v1200
        %v1202 = vpop.f32.mrb[0].mxu0
        %v1203 = vadd.f32 0.0, %v1202
        %v1204 = vpop.f32.mrb[0].mxu0
        %v1205 = vadd.f32 0.0, %v1204
        %v1206 = vpop.f32.mrb[0].mxu0
        %v1207 = vadd.f32 0.0, %v1206
        %1208 = vdwg.mxu0
        %1209 = vmatprep.subr.bf16.mxu0 %v1016
        %1210 = vmatpush1.bf16.msra.mxu0 %v1015
        %1211 = vmatprep.subr.bf16.mxu0 0
        %1212 = vmatpush1.bf16.msra.mxu0 0
        %1213 = vmatprep.subr.bf16.mxu0 0
        %1214 = vmatpush1.bf16.msra.mxu0 0
        %1215 = vmatprep.subr.bf16.mxu0 0
        %1216 = vmatpush1.bf16.msra.mxu0 0
        %1217 = vmatprep.subr.bf16.mxu0 0
        %1218 = vmatpush1.bf16.msra.mxu0 0
        %1219 = vmatprep.subr.bf16.mxu0 0
        %1220 = vmatpush1.bf16.msra.mxu0 0
        %1221 = vmatprep.subr.bf16.mxu0 0
        %1222 = vmatpush1.bf16.msra.mxu0 0
        %1223 = vmatprep.subr.bf16.mxu0 0
        %1224 = vmatpush1.bf16.msra.mxu0 0
        %1225 = vmatprep.subr.bf16.mxu0 0
        %1226 = vmatpush1.bf16.msra.mxu0 0
        %1227 = vmatprep.subr.bf16.mxu0 0
        %1228 = vmatpush1.bf16.msra.mxu0 0
        %1229 = vmatprep.subr.bf16.mxu0 0
        %1230 = vmatpush1.bf16.msra.mxu0 0
        %1231 = vmatprep.subr.bf16.mxu0 0
        %1232 = vmatpush1.bf16.msra.mxu0 0
        %1233 = vmatprep.subr.bf16.mxu0 0
        %1234 = vmatpush1.bf16.msra.mxu0 0
        %1235 = vmatprep.subr.bf16.mxu0 0
        %1236 = vmatpush1.bf16.msra.mxu0 0
        %1237 = vmatprep.subr.bf16.mxu0 0
        %1238 = vmatpush1.bf16.msra.mxu0 0
        %1239 = vmatprep.subr.bf16.mxu0 0
        %1240 = vmatpush1.bf16.msra.mxu0 0
        %1241 = vmatprep.mubr.bf16.mxu0 0
        %1242 = vmatmul.mubr.bf16.gmra.mrb[0].mxu0 %v1073
        %v1243 = vpop.f32.mrb[0].mxu0
        %v1244 = vadd.f32 0.0, %v1243
        %v1245 = vpop.f32.mrb[0].mxu0
        %v1246 = vadd.f32 0.0, %v1245
        %v1247 = vpop.f32.mrb[0].mxu0
        %v1248 = vadd.f32 0.0, %v1247
        %v1249 = vpop.f32.mrb[0].mxu0
        %v1250 = vadd.f32 0.0, %v1249
        %1251 = vmatprep.mubr.bf16.mxu0 0
        %1252 = vmatmul.mubr.bf16.gmra.mrb[0].mxu0 %v1076
        %v1253 = vpop.f32.mrb[0].mxu0
        %v1254 = vadd.f32 0.0, %v1253
        %v1255 = vpop.f32.mrb[0].mxu0
        %v1256 = vadd.f32 0.0, %v1255
        %v1257 = vpop.f32.mrb[0].mxu0
        %v1258 = vadd.f32 0.0, %v1257
        %v1259 = vpop.f32.mrb[0].mxu0
        %v1260 = vadd.f32 0.0, %v1259
        %1261 = vmatprep.mubr.bf16.mxu0 0
        %1262 = vmatmul.mubr.bf16.gmra.mrb[0].mxu0 %v1079
        %v1263 = vpop.f32.mrb[0].mxu0
        %v1264 = vadd.f32 0.0, %v1263
        %v1265 = vpop.f32.mrb[0].mxu0
        %v1266 = vadd.f32 0.0, %v1265
        %v1267 = vpop.f32.mrb[0].mxu0
        %v1268 = vadd.f32 0.0, %v1267
        %v1269 = vpop.f32.mrb[0].mxu0
        %v1270 = vadd.f32 0.0, %v1269
        %1271 = vmatprep.mubr.bf16.mxu0 0
        %1272 = vmatmul.mubr.bf16.gmra.mrb[0].mxu0 %v1082
        %v1273 = vpop.f32.mrb[0].mxu0
        %v1274 = vadd.f32 0.0, %v1273
        %v1275 = vpop.f32.mrb[0].mxu0
        %v1276 = vadd.f32 0.0, %v1275
        %v1277 = vpop.f32.mrb[0].mxu0
        %v1278 = vadd.f32 0.0, %v1277
        %v1279 = vpop.f32.mrb[0].mxu0
        %v1280 = vadd.f32 0.0, %v1279
        %1281 = vmatprep.mubr.bf16.mxu0 0
        %1282 = vmatmul.mubr.bf16.gmra.mrb[0].mxu0 %v1085
        %v1283 = vpop.f32.mrb[0].mxu0
        %v1284 = vadd.f32 0.0, %v1283
        %v1285 = vpop.f32.mrb[0].mxu0
        %v1286 = vadd.f32 0.0, %v1285
        %v1287 = vpop.f32.mrb[0].mxu0
        %v1288 = vadd.f32 0.0, %v1287
        %v1289 = vpop.f32.mrb[0].mxu0
        %v1290 = vadd.f32 0.0, %v1289
        %1291 = vmatprep.mubr.bf16.mxu0 0
        %1292 = vmatmul.mubr.bf16.gmra.mrb[0].mxu0 %v1088
        %v1293 = vpop.f32.mrb[0].mxu0
        %v1294 = vadd.f32 0.0, %v1293
        %v1295 = vpop.f32.mrb[0].mxu0
        %v1296 = vadd.f32 0.0, %v1295
        %v1297 = vpop.f32.mrb[0].mxu0
        %v1298 = vadd.f32 0.0, %v1297
        %v1299 = vpop.f32.mrb[0].mxu0
        %v1300 = vadd.f32 0.0, %v1299
        %1301 = vmatprep.mubr.bf16.mxu0 0
        %1302 = vmatmul.mubr.bf16.gmra.mrb[0].mxu0 %v1091
        %v1303 = vpop.f32.mrb[0].mxu0
        %v1304 = vadd.f32 0.0, %v1303
        %v1305 = vpop.f32.mrb[0].mxu0
        %v1306 = vadd.f32 0.0, %v1305
        %v1307 = vpop.f32.mrb[0].mxu0
        %v1308 = vadd.f32 0.0, %v1307
        %v1309 = vpop.f32.mrb[0].mxu0
        %v1310 = vadd.f32 0.0, %v1309
        %1311 = vmatprep.mubr.bf16.mxu0 0
        %1312 = vmatmul.mubr.bf16.gmra.mrb[0].mxu0 %v1094
        %v1313 = vpop.f32.mrb[0].mxu0
        %v1314 = vadd.f32 0.0, %v1313
        %v1315 = vpop.f32.mrb[0].mxu0
        %v1316 = vadd.f32 0.0, %v1315
        %v1317 = vpop.f32.mrb[0].mxu0
        %v1318 = vadd.f32 0.0, %v1317
        %v1319 = vpop.f32.mrb[0].mxu0
        %v1320 = vadd.f32 0.0, %v1319
        %1321 = vdwg.mxu0
        %1322 = vmatprep.subr.bf16.mxu0 %v1018
        %1323 = vmatpush1.bf16.msra.mxu0 %v1017
        %1324 = vmatprep.subr.bf16.mxu0 0
        %1325 = vmatpush1.bf16.msra.mxu0 0
        %1326 = vmatprep.subr.bf16.mxu0 0
        %1327 = vmatpush1.bf16.msra.mxu0 0
        %1328 = vmatprep.subr.bf16.mxu0 0
        %1329 = vmatpush1.bf16.msra.mxu0 0
        %1330 = vmatprep.subr.bf16.mxu0 0
        %1331 = vmatpush1.bf16.msra.mxu0 0
        %1332 = vmatprep.subr.bf16.mxu0 0
        %1333 = vmatpush1.bf16.msra.mxu0 0
        %1334 = vmatprep.subr.bf16.mxu0 0
        %1335 = vmatpush1.bf16.msra.mxu0 0
        %1336 = vmatprep.subr.bf16.mxu0 0
        %1337 = vmatpush1.bf16.msra.mxu0 0
        %1338 = vmatprep.subr.bf16.mxu0 0
        %1339 = vmatpush1.bf16.msra.mxu0 0
        %1340 = vmatprep.subr.bf16.mxu0 0
        %1341 = vmatpush1.bf16.msra.mxu0 0
        %1342 = vmatprep.subr.bf16.mxu0 0
        %1343 = vmatpush1.bf16.msra.mxu0 0
        %1344 = vmatprep.subr.bf16.mxu0 0
        %1345 = vmatpush1.bf16.msra.mxu0 0
        %1346 = vmatprep.subr.bf16.mxu0 0
        %1347 = vmatpush1.bf16.msra.mxu0 0
        %1348 = vmatprep.subr.bf16.mxu0 0
        %1349 = vmatpush1.bf16.msra.mxu0 0
        %1350 = vmatprep.subr.bf16.mxu0 0
        %1351 = vmatpush1.bf16.msra.mxu0 0
        %1352 = vmatprep.subr.bf16.mxu0 0
        %1353 = vmatpush1.bf16.msra.mxu0 0
        %1354 = vmatprep.mubr.bf16.mxu0 0
        %1355 = vmatmul.mubr.bf16.gmra.mrb[0].mxu0 %v1073
        %v1356 = vpop.f32.mrb[0].mxu0
        %v1357 = vadd.f32 0.0, %v1356
        %v1358 = vpop.f32.mrb[0].mxu0
        %v1359 = vadd.f32 0.0, %v1358
        %v1360 = vpop.f32.mrb[0].mxu0
        %v1361 = vadd.f32 0.0, %v1360
        %v1362 = vpop.f32.mrb[0].mxu0
        %v1363 = vadd.f32 0.0, %v1362
        %1364 = vmatprep.mubr.bf16.mxu0 0
        %1365 = vmatmul.mubr.bf16.gmra.mrb[0].mxu0 %v1076
        %v1366 = vpop.f32.mrb[0].mxu0
        %v1367 = vadd.f32 0.0, %v1366
        %v1368 = vpop.f32.mrb[0].mxu0
        %v1369 = vadd.f32 0.0, %v1368
        %v1370 = vpop.f32.mrb[0].mxu0
        %v1371 = vadd.f32 0.0, %v1370
        %v1372 = vpop.f32.mrb[0].mxu0
        %v1373 = vadd.f32 0.0, %v1372
        %1374 = vmatprep.mubr.bf16.mxu0 0
        %1375 = vmatmul.mubr.bf16.gmra.mrb[0].mxu0 %v1079
        %v1376 = vpop.f32.mrb[0].mxu0
        %v1377 = vadd.f32 0.0, %v1376
        %v1378 = vpop.f32.mrb[0].mxu0
        %v1379 = vadd.f32 0.0, %v1378
        %v1380 = vpop.f32.mrb[0].mxu0
        %v1381 = vadd.f32 0.0, %v1380
        %v1382 = vpop.f32.mrb[0].mxu0
        %v1383 = vadd.f32 0.0, %v1382
        %1384 = vmatprep.mubr.bf16.mxu0 0
        %1385 = vmatmul.mubr.bf16.gmra.mrb[0].mxu0 %v1082
        %v1386 = vpop.f32.mrb[0].mxu0
        %v1387 = vadd.f32 0.0, %v1386
        %v1388 = vpop.f32.mrb[0].mxu0
        %v1389 = vadd.f32 0.0, %v1388
        %v1390 = vpop.f32.mrb[0].mxu0
        %v1391 = vadd.f32 0.0, %v1390
        %v1392 = vpop.f32.mrb[0].mxu0
        %v1393 = vadd.f32 0.0, %v1392
        %1394 = vmatprep.mubr.bf16.mxu0 0
        %1395 = vmatmul.mubr.bf16.gmra.mrb[0].mxu0 %v1085
        %v1396 = vpop.f32.mrb[0].mxu0
        %v1397 = vadd.f32 0.0, %v1396
        %v1398 = vpop.f32.mrb[0].mxu0
        %v1399 = vadd.f32 0.0, %v1398
        %v1400 = vpop.f32.mrb[0].mxu0
        %v1401 = vadd.f32 0.0, %v1400
        %v1402 = vpop.f32.mrb[0].mxu0
        %v1403 = vadd.f32 0.0, %v1402
        %1404 = vmatprep.mubr.bf16.mxu0 0
        %1405 = vmatmul.mubr.bf16.gmra.mrb[0].mxu0 %v1088
        %v1406 = vpop.f32.mrb[0].mxu0
        %v1407 = vadd.f32 0.0, %v1406
        %v1408 = vpop.f32.mrb[0].mxu0
        %v1409 = vadd.f32 0.0, %v1408
        %v1410 = vpop.f32.mrb[0].mxu0
        %v1411 = vadd.f32 0.0, %v1410
        %v1412 = vpop.f32.mrb[0].mxu0
        %v1413 = vadd.f32 0.0, %v1412
        %1414 = vmatprep.mubr.bf16.mxu0 0
        %1415 = vmatmul.mubr.bf16.gmra.mrb[0].mxu0 %v1091
        %v1416 = vpop.f32.mrb[0].mxu0
        %v1417 = vadd.f32 0.0, %v1416
        %v1418 = vpop.f32.mrb[0].mxu0
        %v1419 = vadd.f32 0.0, %v1418
        %v1420 = vpop.f32.mrb[0].mxu0
        %v1421 = vadd.f32 0.0, %v1420
        %v1422 = vpop.f32.mrb[0].mxu0
        %v1423 = vadd.f32 0.0, %v1422
        %1424 = vmatprep.mubr.bf16.mxu0 0
        %1425 = vmatmul.mubr.bf16.gmra.mrb[0].mxu0 %v1094
        %v1426 = vpop.f32.mrb[0].mxu0
        %v1427 = vadd.f32 0.0, %v1426
        %v1428 = vpop.f32.mrb[0].mxu0
        %v1429 = vadd.f32 0.0, %v1428
        %v1430 = vpop.f32.mrb[0].mxu0
        %v1431 = vadd.f32 0.0, %v1430
        %v1432 = vpop.f32.mrb[0].mxu0
        %v1433 = vadd.f32 0.0, %v1432
        %1434 = vdwg.mxu0
        %1435 = vmatprep.subr.bf16.mxu0 %v1020
        %1436 = vmatpush1.bf16.msra.mxu0 %v1019
        %1437 = vmatprep.subr.bf16.mxu0 0
        %1438 = vmatpush1.bf16.msra.mxu0 0
        %1439 = vmatprep.subr.bf16.mxu0 0
        %1440 = vmatpush1.bf16.msra.mxu0 0
        %1441 = vmatprep.subr.bf16.mxu0 0
        %1442 = vmatpush1.bf16.msra.mxu0 0
        %1443 = vmatprep.subr.bf16.mxu0 0
        %1444 = vmatpush1.bf16.msra.mxu0 0
        %1445 = vmatprep.subr.bf16.mxu0 0
        %1446 = vmatpush1.bf16.msra.mxu0 0
        %1447 = vmatprep.subr.bf16.mxu0 0
        %1448 = vmatpush1.bf16.msra.mxu0 0
        %1449 = vmatprep.subr.bf16.mxu0 0
        %1450 = vmatpush1.bf16.msra.mxu0 0
        %1451 = vmatprep.subr.bf16.mxu0 0
        %1452 = vmatpush1.bf16.msra.mxu0 0
        %1453 = vmatprep.subr.bf16.mxu0 0
        %1454 = vmatpush1.bf16.msra.mxu0 0
        %1455 = vmatprep.subr.bf16.mxu0 0
        %1456 = vmatpush1.bf16.msra.mxu0 0
        %1457 = vmatprep.subr.bf16.mxu0 0
        %1458 = vmatpush1.bf16.msra.mxu0 0
        %1459 = vmatprep.subr.bf16.mxu0 0
        %1460 = vmatpush1.bf16.msra.mxu0 0
        %1461 = vmatprep.subr.bf16.mxu0 0
        %1462 = vmatpush1.bf16.msra.mxu0 0
        %1463 = vmatprep.subr.bf16.mxu0 0
        %1464 = vmatpush1.bf16.msra.mxu0 0
        %1465 = vmatprep.subr.bf16.mxu0 0
        %1466 = vmatpush1.bf16.msra.mxu0 0
        %1467 = vmatprep.mubr.bf16.mxu0 0
        %1468 = vmatmul.mubr.bf16.gmra.mrb[0].mxu0 %v1073
        %v1469 = vpop.f32.mrb[0].mxu0
        %v1470 = vadd.f32 0.0, %v1469
        %v1471 = vpop.f32.mrb[0].mxu0
        %v1472 = vadd.f32 0.0, %v1471
        %v1473 = vpop.f32.mrb[0].mxu0
        %v1474 = vadd.f32 0.0, %v1473
        %v1475 = vpop.f32.mrb[0].mxu0
        %v1476 = vadd.f32 0.0, %v1475
        %1477 = vmatprep.mubr.bf16.mxu0 0
        %1478 = vmatmul.mubr.bf16.gmra.mrb[0].mxu0 %v1076
        %v1479 = vpop.f32.mrb[0].mxu0
        %v1480 = vadd.f32 0.0, %v1479
        %v1481 = vpop.f32.mrb[0].mxu0
        %v1482 = vadd.f32 0.0, %v1481
        %v1483 = vpop.f32.mrb[0].mxu0
        %v1484 = vadd.f32 0.0, %v1483
        %v1485 = vpop.f32.mrb[0].mxu0
        %v1486 = vadd.f32 0.0, %v1485
        %1487 = vmatprep.mubr.bf16.mxu0 0
        %1488 = vmatmul.mubr.bf16.gmra.mrb[0].mxu0 %v1079
        %v1489 = vpop.f32.mrb[0].mxu0
        %v1490 = vadd.f32 0.0, %v1489
        %v1491 = vpop.f32.mrb[0].mxu0
        %v1492 = vadd.f32 0.0, %v1491
        %v1493 = vpop.f32.mrb[0].mxu0
        %v1494 = vadd.f32 0.0, %v1493
        %v1495 = vpop.f32.mrb[0].mxu0
        %v1496 = vadd.f32 0.0, %v1495
        %1497 = vmatprep.mubr.bf16.mxu0 0
        %1498 = vmatmul.mubr.bf16.gmra.mrb[0].mxu0 %v1082
        %v1499 = vpop.f32.mrb[0].mxu0
        %v1500 = vadd.f32 0.0, %v1499
        %v1501 = vpop.f32.mrb[0].mxu0
        %v1502 = vadd.f32 0.0, %v1501
        %v1503 = vpop.f32.mrb[0].mxu0
        %v1504 = vadd.f32 0.0, %v1503
        %v1505 = vpop.f32.mrb[0].mxu0
        %v1506 = vadd.f32 0.0, %v1505
        %1507 = vmatprep.mubr.bf16.mxu0 0
        %1508 = vmatmul.mubr.bf16.gmra.mrb[0].mxu0 %v1085
        %v1509 = vpop.f32.mrb[0].mxu0
        %v1510 = vadd.f32 0.0, %v1509
        %v1511 = vpop.f32.mrb[0].mxu0
        %v1512 = vadd.f32 0.0, %v1511
        %v1513 = vpop.f32.mrb[0].mxu0
        %v1514 = vadd.f32 0.0, %v1513
        %v1515 = vpop.f32.mrb[0].mxu0
        %v1516 = vadd.f32 0.0, %v1515
        %1517 = vmatprep.mubr.bf16.mxu0 0
        %1518 = vmatmul.mubr.bf16.gmra.mrb[0].mxu0 %v1088
        %v1519 = vpop.f32.mrb[0].mxu0
        %v1520 = vadd.f32 0.0, %v1519
        %v1521 = vpop.f32.mrb[0].mxu0
        %v1522 = vadd.f32 0.0, %v1521
        %v1523 = vpop.f32.mrb[0].mxu0
        %v1524 = vadd.f32 0.0, %v1523
        %v1525 = vpop.f32.mrb[0].mxu0
        %v1526 = vadd.f32 0.0, %v1525
        %1527 = vmatprep.mubr.bf16.mxu0 0
        %1528 = vmatmul.mubr.bf16.gmra.mrb[0].mxu0 %v1091
        %v1529 = vpop.f32.mrb[0].mxu0
        %v1530 = vadd.f32 0.0, %v1529
        %v1531 = vpop.f32.mrb[0].mxu0
        %v1532 = vadd.f32 0.0, %v1531
        %v1533 = vpop.f32.mrb[0].mxu0
        %v1534 = vadd.f32 0.0, %v1533
        %v1535 = vpop.f32.mrb[0].mxu0
        %v1536 = vadd.f32 0.0, %v1535
        %1537 = vmatprep.mubr.bf16.mxu0 0
        %1538 = vmatmul.mubr.bf16.gmra.mrb[0].mxu0 %v1094
        %v1539 = vpop.f32.mrb[0].mxu0
        %v1540 = vadd.f32 0.0, %v1539
        %v1541 = vpop.f32.mrb[0].mxu0
        %v1542 = vadd.f32 0.0, %v1541
        %v1543 = vpop.f32.mrb[0].mxu0
        %v1544 = vadd.f32 0.0, %v1543
        %v1545 = vpop.f32.mrb[0].mxu0
        %v1546 = vadd.f32 0.0, %v1545
        %1547 = vdwg.mxu0
        %1548 = vmatprep.subr.bf16.mxu0 %v1022
        %1549 = vmatpush1.bf16.msra.mxu0 %v1021
        %1550 = vmatprep.subr.bf16.mxu0 0
        %1551 = vmatpush1.bf16.msra.mxu0 0
        %1552 = vmatprep.subr.bf16.mxu0 0
        %1553 = vmatpush1.bf16.msra.mxu0 0
        %1554 = vmatprep.subr.bf16.mxu0 0
        %1555 = vmatpush1.bf16.msra.mxu0 0
        %1556 = vmatprep.subr.bf16.mxu0 0
        %1557 = vmatpush1.bf16.msra.mxu0 0
        %1558 = vmatprep.subr.bf16.mxu0 0
        %1559 = vmatpush1.bf16.msra.mxu0 0
        %1560 = vmatprep.subr.bf16.mxu0 0
        %1561 = vmatpush1.bf16.msra.mxu0 0
        %1562 = vmatprep.subr.bf16.mxu0 0
        %1563 = vmatpush1.bf16.msra.mxu0 0
        %1564 = vmatprep.subr.bf16.mxu0 0
        %1565 = vmatpush1.bf16.msra.mxu0 0
        %1566 = vmatprep.subr.bf16.mxu0 0
        %1567 = vmatpush1.bf16.msra.mxu0 0
        %1568 = vmatprep.subr.bf16.mxu0 0
        %1569 = vmatpush1.bf16.msra.mxu0 0
        %1570 = vmatprep.subr.bf16.mxu0 0
        %1571 = vmatpush1.bf16.msra.mxu0 0
        %1572 = vmatprep.subr.bf16.mxu0 0
        %1573 = vmatpush1.bf16.msra.mxu0 0
        %1574 = vmatprep.subr.bf16.mxu0 0
        %1575 = vmatpush1.bf16.msra.mxu0 0
        %1576 = vmatprep.subr.bf16.mxu0 0
        %1577 = vmatpush1.bf16.msra.mxu0 0
        %1578 = vmatprep.subr.bf16.mxu0 0
        %1579 = vmatpush1.bf16.msra.mxu0 0
        %1580 = vmatprep.mubr.bf16.mxu0 0
        %1581 = vmatmul.mubr.bf16.gmra.mrb[0].mxu0 %v1073
        %v1582 = vpop.f32.mrb[0].mxu0
        %v1583 = vadd.f32 0.0, %v1582
        %v1584 = vpop.f32.mrb[0].mxu0
        %v1585 = vadd.f32 0.0, %v1584
        %v1586 = vpop.f32.mrb[0].mxu0
        %v1587 = vadd.f32 0.0, %v1586
        %v1588 = vpop.f32.mrb[0].mxu0
        %v1589 = vadd.f32 0.0, %v1588
        %1590 = vmatprep.mubr.bf16.mxu0 0
        %1591 = vmatmul.mubr.bf16.gmra.mrb[0].mxu0 %v1076
        %v1592 = vpop.f32.mrb[0].mxu0
        %v1593 = vadd.f32 0.0, %v1592
        %v1594 = vpop.f32.mrb[0].mxu0
        %v1595 = vadd.f32 0.0, %v1594
        %v1596 = vpop.f32.mrb[0].mxu0
        %v1597 = vadd.f32 0.0, %v1596
        %v1598 = vpop.f32.mrb[0].mxu0
        %v1599 = vadd.f32 0.0, %v1598
        %1600 = vmatprep.mubr.bf16.mxu0 0
        %1601 = vmatmul.mubr.bf16.gmra.mrb[0].mxu0 %v1079
        %v1602 = vpop.f32.mrb[0].mxu0
        %v1603 = vadd.f32 0.0, %v1602
        %v1604 = vpop.f32.mrb[0].mxu0
        %v1605 = vadd.f32 0.0, %v1604
        %v1606 = vpop.f32.mrb[0].mxu0
        %v1607 = vadd.f32 0.0, %v1606
        %v1608 = vpop.f32.mrb[0].mxu0
        %v1609 = vadd.f32 0.0, %v1608
        %1610 = vmatprep.mubr.bf16.mxu0 0
        %1611 = vmatmul.mubr.bf16.gmra.mrb[0].mxu0 %v1082
        %v1612 = vpop.f32.mrb[0].mxu0
        %v1613 = vadd.f32 0.0, %v1612
        %v1614 = vpop.f32.mrb[0].mxu0
        %v1615 = vadd.f32 0.0, %v1614
        %v1616 = vpop.f32.mrb[0].mxu0
        %v1617 = vadd.f32 0.0, %v1616
        %v1618 = vpop.f32.mrb[0].mxu0
        %v1619 = vadd.f32 0.0, %v1618
        %1620 = vmatprep.mubr.bf16.mxu0 0
        %1621 = vmatmul.mubr.bf16.gmra.mrb[0].mxu0 %v1085
        %v1622 = vpop.f32.mrb[0].mxu0
        %v1623 = vadd.f32 0.0, %v1622
        %v1624 = vpop.f32.mrb[0].mxu0
        %v1625 = vadd.f32 0.0, %v1624
        %v1626 = vpop.f32.mrb[0].mxu0
        %v1627 = vadd.f32 0.0, %v1626
        %v1628 = vpop.f32.mrb[0].mxu0
        %v1629 = vadd.f32 0.0, %v1628
        %1630 = vmatprep.mubr.bf16.mxu0 0
        %1631 = vmatmul.mubr.bf16.gmra.mrb[0].mxu0 %v1088
        %v1632 = vpop.f32.mrb[0].mxu0
        %v1633 = vadd.f32 0.0, %v1632
        %v1634 = vpop.f32.mrb[0].mxu0
        %v1635 = vadd.f32 0.0, %v1634
        %v1636 = vpop.f32.mrb[0].mxu0
        %v1637 = vadd.f32 0.0, %v1636
        %v1638 = vpop.f32.mrb[0].mxu0
        %v1639 = vadd.f32 0.0, %v1638
        %1640 = vmatprep.mubr.bf16.mxu0 0
        %1641 = vmatmul.mubr.bf16.gmra.mrb[0].mxu0 %v1091
        %v1642 = vpop.f32.mrb[0].mxu0
        %v1643 = vadd.f32 0.0, %v1642
        %v1644 = vpop.f32.mrb[0].mxu0
        %v1645 = vadd.f32 0.0, %v1644
        %v1646 = vpop.f32.mrb[0].mxu0
        %v1647 = vadd.f32 0.0, %v1646
        %v1648 = vpop.f32.mrb[0].mxu0
        %v1649 = vadd.f32 0.0, %v1648
        %1650 = vmatprep.mubr.bf16.mxu0 0
        %1651 = vmatmul.mubr.bf16.gmra.mrb[0].mxu0 %v1094
        %v1652 = vpop.f32.mrb[0].mxu0
        %v1653 = vadd.f32 0.0, %v1652
        %v1654 = vpop.f32.mrb[0].mxu0
        %v1655 = vadd.f32 0.0, %v1654
        %v1656 = vpop.f32.mrb[0].mxu0
        %v1657 = vadd.f32 0.0, %v1656
        %v1658 = vpop.f32.mrb[0].mxu0
        %v1659 = vadd.f32 0.0, %v1658
        %1660 = vdwg.mxu0
        %1661 = vmatprep.subr.bf16.mxu0 %v1024
        %1662 = vmatpush1.bf16.msra.mxu0 %v1023
        %1663 = vmatprep.subr.bf16.mxu0 0
        %1664 = vmatpush1.bf16.msra.mxu0 0
        %1665 = vmatprep.subr.bf16.mxu0 0
        %1666 = vmatpush1.bf16.msra.mxu0 0
        %1667 = vmatprep.subr.bf16.mxu0 0
        %1668 = vmatpush1.bf16.msra.mxu0 0
        %1669 = vmatprep.subr.bf16.mxu0 0
        %1670 = vmatpush1.bf16.msra.mxu0 0
        %1671 = vmatprep.subr.bf16.mxu0 0
        %1672 = vmatpush1.bf16.msra.mxu0 0
        %1673 = vmatprep.subr.bf16.mxu0 0
        %1674 = vmatpush1.bf16.msra.mxu0 0
        %1675 = vmatprep.subr.bf16.mxu0 0
        %1676 = vmatpush1.bf16.msra.mxu0 0
        %1677 = vmatprep.subr.bf16.mxu0 0
        %1678 = vmatpush1.bf16.msra.mxu0 0
        %1679 = vmatprep.subr.bf16.mxu0 0
        %1680 = vmatpush1.bf16.msra.mxu0 0
        %1681 = vmatprep.subr.bf16.mxu0 0
        %1682 = vmatpush1.bf16.msra.mxu0 0
        %1683 = vmatprep.subr.bf16.mxu0 0
        %1684 = vmatpush1.bf16.msra.mxu0 0
        %1685 = vmatprep.subr.bf16.mxu0 0
        %1686 = vmatpush1.bf16.msra.mxu0 0
        %1687 = vmatprep.subr.bf16.mxu0 0
        %1688 = vmatpush1.bf16.msra.mxu0 0
        %1689 = vmatprep.subr.bf16.mxu0 0
        %1690 = vmatpush1.bf16.msra.mxu0 0
        %1691 = vmatprep.subr.bf16.mxu0 0
        %1692 = vmatpush1.bf16.msra.mxu0 0
        %1693 = vmatprep.mubr.bf16.mxu0 0
        %1694 = vmatmul.mubr.bf16.gmra.mrb[0].mxu0 %v1073
        %v1695 = vpop.f32.mrb[0].mxu0
        %v1696 = vadd.f32 0.0, %v1695
        %v1697 = vpop.f32.mrb[0].mxu0
        %v1698 = vadd.f32 0.0, %v1697
        %v1699 = vpop.f32.mrb[0].mxu0
        %v1700 = vadd.f32 0.0, %v1699
        %v1701 = vpop.f32.mrb[0].mxu0
        %v1702 = vadd.f32 0.0, %v1701
        %1703 = vmatprep.mubr.bf16.mxu0 0
        %1704 = vmatmul.mubr.bf16.gmra.mrb[0].mxu0 %v1076
        %v1705 = vpop.f32.mrb[0].mxu0
        %v1706 = vadd.f32 0.0, %v1705
        %v1707 = vpop.f32.mrb[0].mxu0
        %v1708 = vadd.f32 0.0, %v1707
        %v1709 = vpop.f32.mrb[0].mxu0
        %v1710 = vadd.f32 0.0, %v1709
        %v1711 = vpop.f32.mrb[0].mxu0
        %v1712 = vadd.f32 0.0, %v1711
        %1713 = vmatprep.mubr.bf16.mxu0 0
        %1714 = vmatmul.mubr.bf16.gmra.mrb[0].mxu0 %v1079
        %v1715 = vpop.f32.mrb[0].mxu0
        %v1716 = vadd.f32 0.0, %v1715
        %v1717 = vpop.f32.mrb[0].mxu0
        %v1718 = vadd.f32 0.0, %v1717
        %v1719 = vpop.f32.mrb[0].mxu0
        %v1720 = vadd.f32 0.0, %v1719
        %v1721 = vpop.f32.mrb[0].mxu0
        %v1722 = vadd.f32 0.0, %v1721
        %1723 = vmatprep.mubr.bf16.mxu0 0
        %1724 = vmatmul.mubr.bf16.gmra.mrb[0].mxu0 %v1082
        %v1725 = vpop.f32.mrb[0].mxu0
        %v1726 = vadd.f32 0.0, %v1725
        %v1727 = vpop.f32.mrb[0].mxu0
        %v1728 = vadd.f32 0.0, %v1727
        %v1729 = vpop.f32.mrb[0].mxu0
        %v1730 = vadd.f32 0.0, %v1729
        %v1731 = vpop.f32.mrb[0].mxu0
        %v1732 = vadd.f32 0.0, %v1731
        %1733 = vmatprep.mubr.bf16.mxu0 0
        %1734 = vmatmul.mubr.bf16.gmra.mrb[0].mxu0 %v1085
        %v1735 = vpop.f32.mrb[0].mxu0
        %v1736 = vadd.f32 0.0, %v1735
        %v1737 = vpop.f32.mrb[0].mxu0
        %v1738 = vadd.f32 0.0, %v1737
        %v1739 = vpop.f32.mrb[0].mxu0
        %v1740 = vadd.f32 0.0, %v1739
        %v1741 = vpop.f32.mrb[0].mxu0
        %v1742 = vadd.f32 0.0, %v1741
        %1743 = vmatprep.mubr.bf16.mxu0 0
        %1744 = vmatmul.mubr.bf16.gmra.mrb[0].mxu0 %v1088
        %v1745 = vpop.f32.mrb[0].mxu0
        %v1746 = vadd.f32 0.0, %v1745
        %v1747 = vpop.f32.mrb[0].mxu0
        %v1748 = vadd.f32 0.0, %v1747
        %v1749 = vpop.f32.mrb[0].mxu0
        %v1750 = vadd.f32 0.0, %v1749
        %v1751 = vpop.f32.mrb[0].mxu0
        %v1752 = vadd.f32 0.0, %v1751
        %1753 = vmatprep.mubr.bf16.mxu0 0
        %1754 = vmatmul.mubr.bf16.gmra.mrb[0].mxu0 %v1091
        %v1755 = vpop.f32.mrb[0].mxu0
        %v1756 = vadd.f32 0.0, %v1755
        %v1757 = vpop.f32.mrb[0].mxu0
        %v1758 = vadd.f32 0.0, %v1757
        %v1759 = vpop.f32.mrb[0].mxu0
        %v1760 = vadd.f32 0.0, %v1759
        %v1761 = vpop.f32.mrb[0].mxu0
        %v1762 = vadd.f32 0.0, %v1761
        %1763 = vmatprep.mubr.bf16.mxu0 0
        %1764 = vmatmul.mubr.bf16.gmra.mrb[0].mxu0 %v1094
        %v1765 = vpop.f32.mrb[0].mxu0
        %v1766 = vadd.f32 0.0, %v1765
        %v1767 = vpop.f32.mrb[0].mxu0
        %v1768 = vadd.f32 0.0, %v1767
        %v1769 = vpop.f32.mrb[0].mxu0
        %v1770 = vadd.f32 0.0, %v1769
        %v1771 = vpop.f32.mrb[0].mxu0
        %v1772 = vadd.f32 0.0, %v1771
        %1773 = vdwg.mxu0
        %1774 = vmatprep.subr.bf16.mxu0 %v1026
        %1775 = vmatpush1.bf16.msra.mxu0 %v1025
        %1776 = vmatprep.subr.bf16.mxu0 0
        %1777 = vmatpush1.bf16.msra.mxu0 0
        %1778 = vmatprep.subr.bf16.mxu0 0
        %1779 = vmatpush1.bf16.msra.mxu0 0
        %1780 = vmatprep.subr.bf16.mxu0 0
        %1781 = vmatpush1.bf16.msra.mxu0 0
        %1782 = vmatprep.subr.bf16.mxu0 0
        %1783 = vmatpush1.bf16.msra.mxu0 0
        %1784 = vmatprep.subr.bf16.mxu0 0
        %1785 = vmatpush1.bf16.msra.mxu0 0
        %1786 = vmatprep.subr.bf16.mxu0 0
        %1787 = vmatpush1.bf16.msra.mxu0 0
        %1788 = vmatprep.subr.bf16.mxu0 0
        %1789 = vmatpush1.bf16.msra.mxu0 0
        %1790 = vmatprep.subr.bf16.mxu0 0
        %1791 = vmatpush1.bf16.msra.mxu0 0
        %1792 = vmatprep.subr.bf16.mxu0 0
        %1793 = vmatpush1.bf16.msra.mxu0 0
        %1794 = vmatprep.subr.bf16.mxu0 0
        %1795 = vmatpush1.bf16.msra.mxu0 0
        %1796 = vmatprep.subr.bf16.mxu0 0
        %1797 = vmatpush1.bf16.msra.mxu0 0
        %1798 = vmatprep.subr.bf16.mxu0 0
        %1799 = vmatpush1.bf16.msra.mxu0 0
        %1800 = vmatprep.subr.bf16.mxu0 0
        %1801 = vmatpush1.bf16.msra.mxu0 0
        %1802 = vmatprep.subr.bf16.mxu0 0
        %1803 = vmatpush1.bf16.msra.mxu0 0
        %1804 = vmatprep.subr.bf16.mxu0 0
        %1805 = vmatpush1.bf16.msra.mxu0 0
        %1806 = vmatprep.mubr.bf16.mxu0 0
        %1807 = vmatmul.mubr.bf16.gmra.mrb[0].mxu0 %v1073
        %v1808 = vpop.f32.mrb[0].mxu0
        %v1809 = vadd.f32 0.0, %v1808
        %v1810 = vpop.f32.mrb[0].mxu0
        %v1811 = vadd.f32 0.0, %v1810
        %v1812 = vpop.f32.mrb[0].mxu0
        %v1813 = vadd.f32 0.0, %v1812
        %v1814 = vpop.f32.mrb[0].mxu0
        %v1815 = vadd.f32 0.0, %v1814
        %1816 = vmatprep.mubr.bf16.mxu0 0
        %1817 = vmatmul.mubr.bf16.gmra.mrb[0].mxu0 %v1076
        %v1818 = vpop.f32.mrb[0].mxu0
        %v1819 = vadd.f32 0.0, %v1818
        %v1820 = vpop.f32.mrb[0].mxu0
        %v1821 = vadd.f32 0.0, %v1820
        %v1822 = vpop.f32.mrb[0].mxu0
        %v1823 = vadd.f32 0.0, %v1822
        %v1824 = vpop.f32.mrb[0].mxu0
        %v1825 = vadd.f32 0.0, %v1824
        %1826 = vmatprep.mubr.bf16.mxu0 0
        %1827 = vmatmul.mubr.bf16.gmra.mrb[0].mxu0 %v1079
        %v1828 = vpop.f32.mrb[0].mxu0
        %v1829 = vadd.f32 0.0, %v1828
        %v1830 = vpop.f32.mrb[0].mxu0
        %v1831 = vadd.f32 0.0, %v1830
        %v1832 = vpop.f32.mrb[0].mxu0
        %v1833 = vadd.f32 0.0, %v1832
        %v1834 = vpop.f32.mrb[0].mxu0
        %v1835 = vadd.f32 0.0, %v1834
        %1836 = vmatprep.mubr.bf16.mxu0 0
        %1837 = vmatmul.mubr.bf16.gmra.mrb[0].mxu0 %v1082
        %v1838 = vpop.f32.mrb[0].mxu0
        %v1839 = vadd.f32 0.0, %v1838
        %v1840 = vpop.f32.mrb[0].mxu0
        %v1841 = vadd.f32 0.0, %v1840
        %v1842 = vpop.f32.mrb[0].mxu0
        %v1843 = vadd.f32 0.0, %v1842
        %v1844 = vpop.f32.mrb[0].mxu0
        %v1845 = vadd.f32 0.0, %v1844
        %1846 = vmatprep.mubr.bf16.mxu0 0
        %1847 = vmatmul.mubr.bf16.gmra.mrb[0].mxu0 %v1085
        %v1848 = vpop.f32.mrb[0].mxu0
        %v1849 = vadd.f32 0.0, %v1848
        %v1850 = vpop.f32.mrb[0].mxu0
        %v1851 = vadd.f32 0.0, %v1850
        %v1852 = vpop.f32.mrb[0].mxu0
        %v1853 = vadd.f32 0.0, %v1852
        %v1854 = vpop.f32.mrb[0].mxu0
        %v1855 = vadd.f32 0.0, %v1854
        %1856 = vmatprep.mubr.bf16.mxu0 0
        %1857 = vmatmul.mubr.bf16.gmra.mrb[0].mxu0 %v1088
        %v1858 = vpop.f32.mrb[0].mxu0
        %v1859 = vadd.f32 0.0, %v1858
        %v1860 = vpop.f32.mrb[0].mxu0
        %v1861 = vadd.f32 0.0, %v1860
        %v1862 = vpop.f32.mrb[0].mxu0
        %v1863 = vadd.f32 0.0, %v1862
        %v1864 = vpop.f32.mrb[0].mxu0
        %v1865 = vadd.f32 0.0, %v1864
        %1866 = vmatprep.mubr.bf16.mxu0 0
        %1867 = vmatmul.mubr.bf16.gmra.mrb[0].mxu0 %v1091
        %v1868 = vpop.f32.mrb[0].mxu0
        %v1869 = vadd.f32 0.0, %v1868
        %v1870 = vpop.f32.mrb[0].mxu0
        %v1871 = vadd.f32 0.0, %v1870
        %v1872 = vpop.f32.mrb[0].mxu0
        %v1873 = vadd.f32 0.0, %v1872
        %v1874 = vpop.f32.mrb[0].mxu0
        %v1875 = vadd.f32 0.0, %v1874
        %1876 = vmatprep.mubr.bf16.mxu0 0
        %1877 = vmatmul.mubr.bf16.gmra.mrb[0].mxu0 %v1094
        %v1878 = vpop.f32.mrb[0].mxu0
        %v1879 = vadd.f32 0.0, %v1878
        %v1880 = vpop.f32.mrb[0].mxu0
        %v1881 = vadd.f32 0.0, %v1880
        %v1882 = vpop.f32.mrb[0].mxu0
        %v1883 = vadd.f32 0.0, %v1882
        %v1884 = vpop.f32.mrb[0].mxu0
        %v1885 = vadd.f32 0.0, %v1884
        %1886 = vdwg.mxu0
        %1887 = vmatprep.subr.bf16.mxu0 %v1028
        %1888 = vmatpush1.bf16.msra.mxu0 %v1027
        %1889 = vmatprep.subr.bf16.mxu0 0
        %1890 = vmatpush1.bf16.msra.mxu0 0
        %1891 = vmatprep.subr.bf16.mxu0 0
        %1892 = vmatpush1.bf16.msra.mxu0 0
        %1893 = vmatprep.subr.bf16.mxu0 0
        %1894 = vmatpush1.bf16.msra.mxu0 0
        %1895 = vmatprep.subr.bf16.mxu0 0
        %1896 = vmatpush1.bf16.msra.mxu0 0
        %1897 = vmatprep.subr.bf16.mxu0 0
        %1898 = vmatpush1.bf16.msra.mxu0 0
        %1899 = vmatprep.subr.bf16.mxu0 0
        %1900 = vmatpush1.bf16.msra.mxu0 0
        %1901 = vmatprep.subr.bf16.mxu0 0
        %1902 = vmatpush1.bf16.msra.mxu0 0
        %1903 = vmatprep.subr.bf16.mxu0 0
        %1904 = vmatpush1.bf16.msra.mxu0 0
        %1905 = vmatprep.subr.bf16.mxu0 0
        %1906 = vmatpush1.bf16.msra.mxu0 0
        %1907 = vmatprep.subr.bf16.mxu0 0
        %1908 = vmatpush1.bf16.msra.mxu0 0
        %1909 = vmatprep.subr.bf16.mxu0 0
        %1910 = vmatpush1.bf16.msra.mxu0 0
        %1911 = vmatprep.subr.bf16.mxu0 0
        %1912 = vmatpush1.bf16.msra.mxu0 0
        %1913 = vmatprep.subr.bf16.mxu0 0
        %1914 = vmatpush1.bf16.msra.mxu0 0
        %1915 = vmatprep.subr.bf16.mxu0 0
        %1916 = vmatpush1.bf16.msra.mxu0 0
        %1917 = vmatprep.subr.bf16.mxu0 0
        %1918 = vmatpush1.bf16.msra.mxu0 0
        %1919 = vmatprep.mubr.bf16.mxu0 0
        %1920 = vmatmul.mubr.bf16.gmra.mrb[0].mxu0 %v1073
        %v1921 = vpop.f32.mrb[0].mxu0
        %v1922 = vadd.f32 0.0, %v1921
        %v1923 = vpop.f32.mrb[0].mxu0
        %v1924 = vadd.f32 0.0, %v1923
        %v1925 = vpop.f32.mrb[0].mxu0
        %v1926 = vadd.f32 0.0, %v1925
        %v1927 = vpop.f32.mrb[0].mxu0
        %v1928 = vadd.f32 0.0, %v1927
        %1929 = vmatprep.mubr.bf16.mxu0 0
        %1930 = vmatmul.mubr.bf16.gmra.mrb[0].mxu0 %v1076
        %v1931 = vpop.f32.mrb[0].mxu0
        %v1932 = vadd.f32 0.0, %v1931
        %v1933 = vpop.f32.mrb[0].mxu0
        %v1934 = vadd.f32 0.0, %v1933
        %v1935 = vpop.f32.mrb[0].mxu0
        %v1936 = vadd.f32 0.0, %v1935
        %v1937 = vpop.f32.mrb[0].mxu0
        %v1938 = vadd.f32 0.0, %v1937
        %1939 = vmatprep.mubr.bf16.mxu0 0
        %1940 = vmatmul.mubr.bf16.gmra.mrb[0].mxu0 %v1079
        %v1941 = vpop.f32.mrb[0].mxu0
        %v1942 = vadd.f32 0.0, %v1941
        %v1943 = vpop.f32.mrb[0].mxu0
        %v1944 = vadd.f32 0.0, %v1943
        %v1945 = vpop.f32.mrb[0].mxu0
        %v1946 = vadd.f32 0.0, %v1945
        %v1947 = vpop.f32.mrb[0].mxu0
        %v1948 = vadd.f32 0.0, %v1947
        %1949 = vmatprep.mubr.bf16.mxu0 0
        %1950 = vmatmul.mubr.bf16.gmra.mrb[0].mxu0 %v1082
        %v1951 = vpop.f32.mrb[0].mxu0
        %v1952 = vadd.f32 0.0, %v1951
        %v1953 = vpop.f32.mrb[0].mxu0
        %v1954 = vadd.f32 0.0, %v1953
        %v1955 = vpop.f32.mrb[0].mxu0
        %v1956 = vadd.f32 0.0, %v1955
        %v1957 = vpop.f32.mrb[0].mxu0
        %v1958 = vadd.f32 0.0, %v1957
        %1959 = vmatprep.mubr.bf16.mxu0 0
        %1960 = vmatmul.mubr.bf16.gmra.mrb[0].mxu0 %v1085
        %v1961 = vpop.f32.mrb[0].mxu0
        %v1962 = vadd.f32 0.0, %v1961
        %v1963 = vpop.f32.mrb[0].mxu0
        %v1964 = vadd.f32 0.0, %v1963
        %v1965 = vpop.f32.mrb[0].mxu0
        %v1966 = vadd.f32 0.0, %v1965
        %v1967 = vpop.f32.mrb[0].mxu0
        %v1968 = vadd.f32 0.0, %v1967
        %1969 = vmatprep.mubr.bf16.mxu0 0
        %1970 = vmatmul.mubr.bf16.gmra.mrb[0].mxu0 %v1088
        %v1971 = vpop.f32.mrb[0].mxu0
        %v1972 = vadd.f32 0.0, %v1971
        %v1973 = vpop.f32.mrb[0].mxu0
        %v1974 = vadd.f32 0.0, %v1973
        %v1975 = vpop.f32.mrb[0].mxu0
        %v1976 = vadd.f32 0.0, %v1975
        %v1977 = vpop.f32.mrb[0].mxu0
        %v1978 = vadd.f32 0.0, %v1977
        %1979 = vmatprep.mubr.bf16.mxu0 0
        %1980 = vmatmul.mubr.bf16.gmra.mrb[0].mxu0 %v1091
        %v1981 = vpop.f32.mrb[0].mxu0
        %v1982 = vadd.f32 0.0, %v1981
        %v1983 = vpop.f32.mrb[0].mxu0
        %v1984 = vadd.f32 0.0, %v1983
        %v1985 = vpop.f32.mrb[0].mxu0
        %v1986 = vadd.f32 0.0, %v1985
        %v1987 = vpop.f32.mrb[0].mxu0
        %v1988 = vadd.f32 0.0, %v1987
        %1989 = vmatprep.mubr.bf16.mxu0 0
        %1990 = vmatmul.mubr.bf16.gmra.mrb[0].mxu0 %v1094
        %v1991 = vpop.f32.mrb[0].mxu0
        %v1992 = vadd.f32 0.0, %v1991
        %v1993 = vpop.f32.mrb[0].mxu0
        %v1994 = vadd.f32 0.0, %v1993
        %v1995 = vpop.f32.mrb[0].mxu0
        %v1996 = vadd.f32 0.0, %v1995
        %v1997 = vpop.f32.mrb[0].mxu0
        %v1998 = vadd.f32 0.0, %v1997
        %1999 = vdwg.mxu0
        %2000 = vmatprep.subr.bf16.mxu0 %v1030
        %2001 = vmatpush1.bf16.msra.mxu0 %v1029
        %2002 = vmatprep.subr.bf16.mxu0 0
        %2003 = vmatpush1.bf16.msra.mxu0 0
        %2004 = vmatprep.subr.bf16.mxu0 0
        %2005 = vmatpush1.bf16.msra.mxu0 0
        %2006 = vmatprep.subr.bf16.mxu0 0
        %2007 = vmatpush1.bf16.msra.mxu0 0
        %2008 = vmatprep.subr.bf16.mxu0 0
        %2009 = vmatpush1.bf16.msra.mxu0 0
        %2010 = vmatprep.subr.bf16.mxu0 0
        %2011 = vmatpush1.bf16.msra.mxu0 0
        %2012 = vmatprep.subr.bf16.mxu0 0
        %2013 = vmatpush1.bf16.msra.mxu0 0
        %2014 = vmatprep.subr.bf16.mxu0 0
        %2015 = vmatpush1.bf16.msra.mxu0 0
        %2016 = vmatprep.subr.bf16.mxu0 0
        %2017 = vmatpush1.bf16.msra.mxu0 0
        %2018 = vmatprep.subr.bf16.mxu0 0
        %2019 = vmatpush1.bf16.msra.mxu0 0
        %2020 = vmatprep.subr.bf16.mxu0 0
        %2021 = vmatpush1.bf16.msra.mxu0 0
        %2022 = vmatprep.subr.bf16.mxu0 0
        %2023 = vmatpush1.bf16.msra.mxu0 0
        %2024 = vmatprep.subr.bf16.mxu0 0
        %2025 = vmatpush1.bf16.msra.mxu0 0
        %2026 = vmatprep.subr.bf16.mxu0 0
        %2027 = vmatpush1.bf16.msra.mxu0 0
        %2028 = vmatprep.subr.bf16.mxu0 0
        %2029 = vmatpush1.bf16.msra.mxu0 0
        %2030 = vmatprep.subr.bf16.mxu0 0
        %2031 = vmatpush1.bf16.msra.mxu0 0
        %2032 = vmatprep.mubr.bf16.mxu0 0
        %2033 = vmatmul.mubr.bf16.gmra.mrb[0].mxu0 %v1073
        %v2034 = vpop.f32.mrb[0].mxu0
        %v2035 = vadd.f32 0.0, %v2034
        %v2036 = vpop.f32.mrb[0].mxu0
        %v2037 = vadd.f32 0.0, %v2036
        %v2038 = vpop.f32.mrb[0].mxu0
        %v2039 = vadd.f32 0.0, %v2038
        %v2040 = vpop.f32.mrb[0].mxu0
        %v2041 = vadd.f32 0.0, %v2040
        %2042 = vmatprep.mubr.bf16.mxu0 0
        %2043 = vmatmul.mubr.bf16.gmra.mrb[0].mxu0 %v1076
        %v2044 = vpop.f32.mrb[0].mxu0
        %v2045 = vadd.f32 0.0, %v2044
        %v2046 = vpop.f32.mrb[0].mxu0
        %v2047 = vadd.f32 0.0, %v2046
        %v2048 = vpop.f32.mrb[0].mxu0
        %v2049 = vadd.f32 0.0, %v2048
        %v2050 = vpop.f32.mrb[0].mxu0
        %v2051 = vadd.f32 0.0, %v2050
        %2052 = vmatprep.mubr.bf16.mxu0 0
        %2053 = vmatmul.mubr.bf16.gmra.mrb[0].mxu0 %v1079
        %v2054 = vpop.f32.mrb[0].mxu0
        %v2055 = vadd.f32 0.0, %v2054
        %v2056 = vpop.f32.mrb[0].mxu0
        %v2057 = vadd.f32 0.0, %v2056
        %v2058 = vpop.f32.mrb[0].mxu0
        %v2059 = vadd.f32 0.0, %v2058
        %v2060 = vpop.f32.mrb[0].mxu0
        %v2061 = vadd.f32 0.0, %v2060
        %2062 = vmatprep.mubr.bf16.mxu0 0
        %2063 = vmatmul.mubr.bf16.gmra.mrb[0].mxu0 %v1082
        %v2064 = vpop.f32.mrb[0].mxu0
        %v2065 = vadd.f32 0.0, %v2064
        %v2066 = vpop.f32.mrb[0].mxu0
        %v2067 = vadd.f32 0.0, %v2066
        %v2068 = vpop.f32.mrb[0].mxu0
        %v2069 = vadd.f32 0.0, %v2068
        %v2070 = vpop.f32.mrb[0].mxu0
        %v2071 = vadd.f32 0.0, %v2070
        %2072 = vmatprep.mubr.bf16.mxu0 0
        %2073 = vmatmul.mubr.bf16.gmra.mrb[0].mxu0 %v1085
        %v2074 = vpop.f32.mrb[0].mxu0
        %v2075 = vadd.f32 0.0, %v2074
        %v2076 = vpop.f32.mrb[0].mxu0
        %v2077 = vadd.f32 0.0, %v2076
        %v2078 = vpop.f32.mrb[0].mxu0
        %v2079 = vadd.f32 0.0, %v2078
        %v2080 = vpop.f32.mrb[0].mxu0
        %v2081 = vadd.f32 0.0, %v2080
        %2082 = vmatprep.mubr.bf16.mxu0 0
        %2083 = vmatmul.mubr.bf16.gmra.mrb[0].mxu0 %v1088
        %v2084 = vpop.f32.mrb[0].mxu0
        %v2085 = vadd.f32 0.0, %v2084
        %v2086 = vpop.f32.mrb[0].mxu0
        %v2087 = vadd.f32 0.0, %v2086
        %v2088 = vpop.f32.mrb[0].mxu0
        %v2089 = vadd.f32 0.0, %v2088
        %v2090 = vpop.f32.mrb[0].mxu0
        %v2091 = vadd.f32 0.0, %v2090
        %2092 = vmatprep.mubr.bf16.mxu0 0
        %2093 = vmatmul.mubr.bf16.gmra.mrb[0].mxu0 %v1091
        %v2094 = vpop.f32.mrb[0].mxu0
        %v2095 = vadd.f32 0.0, %v2094
        %v2096 = vpop.f32.mrb[0].mxu0
        %v2097 = vadd.f32 0.0, %v2096
        %v2098 = vpop.f32.mrb[0].mxu0
        %v2099 = vadd.f32 0.0, %v2098
        %v2100 = vpop.f32.mrb[0].mxu0
        %v2101 = vadd.f32 0.0, %v2100
        %2102 = vmatprep.mubr.bf16.mxu0 0
        %2103 = vmatmul.mubr.bf16.gmra.mrb[0].mxu0 %v1094
        %v2104 = vpop.f32.mrb[0].mxu0
        %v2105 = vadd.f32 0.0, %v2104
        %v2106 = vpop.f32.mrb[0].mxu0
        %v2107 = vadd.f32 0.0, %v2106
        %v2108 = vpop.f32.mrb[0].mxu0
        %v2109 = vadd.f32 0.0, %v2108
        %v2110 = vpop.f32.mrb[0].mxu0
        %v2111 = vadd.f32 0.0, %v2110
        %2112 = vdwg.mxu0
        %v2113 = vmul.f32 %v1131, %v977
        %v2114 = vmul.f32 %v1133, %v978
        %v2115 = vmul.f32 %v1244, %v979
        %v2116 = vmul.f32 %v1246, %v980
        %v2117 = vmul.f32 %v1357, %v981
        %v2118 = vmul.f32 %v1359, %v982
        %v2119 = vmul.f32 %v1470, %v983
        %v2120 = vmul.f32 %v1472, %v984
        %v2121 = vmul.f32 %v1583, %v985
        %v2122 = vmul.f32 %v1585, %v986
        %v2123 = vmul.f32 %v1696, %v987
        %v2124 = vmul.f32 %v1698, %v988
        %v2125 = vmul.f32 %v1809, %v989
        %v2126 = vmul.f32 %v1811, %v990
        %v2127 = vmul.f32 %v1922, %v991
        %v2128 = vmul.f32 %v1924, %v992
        %v2129 = vmul.f32 %v2035, %v993
        %v2130 = vmul.f32 %v2037, %v994
        %v2131 = vmul.f32 %v1135, %v995
        %v2132 = vmul.f32 %v1137, %v996
        %v2133 = vmul.f32 %v1248, %v997
        %v2134 = vmul.f32 %v1250, %v998
        %v2135 = vmul.f32 %v1361, %v999
        %v2136 = vmul.f32 %v1363, %v1000
        %v2137 = vmul.f32 %v1474, %v1001
        %v2138 = vmul.f32 %v1476, %v1002
        %v2139 = vmul.f32 %v1587, %v1003
        %v2140 = vmul.f32 %v1589, %v1004
        %v2141 = vmul.f32 %v1700, %v1005
        %v2142 = vmul.f32 %v1702, %v1006
        %v2143 = vmul.f32 %v1813, %v1007
        %v2144 = vmul.f32 %v1815, %v1008
        %v2145 = vmul.f32 %v1926, %v1009
        %v2146 = vmul.f32 %v1928, %v1010
        %v2147 = vmul.f32 %v2039, %v1011
        %v2148 = vmul.f32 %v2041, %v1012
        %v2149 = vmul.f32 %v1141, %v977
        %v2150 = vmul.f32 %v1143, %v978
        %v2151 = vmul.f32 %v1254, %v979
        %v2152 = vmul.f32 %v1256, %v980
        %v2153 = vmul.f32 %v1367, %v981
        %v2154 = vmul.f32 %v1369, %v982
        %v2155 = vmul.f32 %v1480, %v983
        %v2156 = vmul.f32 %v1482, %v984
        %v2157 = vmul.f32 %v1593, %v985
        %v2158 = vmul.f32 %v1595, %v986
        %v2159 = vmul.f32 %v1706, %v987
        %v2160 = vmul.f32 %v1708, %v988
        %v2161 = vmul.f32 %v1819, %v989
        %v2162 = vmul.f32 %v1821, %v990
        %v2163 = vmul.f32 %v1932, %v991
        %v2164 = vmul.f32 %v1934, %v992
        %v2165 = vmul.f32 %v2045, %v993
        %v2166 = vmul.f32 %v2047, %v994
        %v2167 = vmul.f32 %v1145, %v995
        %v2168 = vmul.f32 %v1147, %v996
        %v2169 = vmul.f32 %v1258, %v997
        %v2170 = vmul.f32 %v1260, %v998
        %v2171 = vmul.f32 %v1371, %v999
        %v2172 = vmul.f32 %v1373, %v1000
        %v2173 = vmul.f32 %v1484, %v1001
        %v2174 = vmul.f32 %v1486, %v1002
        %v2175 = vmul.f32 %v1597, %v1003
        %v2176 = vmul.f32 %v1599, %v1004
        %v2177 = vmul.f32 %v1710, %v1005
        %v2178 = vmul.f32 %v1712, %v1006
        %v2179 = vmul.f32 %v1823, %v1007
        %v2180 = vmul.f32 %v1825, %v1008
        %v2181 = vmul.f32 %v1936, %v1009
        %v2182 = vmul.f32 %v1938, %v1010
        %v2183 = vmul.f32 %v2049, %v1011
        %v2184 = vmul.f32 %v2051, %v1012
        %v2185 = vmul.f32 %v1151, %v977
        %v2186 = vmul.f32 %v1153, %v978
        %v2187 = vmul.f32 %v1264, %v979
        %v2188 = vmul.f32 %v1266, %v980
        %v2189 = vmul.f32 %v1377, %v981
        %v2190 = vmul.f32 %v1379, %v982
        %v2191 = vmul.f32 %v1490, %v983
        %v2192 = vmul.f32 %v1492, %v984
        %v2193 = vmul.f32 %v1603, %v985
        %v2194 = vmul.f32 %v1605, %v986
        %v2195 = vmul.f32 %v1716, %v987
        %v2196 = vmul.f32 %v1718, %v988
        %v2197 = vmul.f32 %v1829, %v989
        %v2198 = vmul.f32 %v1831, %v990
        %v2199 = vmul.f32 %v1942, %v991
        %v2200 = vmul.f32 %v1944, %v992
        %v2201 = vmul.f32 %v2055, %v993
        %v2202 = vmul.f32 %v2057, %v994
        %v2203 = vmul.f32 %v1155, %v995
        %v2204 = vmul.f32 %v1157, %v996
        %v2205 = vmul.f32 %v1268, %v997
        %v2206 = vmul.f32 %v1270, %v998
        %v2207 = vmul.f32 %v1381, %v999
        %v2208 = vmul.f32 %v1383, %v1000
        %v2209 = vmul.f32 %v1494, %v1001
        %v2210 = vmul.f32 %v1496, %v1002
        %v2211 = vmul.f32 %v1607, %v1003
        %v2212 = vmul.f32 %v1609, %v1004
        %v2213 = vmul.f32 %v1720, %v1005
        %v2214 = vmul.f32 %v1722, %v1006
        %v2215 = vmul.f32 %v1833, %v1007
        %v2216 = vmul.f32 %v1835, %v1008
        %v2217 = vmul.f32 %v1946, %v1009
        %v2218 = vmul.f32 %v1948, %v1010
        %v2219 = vmul.f32 %v2059, %v1011
        %v2220 = vmul.f32 %v2061, %v1012
        %v2221 = vmul.f32 %v1161, %v977
        %v2222 = vmul.f32 %v1163, %v978
        %v2223 = vmul.f32 %v1274, %v979
        %v2224 = vmul.f32 %v1276, %v980
        %v2225 = vmul.f32 %v1387, %v981
        %v2226 = vmul.f32 %v1389, %v982
        %v2227 = vmul.f32 %v1500, %v983
        %v2228 = vmul.f32 %v1502, %v984
        %v2229 = vmul.f32 %v1613, %v985
        %v2230 = vmul.f32 %v1615, %v986
        %v2231 = vmul.f32 %v1726, %v987
        %v2232 = vmul.f32 %v1728, %v988
        %v2233 = vmul.f32 %v1839, %v989
        %v2234 = vmul.f32 %v1841, %v990
        %v2235 = vmul.f32 %v1952, %v991
        %v2236 = vmul.f32 %v1954, %v992
        %v2237 = vmul.f32 %v2065, %v993
        %v2238 = vmul.f32 %v2067, %v994
        %v2239 = vmul.f32 %v1165, %v995
        %v2240 = vmul.f32 %v1167, %v996
        %v2241 = vmul.f32 %v1278, %v997
        %v2242 = vmul.f32 %v1280, %v998
        %v2243 = vmul.f32 %v1391, %v999
        %v2244 = vmul.f32 %v1393, %v1000
        %v2245 = vmul.f32 %v1504, %v1001
        %v2246 = vmul.f32 %v1506, %v1002
        %v2247 = vmul.f32 %v1617, %v1003
        %v2248 = vmul.f32 %v1619, %v1004
        %v2249 = vmul.f32 %v1730, %v1005
        %v2250 = vmul.f32 %v1732, %v1006
        %v2251 = vmul.f32 %v1843, %v1007
        %v2252 = vmul.f32 %v1845, %v1008
        %v2253 = vmul.f32 %v1956, %v1009
        %v2254 = vmul.f32 %v1958, %v1010
        %v2255 = vmul.f32 %v2069, %v1011
        %v2256 = vmul.f32 %v2071, %v1012
        %v2257 = vmul.f32 %v1171, %v977
        %v2258 = vmul.f32 %v1173, %v978
        %v2259 = vmul.f32 %v1284, %v979
        %v2260 = vmul.f32 %v1286, %v980
        %v2261 = vmul.f32 %v1397, %v981
        %v2262 = vmul.f32 %v1399, %v982
        %v2263 = vmul.f32 %v1510, %v983
        %v2264 = vmul.f32 %v1512, %v984
        %v2265 = vmul.f32 %v1623, %v985
        %v2266 = vmul.f32 %v1625, %v986
        %v2267 = vmul.f32 %v1736, %v987
        %v2268 = vmul.f32 %v1738, %v988
        %v2269 = vmul.f32 %v1849, %v989
        %v2270 = vmul.f32 %v1851, %v990
        %v2271 = vmul.f32 %v1962, %v991
        %v2272 = vmul.f32 %v1964, %v992
        %v2273 = vmul.f32 %v2075, %v993
        %v2274 = vmul.f32 %v2077, %v994
        %v2275 = vmul.f32 %v1175, %v995
        %v2276 = vmul.f32 %v1177, %v996
        %v2277 = vmul.f32 %v1288, %v997
        %v2278 = vmul.f32 %v1290, %v998
        %v2279 = vmul.f32 %v1401, %v999
        %v2280 = vmul.f32 %v1403, %v1000
        %v2281 = vmul.f32 %v1514, %v1001
        %v2282 = vmul.f32 %v1516, %v1002
        %v2283 = vmul.f32 %v1627, %v1003
        %v2284 = vmul.f32 %v1629, %v1004
        %v2285 = vmul.f32 %v1740, %v1005
        %v2286 = vmul.f32 %v1742, %v1006
        %v2287 = vmul.f32 %v1853, %v1007
        %v2288 = vmul.f32 %v1855, %v1008
        %v2289 = vmul.f32 %v1966, %v1009
        %v2290 = vmul.f32 %v1968, %v1010
        %v2291 = vmul.f32 %v2079, %v1011
        %v2292 = vmul.f32 %v2081, %v1012
        %v2293 = vmul.f32 %v1181, %v977
        %v2294 = vmul.f32 %v1183, %v978
        %v2295 = vmul.f32 %v1294, %v979
        %v2296 = vmul.f32 %v1296, %v980
        %v2297 = vmul.f32 %v1407, %v981
        %v2298 = vmul.f32 %v1409, %v982
        %v2299 = vmul.f32 %v1520, %v983
        %v2300 = vmul.f32 %v1522, %v984
        %v2301 = vmul.f32 %v1633, %v985
        %v2302 = vmul.f32 %v1635, %v986
        %v2303 = vmul.f32 %v1746, %v987
        %v2304 = vmul.f32 %v1748, %v988
        %v2305 = vmul.f32 %v1859, %v989
        %v2306 = vmul.f32 %v1861, %v990
        %v2307 = vmul.f32 %v1972, %v991
        %v2308 = vmul.f32 %v1974, %v992
        %v2309 = vmul.f32 %v2085, %v993
        %v2310 = vmul.f32 %v2087, %v994
        %v2311 = vmul.f32 %v1185, %v995
        %v2312 = vmul.f32 %v1187, %v996
        %v2313 = vmul.f32 %v1298, %v997
        %v2314 = vmul.f32 %v1300, %v998
        %v2315 = vmul.f32 %v1411, %v999
        %v2316 = vmul.f32 %v1413, %v1000
        %v2317 = vmul.f32 %v1524, %v1001
        %v2318 = vmul.f32 %v1526, %v1002
        %v2319 = vmul.f32 %v1637, %v1003
        %v2320 = vmul.f32 %v1639, %v1004
        %v2321 = vmul.f32 %v1750, %v1005
        %v2322 = vmul.f32 %v1752, %v1006
        %v2323 = vmul.f32 %v1863, %v1007
        %v2324 = vmul.f32 %v1865, %v1008
        %v2325 = vmul.f32 %v1976, %v1009
        %v2326 = vmul.f32 %v1978, %v1010
        %v2327 = vmul.f32 %v2089, %v1011
        %v2328 = vmul.f32 %v2091, %v1012
        %v2329 = vmul.f32 %v1191, %v977
        %v2330 = vmul.f32 %v1193, %v978
        %v2331 = vmul.f32 %v1304, %v979
        %v2332 = vmul.f32 %v1306, %v980
        %v2333 = vmul.f32 %v1417, %v981
        %v2334 = vmul.f32 %v1419, %v982
        %v2335 = vmul.f32 %v1530, %v983
        %v2336 = vmul.f32 %v1532, %v984
        %v2337 = vmul.f32 %v1643, %v985
        %v2338 = vmul.f32 %v1645, %v986
        %v2339 = vmul.f32 %v1756, %v987
        %v2340 = vmul.f32 %v1758, %v988
        %v2341 = vmul.f32 %v1869, %v989
        %v2342 = vmul.f32 %v1871, %v990
        %v2343 = vmul.f32 %v1982, %v991
        %v2344 = vmul.f32 %v1984, %v992
        %v2345 = vmul.f32 %v2095, %v993
        %v2346 = vmul.f32 %v2097, %v994
        %v2347 = vmul.f32 %v1195, %v995
        %v2348 = vmul.f32 %v1197, %v996
        %v2349 = vmul.f32 %v1308, %v997
        %v2350 = vmul.f32 %v1310, %v998
        %v2351 = vmul.f32 %v1421, %v999
        %v2352 = vmul.f32 %v1423, %v1000
        %v2353 = vmul.f32 %v1534, %v1001
        %v2354 = vmul.f32 %v1536, %v1002
        %v2355 = vmul.f32 %v1647, %v1003
        %v2356 = vmul.f32 %v1649, %v1004
        %v2357 = vmul.f32 %v1760, %v1005
        %v2358 = vmul.f32 %v1762, %v1006
        %v2359 = vmul.f32 %v1873, %v1007
        %v2360 = vmul.f32 %v1875, %v1008
        %v2361 = vmul.f32 %v1986, %v1009
        %v2362 = vmul.f32 %v1988, %v1010
        %v2363 = vmul.f32 %v2099, %v1011
        %v2364 = vmul.f32 %v2101, %v1012
        %v2365 = vmul.f32 %v1201, %v977
        %v2366 = vmul.f32 %v1203, %v978
        %v2367 = vmul.f32 %v1314, %v979
        %v2368 = vmul.f32 %v1316, %v980
        %v2369 = vmul.f32 %v1427, %v981
        %v2370 = vmul.f32 %v1429, %v982
        %v2371 = vmul.f32 %v1540, %v983
        %v2372 = vmul.f32 %v1542, %v984
        %v2373 = vmul.f32 %v1653, %v985
        %v2374 = vmul.f32 %v1655, %v986
        %v2375 = vmul.f32 %v1766, %v987
        %v2376 = vmul.f32 %v1768, %v988
        %v2377 = vmul.f32 %v1879, %v989
        %v2378 = vmul.f32 %v1881, %v990
        %v2379 = vmul.f32 %v1992, %v991
        %v2380 = vmul.f32 %v1994, %v992
        %v2381 = vmul.f32 %v2105, %v993
        %v2382 = vmul.f32 %v2107, %v994
        %v2383 = vmul.f32 %v1205, %v995
        %v2384 = vmul.f32 %v1207, %v996
        %v2385 = vmul.f32 %v1318, %v997
        %v2386 = vmul.f32 %v1320, %v998
        %v2387 = vmul.f32 %v1431, %v999
        %v2388 = vmul.f32 %v1433, %v1000
        %v2389 = vmul.f32 %v1544, %v1001
        %v2390 = vmul.f32 %v1546, %v1002
        %v2391 = vmul.f32 %v1657, %v1003
        %v2392 = vmul.f32 %v1659, %v1004
        %v2393 = vmul.f32 %v1770, %v1005
        %v2394 = vmul.f32 %v1772, %v1006
        %v2395 = vmul.f32 %v1883, %v1007
        %v2396 = vmul.f32 %v1885, %v1008
        %v2397 = vmul.f32 %v1996, %v1009
        %v2398 = vmul.f32 %v1998, %v1010
        %v2399 = vmul.f32 %v2109, %v1011
        %v2400 = vmul.f32 %v2111, %v1012
        %v2401 = vadd.f32 %v2113, %v2131
        %v2402 = vrot.slane %v2401, 4
        %v2403 = vadd.f32 %v2401, %v2402
        %v2404 = vrot.slane %v2403, 2
        %v2405 = vadd.f32 %v2403, %v2404
        %v2406 = vrot.slane %v2405, 1
        %v2407 = vadd.f32 %v2405, %v2406
        %v2408 = vadd.f32 %v2114, %v2132
        %v2409 = vrot.slane %v2408, 4
        %v2410 = vadd.f32 %v2408, %v2409
        %v2411 = vrot.slane %v2410, 2
        %v2412 = vadd.f32 %v2410, %v2411
        %v2413 = vrot.slane %v2412, 1
        %v2414 = vadd.f32 %v2412, %v2413
        %v2415 = vadd.f32 %v2115, %v2133
        %v2416 = vrot.slane %v2415, 4
        %v2417 = vadd.f32 %v2415, %v2416
        %v2418 = vrot.slane %v2417, 2
        %v2419 = vadd.f32 %v2417, %v2418
        %v2420 = vrot.slane %v2419, 1
        %v2421 = vadd.f32 %v2419, %v2420
        %v2422 = vadd.f32 %v2116, %v2134
        %v2423 = vrot.slane %v2422, 4
        %v2424 = vadd.f32 %v2422, %v2423
        %v2425 = vrot.slane %v2424, 2
        %v2426 = vadd.f32 %v2424, %v2425
        %v2427 = vrot.slane %v2426, 1
        %v2428 = vadd.f32 %v2426, %v2427
        %v2429 = vadd.f32 %v2117, %v2135
        %v2430 = vrot.slane %v2429, 4
        %v2431 = vadd.f32 %v2429, %v2430
        %v2432 = vrot.slane %v2431, 2
        %v2433 = vadd.f32 %v2431, %v2432
        %v2434 = vrot.slane %v2433, 1
        %v2435 = vadd.f32 %v2433, %v2434
        %v2436 = vadd.f32 %v2118, %v2136
        %v2437 = vrot.slane %v2436, 4
        %v2438 = vadd.f32 %v2436, %v2437
        %v2439 = vrot.slane %v2438, 2
        %v2440 = vadd.f32 %v2438, %v2439
        %v2441 = vrot.slane %v2440, 1
        %v2442 = vadd.f32 %v2440, %v2441
        %v2443 = vadd.f32 %v2119, %v2137
        %v2444 = vrot.slane %v2443, 4
        %v2445 = vadd.f32 %v2443, %v2444
        %v2446 = vrot.slane %v2445, 2
        %v2447 = vadd.f32 %v2445, %v2446
        %v2448 = vrot.slane %v2447, 1
        %v2449 = vadd.f32 %v2447, %v2448
        %v2450 = vadd.f32 %v2120, %v2138
        %v2451 = vrot.slane %v2450, 4
        %v2452 = vadd.f32 %v2450, %v2451
        %v2453 = vrot.slane %v2452, 2
        %v2454 = vadd.f32 %v2452, %v2453
        %v2455 = vrot.slane %v2454, 1
        %v2456 = vadd.f32 %v2454, %v2455
        %v2457 = vadd.f32 %v2121, %v2139
        %v2458 = vrot.slane %v2457, 4
        %v2459 = vadd.f32 %v2457, %v2458
        %v2460 = vrot.slane %v2459, 2
        %v2461 = vadd.f32 %v2459, %v2460
        %v2462 = vrot.slane %v2461, 1
        %v2463 = vadd.f32 %v2461, %v2462
        %v2464 = vadd.f32 %v2122, %v2140
        %v2465 = vrot.slane %v2464, 4
        %v2466 = vadd.f32 %v2464, %v2465
        %v2467 = vrot.slane %v2466, 2
        %v2468 = vadd.f32 %v2466, %v2467
        %v2469 = vrot.slane %v2468, 1
        %v2470 = vadd.f32 %v2468, %v2469
        %v2471 = vadd.f32 %v2123, %v2141
        %v2472 = vrot.slane %v2471, 4
        %v2473 = vadd.f32 %v2471, %v2472
        %v2474 = vrot.slane %v2473, 2
        %v2475 = vadd.f32 %v2473, %v2474
        %v2476 = vrot.slane %v2475, 1
        %v2477 = vadd.f32 %v2475, %v2476
        %v2478 = vadd.f32 %v2124, %v2142
        %v2479 = vrot.slane %v2478, 4
        %v2480 = vadd.f32 %v2478, %v2479
        %v2481 = vrot.slane %v2480, 2
        %v2482 = vadd.f32 %v2480, %v2481
        %v2483 = vrot.slane %v2482, 1
        %v2484 = vadd.f32 %v2482, %v2483
        %v2485 = vadd.f32 %v2125, %v2143
        %v2486 = vrot.slane %v2485, 4
        %v2487 = vadd.f32 %v2485, %v2486
        %v2488 = vrot.slane %v2487, 2
        %v2489 = vadd.f32 %v2487, %v2488
        %v2490 = vrot.slane %v2489, 1
        %v2491 = vadd.f32 %v2489, %v2490
        %v2492 = vadd.f32 %v2126, %v2144
        %v2493 = vrot.slane %v2492, 4
        %v2494 = vadd.f32 %v2492, %v2493
        %v2495 = vrot.slane %v2494, 2
        %v2496 = vadd.f32 %v2494, %v2495
        %v2497 = vrot.slane %v2496, 1
        %v2498 = vadd.f32 %v2496, %v2497
        %v2499 = vadd.f32 %v2127, %v2145
        %v2500 = vrot.slane %v2499, 4
        %v2501 = vadd.f32 %v2499, %v2500
        %v2502 = vrot.slane %v2501, 2
        %v2503 = vadd.f32 %v2501, %v2502
        %v2504 = vrot.slane %v2503, 1
        %v2505 = vadd.f32 %v2503, %v2504
        %v2506 = vadd.f32 %v2128, %v2146
        %v2507 = vrot.slane %v2506, 4
        %v2508 = vadd.f32 %v2506, %v2507
        %v2509 = vrot.slane %v2508, 2
        %v2510 = vadd.f32 %v2508, %v2509
        %v2511 = vrot.slane %v2510, 1
        %v2512 = vadd.f32 %v2510, %v2511
        %v2513 = vadd.f32 %v2129, %v2147
        %v2514 = vrot.slane %v2513, 4
        %v2515 = vadd.f32 %v2513, %v2514
        %v2516 = vrot.slane %v2515, 2
        %v2517 = vadd.f32 %v2515, %v2516
        %v2518 = vrot.slane %v2517, 1
        %v2519 = vadd.f32 %v2517, %v2518
        %v2520 = vadd.f32 %v2130, %v2148
        %v2521 = vrot.slane %v2520, 4
        %v2522 = vadd.f32 %v2520, %v2521
        %v2523 = vrot.slane %v2522, 2
        %v2524 = vadd.f32 %v2522, %v2523
        %v2525 = vrot.slane %v2524, 1
        %v2526 = vadd.f32 %v2524, %v2525
        %v2527 = vadd.f32 %v2149, %v2167
        %v2528 = vrot.slane %v2527, 4
        %v2529 = vadd.f32 %v2527, %v2528
        %v2530 = vrot.slane %v2529, 2
        %v2531 = vadd.f32 %v2529, %v2530
        %v2532 = vrot.slane %v2531, 1
        %v2533 = vadd.f32 %v2531, %v2532
        %v2534 = vadd.f32 %v2150, %v2168
        %v2535 = vrot.slane %v2534, 4
        %v2536 = vadd.f32 %v2534, %v2535
        %v2537 = vrot.slane %v2536, 2
        %v2538 = vadd.f32 %v2536, %v2537
        %v2539 = vrot.slane %v2538, 1
        %v2540 = vadd.f32 %v2538, %v2539
        %v2541 = vadd.f32 %v2151, %v2169
        %v2542 = vrot.slane %v2541, 4
        %v2543 = vadd.f32 %v2541, %v2542
        %v2544 = vrot.slane %v2543, 2
        %v2545 = vadd.f32 %v2543, %v2544
        %v2546 = vrot.slane %v2545, 1
        %v2547 = vadd.f32 %v2545, %v2546
        %v2548 = vadd.f32 %v2152, %v2170
        %v2549 = vrot.slane %v2548, 4
        %v2550 = vadd.f32 %v2548, %v2549
        %v2551 = vrot.slane %v2550, 2
        %v2552 = vadd.f32 %v2550, %v2551
        %v2553 = vrot.slane %v2552, 1
        %v2554 = vadd.f32 %v2552, %v2553
        %v2555 = vadd.f32 %v2153, %v2171
        %v2556 = vrot.slane %v2555, 4
        %v2557 = vadd.f32 %v2555, %v2556
        %v2558 = vrot.slane %v2557, 2
        %v2559 = vadd.f32 %v2557, %v2558
        %v2560 = vrot.slane %v2559, 1
        %v2561 = vadd.f32 %v2559, %v2560
        %v2562 = vadd.f32 %v2154, %v2172
        %v2563 = vrot.slane %v2562, 4
        %v2564 = vadd.f32 %v2562, %v2563
        %v2565 = vrot.slane %v2564, 2
        %v2566 = vadd.f32 %v2564, %v2565
        %v2567 = vrot.slane %v2566, 1
        %v2568 = vadd.f32 %v2566, %v2567
        %v2569 = vadd.f32 %v2155, %v2173
        %v2570 = vrot.slane %v2569, 4
        %v2571 = vadd.f32 %v2569, %v2570
        %v2572 = vrot.slane %v2571, 2
        %v2573 = vadd.f32 %v2571, %v2572
        %v2574 = vrot.slane %v2573, 1
        %v2575 = vadd.f32 %v2573, %v2574
        %v2576 = vadd.f32 %v2156, %v2174
        %v2577 = vrot.slane %v2576, 4
        %v2578 = vadd.f32 %v2576, %v2577
        %v2579 = vrot.slane %v2578, 2
        %v2580 = vadd.f32 %v2578, %v2579
        %v2581 = vrot.slane %v2580, 1
        %v2582 = vadd.f32 %v2580, %v2581
        %v2583 = vadd.f32 %v2157, %v2175
        %v2584 = vrot.slane %v2583, 4
        %v2585 = vadd.f32 %v2583, %v2584
        %v2586 = vrot.slane %v2585, 2
        %v2587 = vadd.f32 %v2585, %v2586
        %v2588 = vrot.slane %v2587, 1
        %v2589 = vadd.f32 %v2587, %v2588
        %v2590 = vadd.f32 %v2158, %v2176
        %v2591 = vrot.slane %v2590, 4
        %v2592 = vadd.f32 %v2590, %v2591
        %v2593 = vrot.slane %v2592, 2
        %v2594 = vadd.f32 %v2592, %v2593
        %v2595 = vrot.slane %v2594, 1
        %v2596 = vadd.f32 %v2594, %v2595
        %v2597 = vadd.f32 %v2159, %v2177
        %v2598 = vrot.slane %v2597, 4
        %v2599 = vadd.f32 %v2597, %v2598
        %v2600 = vrot.slane %v2599, 2
        %v2601 = vadd.f32 %v2599, %v2600
        %v2602 = vrot.slane %v2601, 1
        %v2603 = vadd.f32 %v2601, %v2602
        %v2604 = vadd.f32 %v2160, %v2178
        %v2605 = vrot.slane %v2604, 4
        %v2606 = vadd.f32 %v2604, %v2605
        %v2607 = vrot.slane %v2606, 2
        %v2608 = vadd.f32 %v2606, %v2607
        %v2609 = vrot.slane %v2608, 1
        %v2610 = vadd.f32 %v2608, %v2609
        %v2611 = vadd.f32 %v2161, %v2179
        %v2612 = vrot.slane %v2611, 4
        %v2613 = vadd.f32 %v2611, %v2612
        %v2614 = vrot.slane %v2613, 2
        %v2615 = vadd.f32 %v2613, %v2614
        %v2616 = vrot.slane %v2615, 1
        %v2617 = vadd.f32 %v2615, %v2616
        %v2618 = vadd.f32 %v2162, %v2180
        %v2619 = vrot.slane %v2618, 4
        %v2620 = vadd.f32 %v2618, %v2619
        %v2621 = vrot.slane %v2620, 2
        %v2622 = vadd.f32 %v2620, %v2621
        %v2623 = vrot.slane %v2622, 1
        %v2624 = vadd.f32 %v2622, %v2623
        %v2625 = vadd.f32 %v2163, %v2181
        %v2626 = vrot.slane %v2625, 4
        %v2627 = vadd.f32 %v2625, %v2626
        %v2628 = vrot.slane %v2627, 2
        %v2629 = vadd.f32 %v2627, %v2628
        %v2630 = vrot.slane %v2629, 1
        %v2631 = vadd.f32 %v2629, %v2630
        %v2632 = vadd.f32 %v2164, %v2182
        %v2633 = vrot.slane %v2632, 4
        %v2634 = vadd.f32 %v2632, %v2633
        %v2635 = vrot.slane %v2634, 2
        %v2636 = vadd.f32 %v2634, %v2635
        %v2637 = vrot.slane %v2636, 1
        %v2638 = vadd.f32 %v2636, %v2637
        %v2639 = vadd.f32 %v2165, %v2183
        %v2640 = vrot.slane %v2639, 4
        %v2641 = vadd.f32 %v2639, %v2640
        %v2642 = vrot.slane %v2641, 2
        %v2643 = vadd.f32 %v2641, %v2642
        %v2644 = vrot.slane %v2643, 1
        %v2645 = vadd.f32 %v2643, %v2644
        %v2646 = vadd.f32 %v2166, %v2184
        %v2647 = vrot.slane %v2646, 4
        %v2648 = vadd.f32 %v2646, %v2647
        %v2649 = vrot.slane %v2648, 2
        %v2650 = vadd.f32 %v2648, %v2649
        %v2651 = vrot.slane %v2650, 1
        %v2652 = vadd.f32 %v2650, %v2651
        %v2653 = vadd.f32 %v2185, %v2203
        %v2654 = vrot.slane %v2653, 4
        %v2655 = vadd.f32 %v2653, %v2654
        %v2656 = vrot.slane %v2655, 2
        %v2657 = vadd.f32 %v2655, %v2656
        %v2658 = vrot.slane %v2657, 1
        %v2659 = vadd.f32 %v2657, %v2658
        %v2660 = vadd.f32 %v2186, %v2204
        %v2661 = vrot.slane %v2660, 4
        %v2662 = vadd.f32 %v2660, %v2661
        %v2663 = vrot.slane %v2662, 2
        %v2664 = vadd.f32 %v2662, %v2663
        %v2665 = vrot.slane %v2664, 1
        %v2666 = vadd.f32 %v2664, %v2665
        %v2667 = vadd.f32 %v2187, %v2205
        %v2668 = vrot.slane %v2667, 4
        %v2669 = vadd.f32 %v2667, %v2668
        %v2670 = vrot.slane %v2669, 2
        %v2671 = vadd.f32 %v2669, %v2670
        %v2672 = vrot.slane %v2671, 1
        %v2673 = vadd.f32 %v2671, %v2672
        %v2674 = vadd.f32 %v2188, %v2206
        %v2675 = vrot.slane %v2674, 4
        %v2676 = vadd.f32 %v2674, %v2675
        %v2677 = vrot.slane %v2676, 2
        %v2678 = vadd.f32 %v2676, %v2677
        %v2679 = vrot.slane %v2678, 1
        %v2680 = vadd.f32 %v2678, %v2679
        %v2681 = vadd.f32 %v2189, %v2207
        %v2682 = vrot.slane %v2681, 4
        %v2683 = vadd.f32 %v2681, %v2682
        %v2684 = vrot.slane %v2683, 2
        %v2685 = vadd.f32 %v2683, %v2684
        %v2686 = vrot.slane %v2685, 1
        %v2687 = vadd.f32 %v2685, %v2686
        %v2688 = vadd.f32 %v2190, %v2208
        %v2689 = vrot.slane %v2688, 4
        %v2690 = vadd.f32 %v2688, %v2689
        %v2691 = vrot.slane %v2690, 2
        %v2692 = vadd.f32 %v2690, %v2691
        %v2693 = vrot.slane %v2692, 1
        %v2694 = vadd.f32 %v2692, %v2693
        %v2695 = vadd.f32 %v2191, %v2209
        %v2696 = vrot.slane %v2695, 4
        %v2697 = vadd.f32 %v2695, %v2696
        %v2698 = vrot.slane %v2697, 2
        %v2699 = vadd.f32 %v2697, %v2698
        %v2700 = vrot.slane %v2699, 1
        %v2701 = vadd.f32 %v2699, %v2700
        %v2702 = vadd.f32 %v2192, %v2210
        %v2703 = vrot.slane %v2702, 4
        %v2704 = vadd.f32 %v2702, %v2703
        %v2705 = vrot.slane %v2704, 2
        %v2706 = vadd.f32 %v2704, %v2705
        %v2707 = vrot.slane %v2706, 1
        %v2708 = vadd.f32 %v2706, %v2707
        %v2709 = vadd.f32 %v2193, %v2211
        %v2710 = vrot.slane %v2709, 4
        %v2711 = vadd.f32 %v2709, %v2710
        %v2712 = vrot.slane %v2711, 2
        %v2713 = vadd.f32 %v2711, %v2712
        %v2714 = vrot.slane %v2713, 1
        %v2715 = vadd.f32 %v2713, %v2714
        %v2716 = vadd.f32 %v2194, %v2212
        %v2717 = vrot.slane %v2716, 4
        %v2718 = vadd.f32 %v2716, %v2717
        %v2719 = vrot.slane %v2718, 2
        %v2720 = vadd.f32 %v2718, %v2719
        %v2721 = vrot.slane %v2720, 1
        %v2722 = vadd.f32 %v2720, %v2721
        %v2723 = vadd.f32 %v2195, %v2213
        %v2724 = vrot.slane %v2723, 4
        %v2725 = vadd.f32 %v2723, %v2724
        %v2726 = vrot.slane %v2725, 2
        %v2727 = vadd.f32 %v2725, %v2726
        %v2728 = vrot.slane %v2727, 1
        %v2729 = vadd.f32 %v2727, %v2728
        %v2730 = vadd.f32 %v2196, %v2214
        %v2731 = vrot.slane %v2730, 4
        %v2732 = vadd.f32 %v2730, %v2731
        %v2733 = vrot.slane %v2732, 2
        %v2734 = vadd.f32 %v2732, %v2733
        %v2735 = vrot.slane %v2734, 1
        %v2736 = vadd.f32 %v2734, %v2735
        %v2737 = vadd.f32 %v2197, %v2215
        %v2738 = vrot.slane %v2737, 4
        %v2739 = vadd.f32 %v2737, %v2738
        %v2740 = vrot.slane %v2739, 2
        %v2741 = vadd.f32 %v2739, %v2740
        %v2742 = vrot.slane %v2741, 1
        %v2743 = vadd.f32 %v2741, %v2742
        %v2744 = vadd.f32 %v2198, %v2216
        %v2745 = vrot.slane %v2744, 4
        %v2746 = vadd.f32 %v2744, %v2745
        %v2747 = vrot.slane %v2746, 2
        %v2748 = vadd.f32 %v2746, %v2747
        %v2749 = vrot.slane %v2748, 1
        %v2750 = vadd.f32 %v2748, %v2749
        %v2751 = vadd.f32 %v2199, %v2217
        %v2752 = vrot.slane %v2751, 4
        %v2753 = vadd.f32 %v2751, %v2752
        %v2754 = vrot.slane %v2753, 2
        %v2755 = vadd.f32 %v2753, %v2754
        %v2756 = vrot.slane %v2755, 1
        %v2757 = vadd.f32 %v2755, %v2756
        %v2758 = vadd.f32 %v2200, %v2218
        %v2759 = vrot.slane %v2758, 4
        %v2760 = vadd.f32 %v2758, %v2759
        %v2761 = vrot.slane %v2760, 2
        %v2762 = vadd.f32 %v2760, %v2761
        %v2763 = vrot.slane %v2762, 1
        %v2764 = vadd.f32 %v2762, %v2763
        %v2765 = vadd.f32 %v2201, %v2219
        %v2766 = vrot.slane %v2765, 4
        %v2767 = vadd.f32 %v2765, %v2766
        %v2768 = vrot.slane %v2767, 2
        %v2769 = vadd.f32 %v2767, %v2768
        %v2770 = vrot.slane %v2769, 1
        %v2771 = vadd.f32 %v2769, %v2770
        %v2772 = vadd.f32 %v2202, %v2220
        %v2773 = vrot.slane %v2772, 4
        %v2774 = vadd.f32 %v2772, %v2773
        %v2775 = vrot.slane %v2774, 2
        %v2776 = vadd.f32 %v2774, %v2775
        %v2777 = vrot.slane %v2776, 1
        %v2778 = vadd.f32 %v2776, %v2777
        %v2779 = vadd.f32 %v2221, %v2239
        %v2780 = vrot.slane %v2779, 4
        %v2781 = vadd.f32 %v2779, %v2780
        %v2782 = vrot.slane %v2781, 2
        %v2783 = vadd.f32 %v2781, %v2782
        %v2784 = vrot.slane %v2783, 1
        %v2785 = vadd.f32 %v2783, %v2784
        %v2786 = vadd.f32 %v2222, %v2240
        %v2787 = vrot.slane %v2786, 4
        %v2788 = vadd.f32 %v2786, %v2787
        %v2789 = vrot.slane %v2788, 2
        %v2790 = vadd.f32 %v2788, %v2789
        %v2791 = vrot.slane %v2790, 1
        %v2792 = vadd.f32 %v2790, %v2791
        %v2793 = vadd.f32 %v2223, %v2241
        %v2794 = vrot.slane %v2793, 4
        %v2795 = vadd.f32 %v2793, %v2794
        %v2796 = vrot.slane %v2795, 2
        %v2797 = vadd.f32 %v2795, %v2796
        %v2798 = vrot.slane %v2797, 1
        %v2799 = vadd.f32 %v2797, %v2798
        %v2800 = vadd.f32 %v2224, %v2242
        %v2801 = vrot.slane %v2800, 4
        %v2802 = vadd.f32 %v2800, %v2801
        %v2803 = vrot.slane %v2802, 2
        %v2804 = vadd.f32 %v2802, %v2803
        %v2805 = vrot.slane %v2804, 1
        %v2806 = vadd.f32 %v2804, %v2805
        %v2807 = vadd.f32 %v2225, %v2243
        %v2808 = vrot.slane %v2807, 4
        %v2809 = vadd.f32 %v2807, %v2808
        %v2810 = vrot.slane %v2809, 2
        %v2811 = vadd.f32 %v2809, %v2810
        %v2812 = vrot.slane %v2811, 1
        %v2813 = vadd.f32 %v2811, %v2812
        %v2814 = vadd.f32 %v2226, %v2244
        %v2815 = vrot.slane %v2814, 4
        %v2816 = vadd.f32 %v2814, %v2815
        %v2817 = vrot.slane %v2816, 2
        %v2818 = vadd.f32 %v2816, %v2817
        %v2819 = vrot.slane %v2818, 1
        %v2820 = vadd.f32 %v2818, %v2819
        %v2821 = vadd.f32 %v2227, %v2245
        %v2822 = vrot.slane %v2821, 4
        %v2823 = vadd.f32 %v2821, %v2822
        %v2824 = vrot.slane %v2823, 2
        %v2825 = vadd.f32 %v2823, %v2824
        %v2826 = vrot.slane %v2825, 1
        %v2827 = vadd.f32 %v2825, %v2826
        %v2828 = vadd.f32 %v2228, %v2246
        %v2829 = vrot.slane %v2828, 4
        %v2830 = vadd.f32 %v2828, %v2829
        %v2831 = vrot.slane %v2830, 2
        %v2832 = vadd.f32 %v2830, %v2831
        %v2833 = vrot.slane %v2832, 1
        %v2834 = vadd.f32 %v2832, %v2833
        %v2835 = vadd.f32 %v2229, %v2247
        %v2836 = vrot.slane %v2835, 4
        %v2837 = vadd.f32 %v2835, %v2836
        %v2838 = vrot.slane %v2837, 2
        %v2839 = vadd.f32 %v2837, %v2838
        %v2840 = vrot.slane %v2839, 1
        %v2841 = vadd.f32 %v2839, %v2840
        %v2842 = vadd.f32 %v2230, %v2248
        %v2843 = vrot.slane %v2842, 4
        %v2844 = vadd.f32 %v2842, %v2843
        %v2845 = vrot.slane %v2844, 2
        %v2846 = vadd.f32 %v2844, %v2845
        %v2847 = vrot.slane %v2846, 1
        %v2848 = vadd.f32 %v2846, %v2847
        %v2849 = vadd.f32 %v2231, %v2249
        %v2850 = vrot.slane %v2849, 4
        %v2851 = vadd.f32 %v2849, %v2850
        %v2852 = vrot.slane %v2851, 2
        %v2853 = vadd.f32 %v2851, %v2852
        %v2854 = vrot.slane %v2853, 1
        %v2855 = vadd.f32 %v2853, %v2854
        %v2856 = vadd.f32 %v2232, %v2250
        %v2857 = vrot.slane %v2856, 4
        %v2858 = vadd.f32 %v2856, %v2857
        %v2859 = vrot.slane %v2858, 2
        %v2860 = vadd.f32 %v2858, %v2859
        %v2861 = vrot.slane %v2860, 1
        %v2862 = vadd.f32 %v2860, %v2861
        %v2863 = vadd.f32 %v2233, %v2251
        %v2864 = vrot.slane %v2863, 4
        %v2865 = vadd.f32 %v2863, %v2864
        %v2866 = vrot.slane %v2865, 2
        %v2867 = vadd.f32 %v2865, %v2866
        %v2868 = vrot.slane %v2867, 1
        %v2869 = vadd.f32 %v2867, %v2868
        %v2870 = vadd.f32 %v2234, %v2252
        %v2871 = vrot.slane %v2870, 4
        %v2872 = vadd.f32 %v2870, %v2871
        %v2873 = vrot.slane %v2872, 2
        %v2874 = vadd.f32 %v2872, %v2873
        %v2875 = vrot.slane %v2874, 1
        %v2876 = vadd.f32 %v2874, %v2875
        %v2877 = vadd.f32 %v2235, %v2253
        %v2878 = vrot.slane %v2877, 4
        %v2879 = vadd.f32 %v2877, %v2878
        %v2880 = vrot.slane %v2879, 2
        %v2881 = vadd.f32 %v2879, %v2880
        %v2882 = vrot.slane %v2881, 1
        %v2883 = vadd.f32 %v2881, %v2882
        %v2884 = vadd.f32 %v2236, %v2254
        %v2885 = vrot.slane %v2884, 4
        %v2886 = vadd.f32 %v2884, %v2885
        %v2887 = vrot.slane %v2886, 2
        %v2888 = vadd.f32 %v2886, %v2887
        %v2889 = vrot.slane %v2888, 1
        %v2890 = vadd.f32 %v2888, %v2889
        %v2891 = vadd.f32 %v2237, %v2255
        %v2892 = vrot.slane %v2891, 4
        %v2893 = vadd.f32 %v2891, %v2892
        %v2894 = vrot.slane %v2893, 2
        %v2895 = vadd.f32 %v2893, %v2894
        %v2896 = vrot.slane %v2895, 1
        %v2897 = vadd.f32 %v2895, %v2896
        %v2898 = vadd.f32 %v2238, %v2256
        %v2899 = vrot.slane %v2898, 4
        %v2900 = vadd.f32 %v2898, %v2899
        %v2901 = vrot.slane %v2900, 2
        %v2902 = vadd.f32 %v2900, %v2901
        %v2903 = vrot.slane %v2902, 1
        %v2904 = vadd.f32 %v2902, %v2903
        %v2905 = vadd.f32 %v2257, %v2275
        %v2906 = vrot.slane %v2905, 4
        %v2907 = vadd.f32 %v2905, %v2906
        %v2908 = vrot.slane %v2907, 2
        %v2909 = vadd.f32 %v2907, %v2908
        %v2910 = vrot.slane %v2909, 1
        %v2911 = vadd.f32 %v2909, %v2910
        %v2912 = vadd.f32 %v2258, %v2276
        %v2913 = vrot.slane %v2912, 4
        %v2914 = vadd.f32 %v2912, %v2913
        %v2915 = vrot.slane %v2914, 2
        %v2916 = vadd.f32 %v2914, %v2915
        %v2917 = vrot.slane %v2916, 1
        %v2918 = vadd.f32 %v2916, %v2917
        %v2919 = vadd.f32 %v2259, %v2277
        %v2920 = vrot.slane %v2919, 4
        %v2921 = vadd.f32 %v2919, %v2920
        %v2922 = vrot.slane %v2921, 2
        %v2923 = vadd.f32 %v2921, %v2922
        %v2924 = vrot.slane %v2923, 1
        %v2925 = vadd.f32 %v2923, %v2924
        %v2926 = vadd.f32 %v2260, %v2278
        %v2927 = vrot.slane %v2926, 4
        %v2928 = vadd.f32 %v2926, %v2927
        %v2929 = vrot.slane %v2928, 2
        %v2930 = vadd.f32 %v2928, %v2929
        %v2931 = vrot.slane %v2930, 1
        %v2932 = vadd.f32 %v2930, %v2931
        %v2933 = vadd.f32 %v2261, %v2279
        %v2934 = vrot.slane %v2933, 4
        %v2935 = vadd.f32 %v2933, %v2934
        %v2936 = vrot.slane %v2935, 2
        %v2937 = vadd.f32 %v2935, %v2936
        %v2938 = vrot.slane %v2937, 1
        %v2939 = vadd.f32 %v2937, %v2938
        %v2940 = vadd.f32 %v2262, %v2280
        %v2941 = vrot.slane %v2940, 4
        %v2942 = vadd.f32 %v2940, %v2941
        %v2943 = vrot.slane %v2942, 2
        %v2944 = vadd.f32 %v2942, %v2943
        %v2945 = vrot.slane %v2944, 1
        %v2946 = vadd.f32 %v2944, %v2945
        %v2947 = vadd.f32 %v2263, %v2281
        %v2948 = vrot.slane %v2947, 4
        %v2949 = vadd.f32 %v2947, %v2948
        %v2950 = vrot.slane %v2949, 2
        %v2951 = vadd.f32 %v2949, %v2950
        %v2952 = vrot.slane %v2951, 1
        %v2953 = vadd.f32 %v2951, %v2952
        %v2954 = vadd.f32 %v2264, %v2282
        %v2955 = vrot.slane %v2954, 4
        %v2956 = vadd.f32 %v2954, %v2955
        %v2957 = vrot.slane %v2956, 2
        %v2958 = vadd.f32 %v2956, %v2957
        %v2959 = vrot.slane %v2958, 1
        %v2960 = vadd.f32 %v2958, %v2959
        %v2961 = vadd.f32 %v2265, %v2283
        %v2962 = vrot.slane %v2961, 4
        %v2963 = vadd.f32 %v2961, %v2962
        %v2964 = vrot.slane %v2963, 2
        %v2965 = vadd.f32 %v2963, %v2964
        %v2966 = vrot.slane %v2965, 1
        %v2967 = vadd.f32 %v2965, %v2966
        %v2968 = vadd.f32 %v2266, %v2284
        %v2969 = vrot.slane %v2968, 4
        %v2970 = vadd.f32 %v2968, %v2969
        %v2971 = vrot.slane %v2970, 2
        %v2972 = vadd.f32 %v2970, %v2971
        %v2973 = vrot.slane %v2972, 1
        %v2974 = vadd.f32 %v2972, %v2973
        %v2975 = vadd.f32 %v2267, %v2285
        %v2976 = vrot.slane %v2975, 4
        %v2977 = vadd.f32 %v2975, %v2976
        %v2978 = vrot.slane %v2977, 2
        %v2979 = vadd.f32 %v2977, %v2978
        %v2980 = vrot.slane %v2979, 1
        %v2981 = vadd.f32 %v2979, %v2980
        %v2982 = vadd.f32 %v2268, %v2286
        %v2983 = vrot.slane %v2982, 4
        %v2984 = vadd.f32 %v2982, %v2983
        %v2985 = vrot.slane %v2984, 2
        %v2986 = vadd.f32 %v2984, %v2985
        %v2987 = vrot.slane %v2986, 1
        %v2988 = vadd.f32 %v2986, %v2987
        %v2989 = vadd.f32 %v2269, %v2287
        %v2990 = vrot.slane %v2989, 4
        %v2991 = vadd.f32 %v2989, %v2990
        %v2992 = vrot.slane %v2991, 2
        %v2993 = vadd.f32 %v2991, %v2992
        %v2994 = vrot.slane %v2993, 1
        %v2995 = vadd.f32 %v2993, %v2994
        %v2996 = vadd.f32 %v2270, %v2288
        %v2997 = vrot.slane %v2996, 4
        %v2998 = vadd.f32 %v2996, %v2997
        %v2999 = vrot.slane %v2998, 2
        %v3000 = vadd.f32 %v2998, %v2999
        %v3001 = vrot.slane %v3000, 1
        %v3002 = vadd.f32 %v3000, %v3001
        %v3003 = vadd.f32 %v2271, %v2289
        %v3004 = vrot.slane %v3003, 4
        %v3005 = vadd.f32 %v3003, %v3004
        %v3006 = vrot.slane %v3005, 2
        %v3007 = vadd.f32 %v3005, %v3006
        %v3008 = vrot.slane %v3007, 1
        %v3009 = vadd.f32 %v3007, %v3008
        %v3010 = vadd.f32 %v2272, %v2290
        %v3011 = vrot.slane %v3010, 4
        %v3012 = vadd.f32 %v3010, %v3011
        %v3013 = vrot.slane %v3012, 2
        %v3014 = vadd.f32 %v3012, %v3013
        %v3015 = vrot.slane %v3014, 1
        %v3016 = vadd.f32 %v3014, %v3015
        %v3017 = vadd.f32 %v2273, %v2291
        %v3018 = vrot.slane %v3017, 4
        %v3019 = vadd.f32 %v3017, %v3018
        %v3020 = vrot.slane %v3019, 2
        %v3021 = vadd.f32 %v3019, %v3020
        %v3022 = vrot.slane %v3021, 1
        %v3023 = vadd.f32 %v3021, %v3022
        %v3024 = vadd.f32 %v2274, %v2292
        %v3025 = vrot.slane %v3024, 4
        %v3026 = vadd.f32 %v3024, %v3025
        %v3027 = vrot.slane %v3026, 2
        %v3028 = vadd.f32 %v3026, %v3027
        %v3029 = vrot.slane %v3028, 1
        %v3030 = vadd.f32 %v3028, %v3029
        %v3031 = vadd.f32 %v2293, %v2311
        %v3032 = vrot.slane %v3031, 4
        %v3033 = vadd.f32 %v3031, %v3032
        %v3034 = vrot.slane %v3033, 2
        %v3035 = vadd.f32 %v3033, %v3034
        %v3036 = vrot.slane %v3035, 1
        %v3037 = vadd.f32 %v3035, %v3036
        %v3038 = vadd.f32 %v2294, %v2312
        %v3039 = vrot.slane %v3038, 4
        %v3040 = vadd.f32 %v3038, %v3039
        %v3041 = vrot.slane %v3040, 2
        %v3042 = vadd.f32 %v3040, %v3041
        %v3043 = vrot.slane %v3042, 1
        %v3044 = vadd.f32 %v3042, %v3043
        %v3045 = vadd.f32 %v2295, %v2313
        %v3046 = vrot.slane %v3045, 4
        %v3047 = vadd.f32 %v3045, %v3046
        %v3048 = vrot.slane %v3047, 2
        %v3049 = vadd.f32 %v3047, %v3048
        %v3050 = vrot.slane %v3049, 1
        %v3051 = vadd.f32 %v3049, %v3050
        %v3052 = vadd.f32 %v2296, %v2314
        %v3053 = vrot.slane %v3052, 4
        %v3054 = vadd.f32 %v3052, %v3053
        %v3055 = vrot.slane %v3054, 2
        %v3056 = vadd.f32 %v3054, %v3055
        %v3057 = vrot.slane %v3056, 1
        %v3058 = vadd.f32 %v3056, %v3057
        %v3059 = vadd.f32 %v2297, %v2315
        %v3060 = vrot.slane %v3059, 4
        %v3061 = vadd.f32 %v3059, %v3060
        %v3062 = vrot.slane %v3061, 2
        %v3063 = vadd.f32 %v3061, %v3062
        %v3064 = vrot.slane %v3063, 1
        %v3065 = vadd.f32 %v3063, %v3064
        %v3066 = vadd.f32 %v2298, %v2316
        %v3067 = vrot.slane %v3066, 4
        %v3068 = vadd.f32 %v3066, %v3067
        %v3069 = vrot.slane %v3068, 2
        %v3070 = vadd.f32 %v3068, %v3069
        %v3071 = vrot.slane %v3070, 1
        %v3072 = vadd.f32 %v3070, %v3071
        %v3073 = vadd.f32 %v2299, %v2317
        %v3074 = vrot.slane %v3073, 4
        %v3075 = vadd.f32 %v3073, %v3074
        %v3076 = vrot.slane %v3075, 2
        %v3077 = vadd.f32 %v3075, %v3076
        %v3078 = vrot.slane %v3077, 1
        %v3079 = vadd.f32 %v3077, %v3078
        %v3080 = vadd.f32 %v2300, %v2318
        %v3081 = vrot.slane %v3080, 4
        %v3082 = vadd.f32 %v3080, %v3081
        %v3083 = vrot.slane %v3082, 2
        %v3084 = vadd.f32 %v3082, %v3083
        %v3085 = vrot.slane %v3084, 1
        %v3086 = vadd.f32 %v3084, %v3085
        %v3087 = vadd.f32 %v2301, %v2319
        %v3088 = vrot.slane %v3087, 4
        %v3089 = vadd.f32 %v3087, %v3088
        %v3090 = vrot.slane %v3089, 2
        %v3091 = vadd.f32 %v3089, %v3090
        %v3092 = vrot.slane %v3091, 1
        %v3093 = vadd.f32 %v3091, %v3092
        %v3094 = vadd.f32 %v2302, %v2320
        %v3095 = vrot.slane %v3094, 4
        %v3096 = vadd.f32 %v3094, %v3095
        %v3097 = vrot.slane %v3096, 2
        %v3098 = vadd.f32 %v3096, %v3097
        %v3099 = vrot.slane %v3098, 1
        %v3100 = vadd.f32 %v3098, %v3099
        %v3101 = vadd.f32 %v2303, %v2321
        %v3102 = vrot.slane %v3101, 4
        %v3103 = vadd.f32 %v3101, %v3102
        %v3104 = vrot.slane %v3103, 2
        %v3105 = vadd.f32 %v3103, %v3104
        %v3106 = vrot.slane %v3105, 1
        %v3107 = vadd.f32 %v3105, %v3106
        %v3108 = vadd.f32 %v2304, %v2322
        %v3109 = vrot.slane %v3108, 4
        %v3110 = vadd.f32 %v3108, %v3109
        %v3111 = vrot.slane %v3110, 2
        %v3112 = vadd.f32 %v3110, %v3111
        %v3113 = vrot.slane %v3112, 1
        %v3114 = vadd.f32 %v3112, %v3113
        %v3115 = vadd.f32 %v2305, %v2323
        %v3116 = vrot.slane %v3115, 4
        %v3117 = vadd.f32 %v3115, %v3116
        %v3118 = vrot.slane %v3117, 2
        %v3119 = vadd.f32 %v3117, %v3118
        %v3120 = vrot.slane %v3119, 1
        %v3121 = vadd.f32 %v3119, %v3120
        %v3122 = vadd.f32 %v2306, %v2324
        %v3123 = vrot.slane %v3122, 4
        %v3124 = vadd.f32 %v3122, %v3123
        %v3125 = vrot.slane %v3124, 2
        %v3126 = vadd.f32 %v3124, %v3125
        %v3127 = vrot.slane %v3126, 1
        %v3128 = vadd.f32 %v3126, %v3127
        %v3129 = vadd.f32 %v2307, %v2325
        %v3130 = vrot.slane %v3129, 4
        %v3131 = vadd.f32 %v3129, %v3130
        %v3132 = vrot.slane %v3131, 2
        %v3133 = vadd.f32 %v3131, %v3132
        %v3134 = vrot.slane %v3133, 1
        %v3135 = vadd.f32 %v3133, %v3134
        %v3136 = vadd.f32 %v2308, %v2326
        %v3137 = vrot.slane %v3136, 4
        %v3138 = vadd.f32 %v3136, %v3137
        %v3139 = vrot.slane %v3138, 2
        %v3140 = vadd.f32 %v3138, %v3139
        %v3141 = vrot.slane %v3140, 1
        %v3142 = vadd.f32 %v3140, %v3141
        %v3143 = vadd.f32 %v2309, %v2327
        %v3144 = vrot.slane %v3143, 4
        %v3145 = vadd.f32 %v3143, %v3144
        %v3146 = vrot.slane %v3145, 2
        %v3147 = vadd.f32 %v3145, %v3146
        %v3148 = vrot.slane %v3147, 1
        %v3149 = vadd.f32 %v3147, %v3148
        %v3150 = vadd.f32 %v2310, %v2328
        %v3151 = vrot.slane %v3150, 4
        %v3152 = vadd.f32 %v3150, %v3151
        %v3153 = vrot.slane %v3152, 2
        %v3154 = vadd.f32 %v3152, %v3153
        %v3155 = vrot.slane %v3154, 1
        %v3156 = vadd.f32 %v3154, %v3155
        %v3157 = vadd.f32 %v2329, %v2347
        %v3158 = vrot.slane %v3157, 4
        %v3159 = vadd.f32 %v3157, %v3158
        %v3160 = vrot.slane %v3159, 2
        %v3161 = vadd.f32 %v3159, %v3160
        %v3162 = vrot.slane %v3161, 1
        %v3163 = vadd.f32 %v3161, %v3162
        %v3164 = vadd.f32 %v2330, %v2348
        %v3165 = vrot.slane %v3164, 4
        %v3166 = vadd.f32 %v3164, %v3165
        %v3167 = vrot.slane %v3166, 2
        %v3168 = vadd.f32 %v3166, %v3167
        %v3169 = vrot.slane %v3168, 1
        %v3170 = vadd.f32 %v3168, %v3169
        %v3171 = vadd.f32 %v2331, %v2349
        %v3172 = vrot.slane %v3171, 4
        %v3173 = vadd.f32 %v3171, %v3172
        %v3174 = vrot.slane %v3173, 2
        %v3175 = vadd.f32 %v3173, %v3174
        %v3176 = vrot.slane %v3175, 1
        %v3177 = vadd.f32 %v3175, %v3176
        %v3178 = vadd.f32 %v2332, %v2350
        %v3179 = vrot.slane %v3178, 4
        %v3180 = vadd.f32 %v3178, %v3179
        %v3181 = vrot.slane %v3180, 2
        %v3182 = vadd.f32 %v3180, %v3181
        %v3183 = vrot.slane %v3182, 1
        %v3184 = vadd.f32 %v3182, %v3183
        %v3185 = vadd.f32 %v2333, %v2351
        %v3186 = vrot.slane %v3185, 4
        %v3187 = vadd.f32 %v3185, %v3186
        %v3188 = vrot.slane %v3187, 2
        %v3189 = vadd.f32 %v3187, %v3188
        %v3190 = vrot.slane %v3189, 1
        %v3191 = vadd.f32 %v3189, %v3190
        %v3192 = vadd.f32 %v2334, %v2352
        %v3193 = vrot.slane %v3192, 4
        %v3194 = vadd.f32 %v3192, %v3193
        %v3195 = vrot.slane %v3194, 2
        %v3196 = vadd.f32 %v3194, %v3195
        %v3197 = vrot.slane %v3196, 1
        %v3198 = vadd.f32 %v3196, %v3197
        %v3199 = vadd.f32 %v2335, %v2353
        %v3200 = vrot.slane %v3199, 4
        %v3201 = vadd.f32 %v3199, %v3200
        %v3202 = vrot.slane %v3201, 2
        %v3203 = vadd.f32 %v3201, %v3202
        %v3204 = vrot.slane %v3203, 1
        %v3205 = vadd.f32 %v3203, %v3204
        %v3206 = vadd.f32 %v2336, %v2354
        %v3207 = vrot.slane %v3206, 4
        %v3208 = vadd.f32 %v3206, %v3207
        %v3209 = vrot.slane %v3208, 2
        %v3210 = vadd.f32 %v3208, %v3209
        %v3211 = vrot.slane %v3210, 1
        %v3212 = vadd.f32 %v3210, %v3211
        %v3213 = vadd.f32 %v2337, %v2355
        %v3214 = vrot.slane %v3213, 4
        %v3215 = vadd.f32 %v3213, %v3214
        %v3216 = vrot.slane %v3215, 2
        %v3217 = vadd.f32 %v3215, %v3216
        %v3218 = vrot.slane %v3217, 1
        %v3219 = vadd.f32 %v3217, %v3218
        %v3220 = vadd.f32 %v2338, %v2356
        %v3221 = vrot.slane %v3220, 4
        %v3222 = vadd.f32 %v3220, %v3221
        %v3223 = vrot.slane %v3222, 2
        %v3224 = vadd.f32 %v3222, %v3223
        %v3225 = vrot.slane %v3224, 1
        %v3226 = vadd.f32 %v3224, %v3225
        %v3227 = vadd.f32 %v2339, %v2357
        %v3228 = vrot.slane %v3227, 4
        %v3229 = vadd.f32 %v3227, %v3228
        %v3230 = vrot.slane %v3229, 2
        %v3231 = vadd.f32 %v3229, %v3230
        %v3232 = vrot.slane %v3231, 1
        %v3233 = vadd.f32 %v3231, %v3232
        %v3234 = vadd.f32 %v2340, %v2358
        %v3235 = vrot.slane %v3234, 4
        %v3236 = vadd.f32 %v3234, %v3235
        %v3237 = vrot.slane %v3236, 2
        %v3238 = vadd.f32 %v3236, %v3237
        %v3239 = vrot.slane %v3238, 1
        %v3240 = vadd.f32 %v3238, %v3239
        %v3241 = vadd.f32 %v2341, %v2359
        %v3242 = vrot.slane %v3241, 4
        %v3243 = vadd.f32 %v3241, %v3242
        %v3244 = vrot.slane %v3243, 2
        %v3245 = vadd.f32 %v3243, %v3244
        %v3246 = vrot.slane %v3245, 1
        %v3247 = vadd.f32 %v3245, %v3246
        %v3248 = vadd.f32 %v2342, %v2360
        %v3249 = vrot.slane %v3248, 4
        %v3250 = vadd.f32 %v3248, %v3249
        %v3251 = vrot.slane %v3250, 2
        %v3252 = vadd.f32 %v3250, %v3251
        %v3253 = vrot.slane %v3252, 1
        %v3254 = vadd.f32 %v3252, %v3253
        %v3255 = vadd.f32 %v2343, %v2361
        %v3256 = vrot.slane %v3255, 4
        %v3257 = vadd.f32 %v3255, %v3256
        %v3258 = vrot.slane %v3257, 2
        %v3259 = vadd.f32 %v3257, %v3258
        %v3260 = vrot.slane %v3259, 1
        %v3261 = vadd.f32 %v3259, %v3260
        %v3262 = vadd.f32 %v2344, %v2362
        %v3263 = vrot.slane %v3262, 4
        %v3264 = vadd.f32 %v3262, %v3263
        %v3265 = vrot.slane %v3264, 2
        %v3266 = vadd.f32 %v3264, %v3265
        %v3267 = vrot.slane %v3266, 1
        %v3268 = vadd.f32 %v3266, %v3267
        %v3269 = vadd.f32 %v2345, %v2363
        %v3270 = vrot.slane %v3269, 4
        %v3271 = vadd.f32 %v3269, %v3270
        %v3272 = vrot.slane %v3271, 2
        %v3273 = vadd.f32 %v3271, %v3272
        %v3274 = vrot.slane %v3273, 1
        %v3275 = vadd.f32 %v3273, %v3274
        %v3276 = vadd.f32 %v2346, %v2364
        %v3277 = vrot.slane %v3276, 4
        %v3278 = vadd.f32 %v3276, %v3277
        %v3279 = vrot.slane %v3278, 2
        %v3280 = vadd.f32 %v3278, %v3279
        %v3281 = vrot.slane %v3280, 1
        %v3282 = vadd.f32 %v3280, %v3281
        %v3283 = vadd.f32 %v2365, %v2383
        %v3284 = vrot.slane %v3283, 4
        %v3285 = vadd.f32 %v3283, %v3284
        %v3286 = vrot.slane %v3285, 2
        %v3287 = vadd.f32 %v3285, %v3286
        %v3288 = vrot.slane %v3287, 1
        %v3289 = vadd.f32 %v3287, %v3288
        %v3290 = vadd.f32 %v2366, %v2384
        %v3291 = vrot.slane %v3290, 4
        %v3292 = vadd.f32 %v3290, %v3291
        %v3293 = vrot.slane %v3292, 2
        %v3294 = vadd.f32 %v3292, %v3293
        %v3295 = vrot.slane %v3294, 1
        %v3296 = vadd.f32 %v3294, %v3295
        %v3297 = vadd.f32 %v2367, %v2385
        %v3298 = vrot.slane %v3297, 4
        %v3299 = vadd.f32 %v3297, %v3298
        %v3300 = vrot.slane %v3299, 2
        %v3301 = vadd.f32 %v3299, %v3300
        %v3302 = vrot.slane %v3301, 1
        %v3303 = vadd.f32 %v3301, %v3302
        %v3304 = vadd.f32 %v2368, %v2386
        %v3305 = vrot.slane %v3304, 4
        %v3306 = vadd.f32 %v3304, %v3305
        %v3307 = vrot.slane %v3306, 2
        %v3308 = vadd.f32 %v3306, %v3307
        %v3309 = vrot.slane %v3308, 1
        %v3310 = vadd.f32 %v3308, %v3309
        %v3311 = vadd.f32 %v2369, %v2387
        %v3312 = vrot.slane %v3311, 4
        %v3313 = vadd.f32 %v3311, %v3312
        %v3314 = vrot.slane %v3313, 2
        %v3315 = vadd.f32 %v3313, %v3314
        %v3316 = vrot.slane %v3315, 1
        %v3317 = vadd.f32 %v3315, %v3316
        %v3318 = vadd.f32 %v2370, %v2388
        %v3319 = vrot.slane %v3318, 4
        %v3320 = vadd.f32 %v3318, %v3319
        %v3321 = vrot.slane %v3320, 2
        %v3322 = vadd.f32 %v3320, %v3321
        %v3323 = vrot.slane %v3322, 1
        %v3324 = vadd.f32 %v3322, %v3323
        %v3325 = vadd.f32 %v2371, %v2389
        %v3326 = vrot.slane %v3325, 4
        %v3327 = vadd.f32 %v3325, %v3326
        %v3328 = vrot.slane %v3327, 2
        %v3329 = vadd.f32 %v3327, %v3328
        %v3330 = vrot.slane %v3329, 1
        %v3331 = vadd.f32 %v3329, %v3330
        %v3332 = vadd.f32 %v2372, %v2390
        %v3333 = vrot.slane %v3332, 4
        %v3334 = vadd.f32 %v3332, %v3333
        %v3335 = vrot.slane %v3334, 2
        %v3336 = vadd.f32 %v3334, %v3335
        %v3337 = vrot.slane %v3336, 1
        %v3338 = vadd.f32 %v3336, %v3337
        %v3339 = vadd.f32 %v2373, %v2391
        %v3340 = vrot.slane %v3339, 4
        %v3341 = vadd.f32 %v3339, %v3340
        %v3342 = vrot.slane %v3341, 2
        %v3343 = vadd.f32 %v3341, %v3342
        %v3344 = vrot.slane %v3343, 1
        %v3345 = vadd.f32 %v3343, %v3344
        %v3346 = vadd.f32 %v2374, %v2392
        %v3347 = vrot.slane %v3346, 4
        %v3348 = vadd.f32 %v3346, %v3347
        %v3349 = vrot.slane %v3348, 2
        %v3350 = vadd.f32 %v3348, %v3349
        %v3351 = vrot.slane %v3350, 1
        %v3352 = vadd.f32 %v3350, %v3351
        %v3353 = vadd.f32 %v2375, %v2393
        %v3354 = vrot.slane %v3353, 4
        %v3355 = vadd.f32 %v3353, %v3354
        %v3356 = vrot.slane %v3355, 2
        %v3357 = vadd.f32 %v3355, %v3356
        %v3358 = vrot.slane %v3357, 1
        %v3359 = vadd.f32 %v3357, %v3358
        %v3360 = vadd.f32 %v2376, %v2394
        %v3361 = vrot.slane %v3360, 4
        %v3362 = vadd.f32 %v3360, %v3361
        %v3363 = vrot.slane %v3362, 2
        %v3364 = vadd.f32 %v3362, %v3363
        %v3365 = vrot.slane %v3364, 1
        %v3366 = vadd.f32 %v3364, %v3365
        %v3367 = vadd.f32 %v2377, %v2395
        %v3368 = vrot.slane %v3367, 4
        %v3369 = vadd.f32 %v3367, %v3368
        %v3370 = vrot.slane %v3369, 2
        %v3371 = vadd.f32 %v3369, %v3370
        %v3372 = vrot.slane %v3371, 1
        %v3373 = vadd.f32 %v3371, %v3372
        %v3374 = vadd.f32 %v2378, %v2396
        %v3375 = vrot.slane %v3374, 4
        %v3376 = vadd.f32 %v3374, %v3375
        %v3377 = vrot.slane %v3376, 2
        %v3378 = vadd.f32 %v3376, %v3377
        %v3379 = vrot.slane %v3378, 1
        %v3380 = vadd.f32 %v3378, %v3379
        %v3381 = vadd.f32 %v2379, %v2397
        %v3382 = vrot.slane %v3381, 4
        %v3383 = vadd.f32 %v3381, %v3382
        %v3384 = vrot.slane %v3383, 2
        %v3385 = vadd.f32 %v3383, %v3384
        %v3386 = vrot.slane %v3385, 1
        %v3387 = vadd.f32 %v3385, %v3386
        %v3388 = vadd.f32 %v2380, %v2398
        %v3389 = vrot.slane %v3388, 4
        %v3390 = vadd.f32 %v3388, %v3389
        %v3391 = vrot.slane %v3390, 2
        %v3392 = vadd.f32 %v3390, %v3391
        %v3393 = vrot.slane %v3392, 1
        %v3394 = vadd.f32 %v3392, %v3393
        %v3395 = vadd.f32 %v2381, %v2399
        %v3396 = vrot.slane %v3395, 4
        %v3397 = vadd.f32 %v3395, %v3396
        %v3398 = vrot.slane %v3397, 2
        %v3399 = vadd.f32 %v3397, %v3398
        %v3400 = vrot.slane %v3399, 1
        %v3401 = vadd.f32 %v3399, %v3400
        %v3402 = vadd.f32 %v2382, %v2400
        %v3403 = vrot.slane %v3402, 4
        %v3404 = vadd.f32 %v3402, %v3403
        %v3405 = vrot.slane %v3404, 2
        %v3406 = vadd.f32 %v3404, %v3405
        %v3407 = vrot.slane %v3406, 1
        %v3408 = vadd.f32 %v3406, %v3407
        %v3409 = vpack.c.bf16 %v2407, %v2407
        %v3410 = vpack.c.bf16 %v2414, %v2414
        %v3411 = vpack.c.bf16 %v2421, %v2421
        %v3412 = vpack.c.bf16 %v2428, %v2428
        %v3413 = vpack.c.bf16 %v2435, %v2435
        %v3414 = vpack.c.bf16 %v2442, %v2442
        %v3415 = vpack.c.bf16 %v2449, %v2449
        %v3416 = vpack.c.bf16 %v2456, %v2456
        %v3417 = vpack.c.bf16 %v2463, %v2463
        %v3418 = vpack.c.bf16 %v2470, %v2470
        %v3419 = vpack.c.bf16 %v2477, %v2477
        %v3420 = vpack.c.bf16 %v2484, %v2484
        %v3421 = vpack.c.bf16 %v2491, %v2491
        %v3422 = vpack.c.bf16 %v2498, %v2498
        %v3423 = vpack.c.bf16 %v2505, %v2505
        %v3424 = vpack.c.bf16 %v2512, %v2512
        %v3425 = vpack.c.bf16 %v2519, %v2519
        %v3426 = vpack.c.bf16 %v2526, %v2526
        %v3427 = vpack.c.bf16 %v2533, %v2533
        %v3428 = vpack.c.bf16 %v2540, %v2540
        %v3429 = vpack.c.bf16 %v2547, %v2547
        %v3430 = vpack.c.bf16 %v2554, %v2554
        %v3431 = vpack.c.bf16 %v2561, %v2561
        %v3432 = vpack.c.bf16 %v2568, %v2568
        %v3433 = vpack.c.bf16 %v2575, %v2575
        %v3434 = vpack.c.bf16 %v2582, %v2582
        %v3435 = vpack.c.bf16 %v2589, %v2589
        %v3436 = vpack.c.bf16 %v2596, %v2596
        %v3437 = vpack.c.bf16 %v2603, %v2603
        %v3438 = vpack.c.bf16 %v2610, %v2610
        %v3439 = vpack.c.bf16 %v2617, %v2617
        %v3440 = vpack.c.bf16 %v2624, %v2624
        %v3441 = vpack.c.bf16 %v2631, %v2631
        %v3442 = vpack.c.bf16 %v2638, %v2638
        %v3443 = vpack.c.bf16 %v2645, %v2645
        %v3444 = vpack.c.bf16 %v2652, %v2652
        %v3445 = vpack.c.bf16 %v2659, %v2659
        %v3446 = vpack.c.bf16 %v2666, %v2666
        %v3447 = vpack.c.bf16 %v2673, %v2673
        %v3448 = vpack.c.bf16 %v2680, %v2680
        %v3449 = vpack.c.bf16 %v2687, %v2687
        %v3450 = vpack.c.bf16 %v2694, %v2694
        %v3451 = vpack.c.bf16 %v2701, %v2701
        %v3452 = vpack.c.bf16 %v2708, %v2708
        %v3453 = vpack.c.bf16 %v2715, %v2715
        %v3454 = vpack.c.bf16 %v2722, %v2722
        %v3455 = vpack.c.bf16 %v2729, %v2729
        %v3456 = vpack.c.bf16 %v2736, %v2736
        %v3457 = vpack.c.bf16 %v2743, %v2743
        %v3458 = vpack.c.bf16 %v2750, %v2750
        %v3459 = vpack.c.bf16 %v2757, %v2757
        %v3460 = vpack.c.bf16 %v2764, %v2764
        %v3461 = vpack.c.bf16 %v2771, %v2771
        %v3462 = vpack.c.bf16 %v2778, %v2778
        %v3463 = vpack.c.bf16 %v2785, %v2785
        %v3464 = vpack.c.bf16 %v2792, %v2792
        %v3465 = vpack.c.bf16 %v2799, %v2799
        %v3466 = vpack.c.bf16 %v2806, %v2806
        %v3467 = vpack.c.bf16 %v2813, %v2813
        %v3468 = vpack.c.bf16 %v2820, %v2820
        %v3469 = vpack.c.bf16 %v2827, %v2827
        %v3470 = vpack.c.bf16 %v2834, %v2834
        %v3471 = vpack.c.bf16 %v2841, %v2841
        %v3472 = vpack.c.bf16 %v2848, %v2848
        %v3473 = vpack.c.bf16 %v2855, %v2855
        %v3474 = vpack.c.bf16 %v2862, %v2862
        %v3475 = vpack.c.bf16 %v2869, %v2869
        %v3476 = vpack.c.bf16 %v2876, %v2876
        %v3477 = vpack.c.bf16 %v2883, %v2883
        %v3478 = vpack.c.bf16 %v2890, %v2890
        %v3479 = vpack.c.bf16 %v2897, %v2897
        %v3480 = vpack.c.bf16 %v2904, %v2904
        %v3481 = vpack.c.bf16 %v2911, %v2911
        %v3482 = vpack.c.bf16 %v2918, %v2918
        %v3483 = vpack.c.bf16 %v2925, %v2925
        %v3484 = vpack.c.bf16 %v2932, %v2932
        %v3485 = vpack.c.bf16 %v2939, %v2939
        %v3486 = vpack.c.bf16 %v2946, %v2946
        %v3487 = vpack.c.bf16 %v2953, %v2953
        %v3488 = vpack.c.bf16 %v2960, %v2960
        %v3489 = vpack.c.bf16 %v2967, %v2967
        %v3490 = vpack.c.bf16 %v2974, %v2974
        %v3491 = vpack.c.bf16 %v2981, %v2981
        %v3492 = vpack.c.bf16 %v2988, %v2988
        %v3493 = vpack.c.bf16 %v2995, %v2995
        %v3494 = vpack.c.bf16 %v3002, %v3002
        %v3495 = vpack.c.bf16 %v3009, %v3009
        %v3496 = vpack.c.bf16 %v3016, %v3016
        %v3497 = vpack.c.bf16 %v3023, %v3023
        %v3498 = vpack.c.bf16 %v3030, %v3030
        %v3499 = vpack.c.bf16 %v3037, %v3037
        %v3500 = vpack.c.bf16 %v3044, %v3044
        %v3501 = vpack.c.bf16 %v3051, %v3051
        %v3502 = vpack.c.bf16 %v3058, %v3058
        %v3503 = vpack.c.bf16 %v3065, %v3065
        %v3504 = vpack.c.bf16 %v3072, %v3072
        %v3505 = vpack.c.bf16 %v3079, %v3079
        %v3506 = vpack.c.bf16 %v3086, %v3086
        %v3507 = vpack.c.bf16 %v3093, %v3093
        %v3508 = vpack.c.bf16 %v3100, %v3100
        %v3509 = vpack.c.bf16 %v3107, %v3107
        %v3510 = vpack.c.bf16 %v3114, %v3114
        %v3511 = vpack.c.bf16 %v3121, %v3121
        %v3512 = vpack.c.bf16 %v3128, %v3128
        %v3513 = vpack.c.bf16 %v3135, %v3135
        %v3514 = vpack.c.bf16 %v3142, %v3142
        %v3515 = vpack.c.bf16 %v3149, %v3149
        %v3516 = vpack.c.bf16 %v3156, %v3156
        %v3517 = vpack.c.bf16 %v3163, %v3163
        %v3518 = vpack.c.bf16 %v3170, %v3170
        %v3519 = vpack.c.bf16 %v3177, %v3177
        %v3520 = vpack.c.bf16 %v3184, %v3184
        %v3521 = vpack.c.bf16 %v3191, %v3191
        %v3522 = vpack.c.bf16 %v3198, %v3198
        %v3523 = vpack.c.bf16 %v3205, %v3205
        %v3524 = vpack.c.bf16 %v3212, %v3212
        %v3525 = vpack.c.bf16 %v3219, %v3219
        %v3526 = vpack.c.bf16 %v3226, %v3226
        %v3527 = vpack.c.bf16 %v3233, %v3233
        %v3528 = vpack.c.bf16 %v3240, %v3240
        %v3529 = vpack.c.bf16 %v3247, %v3247
        %v3530 = vpack.c.bf16 %v3254, %v3254
        %v3531 = vpack.c.bf16 %v3261, %v3261
        %v3532 = vpack.c.bf16 %v3268, %v3268
        %v3533 = vpack.c.bf16 %v3275, %v3275
        %v3534 = vpack.c.bf16 %v3282, %v3282
        %v3535 = vpack.c.bf16 %v3289, %v3289
        %v3536 = vpack.c.bf16 %v3296, %v3296
        %v3537 = vpack.c.bf16 %v3303, %v3303
        %v3538 = vpack.c.bf16 %v3310, %v3310
        %v3539 = vpack.c.bf16 %v3317, %v3317
        %v3540 = vpack.c.bf16 %v3324, %v3324
        %v3541 = vpack.c.bf16 %v3331, %v3331
        %v3542 = vpack.c.bf16 %v3338, %v3338
        %v3543 = vpack.c.bf16 %v3345, %v3345
        %v3544 = vpack.c.bf16 %v3352, %v3352
        %v3545 = vpack.c.bf16 %v3359, %v3359
        %v3546 = vpack.c.bf16 %v3366, %v3366
        %v3547 = vpack.c.bf16 %v3373, %v3373
        %v3548 = vpack.c.bf16 %v3380, %v3380
        %v3549 = vpack.c.bf16 %v3387, %v3387
        %v3550 = vpack.c.bf16 %v3394, %v3394
        %v3551 = vpack.c.bf16 %v3401, %v3401
        %v3552 = vpack.c.bf16 %v3408, %v3408
        %v3569 = vunpack.c.l.b16 %v3409
        %v3570 = vunpack.c.l.b16 %v3410
        %v3571 = vunpack.c.l.b16 %v3427
        %v3572 = vunpack.c.l.b16 %v3428
        %v3573 = vunpack.c.l.b16 %v3445
        %v3574 = vunpack.c.l.b16 %v3446
        %v3575 = vunpack.c.l.b16 %v3463
        %v3576 = vunpack.c.l.b16 %v3464
        %v3577 = vunpack.c.l.b16 %v3481
        %v3578 = vunpack.c.l.b16 %v3482
        %v3579 = vunpack.c.l.b16 %v3499
        %v3580 = vunpack.c.l.b16 %v3500
        %v3581 = vunpack.c.l.b16 %v3517
        %v3582 = vunpack.c.l.b16 %v3518
        %v3583 = vunpack.c.l.b16 %v3535
        %v3584 = vunpack.c.l.b16 %v3536
        %v3585 = vpack.c.b16 %v3570, %v3569
        %v3586 = vpack.c.b16 %v3572, %v3571
        %v3587 = vpack.c.b16 %v3574, %v3573
        %v3588 = vpack.c.b16 %v3576, %v3575
        %v3589 = vpack.c.b16 %v3578, %v3577
        %v3590 = vpack.c.b16 %v3580, %v3579
        %v3591 = vpack.c.b16 %v3582, %v3581
        %v3592 = vpack.c.b16 %v3584, %v3583
        %v3593 = vunpack.c.l.b16 %v3585
        %v3594 = vunpack.c.h.b16 %v3585
        %v3595 = vunpack.c.l.b16 %v3586
        %v3596 = vunpack.c.h.b16 %v3586
        %v3597 = vunpack.c.l.b16 %v3587
        %v3598 = vunpack.c.h.b16 %v3587
        %v3599 = vunpack.c.l.b16 %v3588
        %v3600 = vunpack.c.h.b16 %v3588
        %v3601 = vunpack.c.l.b16 %v3589
        %v3602 = vunpack.c.h.b16 %v3589
        %v3603 = vunpack.c.l.b16 %v3590
        %v3604 = vunpack.c.h.b16 %v3590
        %v3605 = vunpack.c.l.b16 %v3591
        %v3606 = vunpack.c.h.b16 %v3591
        %v3607 = vunpack.c.l.b16 %v3592
        %v3608 = vunpack.c.h.b16 %v3592
        %vm3609 = vcmask 1041409
        %v3610 = vsel %vm3609, %v3595, %v3593
        %vm3611 = vcmask 1042434
        %v3612 = vsel %vm3611, %v3597, %v3610
        %vm3613 = vcmask 1043459
        %v3614 = vsel %vm3613, %v3599, %v3612
        %vm3615 = vcmask 1044484
        %v3616 = vsel %vm3615, %v3601, %v3614
        %vm3617 = vcmask 1045509
        %v3618 = vsel %vm3617, %v3603, %v3616
        %vm3619 = vcmask 1046534
        %v3620 = vsel %vm3619, %v3605, %v3618
        %vm3621 = vcmask 1047559
        %v3622 = vsel %vm3621, %v3607, %v3620
        %v3623 = vsel %vm3609, %v3596, %v3594
        %v3624 = vsel %vm3611, %v3598, %v3623
        %v3625 = vsel %vm3613, %v3600, %v3624
        %v3626 = vsel %vm3615, %v3602, %v3625
        %v3627 = vsel %vm3617, %v3604, %v3626
        %v3628 = vsel %vm3619, %v3606, %v3627
        %v3629 = vsel %vm3621, %v3608, %v3628
        %v3630 = vpack.c.b16 %v3629, %v3622
        %3632 = vst [vmem:[#allocation2] sm:$0xff] %v3630
        %v3649 = vunpack.c.l.b16 %v3411
        %v3650 = vunpack.c.l.b16 %v3412
        %v3651 = vunpack.c.l.b16 %v3429
        %v3652 = vunpack.c.l.b16 %v3430
        %v3653 = vunpack.c.l.b16 %v3447
        %v3654 = vunpack.c.l.b16 %v3448
        %v3655 = vunpack.c.l.b16 %v3465
        %v3656 = vunpack.c.l.b16 %v3466
        %v3657 = vunpack.c.l.b16 %v3483
        %v3658 = vunpack.c.l.b16 %v3484
        %v3659 = vunpack.c.l.b16 %v3501
        %v3660 = vunpack.c.l.b16 %v3502
        %v3661 = vunpack.c.l.b16 %v3519
        %v3662 = vunpack.c.l.b16 %v3520
        %v3663 = vunpack.c.l.b16 %v3537
        %v3664 = vunpack.c.l.b16 %v3538
        %v3665 = vpack.c.b16 %v3650, %v3649
        %v3666 = vpack.c.b16 %v3652, %v3651
        %v3667 = vpack.c.b16 %v3654, %v3653
        %v3668 = vpack.c.b16 %v3656, %v3655
        %v3669 = vpack.c.b16 %v3658, %v3657
        %v3670 = vpack.c.b16 %v3660, %v3659
        %v3671 = vpack.c.b16 %v3662, %v3661
        %v3672 = vpack.c.b16 %v3664, %v3663
        %v3673 = vunpack.c.l.b16 %v3665
        %v3674 = vunpack.c.h.b16 %v3665
        %v3675 = vunpack.c.l.b16 %v3666
        %v3676 = vunpack.c.h.b16 %v3666
        %v3677 = vunpack.c.l.b16 %v3667
        %v3678 = vunpack.c.h.b16 %v3667
        %v3679 = vunpack.c.l.b16 %v3668
        %v3680 = vunpack.c.h.b16 %v3668
        %v3681 = vunpack.c.l.b16 %v3669
        %v3682 = vunpack.c.h.b16 %v3669
        %v3683 = vunpack.c.l.b16 %v3670
        %v3684 = vunpack.c.h.b16 %v3670
        %v3685 = vunpack.c.l.b16 %v3671
        %v3686 = vunpack.c.h.b16 %v3671
        %v3687 = vunpack.c.l.b16 %v3672
        %v3688 = vunpack.c.h.b16 %v3672
        %v3689 = vsel %vm3609, %v3675, %v3673
        %v3690 = vsel %vm3611, %v3677, %v3689
        %v3691 = vsel %vm3613, %v3679, %v3690
        %v3692 = vsel %vm3615, %v3681, %v3691
        %v3693 = vsel %vm3617, %v3683, %v3692
        %v3694 = vsel %vm3619, %v3685, %v3693
        %v3695 = vsel %vm3621, %v3687, %v3694
        %v3696 = vsel %vm3609, %v3676, %v3674
        %v3697 = vsel %vm3611, %v3678, %v3696
        %v3698 = vsel %vm3613, %v3680, %v3697
        %v3699 = vsel %vm3615, %v3682, %v3698
        %v3700 = vsel %vm3617, %v3684, %v3699
        %v3701 = vsel %vm3619, %v3686, %v3700
        %v3702 = vsel %vm3621, %v3688, %v3701
        %v3703 = vpack.c.b16 %v3702, %v3695
        %3705 = vst [vmem:[#allocation2 + $0x8] sm:$0xff] %v3703
        %v3722 = vunpack.c.l.b16 %v3413
        %v3723 = vunpack.c.l.b16 %v3414
        %v3724 = vunpack.c.l.b16 %v3431
        %v3725 = vunpack.c.l.b16 %v3432
        %v3726 = vunpack.c.l.b16 %v3449
        %v3727 = vunpack.c.l.b16 %v3450
        %v3728 = vunpack.c.l.b16 %v3467
        %v3729 = vunpack.c.l.b16 %v3468
        %v3730 = vunpack.c.l.b16 %v3485
        %v3731 = vunpack.c.l.b16 %v3486
        %v3732 = vunpack.c.l.b16 %v3503
        %v3733 = vunpack.c.l.b16 %v3504
        %v3734 = vunpack.c.l.b16 %v3521
        %v3735 = vunpack.c.l.b16 %v3522
        %v3736 = vunpack.c.l.b16 %v3539
        %v3737 = vunpack.c.l.b16 %v3540
        %v3738 = vpack.c.b16 %v3723, %v3722
        %v3739 = vpack.c.b16 %v3725, %v3724
        %v3740 = vpack.c.b16 %v3727, %v3726
        %v3741 = vpack.c.b16 %v3729, %v3728
        %v3742 = vpack.c.b16 %v3731, %v3730
        %v3743 = vpack.c.b16 %v3733, %v3732
        %v3744 = vpack.c.b16 %v3735, %v3734
        %v3745 = vpack.c.b16 %v3737, %v3736
        %v3746 = vunpack.c.l.b16 %v3738
        %v3747 = vunpack.c.h.b16 %v3738
        %v3748 = vunpack.c.l.b16 %v3739
        %v3749 = vunpack.c.h.b16 %v3739
        %v3750 = vunpack.c.l.b16 %v3740
        %v3751 = vunpack.c.h.b16 %v3740
        %v3752 = vunpack.c.l.b16 %v3741
        %v3753 = vunpack.c.h.b16 %v3741
        %v3754 = vunpack.c.l.b16 %v3742
        %v3755 = vunpack.c.h.b16 %v3742
        %v3756 = vunpack.c.l.b16 %v3743
        %v3757 = vunpack.c.h.b16 %v3743
        %v3758 = vunpack.c.l.b16 %v3744
        %v3759 = vunpack.c.h.b16 %v3744
        %v3760 = vunpack.c.l.b16 %v3745
        %v3761 = vunpack.c.h.b16 %v3745
        %v3762 = vsel %vm3609, %v3748, %v3746
        %v3763 = vsel %vm3611, %v3750, %v3762
        %v3764 = vsel %vm3613, %v3752, %v3763
        %v3765 = vsel %vm3615, %v3754, %v3764
        %v3766 = vsel %vm3617, %v3756, %v3765
        %v3767 = vsel %vm3619, %v3758, %v3766
        %v3768 = vsel %vm3621, %v3760, %v3767
        %v3769 = vsel %vm3609, %v3749, %v3747
        %v3770 = vsel %vm3611, %v3751, %v3769
        %v3771 = vsel %vm3613, %v3753, %v3770
        %v3772 = vsel %vm3615, %v3755, %v3771
        %v3773 = vsel %vm3617, %v3757, %v3772
        %v3774 = vsel %vm3619, %v3759, %v3773
        %v3775 = vsel %vm3621, %v3761, %v3774
        %v3776 = vpack.c.b16 %v3775, %v3768
        %3778 = vst [vmem:[#allocation2 + $0x10] sm:$0xff] %v3776
        %v3795 = vunpack.c.l.b16 %v3415
        %v3796 = vunpack.c.l.b16 %v3416
        %v3797 = vunpack.c.l.b16 %v3433
        %v3798 = vunpack.c.l.b16 %v3434
        %v3799 = vunpack.c.l.b16 %v3451
        %v3800 = vunpack.c.l.b16 %v3452
        %v3801 = vunpack.c.l.b16 %v3469
        %v3802 = vunpack.c.l.b16 %v3470
        %v3803 = vunpack.c.l.b16 %v3487
        %v3804 = vunpack.c.l.b16 %v3488
        %v3805 = vunpack.c.l.b16 %v3505
        %v3806 = vunpack.c.l.b16 %v3506
        %v3807 = vunpack.c.l.b16 %v3523
        %v3808 = vunpack.c.l.b16 %v3524
        %v3809 = vunpack.c.l.b16 %v3541
        %v3810 = vunpack.c.l.b16 %v3542
        %v3811 = vpack.c.b16 %v3796, %v3795
        %v3812 = vpack.c.b16 %v3798, %v3797
        %v3813 = vpack.c.b16 %v3800, %v3799
        %v3814 = vpack.c.b16 %v3802, %v3801
        %v3815 = vpack.c.b16 %v3804, %v3803
        %v3816 = vpack.c.b16 %v3806, %v3805
        %v3817 = vpack.c.b16 %v3808, %v3807
        %v3818 = vpack.c.b16 %v3810, %v3809
        %v3819 = vunpack.c.l.b16 %v3811
        %v3820 = vunpack.c.h.b16 %v3811
        %v3821 = vunpack.c.l.b16 %v3812
        %v3822 = vunpack.c.h.b16 %v3812
        %v3823 = vunpack.c.l.b16 %v3813
        %v3824 = vunpack.c.h.b16 %v3813
        %v3825 = vunpack.c.l.b16 %v3814
        %v3826 = vunpack.c.h.b16 %v3814
        %v3827 = vunpack.c.l.b16 %v3815
        %v3828 = vunpack.c.h.b16 %v3815
        %v3829 = vunpack.c.l.b16 %v3816
        %v3830 = vunpack.c.h.b16 %v3816
        %v3831 = vunpack.c.l.b16 %v3817
        %v3832 = vunpack.c.h.b16 %v3817
        %v3833 = vunpack.c.l.b16 %v3818
        %v3834 = vunpack.c.h.b16 %v3818
        %v3835 = vsel %vm3609, %v3821, %v3819
        %v3836 = vsel %vm3611, %v3823, %v3835
        %v3837 = vsel %vm3613, %v3825, %v3836
        %v3838 = vsel %vm3615, %v3827, %v3837
        %v3839 = vsel %vm3617, %v3829, %v3838
        %v3840 = vsel %vm3619, %v3831, %v3839
        %v3841 = vsel %vm3621, %v3833, %v3840
        %v3842 = vsel %vm3609, %v3822, %v3820
        %v3843 = vsel %vm3611, %v3824, %v3842
        %v3844 = vsel %vm3613, %v3826, %v3843
        %v3845 = vsel %vm3615, %v3828, %v3844
        %v3846 = vsel %vm3617, %v3830, %v3845
        %v3847 = vsel %vm3619, %v3832, %v3846
        %v3848 = vsel %vm3621, %v3834, %v3847
        %v3849 = vpack.c.b16 %v3848, %v3841
        %3851 = vst [vmem:[#allocation2 + $0x18] sm:$0xff] %v3849
        %v3868 = vunpack.c.l.b16 %v3417
        %v3869 = vunpack.c.l.b16 %v3418
        %v3870 = vunpack.c.l.b16 %v3435
        %v3871 = vunpack.c.l.b16 %v3436
        %v3872 = vunpack.c.l.b16 %v3453
        %v3873 = vunpack.c.l.b16 %v3454
        %v3874 = vunpack.c.l.b16 %v3471
        %v3875 = vunpack.c.l.b16 %v3472
        %v3876 = vunpack.c.l.b16 %v3489
        %v3877 = vunpack.c.l.b16 %v3490
        %v3878 = vunpack.c.l.b16 %v3507
        %v3879 = vunpack.c.l.b16 %v3508
        %v3880 = vunpack.c.l.b16 %v3525
        %v3881 = vunpack.c.l.b16 %v3526
        %v3882 = vunpack.c.l.b16 %v3543
        %v3883 = vunpack.c.l.b16 %v3544
        %v3884 = vpack.c.b16 %v3869, %v3868
        %v3885 = vpack.c.b16 %v3871, %v3870
        %v3886 = vpack.c.b16 %v3873, %v3872
        %v3887 = vpack.c.b16 %v3875, %v3874
        %v3888 = vpack.c.b16 %v3877, %v3876
        %v3889 = vpack.c.b16 %v3879, %v3878
        %v3890 = vpack.c.b16 %v3881, %v3880
        %v3891 = vpack.c.b16 %v3883, %v3882
        %v3892 = vunpack.c.l.b16 %v3884
        %v3893 = vunpack.c.h.b16 %v3884
        %v3894 = vunpack.c.l.b16 %v3885
        %v3895 = vunpack.c.h.b16 %v3885
        %v3896 = vunpack.c.l.b16 %v3886
        %v3897 = vunpack.c.h.b16 %v3886
        %v3898 = vunpack.c.l.b16 %v3887
        %v3899 = vunpack.c.h.b16 %v3887
        %v3900 = vunpack.c.l.b16 %v3888
        %v3901 = vunpack.c.h.b16 %v3888
        %v3902 = vunpack.c.l.b16 %v3889
        %v3903 = vunpack.c.h.b16 %v3889
        %v3904 = vunpack.c.l.b16 %v3890
        %v3905 = vunpack.c.h.b16 %v3890
        %v3906 = vunpack.c.l.b16 %v3891
        %v3907 = vunpack.c.h.b16 %v3891
        %v3908 = vsel %vm3609, %v3894, %v3892
        %v3909 = vsel %vm3611, %v3896, %v3908
        %v3910 = vsel %vm3613, %v3898, %v3909
        %v3911 = vsel %vm3615, %v3900, %v3910
        %v3912 = vsel %vm3617, %v3902, %v3911
        %v3913 = vsel %vm3619, %v3904, %v3912
        %v3914 = vsel %vm3621, %v3906, %v3913
        %v3915 = vsel %vm3609, %v3895, %v3893
        %v3916 = vsel %vm3611, %v3897, %v3915
        %v3917 = vsel %vm3613, %v3899, %v3916
        %v3918 = vsel %vm3615, %v3901, %v3917
        %v3919 = vsel %vm3617, %v3903, %v3918
        %v3920 = vsel %vm3619, %v3905, %v3919
        %v3921 = vsel %vm3621, %v3907, %v3920
        %v3922 = vpack.c.b16 %v3921, %v3914
        %3924 = vst [vmem:[#allocation2 + $0x20] sm:$0xff] %v3922
        %v3941 = vunpack.c.l.b16 %v3419
        %v3942 = vunpack.c.l.b16 %v3420
        %v3943 = vunpack.c.l.b16 %v3437
        %v3944 = vunpack.c.l.b16 %v3438
        %v3945 = vunpack.c.l.b16 %v3455
        %v3946 = vunpack.c.l.b16 %v3456
        %v3947 = vunpack.c.l.b16 %v3473
        %v3948 = vunpack.c.l.b16 %v3474
        %v3949 = vunpack.c.l.b16 %v3491
        %v3950 = vunpack.c.l.b16 %v3492
        %v3951 = vunpack.c.l.b16 %v3509
        %v3952 = vunpack.c.l.b16 %v3510
        %v3953 = vunpack.c.l.b16 %v3527
        %v3954 = vunpack.c.l.b16 %v3528
        %v3955 = vunpack.c.l.b16 %v3545
        %v3956 = vunpack.c.l.b16 %v3546
        %v3957 = vpack.c.b16 %v3942, %v3941
        %v3958 = vpack.c.b16 %v3944, %v3943
        %v3959 = vpack.c.b16 %v3946, %v3945
        %v3960 = vpack.c.b16 %v3948, %v3947
        %v3961 = vpack.c.b16 %v3950, %v3949
        %v3962 = vpack.c.b16 %v3952, %v3951
        %v3963 = vpack.c.b16 %v3954, %v3953
        %v3964 = vpack.c.b16 %v3956, %v3955
        %v3965 = vunpack.c.l.b16 %v3957
        %v3966 = vunpack.c.h.b16 %v3957
        %v3967 = vunpack.c.l.b16 %v3958
        %v3968 = vunpack.c.h.b16 %v3958
        %v3969 = vunpack.c.l.b16 %v3959
        %v3970 = vunpack.c.h.b16 %v3959
        %v3971 = vunpack.c.l.b16 %v3960
        %v3972 = vunpack.c.h.b16 %v3960
        %v3973 = vunpack.c.l.b16 %v3961
        %v3974 = vunpack.c.h.b16 %v3961
        %v3975 = vunpack.c.l.b16 %v3962
        %v3976 = vunpack.c.h.b16 %v3962
        %v3977 = vunpack.c.l.b16 %v3963
        %v3978 = vunpack.c.h.b16 %v3963
        %v3979 = vunpack.c.l.b16 %v3964
        %v3980 = vunpack.c.h.b16 %v3964
        %v3981 = vsel %vm3609, %v3967, %v3965
        %v3982 = vsel %vm3611, %v3969, %v3981
        %v3983 = vsel %vm3613, %v3971, %v3982
        %v3984 = vsel %vm3615, %v3973, %v3983
        %v3985 = vsel %vm3617, %v3975, %v3984
        %v3986 = vsel %vm3619, %v3977, %v3985
        %v3987 = vsel %vm3621, %v3979, %v3986
        %v3988 = vsel %vm3609, %v3968, %v3966
        %v3989 = vsel %vm3611, %v3970, %v3988
        %v3990 = vsel %vm3613, %v3972, %v3989
        %v3991 = vsel %vm3615, %v3974, %v3990
        %v3992 = vsel %vm3617, %v3976, %v3991
        %v3993 = vsel %vm3619, %v3978, %v3992
        %v3994 = vsel %vm3621, %v3980, %v3993
        %v3995 = vpack.c.b16 %v3994, %v3987
        %3997 = vst [vmem:[#allocation2 + $0x28] sm:$0xff] %v3995
        %v4014 = vunpack.c.l.b16 %v3421
        %v4015 = vunpack.c.l.b16 %v3422
        %v4016 = vunpack.c.l.b16 %v3439
        %v4017 = vunpack.c.l.b16 %v3440
        %v4018 = vunpack.c.l.b16 %v3457
        %v4019 = vunpack.c.l.b16 %v3458
        %v4020 = vunpack.c.l.b16 %v3475
        %v4021 = vunpack.c.l.b16 %v3476
        %v4022 = vunpack.c.l.b16 %v3493
        %v4023 = vunpack.c.l.b16 %v3494
        %v4024 = vunpack.c.l.b16 %v3511
        %v4025 = vunpack.c.l.b16 %v3512
        %v4026 = vunpack.c.l.b16 %v3529
        %v4027 = vunpack.c.l.b16 %v3530
        %v4028 = vunpack.c.l.b16 %v3547
        %v4029 = vunpack.c.l.b16 %v3548
        %v4030 = vpack.c.b16 %v4015, %v4014
        %v4031 = vpack.c.b16 %v4017, %v4016
        %v4032 = vpack.c.b16 %v4019, %v4018
        %v4033 = vpack.c.b16 %v4021, %v4020
        %v4034 = vpack.c.b16 %v4023, %v4022
        %v4035 = vpack.c.b16 %v4025, %v4024
        %v4036 = vpack.c.b16 %v4027, %v4026
        %v4037 = vpack.c.b16 %v4029, %v4028
        %v4038 = vunpack.c.l.b16 %v4030
        %v4039 = vunpack.c.h.b16 %v4030
        %v4040 = vunpack.c.l.b16 %v4031
        %v4041 = vunpack.c.h.b16 %v4031
        %v4042 = vunpack.c.l.b16 %v4032
        %v4043 = vunpack.c.h.b16 %v4032
        %v4044 = vunpack.c.l.b16 %v4033
        %v4045 = vunpack.c.h.b16 %v4033
        %v4046 = vunpack.c.l.b16 %v4034
        %v4047 = vunpack.c.h.b16 %v4034
        %v4048 = vunpack.c.l.b16 %v4035
        %v4049 = vunpack.c.h.b16 %v4035
        %v4050 = vunpack.c.l.b16 %v4036
        %v4051 = vunpack.c.h.b16 %v4036
        %v4052 = vunpack.c.l.b16 %v4037
        %v4053 = vunpack.c.h.b16 %v4037
        %v4054 = vsel %vm3609, %v4040, %v4038
        %v4055 = vsel %vm3611, %v4042, %v4054
        %v4056 = vsel %vm3613, %v4044, %v4055
        %v4057 = vsel %vm3615, %v4046, %v4056
        %v4058 = vsel %vm3617, %v4048, %v4057
        %v4059 = vsel %vm3619, %v4050, %v4058
        %v4060 = vsel %vm3621, %v4052, %v4059
        %v4061 = vsel %vm3609, %v4041, %v4039
        %v4062 = vsel %vm3611, %v4043, %v4061
        %v4063 = vsel %vm3613, %v4045, %v4062
        %v4064 = vsel %vm3615, %v4047, %v4063
        %v4065 = vsel %vm3617, %v4049, %v4064
        %v4066 = vsel %vm3619, %v4051, %v4065
        %v4067 = vsel %vm3621, %v4053, %v4066
        %v4068 = vpack.c.b16 %v4067, %v4060
        %4070 = vst [vmem:[#allocation2 + $0x30] sm:$0xff] %v4068
        %v4087 = vunpack.c.l.b16 %v3423
        %v4088 = vunpack.c.l.b16 %v3424
        %v4089 = vunpack.c.l.b16 %v3441
        %v4090 = vunpack.c.l.b16 %v3442
        %v4091 = vunpack.c.l.b16 %v3459
        %v4092 = vunpack.c.l.b16 %v3460
        %v4093 = vunpack.c.l.b16 %v3477
        %v4094 = vunpack.c.l.b16 %v3478
        %v4095 = vunpack.c.l.b16 %v3495
        %v4096 = vunpack.c.l.b16 %v3496
        %v4097 = vunpack.c.l.b16 %v3513
        %v4098 = vunpack.c.l.b16 %v3514
        %v4099 = vunpack.c.l.b16 %v3531
        %v4100 = vunpack.c.l.b16 %v3532
        %v4101 = vunpack.c.l.b16 %v3549
        %v4102 = vunpack.c.l.b16 %v3550
        %v4103 = vpack.c.b16 %v4088, %v4087
        %v4104 = vpack.c.b16 %v4090, %v4089
        %v4105 = vpack.c.b16 %v4092, %v4091
        %v4106 = vpack.c.b16 %v4094, %v4093
        %v4107 = vpack.c.b16 %v4096, %v4095
        %v4108 = vpack.c.b16 %v4098, %v4097
        %v4109 = vpack.c.b16 %v4100, %v4099
        %v4110 = vpack.c.b16 %v4102, %v4101
        %v4111 = vunpack.c.l.b16 %v4103
        %v4112 = vunpack.c.h.b16 %v4103
        %v4113 = vunpack.c.l.b16 %v4104
        %v4114 = vunpack.c.h.b16 %v4104
        %v4115 = vunpack.c.l.b16 %v4105
        %v4116 = vunpack.c.h.b16 %v4105
        %v4117 = vunpack.c.l.b16 %v4106
        %v4118 = vunpack.c.h.b16 %v4106
        %v4119 = vunpack.c.l.b16 %v4107
        %v4120 = vunpack.c.h.b16 %v4107
        %v4121 = vunpack.c.l.b16 %v4108
        %v4122 = vunpack.c.h.b16 %v4108
        %v4123 = vunpack.c.l.b16 %v4109
        %v4124 = vunpack.c.h.b16 %v4109
        %v4125 = vunpack.c.l.b16 %v4110
        %v4126 = vunpack.c.h.b16 %v4110
        %v4127 = vsel %vm3609, %v4113, %v4111
        %v4128 = vsel %vm3611, %v4115, %v4127
        %v4129 = vsel %vm3613, %v4117, %v4128
        %v4130 = vsel %vm3615, %v4119, %v4129
        %v4131 = vsel %vm3617, %v4121, %v4130
        %v4132 = vsel %vm3619, %v4123, %v4131
        %v4133 = vsel %vm3621, %v4125, %v4132
        %v4134 = vsel %vm3609, %v4114, %v4112
        %v4135 = vsel %vm3611, %v4116, %v4134
        %v4136 = vsel %vm3613, %v4118, %v4135
        %v4137 = vsel %vm3615, %v4120, %v4136
        %v4138 = vsel %vm3617, %v4122, %v4137
        %v4139 = vsel %vm3619, %v4124, %v4138
        %v4140 = vsel %vm3621, %v4126, %v4139
        %v4141 = vpack.c.b16 %v4140, %v4133
        %4143 = vst [vmem:[#allocation2 + $0x38] sm:$0xff] %v4141
        %v4160 = vunpack.c.l.b16 %v3425
        %v4161 = vunpack.c.l.b16 %v3426
        %v4162 = vunpack.c.l.b16 %v3443
        %v4163 = vunpack.c.l.b16 %v3444
        %v4164 = vunpack.c.l.b16 %v3461
        %v4165 = vunpack.c.l.b16 %v3462
        %v4166 = vunpack.c.l.b16 %v3479
        %v4167 = vunpack.c.l.b16 %v3480
        %v4168 = vunpack.c.l.b16 %v3497
        %v4169 = vunpack.c.l.b16 %v3498
        %v4170 = vunpack.c.l.b16 %v3515
        %v4171 = vunpack.c.l.b16 %v3516
        %v4172 = vunpack.c.l.b16 %v3533
        %v4173 = vunpack.c.l.b16 %v3534
        %v4174 = vunpack.c.l.b16 %v3551
        %v4175 = vunpack.c.l.b16 %v3552
        %v4176 = vpack.c.b16 %v4161, %v4160
        %v4177 = vpack.c.b16 %v4163, %v4162
        %v4178 = vpack.c.b16 %v4165, %v4164
        %v4179 = vpack.c.b16 %v4167, %v4166
        %v4180 = vpack.c.b16 %v4169, %v4168
        %v4181 = vpack.c.b16 %v4171, %v4170
        %v4182 = vpack.c.b16 %v4173, %v4172
        %v4183 = vpack.c.b16 %v4175, %v4174
        %v4184 = vunpack.c.l.b16 %v4176
        %v4185 = vunpack.c.h.b16 %v4176
        %v4186 = vunpack.c.l.b16 %v4177
        %v4187 = vunpack.c.h.b16 %v4177
        %v4188 = vunpack.c.l.b16 %v4178
        %v4189 = vunpack.c.h.b16 %v4178
        %v4190 = vunpack.c.l.b16 %v4179
        %v4191 = vunpack.c.h.b16 %v4179
        %v4192 = vunpack.c.l.b16 %v4180
        %v4193 = vunpack.c.h.b16 %v4180
        %v4194 = vunpack.c.l.b16 %v4181
        %v4195 = vunpack.c.h.b16 %v4181
        %v4196 = vunpack.c.l.b16 %v4182
        %v4197 = vunpack.c.h.b16 %v4182
        %v4198 = vunpack.c.l.b16 %v4183
        %v4199 = vunpack.c.h.b16 %v4183
        %v4200 = vsel %vm3609, %v4186, %v4184
        %v4201 = vsel %vm3611, %v4188, %v4200
        %v4202 = vsel %vm3613, %v4190, %v4201
        %v4203 = vsel %vm3615, %v4192, %v4202
        %v4204 = vsel %vm3617, %v4194, %v4203
        %v4205 = vsel %vm3619, %v4196, %v4204
        %v4206 = vsel %vm3621, %v4198, %v4205
        %v4207 = vsel %vm3609, %v4187, %v4185
        %v4208 = vsel %vm3611, %v4189, %v4207
        %v4209 = vsel %vm3613, %v4191, %v4208
        %v4210 = vsel %vm3615, %v4193, %v4209
        %v4211 = vsel %vm3617, %v4195, %v4210
        %v4212 = vsel %vm3619, %v4197, %v4211
        %v4213 = vsel %vm3621, %v4199, %v4212
        %v4214 = vpack.c.b16 %v4213, %v4206
        %4216 = vst [vmem:[#allocation2 + $0x40] sm:$0xff] %v4214
        %v4217 = vld [vmem:[%s4] sm:$0xf]
        %v4218 = vld [vmem:[#allocation2] sm:$0xff]
        %v4219 = vld [vmem:[#allocation2 + $0x8] sm:$0xff]
        %v4220 = vld [vmem:[#allocation2 + $0x10] sm:$0xff]
        %v4221 = vld [vmem:[#allocation2 + $0x18] sm:$0xff]
        %v4222 = vld [vmem:[#allocation2 + $0x20] sm:$0xff]
        %v4223 = vld [vmem:[#allocation2 + $0x28] sm:$0xff]
        %v4224 = vld [vmem:[#allocation2 + $0x30] sm:$0xff]
        %v4225 = vld [vmem:[#allocation2 + $0x38] sm:$0xff]
        %v4226 = vld [vmem:[#allocation2 + $0x40] sm:$0xff]
        %v4227 = vld [vmem:[%s5] sm:$0xff]
        %4229 = vset.pattern.permute.xlu0 0
        %4230 = vperm.xlu0 %4229, %v4227
        %v4231 = vpop.permute.xlu0 %4230
        %v4242 = vunpack.c.l.b16 %v4218
        %v4243 = vunpack.c.h.b16 %v4218
        %v4244 = vunpack.c.l.b16 %v4219
        %v4245 = vunpack.c.h.b16 %v4219
        %v4246 = vunpack.c.l.b16 %v4220
        %v4247 = vunpack.c.h.b16 %v4220
        %v4248 = vunpack.c.l.b16 %v4221
        %v4249 = vunpack.c.h.b16 %v4221
        %v4250 = vunpack.c.l.b16 %v4222
        %v4251 = vunpack.c.h.b16 %v4222
        %v4252 = vunpack.c.l.b16 %v4223
        %v4253 = vunpack.c.h.b16 %v4223
        %v4254 = vunpack.c.l.b16 %v4224
        %v4255 = vunpack.c.h.b16 %v4224
        %v4256 = vunpack.c.l.b16 %v4225
        %v4257 = vunpack.c.h.b16 %v4225
        %v4258 = vunpack.c.l.b16 %v4226
        %v4259 = vunpack.c.h.b16 %v4226
        %v4260 = vpack.c.b16 %v4244, %v4242
        %v4261 = vpack.c.b16 %v4245, %v4243
        %v4262 = vpack.c.b16 %v4248, %v4246
        %v4263 = vpack.c.b16 %v4249, %v4247
        %v4264 = vpack.c.b16 %v4252, %v4250
        %v4265 = vpack.c.b16 %v4253, %v4251
        %v4266 = vpack.c.b16 %v4256, %v4254
        %v4267 = vpack.c.b16 %v4257, %v4255
        %v4268 = vpack.c.b16 %v4258, %v4258
        %v4269 = vpack.c.b16 %v4259, %v4259
        %vm4278 = vcmask 588800
        %v4280 = vsel %vm4278, %v4217, 0
        %vm4282 = vcmask 1043456
        %v4284 = vsel %vm4282, %v4268, 0
        %v4287 = vsel %vm4282, %v4269, 0
        %4289 = vmatprep.subr.bf16.mxu0 %v4261
        %4290 = vmatpush1.bf16.msra.mxu0 %v4260
        %4291 = vmatprep.subr.bf16.mxu0 %v4263
        %4292 = vmatpush1.bf16.msra.mxu0 %v4262
        %4293 = vmatprep.subr.bf16.mxu0 %v4265
        %4294 = vmatpush1.bf16.msra.mxu0 %v4264
        %4295 = vmatprep.subr.bf16.mxu0 %v4267
        %4296 = vmatpush1.bf16.msra.mxu0 %v4266
        %4297 = vmatprep.subr.bf16.mxu0 %v4287
        %4298 = vmatpush1.bf16.msra.mxu0 %v4284
        %4299 = vmatprep.subr.bf16.mxu0 0
        %4300 = vmatpush1.bf16.msra.mxu0 0
        %4301 = vmatprep.subr.bf16.mxu0 0
        %4302 = vmatpush1.bf16.msra.mxu0 0
        %4303 = vmatprep.subr.bf16.mxu0 0
        %4304 = vmatpush1.bf16.msra.mxu0 0
        %4305 = vmatprep.subr.bf16.mxu0 0
        %4306 = vmatpush1.bf16.msra.mxu0 0
        %4307 = vmatprep.subr.bf16.mxu0 0
        %4308 = vmatpush1.bf16.msra.mxu0 0
        %4309 = vmatprep.subr.bf16.mxu0 0
        %4310 = vmatpush1.bf16.msra.mxu0 0
        %4311 = vmatprep.subr.bf16.mxu0 0
        %4312 = vmatpush1.bf16.msra.mxu0 0
        %4313 = vmatprep.subr.bf16.mxu0 0
        %4314 = vmatpush1.bf16.msra.mxu0 0
        %4315 = vmatprep.subr.bf16.mxu0 0
        %4316 = vmatpush1.bf16.msra.mxu0 0
        %4317 = vmatprep.subr.bf16.mxu0 0
        %4318 = vmatpush1.bf16.msra.mxu0 0
        %4319 = vmatprep.subr.bf16.mxu0 0
        %4320 = vmatpush1.bf16.msra.mxu0 0
        %4321 = vmatprep.mubr.bf16.mxu0 0
        %4322 = vmatmul.mubr.bf16.gmra.mrb[0].mxu0 %v4280
        %v4323 = vpop.f32.mrb[0].mxu0
        %v4324 = vadd.f32 %v4231, %v4323
        %v4325 = vpop.f32.mrb[0].mxu0
        %v4326 = vadd.f32 %v4231, %v4325
        %v4327 = vpop.f32.mrb[0].mxu0
        %v4328 = vpop.f32.mrb[0].mxu0
        %4329 = vdwg.mxu0
        %4330 = vst [vmem:[%s330] sm:$0xff] %v4324
        %4331 = vst [vmem:[%s330 + $0x8] sm:$0xff] %v4326
        %s4332 = sand.u32 %s194, 1
        %s4333 = scalar_lea.sflag [#allocation4], %s4332
        %s4334 = sand.u32 %s194, 1
        %s4335 = smul.addr %s4334, 16
        %s4336 = scalar_lea.vmem [#allocation3], %s4335
        // Predicated region
        $region45: #{tpu_custom_call.1} parent=43 // pred_check
          %p4337 = pneg %p204
        $region46: #{tpu_custom_call.1} parent=43 // pred_check_branch
          %4339 = sbr.rel (%p4337) target = $region48
        $region47: #{tpu_custom_call.1} parent=43 // pred_region
          %s4340 = smul.u32 2, %s25
          %s4342 = ssub.s32 256, 256
          %4343 = vsyncadd %s4333, %s4342
          %s4344 = smul.addr %s24, 2
          %s4345 = sadd.s32 %s4340, %s4344
          %s4346 = smul.addr %s4345, 128
          %s4347 = scalar_lea.hbm %s6, %s4346
          %s4349 = sshll.u32 %s4336, 4
          %s4350 = int_to_ptr.vmem [resolvable:$true] %s4349
          %4352 = dma.vmem_to_hbm [thread:$0]  %s4350, 256, %s4347, %s4333
        $region48: #{tpu_custom_call.1} parent=43 // pred_fallthru
          _
      $region44: #{tpu_custom_call.1} parent=5 // pred_fallthru
        _
      %p4353 = scmp.le.s32.totalorder 2, %s15
      // Predicated region
      $region49: #{tpu_custom_call.1} parent=5 // pred_check
        %p4354 = pneg %p4353
      $region50: #{tpu_custom_call.1} parent=5 // pred_check_branch
        %4356 = sbr.rel (%p4354) target = $region52
      $region51: #{tpu_custom_call.1} parent=5 // pred_region
        %s4357 = ssub.s32 %s15, 2
        // Predicated region
        $region53: #{tpu_custom_call.1} parent=51 // pred_check
          %p4358 = pneg %p210
        $region54: #{tpu_custom_call.1} parent=51 // pred_check_branch
          %4360 = sbr.rel (%p4358) target = $region56
        $region55: #{tpu_custom_call.1} parent=51 // pred_region
          %s4361 = sand.u32 %s195, 1
          %s4362 = scalar_lea.sflag [#allocation4], %s4361
          %s4363 = sand.u32 %s195, 1
          %s4364 = smul.addr %s4363, 16
          %s4365 = scalar_lea.vmem [#allocation3], %s4364
          %4366 = dma.done %s4362, 256
        $region56: #{tpu_custom_call.1} parent=51 // pred_fallthru
          _
      $region52: #{tpu_custom_call.1} parent=5 // pred_fallthru
        _
    $region6: #{tpu_custom_call.1} parent=1 // loop_footer
      %s19 = sadd.s32 1, %s15
    $region7: #{tpu_custom_call.1} parent=1 // loop_footer_branch
      %14 = sbr.rel target = $region3
    $region8: #{tpu_custom_call.1} parent=1 // loop_exit
      _
    %4367 = vsyncpa [#allocation4], 1
    %s4368 = scalar_lea.sflag [#allocation4], 1
    %4369 = vsyncpa %s4368, 1

</llo_original>
